<compile_context>
chip_gen: v6e
topology: v6e:2x2x1
jax: 0.10.0
libtpu: 0.0.40
codegen_flags: <defaults>
</compile_context>

<pallas_src>
import jax
import jax.numpy as jnp
from jax.experimental import pallas as pl
from jax.experimental.pallas import tpu as pltpu


# --------------------------------------------------------------------------- #
# Kernel
# --------------------------------------------------------------------------- #
def nmf_kernel(gmf_u_ref, ncf_u_ref, item_ref,
               w1n_ref, w1i_ref, b1_ref, w2_ref, b2_ref,
               w3g_ref, w3n_ref, b3_ref, w4_ref, b4_ref,
               w5_ref, b5_ref, out_ref):
    f32, bf16 = jnp.float32, jnp.bfloat16

    def dot_t(w, x):
        # (N, F) contracted against (tb, F) on the feature axis -> (N, tb).
        # Batch-major activation tile, feature-major result; f32 accumulation.
        return jax.lax.dot_general(
            w, x, dimension_numbers=(((1,), (1,)), ((), ())),
            preferred_element_type=f32)

    gmf_u = gmf_u_ref[...]          # (tb, F) bf16
    ncf_u = ncf_u_ref[...]          # (tb, F) bf16
    item = item_ref[...]            # (tb, F) bf16

    # GMF branch: elementwise product in f32 (v5e has no bf16 VPU), bf16 for MXU.
    gmf = (gmf_u.astype(f32) * item.astype(f32)).astype(bf16)          # (tb, F)

    # NCF MLP.  Layer 1 is concat-free: W1 @ [ncf_u; item] == W1n@ncf_u + W1i@item.
    h = dot_t(w1n_ref[...], ncf_u) + dot_t(w1i_ref[...], item) + b1_ref[...]
    h = jnp.maximum(h, 0.0)                                            # (256, tb)
    h = jnp.dot(w2_ref[...], h.astype(bf16),
                preferred_element_type=f32) + b2_ref[...]
    h = jnp.maximum(h, 0.0)                                            # (128, tb)

    # Fusion MLP (concat-free): W3 @ [gmf; h] == W3g@gmf + W3n@h.
    z = (dot_t(w3g_ref[...], gmf)
         + jnp.dot(w3n_ref[...], h.astype(bf16), preferred_element_type=f32)
         + b3_ref[...])
    z = jnp.maximum(z, 0.0)                                            # (256, tb)
    z = jnp.dot(w4_ref[...], z.astype(bf16),
                preferred_element_type=f32) + b4_ref[...]
    z = jnp.maximum(z, 0.0)                                            # (128, tb)

    # Final Linear(128 -> 1): VPU multiply + sublane reduce instead of an N=1
    # MXU matmul; result is already the lane-dense (1, tb) output row.
    logits = jnp.sum(z * w5_ref[...], axis=0, keepdims=True) + b5_ref[...]
    out_ref[...] = jax.nn.sigmoid(logits).astype(out_ref.dtype)


# --------------------------------------------------------------------------- #
# Wrapper
# --------------------------------------------------------------------------- #
def _choose_tb(batch, tb_max=2048):
    """Lane-aligned batch tile.

    Big tiles amortize per-grid-step overhead; aim for grid >= 2 so both v7x
    TensorCores get work; cap at 2048 so f32 intermediates + double-buffered
    inputs stay under v5e's 16 MiB scoped-VMEM default.
    """
    half = -(-batch // 2)                       # cdiv(batch, 2)
    tb = -(-half // 128) * 128                  # round up to a lane multiple
    return int(min(tb_max, max(128, tb)))


def nmf_forward(gmf_u, ncf_u, item, params, *, tb=None):
    """gmf_u, ncf_u, item: (B, F) float32. Returns (B,) float32 scores."""
    B, F = item.shape
    # bf16 sublane packing: keep the feature axis a multiple of 16.
    assert F % 16 == 0, "factor_num must be a multiple of 16"
    (w1, b1, w2, b2, w3g, w3n, b3, w4, b4, w5, b5) = params

    if tb is None:
        tb = _choose_tb(B)
    Bp = ((B + tb - 1) // tb) * tb
    grid = (Bp // tb,)

    bf16 = jnp.bfloat16

    def prep(a):
        # bf16 activation slab halves HBM streaming traffic; pad batch to the
        # tile multiple (padded rows compute garbage that is sliced off below).
        a = a.astype(bf16)
        if Bp != B:
            a = jnp.pad(a, ((0, Bp - B), (0, 0)))
        return a

    gmf_u_b, ncf_u_b, item_b = prep(gmf_u), prep(ncf_u), prep(item)

    # Resident bf16 weights; layer-1 weight split for the concat-free matmul.
    w1n_b, w1i_b = w1[:, :F].astype(bf16), w1[:, F:].astype(bf16)
    w2_b, w3g_b, w3n_b, w4_b = (w.astype(bf16) for w in (w2, w3g, w3n, w4))
    w5c = w5.T                                   # (128, 1) f32, stays on VPU path

    weights = (w1n_b, w1i_b, b1, w2_b, b2, w3g_b, w3n_b, b3, w4_b, b4, w5c, b5)

    act_spec = lambda: pl.BlockSpec((tb, F), lambda i: (i, 0))
    full2d = lambda a: pl.BlockSpec(a.shape, lambda i: (0, 0))  # grid-invariant

    macs = 256 * 2 * F + 128 * 256 + 256 * F + 256 * 128 + 128 * 256 + 128
    weight_bytes = sum(int(w.size) * w.dtype.itemsize for w in weights)
    cost = pl.CostEstimate(
        flops=2 * macs * Bp,
        transcendentals=Bp,
        bytes_accessed=3 * Bp * F * 2 + Bp * 4 + weight_bytes)

    out = pl.pallas_call(
        nmf_kernel,
        out_shape=jax.ShapeDtypeStruct((1, Bp), jnp.float32),
        grid_spec=pltpu.PrefetchScalarGridSpec(
            num_scalar_prefetch=0,
            grid=grid,
            in_specs=[act_spec(), act_spec(), act_spec()]
                     + [full2d(w) for w in weights],
            out_specs=pl.BlockSpec((1, tb), lambda i: (0, i)),
        ),
        compiler_params=pltpu.CompilerParams(
            dimension_semantics=("parallel",)),
        cost_estimate=cost,
    )(gmf_u_b, ncf_u_b, item_b, *weights)

    return out.reshape(-1)[:B]   # equivalent of output.view(-1)


# --------------------------------------------------------------------------- #
# Params + references
# --------------------------------------------------------------------------- #
def init_params(key, user_num, factor_num):
    """Parameter init mirroring the module (weights in PyTorch (out, in) layout)."""
    ks = jax.random.split(key, 12)
    F = factor_num

    gmf_emb = 0.01 * jax.random.normal(ks[0], (user_num, F), jnp.float32)
    ncf_emb = 0.01 * jax.random.normal(ks[1], (user_num, F), jnp.float32)

    def lin(kw, kb, fan_in, fan_out):
        bw = jnp.sqrt(6.0 / fan_in)
        bb = 1.0 / jnp.sqrt(fan_in)
        w = jax.random.uniform(kw, (fan_out, fan_in), jnp.float32, -bw, bw)
        b = jax.random.uniform(kb, (fan_out, 1), jnp.float32, -bb, bb)
        return w, b

    # NCF_FC_layer: Linear(2F, 256) -> ReLU -> Linear(256, 128) -> ReLU
    w1, b1 = lin(ks[2], ks[3], 2 * F, 256)
    w2, b2 = lin(ks[4], ks[5], 256, 128)
    # FC_layer: Linear(F+128, 256) -> ReLU -> Linear(256, 128) -> ReLU -> Linear(128, 1) -> Sigmoid
    w3, b3 = lin(ks[6], ks[7], F + 128, 256)
    w4, b4 = lin(ks[8], ks[9], 256, 128)
    w5, b5 = lin(ks[10], ks[11], 128, 1)

    w3g, w3n = w3[:, :F], w3[:, F:]            # split for the concat-free matmul
    params = (w1, b1, w2, b2, w3g, w3n, b3, w4, b4, w5, b5)
    return gmf_emb, ncf_emb, params


def _mm(a, b):
    return jnp.dot(a, b, precision=jax.lax.Precision.HIGHEST)


def reference_forward(gmf_u, ncf_u, item, params):
    """Pure-f32 reference matching the PyTorch module."""
    (w1, b1, w2, b2, w3g, w3n, b3, w4, b4, w5, b5) = params
    gmf = gmf_u * item
    ncf_in = jnp.concatenate([ncf_u, item], axis=-1)
    h = jnp.maximum(_mm(ncf_in, w1.T) + b1.T, 0.0)
    h = jnp.maximum(_mm(h, w2.T) + b2.T, 0.0)
    z = jnp.maximum(_mm(gmf, w3g.T) + _mm(h, w3n.T) + b3.T, 0.0)
    z = jnp.maximum(_mm(z, w4.T) + b4.T, 0.0)
    z = jax.nn.sigmoid(_mm(z, w5.T) + b5.T)
    return z.reshape(-1)


def matched_reference(gmf_u, ncf_u, item, params):
    """f32 reference with the kernel's bf16 rounding points inserted
    (bf16 matmul operands, f32 accumulation) — tight regression check."""
    (w1, b1, w2, b2, w3g, w3n, b3, w4, b4, w5, b5) = params
    bf = lambda a: a.astype(jnp.bfloat16).astype(jnp.float32)
    gu, nu, it = bf(gmf_u), bf(ncf_u), bf(item)
    gmf = bf(gu * it)
    ncf_in = jnp.concatenate([nu, it], axis=-1)
    h = jnp.maximum(_mm(ncf_in, bf(w1).T) + b1.T, 0.0)
    h = jnp.maximum(_mm(bf(h), bf(w2).T) + b2.T, 0.0)
    z = jnp.maximum(_mm(gmf, bf(w3g).T) + _mm(bf(h), bf(w3n).T) + b3.T, 0.0)
    z = jnp.maximum(_mm(bf(z), bf(w4).T) + b4.T, 0.0)
    z = jax.nn.sigmoid(_mm(z, w5.T) + b5.T)     # final layer stays f32 in-kernel
    return z.reshape(-1)


# --------------------------------------------------------------------------- #
# Main
# --------------------------------------------------------------------------- #
if __name__ == "__main__":
    key = jax.random.PRNGKey(0)
    k_param, k_idx, k_item = jax.random.split(key, 3)

    user_num = 100
    factor_num = 32
    batch = 2500       # not a tile multiple -> exercises padding; grid comes out 2

    gmf_emb, ncf_emb, params = init_params(k_param, user_num, factor_num)

    user_idx = jax.random.randint(k_idx, (batch,), 0, user_num)
    item_embedding = jax.random.normal(k_item, (batch, factor_num), jnp.float32)

    # Embedding lookups (glue, outside the kernel).
    gmf_u = jnp.take(gmf_emb, user_idx, axis=0)
    ncf_u = jnp.take(ncf_emb, user_idx, axis=0)

    out = jax.block_until_ready(nmf_forward(gmf_u, ncf_u, item_embedding, params))
    assert out.shape == (batch,)

    ref_f32 = reference_forward(gmf_u, ncf_u, item_embedding, params)
    ref_bf = matched_reference(gmf_u, ncf_u, item_embedding, params)

    err_matched = float(jnp.max(jnp.abs(out - ref_bf)))
    err_f32 = float(jnp.max(jnp.abs(out - ref_f32)))

    # Tight check vs the precision-matched reference catches real regressions;
    # the f32 check bounds the overall bf16-induced drift.
    assert err_matched < 2e-3, f"mismatch vs matched ref: {err_matched}"
    assert err_f32 < 1.5e-2, f"mismatch vs f32 ref: {err_f32}"

    print("KERNEL_OK")
</pallas_src>

<mosaic_0001>
module attributes {stable_mosaic.version = 11 : i64} {
  func.func @nmf_kernel(%arg0: i32, %arg1: memref<1280x32xbf16, #tpu.memory_space<vmem>>, %arg2: memref<1280x32xbf16, #tpu.memory_space<vmem>>, %arg3: memref<1280x32xbf16, #tpu.memory_space<vmem>>, %arg4: memref<256x32xbf16, #tpu.memory_space<vmem>>, %arg5: memref<256x32xbf16, #tpu.memory_space<vmem>>, %arg6: memref<256x1xf32, #tpu.memory_space<vmem>>, %arg7: memref<128x256xbf16, #tpu.memory_space<vmem>>, %arg8: memref<128x1xf32, #tpu.memory_space<vmem>>, %arg9: memref<256x32xbf16, #tpu.memory_space<vmem>>, %arg10: memref<256x128xbf16, #tpu.memory_space<vmem>>, %arg11: memref<256x1xf32, #tpu.memory_space<vmem>>, %arg12: memref<128x256xbf16, #tpu.memory_space<vmem>>, %arg13: memref<128x1xf32, #tpu.memory_space<vmem>>, %arg14: memref<128x1xf32, #tpu.memory_space<vmem>>, %arg15: memref<1x1xf32, #tpu.memory_space<vmem>>, %arg16: memref<1x1280xf32, #tpu.memory_space<vmem>>) attributes {dimension_semantics = [#tpu.dimension_semantics<parallel>], iteration_bounds = array<i64: 2>, scalar_prefetch = 0 : i64, scratch_operands = 0 : i64, tpu.core_type = #tpu.core_type<tc>, window_params = [{transform_indices = @transform_0, window_bounds = array<i64: 1280, 32>}, {transform_indices = @transform_1, window_bounds = array<i64: 1280, 32>}, {transform_indices = @transform_2, window_bounds = array<i64: 1280, 32>}, {pipeline_mode = #tpu.pipeline_mode<synchronous>, transform_indices = @transform_3, window_bounds = array<i64: 256, 32>}, {pipeline_mode = #tpu.pipeline_mode<synchronous>, transform_indices = @transform_4, window_bounds = array<i64: 256, 32>}, {pipeline_mode = #tpu.pipeline_mode<synchronous>, transform_indices = @transform_5, window_bounds = array<i64: 256, 1>}, {pipeline_mode = #tpu.pipeline_mode<synchronous>, transform_indices = @transform_6, window_bounds = array<i64: 128, 256>}, {pipeline_mode = #tpu.pipeline_mode<synchronous>, transform_indices = @transform_7, window_bounds = array<i64: 128, 1>}, {pipeline_mode = #tpu.pipeline_mode<synchronous>, transform_indices = @transform_8, window_bounds = array<i64: 256, 32>}, {pipeline_mode = #tpu.pipeline_mode<synchronous>, transform_indices = @transform_9, window_bounds = array<i64: 256, 128>}, {pipeline_mode = #tpu.pipeline_mode<synchronous>, transform_indices = @transform_10, window_bounds = array<i64: 256, 1>}, {pipeline_mode = #tpu.pipeline_mode<synchronous>, transform_indices = @transform_11, window_bounds = array<i64: 128, 256>}, {pipeline_mode = #tpu.pipeline_mode<synchronous>, transform_indices = @transform_12, window_bounds = array<i64: 128, 1>}, {pipeline_mode = #tpu.pipeline_mode<synchronous>, transform_indices = @transform_13, window_bounds = array<i64: 128, 1>}, {pipeline_mode = #tpu.pipeline_mode<synchronous>, transform_indices = @transform_14, window_bounds = array<i64: 1, 1>}, {transform_indices = @transform_15, window_bounds = array<i64: 1, 1280>}]} {
    %c0 = arith.constant 0 : index
    %c0_0 = arith.constant 0 : index
    %0 = vector.load %arg1[%c0, %c0_0] : memref<1280x32xbf16, #tpu.memory_space<vmem>>, vector<1280x32xbf16>
    %c0_1 = arith.constant 0 : index
    %c0_2 = arith.constant 0 : index
    %1 = vector.load %arg2[%c0_1, %c0_2] : memref<1280x32xbf16, #tpu.memory_space<vmem>>, vector<1280x32xbf16>
    %c0_3 = arith.constant 0 : index
    %c0_4 = arith.constant 0 : index
    %2 = vector.load %arg3[%c0_3, %c0_4] : memref<1280x32xbf16, #tpu.memory_space<vmem>>, vector<1280x32xbf16>
    %3 = arith.extf %0 : vector<1280x32xbf16> to vector<1280x32xf32>
    %4 = arith.extf %2 : vector<1280x32xbf16> to vector<1280x32xf32>
    %5 = arith.mulf %3, %4 : vector<1280x32xf32>
    %6 = arith.truncf %5 : vector<1280x32xf32> to vector<1280x32xbf16>
    %c0_5 = arith.constant 0 : index
    %c0_6 = arith.constant 0 : index
    %7 = vector.load %arg4[%c0_5, %c0_6] : memref<256x32xbf16, #tpu.memory_space<vmem>>, vector<256x32xbf16>
    %cst = arith.constant dense<0.000000e+00> : vector<256x1280xf32>
    %8 = tpu.matmul %7, %1, %cst {dimension_numbers = #tpu.dot_dimension_numbers<[1], [1], [0], [0], [0, 0, 1, 0], [], []>} : vector<256x32xbf16>, vector<1280x32xbf16>, vector<256x1280xf32> -> vector<256x1280xf32>
    %c0_7 = arith.constant 0 : index
    %c0_8 = arith.constant 0 : index
    %9 = vector.load %arg5[%c0_7, %c0_8] : memref<256x32xbf16, #tpu.memory_space<vmem>>, vector<256x32xbf16>
    %cst_9 = arith.constant dense<0.000000e+00> : vector<256x1280xf32>
    %10 = tpu.matmul %9, %2, %cst_9 {dimension_numbers = #tpu.dot_dimension_numbers<[1], [1], [0], [0], [0, 0, 1, 0], [], []>} : vector<256x32xbf16>, vector<1280x32xbf16>, vector<256x1280xf32> -> vector<256x1280xf32>
    %11 = arith.addf %8, %10 : vector<256x1280xf32>
    %c0_10 = arith.constant 0 : index
    %c0_11 = arith.constant 0 : index
    %12 = vector.load %arg6[%c0_10, %c0_11] : memref<256x1xf32, #tpu.memory_space<vmem>>, vector<256x1xf32>
    %13 = vector.broadcast %12 : vector<256x1xf32> to vector<256x1280xf32>
    %14 = arith.addf %11, %13 : vector<256x1280xf32>
    %cst_12 = arith.constant 0.000000e+00 : f32
    %15 = vector.broadcast %cst_12 : f32 to vector<256x1280xf32>
    %16 = arith.maximumf %14, %15 : vector<256x1280xf32>
    %c0_13 = arith.constant 0 : index
    %c0_14 = arith.constant 0 : index
    %17 = vector.load %arg7[%c0_13, %c0_14] : memref<128x256xbf16, #tpu.memory_space<vmem>>, vector<128x256xbf16>
    %18 = arith.truncf %16 : vector<256x1280xf32> to vector<256x1280xbf16>
    %cst_15 = arith.constant dense<0.000000e+00> : vector<128x1280xf32>
    %19 = tpu.matmul %17, %18, %cst_15 {dimension_numbers = #tpu.dot_dimension_numbers<[1], [0], [0], [1], [0, 0, 1, 1], [], []>} : vector<128x256xbf16>, vector<256x1280xbf16>, vector<128x1280xf32> -> vector<128x1280xf32>
    %c0_16 = arith.constant 0 : index
    %c0_17 = arith.constant 0 : index
    %20 = vector.load %arg8[%c0_16, %c0_17] : memref<128x1xf32, #tpu.memory_space<vmem>>, vector<128x1xf32>
    %21 = vector.broadcast %20 : vector<128x1xf32> to vector<128x1280xf32>
    %22 = arith.addf %19, %21 : vector<128x1280xf32>
    %cst_18 = arith.constant 0.000000e+00 : f32
    %23 = vector.broadcast %cst_18 : f32 to vector<128x1280xf32>
    %24 = arith.maximumf %22, %23 : vector<128x1280xf32>
    %c0_19 = arith.constant 0 : index
    %c0_20 = arith.constant 0 : index
    %25 = vector.load %arg9[%c0_19, %c0_20] : memref<256x32xbf16, #tpu.memory_space<vmem>>, vector<256x32xbf16>
    %cst_21 = arith.constant dense<0.000000e+00> : vector<256x1280xf32>
    %26 = tpu.matmul %25, %6, %cst_21 {dimension_numbers = #tpu.dot_dimension_numbers<[1], [1], [0], [0], [0, 0, 1, 0], [], []>} : vector<256x32xbf16>, vector<1280x32xbf16>, vector<256x1280xf32> -> vector<256x1280xf32>
    %c0_22 = arith.constant 0 : index
    %c0_23 = arith.constant 0 : index
    %27 = vector.load %arg10[%c0_22, %c0_23] : memref<256x128xbf16, #tpu.memory_space<vmem>>, vector<256x128xbf16>
    %28 = arith.truncf %24 : vector<128x1280xf32> to vector<128x1280xbf16>
    %cst_24 = arith.constant dense<0.000000e+00> : vector<256x1280xf32>
    %29 = tpu.matmul %27, %28, %cst_24 {dimension_numbers = #tpu.dot_dimension_numbers<[1], [0], [0], [1], [0, 0, 1, 1], [], []>} : vector<256x128xbf16>, vector<128x1280xbf16>, vector<256x1280xf32> -> vector<256x1280xf32>
    %30 = arith.addf %26, %29 : vector<256x1280xf32>
    %c0_25 = arith.constant 0 : index
    %c0_26 = arith.constant 0 : index
    %31 = vector.load %arg11[%c0_25, %c0_26] : memref<256x1xf32, #tpu.memory_space<vmem>>, vector<256x1xf32>
    %32 = vector.broadcast %31 : vector<256x1xf32> to vector<256x1280xf32>
    %33 = arith.addf %30, %32 : vector<256x1280xf32>
    %cst_27 = arith.constant 0.000000e+00 : f32
    %34 = vector.broadcast %cst_27 : f32 to vector<256x1280xf32>
    %35 = arith.maximumf %33, %34 : vector<256x1280xf32>
    %c0_28 = arith.constant 0 : index
    %c0_29 = arith.constant 0 : index
    %36 = vector.load %arg12[%c0_28, %c0_29] : memref<128x256xbf16, #tpu.memory_space<vmem>>, vector<128x256xbf16>
    %37 = arith.truncf %35 : vector<256x1280xf32> to vector<256x1280xbf16>
    %cst_30 = arith.constant dense<0.000000e+00> : vector<128x1280xf32>
    %38 = tpu.matmul %36, %37, %cst_30 {dimension_numbers = #tpu.dot_dimension_numbers<[1], [0], [0], [1], [0, 0, 1, 1], [], []>} : vector<128x256xbf16>, vector<256x1280xbf16>, vector<128x1280xf32> -> vector<128x1280xf32>
    %c0_31 = arith.constant 0 : index
    %c0_32 = arith.constant 0 : index
    %39 = vector.load %arg13[%c0_31, %c0_32] : memref<128x1xf32, #tpu.memory_space<vmem>>, vector<128x1xf32>
    %40 = vector.broadcast %39 : vector<128x1xf32> to vector<128x1280xf32>
    %41 = arith.addf %38, %40 : vector<128x1280xf32>
    %cst_33 = arith.constant 0.000000e+00 : f32
    %42 = vector.broadcast %cst_33 : f32 to vector<128x1280xf32>
    %43 = arith.maximumf %41, %42 : vector<128x1280xf32>
    %c0_34 = arith.constant 0 : index
    %c0_35 = arith.constant 0 : index
    %44 = vector.load %arg14[%c0_34, %c0_35] : memref<128x1xf32, #tpu.memory_space<vmem>>, vector<128x1xf32>
    %45 = vector.broadcast %44 : vector<128x1xf32> to vector<128x1280xf32>
    %46 = arith.mulf %43, %45 : vector<128x1280xf32>
    %cst_36 = arith.constant dense<0.000000e+00> : vector<1280xf32>
    %47 = vector.multi_reduction <add>, %46, %cst_36 [0] : vector<128x1280xf32> to vector<1280xf32>
    %48 = vector.shape_cast %47 : vector<1280xf32> to vector<1x1280xf32>
    %c0_37 = arith.constant 0 : index
    %c0_38 = arith.constant 0 : index
    %49 = vector.load %arg15[%c0_37, %c0_38] : memref<1x1xf32, #tpu.memory_space<vmem>>, vector<1x1xf32>
    %50 = vector.broadcast %49 : vector<1x1xf32> to vector<1x1280xf32>
    %51 = arith.addf %48, %50 : vector<1x1280xf32>
    %52 = arith.negf %51 : vector<1x1280xf32>
    %53 = math.exp %52 : vector<1x1280xf32>
    %cst_39 = arith.constant 1.000000e+00 : f32
    %54 = vector.broadcast %cst_39 : f32 to vector<1x1280xf32>
    %55 = arith.addf %54, %53 : vector<1x1280xf32>
    %56 = arith.divf %54, %55 : vector<1x1280xf32>
    %c0_40 = arith.constant 0 : index
    %c0_41 = arith.constant 0 : index
    %57 = vector.load %arg16[%c0_40, %c0_41] : memref<1x1280xf32, #tpu.memory_space<vmem>>, vector<1x1280xf32>
    tpu.vector_store %arg16[%c0_40, %c0_41], %56 {strides = array<i32>} : memref<1x1280xf32, #tpu.memory_space<vmem>>, vector<1x1280xf32>,
    return
  }
  func.func @transform_0(%arg0: i32) -> (i32, i32) {
    %c0_i32 = arith.constant 0 : i32
    %c0_i32_0 = arith.constant 0 : i32
    return %arg0, %c0_i32 : i32, i32
  }
  func.func @transform_1(%arg0: i32) -> (i32, i32) {
    %c0_i32 = arith.constant 0 : i32
    %c0_i32_0 = arith.constant 0 : i32
    return %arg0, %c0_i32 : i32, i32
  }
  func.func @transform_2(%arg0: i32) -> (i32, i32) {
    %c0_i32 = arith.constant 0 : i32
    %c0_i32_0 = arith.constant 0 : i32
    return %arg0, %c0_i32 : i32, i32
  }
  func.func @transform_3(%arg0: i32) -> (i32, i32) {
    %c0_i32 = arith.constant 0 : i32
    %c0_i32_0 = arith.constant 0 : i32
    %c0_i32_1 = arith.constant 0 : i32
    return %c0_i32, %c0_i32_0 : i32, i32
  }
  func.func @transform_4(%arg0: i32) -> (i32, i32) {
    %c0_i32 = arith.constant 0 : i32
    %c0_i32_0 = arith.constant 0 : i32
    %c0_i32_1 = arith.constant 0 : i32
    return %c0_i32, %c0_i32_0 : i32, i32
  }
  func.func @transform_5(%arg0: i32) -> (i32, i32) {
    %c0_i32 = arith.constant 0 : i32
    %c0_i32_0 = arith.constant 0 : i32
    %c0_i32_1 = arith.constant 0 : i32
    return %c0_i32, %c0_i32_0 : i32, i32
  }
  func.func @transform_6(%arg0: i32) -> (i32, i32) {
    %c0_i32 = arith.constant 0 : i32
    %c0_i32_0 = arith.constant 0 : i32
    %c0_i32_1 = arith.constant 0 : i32
    return %c0_i32, %c0_i32_0 : i32, i32
  }
  func.func @transform_7(%arg0: i32) -> (i32, i32) {
    %c0_i32 = arith.constant 0 : i32
    %c0_i32_0 = arith.constant 0 : i32
    %c0_i32_1 = arith.constant 0 : i32
    return %c0_i32, %c0_i32_0 : i32, i32
  }
  func.func @transform_8(%arg0: i32) -> (i32, i32) {
    %c0_i32 = arith.constant 0 : i32
    %c0_i32_0 = arith.constant 0 : i32
    %c0_i32_1 = arith.constant 0 : i32
    return %c0_i32, %c0_i32_0 : i32, i32
  }
  func.func @transform_9(%arg0: i32) -> (i32, i32) {
    %c0_i32 = arith.constant 0 : i32
    %c0_i32_0 = arith.constant 0 : i32
    %c0_i32_1 = arith.constant 0 : i32
    return %c0_i32, %c0_i32_0 : i32, i32
  }
  func.func @transform_10(%arg0: i32) -> (i32, i32) {
    %c0_i32 = arith.constant 0 : i32
    %c0_i32_0 = arith.constant 0 : i32
    %c0_i32_1 = arith.constant 0 : i32
    return %c0_i32, %c0_i32_0 : i32, i32
  }
  func.func @transform_11(%arg0: i32) -> (i32, i32) {
    %c0_i32 = arith.constant 0 : i32
    %c0_i32_0 = arith.constant 0 : i32
    %c0_i32_1 = arith.constant 0 : i32
    return %c0_i32, %c0_i32_0 : i32, i32
  }
  func.func @transform_12(%arg0: i32) -> (i32, i32) {
    %c0_i32 = arith.constant 0 : i32
    %c0_i32_0 = arith.constant 0 : i32
    %c0_i32_1 = arith.constant 0 : i32
    return %c0_i32, %c0_i32_0 : i32, i32
  }
  func.func @transform_13(%arg0: i32) -> (i32, i32) {
    %c0_i32 = arith.constant 0 : i32
    %c0_i32_0 = arith.constant 0 : i32
    %c0_i32_1 = arith.constant 0 : i32
    return %c0_i32, %c0_i32_0 : i32, i32
  }
  func.func @transform_14(%arg0: i32) -> (i32, i32) {
    %c0_i32 = arith.constant 0 : i32
    %c0_i32_0 = arith.constant 0 : i32
    %c0_i32_1 = arith.constant 0 : i32
    return %c0_i32, %c0_i32_0 : i32, i32
  }
  func.func @transform_15(%arg0: i32) -> (i32, i32) {
    %c0_i32 = arith.constant 0 : i32
    %c0_i32_0 = arith.constant 0 : i32
    return %c0_i32, %arg0 : i32, i32
  }
}

</mosaic_0001>

<llo_original>
// kernel: tpu_custom_call.1
$region0: #{tpu_custom_call.1}
  #allocation0 [shape = 'u32[]', space=smem, size = 0x4, offset = 0x4, fixed_abs, tag = 'smem constant byte address 0x4 - core index']
  #allocation1 [shape = 'u32[144,128]{1,0:T(1,128)}', space=vmem, size = 0x12000, scoped, tag = 'internal scratch']
  #allocation2 [shape = 'f32[1,1]{1,0:T(1,128)S(1)}', space=vmem, size = 0x200, scoped, tag = 'scoped memory for tpu_custom_call.1']
  %s0 = inlined_call_operand.vmem [shape: bf16[2560,32], index: 0, kind: input, shape index: {}]
  %s1 = inlined_call_operand.vmem [shape: bf16[2560,32], index: 1, kind: input, shape index: {}]
  %s2 = inlined_call_operand.vmem [shape: bf16[2560,32], index: 2, kind: input, shape index: {}]
  %s3 = inlined_call_operand.vmem [shape: bf16[256,32], index: 3, kind: input, shape index: {}]
  %s4 = inlined_call_operand.vmem [shape: bf16[256,32], index: 4, kind: input, shape index: {}]
  %s5 = inlined_call_operand.vmem [shape: f32[256,1], index: 5, kind: input, shape index: {}]
  %s6 = inlined_call_operand.vmem [shape: bf16[128,256], index: 6, kind: input, shape index: {}]
  %s7 = inlined_call_operand.vmem [shape: f32[128,1], index: 7, kind: input, shape index: {}]
  %s8 = inlined_call_operand.vmem [shape: bf16[256,32], index: 8, kind: input, shape index: {}]
  %s9 = inlined_call_operand.vmem [shape: bf16[256,128], index: 9, kind: input, shape index: {}]
  %s10 = inlined_call_operand.vmem [shape: f32[256,1], index: 10, kind: input, shape index: {}]
  %s11 = inlined_call_operand.vmem [shape: bf16[128,256], index: 11, kind: input, shape index: {}]
  %s12 = inlined_call_operand.vmem [shape: f32[128,1], index: 12, kind: input, shape index: {}]
  %s13 = inlined_call_operand.vmem [shape: f32[128,1], index: 13, kind: input, shape index: {}]
  %s14 = inlined_call_operand.<no memory space> [shape: f32[1,1], index: 14, kind: input, shape index: {}]
  %s15 = inlined_call_operand.hbm [shape: f32[1,2560], index: 15, kind: output, shape index: {}]
  %s16 = sld [smem:[#allocation0]]
  $region93: #{tpu_custom_call.1} parent=0
    _
  %s18 = ssub.s32 1, %s16
  %s19 = scalar_select 0, %s18, %s16
  %v20 = vstv %s14
  %21 = vst [vmem:[#allocation2] sm:$0x1] %v20
  $region1: #{tpu_custom_call.1} parent=0
    #allocation3 [shape = 'u8[10240]{0}', space=vmem, size = 0x2800, scoped, tag = 'output window, operand 0']
    #allocation4 [shape = 's32[2]{0}', space=sflag, size = 0x8, scoped, tag = 'scoped memory for tpu_custom_call.1']
    %22 = vsyncpa [#allocation4], 0
    %s23 = scalar_lea.sflag [#allocation4], 1
    %24 = vsyncpa %s23, 0
    loop: start=0, step=1, limit=4
    $region2: #{tpu_custom_call.1} parent=1 // loop_pre_header
      _
    $region3: #{tpu_custom_call.1} parent=1 // loop_header
      %s26 = sphi 0, %s30
      %p27 = scmp.ge.s32.totalorder %s26, 4
      %s36 = sphi 0, %s38
      %s39 = sphi 0, %s36
      %s40 = sphi 0, %s39
      %s56 = sphi 0, %s40
      %s62 = sphi 0, %s64
      %s65 = sphi 0, %s62
      %s66 = sphi 0, %s65
      %s82 = sphi 0, %s66
      %s88 = sphi 0, %s90
      %s91 = sphi 0, %s88
      %s92 = sphi 0, %s91
      %s108 = sphi 0, %s92
      %s112 = sphi 0, %s112
      %s114 = sphi 0, %s112
      %s115 = sphi 0, %s114
      %s129 = sphi 0, %s115
      %s133 = sphi 0, %s133
      %s135 = sphi 0, %s133
      %s136 = sphi 0, %s135
      %s150 = sphi 0, %s136
      %s154 = sphi 0, %s154
      %s156 = sphi 0, %s154
      %s157 = sphi 0, %s156
      %s171 = sphi 0, %s157
      %s175 = sphi 0, %s175
      %s177 = sphi 0, %s175
      %s178 = sphi 0, %s177
      %s192 = sphi 0, %s178
      %s196 = sphi 0, %s196
      %s198 = sphi 0, %s196
      %s199 = sphi 0, %s198
      %s213 = sphi 0, %s199
      %s217 = sphi 0, %s217
      %s219 = sphi 0, %s217
      %s220 = sphi 0, %s219
      %s234 = sphi 0, %s220
      %s238 = sphi 0, %s238
      %s240 = sphi 0, %s238
      %s241 = sphi 0, %s240
      %s255 = sphi 0, %s241
      %s259 = sphi 0, %s259
      %s261 = sphi 0, %s259
      %s262 = sphi 0, %s261
      %s276 = sphi 0, %s262
      %s280 = sphi 0, %s280
      %s282 = sphi 0, %s280
      %s283 = sphi 0, %s282
      %s297 = sphi 0, %s283
      %s301 = sphi 0, %s301
      %s303 = sphi 0, %s301
      %s304 = sphi 0, %s303
      %s318 = sphi 0, %s304
      %s322 = sphi 0, %s322
      %s324 = sphi 0, %s322
      %s325 = sphi 0, %s324
      %s339 = sphi 0, %s325
      %s343 = sphi 0, %s343
      %s345 = sphi 0, %s343
      %s346 = sphi 0, %s345
      %s360 = sphi 0, %s346
      %s366 = sphi 0, %s368
      %s369 = sphi 0, %s366
      %s370 = sphi 0, %s369
      %s386 = sphi 0, %s370
    $region4: #{tpu_custom_call.1} parent=1 // loop_header_branch
      %29 = sbr.rel (%p27) target = $region8
    $region5: #{tpu_custom_call.1} parent=1 // loop_body
      %s31 = ssub.s32 %s26, 1
      %s32 = ssub.s32 %s26, 2
      %s33 = sadd.s32 %s26, 1
      %s34 = ssub.s32 %s26, %s33
      %p35 = scmp.eq.s32.totalorder %s34, 0
      %s37 = sadd.s32 %s36, 1
      %s38 = scalar_select %p35, %s36, %s37
      %p41 = pneg %p35
      %p42 = scmp.eq.s32.totalorder %s26, 1
      %p43 = por %p41, %p42
      %p44 = scmp.ne.s32.totalorder %s36, %s39
      %p45 = scmp.eq.s32.totalorder %s26, 0
      %p46 = por %p44, %p45
      %p47 = scmp.ne.s32.totalorder %s36, %s39
      %p48 = scmp.eq.s32.totalorder %s31, 1
      %p49 = por %p47, %p48
      %p50 = scmp.ne.s32.totalorder %s39, %s40
      %p51 = scmp.eq.s32.totalorder %s31, 0
      %p52 = por %p50, %p51
      %p53 = scmp.ne.s32.totalorder %s39, %s40
      %p54 = scmp.eq.s32.totalorder %s32, 1
      %p55 = por %p53, %p54
      %p57 = scmp.ne.s32.totalorder %s40, %s56
      %p58 = scmp.eq.s32.totalorder %s32, 0
      %p59 = por %p57, %p58
      %s60 = ssub.s32 %s26, %s33
      %p61 = scmp.eq.s32.totalorder %s60, 0
      %s63 = sadd.s32 %s62, 1
      %s64 = scalar_select %p61, %s62, %s63
      %p67 = pneg %p61
      %p68 = scmp.eq.s32.totalorder %s26, 1
      %p69 = por %p67, %p68
      %p70 = scmp.ne.s32.totalorder %s62, %s65
      %p71 = scmp.eq.s32.totalorder %s26, 0
      %p72 = por %p70, %p71
      %p73 = scmp.ne.s32.totalorder %s62, %s65
      %p74 = scmp.eq.s32.totalorder %s31, 1
      %p75 = por %p73, %p74
      %p76 = scmp.ne.s32.totalorder %s65, %s66
      %p77 = scmp.eq.s32.totalorder %s31, 0
      %p78 = por %p76, %p77
      %p79 = scmp.ne.s32.totalorder %s65, %s66
      %p80 = scmp.eq.s32.totalorder %s32, 1
      %p81 = por %p79, %p80
      %p83 = scmp.ne.s32.totalorder %s66, %s82
      %p84 = scmp.eq.s32.totalorder %s32, 0
      %p85 = por %p83, %p84
      %s86 = ssub.s32 %s26, %s33
      %p87 = scmp.eq.s32.totalorder %s86, 0
      %s89 = sadd.s32 %s88, 1
      %s90 = scalar_select %p87, %s88, %s89
      %p93 = pneg %p87
      %p94 = scmp.eq.s32.totalorder %s26, 1
      %p95 = por %p93, %p94
      %p96 = scmp.ne.s32.totalorder %s88, %s91
      %p97 = scmp.eq.s32.totalorder %s26, 0
      %p98 = por %p96, %p97
      %p99 = scmp.ne.s32.totalorder %s88, %s91
      %p100 = scmp.eq.s32.totalorder %s31, 1
      %p101 = por %p99, %p100
      %p102 = scmp.ne.s32.totalorder %s91, %s92
      %p103 = scmp.eq.s32.totalorder %s31, 0
      %p104 = por %p102, %p103
      %p105 = scmp.ne.s32.totalorder %s91, %s92
      %p106 = scmp.eq.s32.totalorder %s32, 1
      %p107 = por %p105, %p106
      %p109 = scmp.ne.s32.totalorder %s92, %s108
      %p110 = scmp.eq.s32.totalorder %s32, 0
      %p111 = por %p109, %p110
      %s113 = sadd.s32 %s112, 1
      %p116 = scmp.eq.s32.totalorder %s26, 1
      %p117 = scmp.ne.s32.totalorder %s112, %s114
      %p118 = scmp.eq.s32.totalorder %s26, 0
      %p119 = por %p117, %p118
      %p120 = scmp.ne.s32.totalorder %s112, %s114
      %p121 = scmp.eq.s32.totalorder %s31, 1
      %p122 = por %p120, %p121
      %p123 = scmp.ne.s32.totalorder %s114, %s115
      %p124 = scmp.eq.s32.totalorder %s31, 0
      %p125 = por %p123, %p124
      %p126 = scmp.ne.s32.totalorder %s114, %s115
      %p127 = scmp.eq.s32.totalorder %s32, 1
      %p128 = por %p126, %p127
      %p130 = scmp.ne.s32.totalorder %s115, %s129
      %p131 = scmp.eq.s32.totalorder %s32, 0
      %p132 = por %p130, %p131
      %s134 = sadd.s32 %s133, 1
      %p137 = scmp.eq.s32.totalorder %s26, 1
      %p138 = scmp.ne.s32.totalorder %s133, %s135
      %p139 = scmp.eq.s32.totalorder %s26, 0
      %p140 = por %p138, %p139
      %p141 = scmp.ne.s32.totalorder %s133, %s135
      %p142 = scmp.eq.s32.totalorder %s31, 1
      %p143 = por %p141, %p142
      %p144 = scmp.ne.s32.totalorder %s135, %s136
      %p145 = scmp.eq.s32.totalorder %s31, 0
      %p146 = por %p144, %p145
      %p147 = scmp.ne.s32.totalorder %s135, %s136
      %p148 = scmp.eq.s32.totalorder %s32, 1
      %p149 = por %p147, %p148
      %p151 = scmp.ne.s32.totalorder %s136, %s150
      %p152 = scmp.eq.s32.totalorder %s32, 0
      %p153 = por %p151, %p152
      %s155 = sadd.s32 %s154, 1
      %p158 = scmp.eq.s32.totalorder %s26, 1
      %p159 = scmp.ne.s32.totalorder %s154, %s156
      %p160 = scmp.eq.s32.totalorder %s26, 0
      %p161 = por %p159, %p160
      %p162 = scmp.ne.s32.totalorder %s154, %s156
      %p163 = scmp.eq.s32.totalorder %s31, 1
      %p164 = por %p162, %p163
      %p165 = scmp.ne.s32.totalorder %s156, %s157
      %p166 = scmp.eq.s32.totalorder %s31, 0
      %p167 = por %p165, %p166
      %p168 = scmp.ne.s32.totalorder %s156, %s157
      %p169 = scmp.eq.s32.totalorder %s32, 1
      %p170 = por %p168, %p169
      %p172 = scmp.ne.s32.totalorder %s157, %s171
      %p173 = scmp.eq.s32.totalorder %s32, 0
      %p174 = por %p172, %p173
      %s176 = sadd.s32 %s175, 1
      %p179 = scmp.eq.s32.totalorder %s26, 1
      %p180 = scmp.ne.s32.totalorder %s175, %s177
      %p181 = scmp.eq.s32.totalorder %s26, 0
      %p182 = por %p180, %p181
      %p183 = scmp.ne.s32.totalorder %s175, %s177
      %p184 = scmp.eq.s32.totalorder %s31, 1
      %p185 = por %p183, %p184
      %p186 = scmp.ne.s32.totalorder %s177, %s178
      %p187 = scmp.eq.s32.totalorder %s31, 0
      %p188 = por %p186, %p187
      %p189 = scmp.ne.s32.totalorder %s177, %s178
      %p190 = scmp.eq.s32.totalorder %s32, 1
      %p191 = por %p189, %p190
      %p193 = scmp.ne.s32.totalorder %s178, %s192
      %p194 = scmp.eq.s32.totalorder %s32, 0
      %p195 = por %p193, %p194
      %s197 = sadd.s32 %s196, 1
      %p200 = scmp.eq.s32.totalorder %s26, 1
      %p201 = scmp.ne.s32.totalorder %s196, %s198
      %p202 = scmp.eq.s32.totalorder %s26, 0
      %p203 = por %p201, %p202
      %p204 = scmp.ne.s32.totalorder %s196, %s198
      %p205 = scmp.eq.s32.totalorder %s31, 1
      %p206 = por %p204, %p205
      %p207 = scmp.ne.s32.totalorder %s198, %s199
      %p208 = scmp.eq.s32.totalorder %s31, 0
      %p209 = por %p207, %p208
      %p210 = scmp.ne.s32.totalorder %s198, %s199
      %p211 = scmp.eq.s32.totalorder %s32, 1
      %p212 = por %p210, %p211
      %p214 = scmp.ne.s32.totalorder %s199, %s213
      %p215 = scmp.eq.s32.totalorder %s32, 0
      %p216 = por %p214, %p215
      %s218 = sadd.s32 %s217, 1
      %p221 = scmp.eq.s32.totalorder %s26, 1
      %p222 = scmp.ne.s32.totalorder %s217, %s219
      %p223 = scmp.eq.s32.totalorder %s26, 0
      %p224 = por %p222, %p223
      %p225 = scmp.ne.s32.totalorder %s217, %s219
      %p226 = scmp.eq.s32.totalorder %s31, 1
      %p227 = por %p225, %p226
      %p228 = scmp.ne.s32.totalorder %s219, %s220
      %p229 = scmp.eq.s32.totalorder %s31, 0
      %p230 = por %p228, %p229
      %p231 = scmp.ne.s32.totalorder %s219, %s220
      %p232 = scmp.eq.s32.totalorder %s32, 1
      %p233 = por %p231, %p232
      %p235 = scmp.ne.s32.totalorder %s220, %s234
      %p236 = scmp.eq.s32.totalorder %s32, 0
      %p237 = por %p235, %p236
      %s239 = sadd.s32 %s238, 1
      %p242 = scmp.eq.s32.totalorder %s26, 1
      %p243 = scmp.ne.s32.totalorder %s238, %s240
      %p244 = scmp.eq.s32.totalorder %s26, 0
      %p245 = por %p243, %p244
      %p246 = scmp.ne.s32.totalorder %s238, %s240
      %p247 = scmp.eq.s32.totalorder %s31, 1
      %p248 = por %p246, %p247
      %p249 = scmp.ne.s32.totalorder %s240, %s241
      %p250 = scmp.eq.s32.totalorder %s31, 0
      %p251 = por %p249, %p250
      %p252 = scmp.ne.s32.totalorder %s240, %s241
      %p253 = scmp.eq.s32.totalorder %s32, 1
      %p254 = por %p252, %p253
      %p256 = scmp.ne.s32.totalorder %s241, %s255
      %p257 = scmp.eq.s32.totalorder %s32, 0
      %p258 = por %p256, %p257
      %s260 = sadd.s32 %s259, 1
      %p263 = scmp.eq.s32.totalorder %s26, 1
      %p264 = scmp.ne.s32.totalorder %s259, %s261
      %p265 = scmp.eq.s32.totalorder %s26, 0
      %p266 = por %p264, %p265
      %p267 = scmp.ne.s32.totalorder %s259, %s261
      %p268 = scmp.eq.s32.totalorder %s31, 1
      %p269 = por %p267, %p268
      %p270 = scmp.ne.s32.totalorder %s261, %s262
      %p271 = scmp.eq.s32.totalorder %s31, 0
      %p272 = por %p270, %p271
      %p273 = scmp.ne.s32.totalorder %s261, %s262
      %p274 = scmp.eq.s32.totalorder %s32, 1
      %p275 = por %p273, %p274
      %p277 = scmp.ne.s32.totalorder %s262, %s276
      %p278 = scmp.eq.s32.totalorder %s32, 0
      %p279 = por %p277, %p278
      %s281 = sadd.s32 %s280, 1
      %p284 = scmp.eq.s32.totalorder %s26, 1
      %p285 = scmp.ne.s32.totalorder %s280, %s282
      %p286 = scmp.eq.s32.totalorder %s26, 0
      %p287 = por %p285, %p286
      %p288 = scmp.ne.s32.totalorder %s280, %s282
      %p289 = scmp.eq.s32.totalorder %s31, 1
      %p290 = por %p288, %p289
      %p291 = scmp.ne.s32.totalorder %s282, %s283
      %p292 = scmp.eq.s32.totalorder %s31, 0
      %p293 = por %p291, %p292
      %p294 = scmp.ne.s32.totalorder %s282, %s283
      %p295 = scmp.eq.s32.totalorder %s32, 1
      %p296 = por %p294, %p295
      %p298 = scmp.ne.s32.totalorder %s283, %s297
      %p299 = scmp.eq.s32.totalorder %s32, 0
      %p300 = por %p298, %p299
      %s302 = sadd.s32 %s301, 1
      %p305 = scmp.eq.s32.totalorder %s26, 1
      %p306 = scmp.ne.s32.totalorder %s301, %s303
      %p307 = scmp.eq.s32.totalorder %s26, 0
      %p308 = por %p306, %p307
      %p309 = scmp.ne.s32.totalorder %s301, %s303
      %p310 = scmp.eq.s32.totalorder %s31, 1
      %p311 = por %p309, %p310
      %p312 = scmp.ne.s32.totalorder %s303, %s304
      %p313 = scmp.eq.s32.totalorder %s31, 0
      %p314 = por %p312, %p313
      %p315 = scmp.ne.s32.totalorder %s303, %s304
      %p316 = scmp.eq.s32.totalorder %s32, 1
      %p317 = por %p315, %p316
      %p319 = scmp.ne.s32.totalorder %s304, %s318
      %p320 = scmp.eq.s32.totalorder %s32, 0
      %p321 = por %p319, %p320
      %s323 = sadd.s32 %s322, 1
      %p326 = scmp.eq.s32.totalorder %s26, 1
      %p327 = scmp.ne.s32.totalorder %s322, %s324
      %p328 = scmp.eq.s32.totalorder %s26, 0
      %p329 = por %p327, %p328
      %p330 = scmp.ne.s32.totalorder %s322, %s324
      %p331 = scmp.eq.s32.totalorder %s31, 1
      %p332 = por %p330, %p331
      %p333 = scmp.ne.s32.totalorder %s324, %s325
      %p334 = scmp.eq.s32.totalorder %s31, 0
      %p335 = por %p333, %p334
      %p336 = scmp.ne.s32.totalorder %s324, %s325
      %p337 = scmp.eq.s32.totalorder %s32, 1
      %p338 = por %p336, %p337
      %p340 = scmp.ne.s32.totalorder %s325, %s339
      %p341 = scmp.eq.s32.totalorder %s32, 0
      %p342 = por %p340, %p341
      %s344 = sadd.s32 %s343, 1
      %p347 = scmp.eq.s32.totalorder %s26, 1
      %p348 = scmp.ne.s32.totalorder %s343, %s345
      %p349 = scmp.eq.s32.totalorder %s26, 0
      %p350 = por %p348, %p349
      %p351 = scmp.ne.s32.totalorder %s343, %s345
      %p352 = scmp.eq.s32.totalorder %s31, 1
      %p353 = por %p351, %p352
      %p354 = scmp.ne.s32.totalorder %s345, %s346
      %p355 = scmp.eq.s32.totalorder %s31, 0
      %p356 = por %p354, %p355
      %p357 = scmp.ne.s32.totalorder %s345, %s346
      %p358 = scmp.eq.s32.totalorder %s32, 1
      %p359 = por %p357, %p358
      %p361 = scmp.ne.s32.totalorder %s346, %s360
      %p362 = scmp.eq.s32.totalorder %s32, 0
      %p363 = por %p361, %p362
      %s364 = ssub.s32 %s26, %s33
      %p365 = scmp.eq.s32.totalorder %s364, 0
      %s367 = sadd.s32 %s366, 1
      %s368 = scalar_select %p365, %s366, %s367
      %p371 = pneg %p365
      %p372 = scmp.eq.s32.totalorder %s26, 1
      %p373 = por %p371, %p372
      %p374 = scmp.ne.s32.totalorder %s366, %s369
      %p375 = scmp.eq.s32.totalorder %s26, 0
      %p376 = por %p374, %p375
      %p377 = scmp.ne.s32.totalorder %s366, %s369
      %p378 = scmp.eq.s32.totalorder %s31, 1
      %p379 = por %p377, %p378
      %p380 = scmp.ne.s32.totalorder %s369, %s370
      %p381 = scmp.eq.s32.totalorder %s31, 0
      %p382 = por %p380, %p381
      %p383 = scmp.ne.s32.totalorder %s369, %s370
      %p384 = scmp.eq.s32.totalorder %s32, 1
      %p385 = por %p383, %p384
      %p387 = scmp.ne.s32.totalorder %s370, %s386
      %p388 = scmp.eq.s32.totalorder %s32, 0
      %p389 = por %p387, %p388
      %p390 = scmp.le.s32.totalorder 1, %s26
      %p391 = scmp.lt.s32.totalorder %s26, 3
      %p392 = pnand %p390, %p391
      %p393 = pneg %p392
      // Predicated region
      $region9: #{tpu_custom_call.1} parent=5 // pred_check
        _
      $region10: #{tpu_custom_call.1} parent=5 // pred_check_branch
        %395 = sbr.rel (%p392) target = $region12
      $region11: #{tpu_custom_call.1} parent=5 // pred_region
        %s396 = ssub.s32 %s26, 1
        // Predicated region
        $region13: #{tpu_custom_call.1} parent=11 // pred_check
          %p397 = pneg %p125
        $region14: #{tpu_custom_call.1} parent=11 // pred_check_branch
          %399 = sbr.rel (%p397) target = $region16
        $region15: #{tpu_custom_call.1} parent=11 // pred_region
          _
        $region16: #{tpu_custom_call.1} parent=11 // pred_fallthru
          _
        // Predicated region
        $region17: #{tpu_custom_call.1} parent=11 // pred_check
          %p400 = pneg %p146
        $region18: #{tpu_custom_call.1} parent=11 // pred_check_branch
          %402 = sbr.rel (%p400) target = $region20
        $region19: #{tpu_custom_call.1} parent=11 // pred_region
          _
        $region20: #{tpu_custom_call.1} parent=11 // pred_fallthru
          _
        // Predicated region
        $region21: #{tpu_custom_call.1} parent=11 // pred_check
          %p403 = pneg %p167
        $region22: #{tpu_custom_call.1} parent=11 // pred_check_branch
          %405 = sbr.rel (%p403) target = $region24
        $region23: #{tpu_custom_call.1} parent=11 // pred_region
          _
        $region24: #{tpu_custom_call.1} parent=11 // pred_fallthru
          _
        // Predicated region
        $region25: #{tpu_custom_call.1} parent=11 // pred_check
          %p406 = pneg %p188
        $region26: #{tpu_custom_call.1} parent=11 // pred_check_branch
          %408 = sbr.rel (%p406) target = $region28
        $region27: #{tpu_custom_call.1} parent=11 // pred_region
          _
        $region28: #{tpu_custom_call.1} parent=11 // pred_fallthru
          _
        // Predicated region
        $region29: #{tpu_custom_call.1} parent=11 // pred_check
          %p409 = pneg %p209
        $region30: #{tpu_custom_call.1} parent=11 // pred_check_branch
          %411 = sbr.rel (%p409) target = $region32
        $region31: #{tpu_custom_call.1} parent=11 // pred_region
          _
        $region32: #{tpu_custom_call.1} parent=11 // pred_fallthru
          _
        // Predicated region
        $region33: #{tpu_custom_call.1} parent=11 // pred_check
          %p412 = pneg %p230
        $region34: #{tpu_custom_call.1} parent=11 // pred_check_branch
          %414 = sbr.rel (%p412) target = $region36
        $region35: #{tpu_custom_call.1} parent=11 // pred_region
          _
        $region36: #{tpu_custom_call.1} parent=11 // pred_fallthru
          _
        // Predicated region
        $region37: #{tpu_custom_call.1} parent=11 // pred_check
          %p415 = pneg %p251
        $region38: #{tpu_custom_call.1} parent=11 // pred_check_branch
          %417 = sbr.rel (%p415) target = $region40
        $region39: #{tpu_custom_call.1} parent=11 // pred_region
          _
        $region40: #{tpu_custom_call.1} parent=11 // pred_fallthru
          _
        // Predicated region
        $region41: #{tpu_custom_call.1} parent=11 // pred_check
          %p418 = pneg %p272
        $region42: #{tpu_custom_call.1} parent=11 // pred_check_branch
          %420 = sbr.rel (%p418) target = $region44
        $region43: #{tpu_custom_call.1} parent=11 // pred_region
          _
        $region44: #{tpu_custom_call.1} parent=11 // pred_fallthru
          _
        // Predicated region
        $region45: #{tpu_custom_call.1} parent=11 // pred_check
          %p421 = pneg %p293
        $region46: #{tpu_custom_call.1} parent=11 // pred_check_branch
          %423 = sbr.rel (%p421) target = $region48
        $region47: #{tpu_custom_call.1} parent=11 // pred_region
          _
        $region48: #{tpu_custom_call.1} parent=11 // pred_fallthru
          _
        // Predicated region
        $region49: #{tpu_custom_call.1} parent=11 // pred_check
          %p424 = pneg %p314
        $region50: #{tpu_custom_call.1} parent=11 // pred_check_branch
          %426 = sbr.rel (%p424) target = $region52
        $region51: #{tpu_custom_call.1} parent=11 // pred_region
          _
        $region52: #{tpu_custom_call.1} parent=11 // pred_fallthru
          _
        // Predicated region
        $region53: #{tpu_custom_call.1} parent=11 // pred_check
          %p427 = pneg %p335
        $region54: #{tpu_custom_call.1} parent=11 // pred_check_branch
          %429 = sbr.rel (%p427) target = $region56
        $region55: #{tpu_custom_call.1} parent=11 // pred_region
          _
        $region56: #{tpu_custom_call.1} parent=11 // pred_fallthru
          _
        // Predicated region
        $region57: #{tpu_custom_call.1} parent=11 // pred_check
          %p430 = pneg %p356
        $region58: #{tpu_custom_call.1} parent=11 // pred_check_branch
          %432 = sbr.rel (%p430) target = $region60
        $region59: #{tpu_custom_call.1} parent=11 // pred_region
          _
        $region60: #{tpu_custom_call.1} parent=11 // pred_fallthru
          _
      $region12: #{tpu_custom_call.1} parent=5 // pred_fallthru
        _
      %p433 = scmp.lt.s32.totalorder %s26, 2
      // Predicated region
      $region61: #{tpu_custom_call.1} parent=5 // pred_check
        %p434 = pneg %p433
      $region62: #{tpu_custom_call.1} parent=5 // pred_check_branch
        %436 = sbr.rel (%p434) target = $region64
      $region63: #{tpu_custom_call.1} parent=5 // pred_region
        // Predicated region
        $region65: #{tpu_custom_call.1} parent=63 // pred_check
          %p437 = pneg %p46
        $region66: #{tpu_custom_call.1} parent=63 // pred_check_branch
          %439 = sbr.rel (%p437) target = $region68
        $region67: #{tpu_custom_call.1} parent=63 // pred_region
          %s440 = smul.u32 160, %s26
          %p441 = scmp.lt.s32.totalorder %s440, 319
          %s442 = scalar_select %p441, %s440, 319
          %s443 = smul.addr %s442, 4
          %s444 = scalar_lea.vmem %s0, %s443
          %s445 = smul.u32 160, %s26
        $region68: #{tpu_custom_call.1} parent=63 // pred_fallthru
          _
        // Predicated region
        $region69: #{tpu_custom_call.1} parent=63 // pred_check
          %p446 = pneg %p72
        $region70: #{tpu_custom_call.1} parent=63 // pred_check_branch
          %448 = sbr.rel (%p446) target = $region72
        $region71: #{tpu_custom_call.1} parent=63 // pred_region
          %s449 = smul.u32 160, %s26
          %p450 = scmp.lt.s32.totalorder %s449, 319
          %s451 = scalar_select %p450, %s449, 319
          %s452 = smul.addr %s451, 4
          %s453 = scalar_lea.vmem %s1, %s452
          %s454 = smul.u32 160, %s26
        $region72: #{tpu_custom_call.1} parent=63 // pred_fallthru
          _
        // Predicated region
        $region73: #{tpu_custom_call.1} parent=63 // pred_check
          %p455 = pneg %p98
        $region74: #{tpu_custom_call.1} parent=63 // pred_check_branch
          %457 = sbr.rel (%p455) target = $region76
        $region75: #{tpu_custom_call.1} parent=63 // pred_region
          %s458 = smul.u32 160, %s26
          %p459 = scmp.lt.s32.totalorder %s458, 319
          %s460 = scalar_select %p459, %s458, 319
          %s461 = smul.addr %s460, 4
          %s462 = scalar_lea.vmem %s2, %s461
          %s463 = smul.u32 160, %s26
        $region76: #{tpu_custom_call.1} parent=63 // pred_fallthru
          _
      $region64: #{tpu_custom_call.1} parent=5 // pred_fallthru
        _
      %p464 = scmp.le.s32.totalorder 1, %s26
      %p465 = scmp.lt.s32.totalorder %s26, 3
      %p466 = pnand %p464, %p465
      %p467 = pneg %p466
      // Predicated region
      $region77: #{tpu_custom_call.1} parent=5 // pred_check
        _
      $region78: #{tpu_custom_call.1} parent=5 // pred_check_branch
        %469 = sbr.rel (%p466) target = $region80
      $region79: #{tpu_custom_call.1} parent=5 // pred_region
        %s470 = ssub.s32 %s26, 1
        %s471 = smul.u32 160, %s31
        %p472 = scmp.lt.s32.totalorder %s471, 319
        %s473 = scalar_select %p472, %s471, 319
        %s474 = smul.addr %s473, 4
        %s475 = scalar_lea.vmem %s0, %s474
        %p476 = pneg %p52
        %p477 = pneg %p49
        %s478 = smul.u32 160, %s31
        %p479 = scmp.lt.s32.totalorder %s478, 319
        %s480 = scalar_select %p479, %s478, 319
        %s481 = smul.addr %s480, 4
        %s482 = scalar_lea.vmem %s1, %s481
        %p483 = pneg %p78
        %p484 = pneg %p75
        %s485 = smul.u32 160, %s31
        %p486 = scmp.lt.s32.totalorder %s485, 319
        %s487 = scalar_select %p486, %s485, 319
        %s488 = smul.addr %s487, 4
        %s489 = scalar_lea.vmem %s2, %s488
        %p490 = pneg %p104
        %p491 = pneg %p101
        %p492 = pneg %p125
        %p493 = pneg %p122
        %p494 = pneg %p146
        %p495 = pneg %p143
        %p496 = pneg %p167
        %p497 = pneg %p164
        %p498 = pneg %p188
        %p499 = pneg %p185
        %p500 = pneg %p209
        %p501 = pneg %p206
        %p502 = pneg %p230
        %p503 = pneg %p227
        %p504 = pneg %p251
        %p505 = pneg %p248
        %p506 = pneg %p272
        %p507 = pneg %p269
        %p508 = pneg %p293
        %p509 = pneg %p290
        %p510 = pneg %p314
        %p511 = pneg %p311
        %p512 = pneg %p335
        %p513 = pneg %p332
        %p514 = pneg %p356
        %p515 = pneg %p353
        %p516 = pneg %p382
        %p517 = pneg %p379
        %s518 = sand.u32 %s369, 1
        %s519 = scalar_lea.sflag [#allocation4], %s518
        %s520 = sand.u32 %s369, 1
        %s521 = smul.addr %s520, 10
        %s522 = scalar_lea.vmem [#allocation3], %s521
        %s523 = smul.u32 160, %s31
        %p524 = scmp.lt.s32.totalorder %s523, 319
        %s525 = scalar_select %p524, %s523, 319
        %s526 = smul.addr %s525, 4
        %s527 = scalar_lea.vmem %s0, %s526
        %s528 = smul.u32 160, %s31
        %s529 = smul.u32 160, %s31
        %p530 = scmp.lt.s32.totalorder %s529, 319
        %s531 = scalar_select %p530, %s529, 319
        %s532 = smul.addr %s531, 4
        %s533 = scalar_lea.vmem %s1, %s532
        %s534 = smul.u32 160, %s31
        %s535 = smul.u32 160, %s31
        %p536 = scmp.lt.s32.totalorder %s535, 319
        %s537 = scalar_select %p536, %s535, 319
        %s538 = smul.addr %s537, 4
        %s539 = scalar_lea.vmem %s2, %s538
        %s540 = smul.u32 160, %s31
        %s541 = smul.u32 10, %s31
        %v543 = vld [vmem:[%s527] sm:$0xf]
        %v544 = vld [vmem:[%s527 + $0x4] sm:$0xf]
        %v545 = vld [vmem:[%s527 + $0x8] sm:$0xf]
        %v546 = vld [vmem:[%s527 + $0xc] sm:$0xf]
        %v547 = vld [vmem:[%s527 + $0x10] sm:$0xf]
        %v548 = vld [vmem:[%s527 + $0x14] sm:$0xf]
        %v549 = vld [vmem:[%s527 + $0x18] sm:$0xf]
        %v550 = vld [vmem:[%s527 + $0x1c] sm:$0xf]
        %v551 = vld [vmem:[%s527 + $0x20] sm:$0xf]
        %v552 = vld [vmem:[%s527 + $0x24] sm:$0xf]
        %v553 = vld [vmem:[%s527 + $0x28] sm:$0xf]
        %v554 = vld [vmem:[%s527 + $0x2c] sm:$0xf]
        %v555 = vld [vmem:[%s527 + $0x30] sm:$0xf]
        %v556 = vld [vmem:[%s527 + $0x34] sm:$0xf]
        %v557 = vld [vmem:[%s527 + $0x38] sm:$0xf]
        %v558 = vld [vmem:[%s527 + $0x3c] sm:$0xf]
        %v559 = vld [vmem:[%s527 + $0x40] sm:$0xf]
        %v560 = vld [vmem:[%s527 + $0x44] sm:$0xf]
        %v561 = vld [vmem:[%s527 + $0x48] sm:$0xf]
        %v562 = vld [vmem:[%s527 + $0x4c] sm:$0xf]
        %v563 = vld [vmem:[%s527 + $0x50] sm:$0xf]
        %v564 = vld [vmem:[%s527 + $0x54] sm:$0xf]
        %v565 = vld [vmem:[%s527 + $0x58] sm:$0xf]
        %v566 = vld [vmem:[%s527 + $0x5c] sm:$0xf]
        %v567 = vld [vmem:[%s527 + $0x60] sm:$0xf]
        %v568 = vld [vmem:[%s527 + $0x64] sm:$0xf]
        %v569 = vld [vmem:[%s527 + $0x68] sm:$0xf]
        %v570 = vld [vmem:[%s527 + $0x6c] sm:$0xf]
        %v571 = vld [vmem:[%s527 + $0x70] sm:$0xf]
        %v572 = vld [vmem:[%s527 + $0x74] sm:$0xf]
        %v573 = vld [vmem:[%s527 + $0x78] sm:$0xf]
        %v574 = vld [vmem:[%s527 + $0x7c] sm:$0xf]
        %v575 = vld [vmem:[%s527 + $0x80] sm:$0xf]
        %v576 = vld [vmem:[%s527 + $0x84] sm:$0xf]
        %v577 = vld [vmem:[%s527 + $0x88] sm:$0xf]
        %v578 = vld [vmem:[%s527 + $0x8c] sm:$0xf]
        %v579 = vld [vmem:[%s527 + $0x90] sm:$0xf]
        %v580 = vld [vmem:[%s527 + $0x94] sm:$0xf]
        %v581 = vld [vmem:[%s527 + $0x98] sm:$0xf]
        %v582 = vld [vmem:[%s527 + $0x9c] sm:$0xf]
        %v583 = vld [vmem:[%s527 + $0xa0] sm:$0xf]
        %v584 = vld [vmem:[%s527 + $0xa4] sm:$0xf]
        %v585 = vld [vmem:[%s527 + $0xa8] sm:$0xf]
        %v586 = vld [vmem:[%s527 + $0xac] sm:$0xf]
        %v587 = vld [vmem:[%s527 + $0xb0] sm:$0xf]
        %v588 = vld [vmem:[%s527 + $0xb4] sm:$0xf]
        %v589 = vld [vmem:[%s527 + $0xb8] sm:$0xf]
        %v590 = vld [vmem:[%s527 + $0xbc] sm:$0xf]
        %v591 = vld [vmem:[%s527 + $0xc0] sm:$0xf]
        %v592 = vld [vmem:[%s527 + $0xc4] sm:$0xf]
        %v593 = vld [vmem:[%s527 + $0xc8] sm:$0xf]
        %v594 = vld [vmem:[%s527 + $0xcc] sm:$0xf]
        %v595 = vld [vmem:[%s527 + $0xd0] sm:$0xf]
        %v596 = vld [vmem:[%s527 + $0xd4] sm:$0xf]
        %v597 = vld [vmem:[%s527 + $0xd8] sm:$0xf]
        %v598 = vld [vmem:[%s527 + $0xdc] sm:$0xf]
        %v599 = vld [vmem:[%s527 + $0xe0] sm:$0xf]
        %v600 = vld [vmem:[%s527 + $0xe4] sm:$0xf]
        %v601 = vld [vmem:[%s527 + $0xe8] sm:$0xf]
        %v602 = vld [vmem:[%s527 + $0xec] sm:$0xf]
        %v603 = vld [vmem:[%s527 + $0xf0] sm:$0xf]
        %v604 = vld [vmem:[%s527 + $0xf4] sm:$0xf]
        %v605 = vld [vmem:[%s527 + $0xf8] sm:$0xf]
        %v606 = vld [vmem:[%s527 + $0xfc] sm:$0xf]
        %v607 = vld [vmem:[%s527 + $0x100] sm:$0xf]
        %v608 = vld [vmem:[%s527 + $0x104] sm:$0xf]
        %v609 = vld [vmem:[%s527 + $0x108] sm:$0xf]
        %v610 = vld [vmem:[%s527 + $0x10c] sm:$0xf]
        %v611 = vld [vmem:[%s527 + $0x110] sm:$0xf]
        %v612 = vld [vmem:[%s527 + $0x114] sm:$0xf]
        %v613 = vld [vmem:[%s527 + $0x118] sm:$0xf]
        %v614 = vld [vmem:[%s527 + $0x11c] sm:$0xf]
        %v615 = vld [vmem:[%s527 + $0x120] sm:$0xf]
        %v616 = vld [vmem:[%s527 + $0x124] sm:$0xf]
        %v617 = vld [vmem:[%s527 + $0x128] sm:$0xf]
        %v618 = vld [vmem:[%s527 + $0x12c] sm:$0xf]
        %v619 = vld [vmem:[%s527 + $0x130] sm:$0xf]
        %v620 = vld [vmem:[%s527 + $0x134] sm:$0xf]
        %v621 = vld [vmem:[%s527 + $0x138] sm:$0xf]
        %v622 = vld [vmem:[%s527 + $0x13c] sm:$0xf]
        %v623 = vld [vmem:[%s527 + $0x140] sm:$0xf]
        %v624 = vld [vmem:[%s527 + $0x144] sm:$0xf]
        %v625 = vld [vmem:[%s527 + $0x148] sm:$0xf]
        %v626 = vld [vmem:[%s527 + $0x14c] sm:$0xf]
        %v627 = vld [vmem:[%s527 + $0x150] sm:$0xf]
        %v628 = vld [vmem:[%s527 + $0x154] sm:$0xf]
        %v629 = vld [vmem:[%s527 + $0x158] sm:$0xf]
        %v630 = vld [vmem:[%s527 + $0x15c] sm:$0xf]
        %v631 = vld [vmem:[%s527 + $0x160] sm:$0xf]
        %v632 = vld [vmem:[%s527 + $0x164] sm:$0xf]
        %v633 = vld [vmem:[%s527 + $0x168] sm:$0xf]
        %v634 = vld [vmem:[%s527 + $0x16c] sm:$0xf]
        %v635 = vld [vmem:[%s527 + $0x170] sm:$0xf]
        %v636 = vld [vmem:[%s527 + $0x174] sm:$0xf]
        %v637 = vld [vmem:[%s527 + $0x178] sm:$0xf]
        %v638 = vld [vmem:[%s527 + $0x17c] sm:$0xf]
        %v639 = vld [vmem:[%s527 + $0x180] sm:$0xf]
        %v640 = vld [vmem:[%s527 + $0x184] sm:$0xf]
        %v641 = vld [vmem:[%s527 + $0x188] sm:$0xf]
        %v642 = vld [vmem:[%s527 + $0x18c] sm:$0xf]
        %v643 = vld [vmem:[%s527 + $0x190] sm:$0xf]
        %v644 = vld [vmem:[%s527 + $0x194] sm:$0xf]
        %v645 = vld [vmem:[%s527 + $0x198] sm:$0xf]
        %v646 = vld [vmem:[%s527 + $0x19c] sm:$0xf]
        %v647 = vld [vmem:[%s527 + $0x1a0] sm:$0xf]
        %v648 = vld [vmem:[%s527 + $0x1a4] sm:$0xf]
        %v649 = vld [vmem:[%s527 + $0x1a8] sm:$0xf]
        %v650 = vld [vmem:[%s527 + $0x1ac] sm:$0xf]
        %v651 = vld [vmem:[%s527 + $0x1b0] sm:$0xf]
        %v652 = vld [vmem:[%s527 + $0x1b4] sm:$0xf]
        %v653 = vld [vmem:[%s527 + $0x1b8] sm:$0xf]
        %v654 = vld [vmem:[%s527 + $0x1bc] sm:$0xf]
        %v655 = vld [vmem:[%s527 + $0x1c0] sm:$0xf]
        %v656 = vld [vmem:[%s527 + $0x1c4] sm:$0xf]
        %v657 = vld [vmem:[%s527 + $0x1c8] sm:$0xf]
        %v658 = vld [vmem:[%s527 + $0x1cc] sm:$0xf]
        %v659 = vld [vmem:[%s527 + $0x1d0] sm:$0xf]
        %v660 = vld [vmem:[%s527 + $0x1d4] sm:$0xf]
        %v661 = vld [vmem:[%s527 + $0x1d8] sm:$0xf]
        %v662 = vld [vmem:[%s527 + $0x1dc] sm:$0xf]
        %v663 = vld [vmem:[%s527 + $0x1e0] sm:$0xf]
        %v664 = vld [vmem:[%s527 + $0x1e4] sm:$0xf]
        %v665 = vld [vmem:[%s527 + $0x1e8] sm:$0xf]
        %v666 = vld [vmem:[%s527 + $0x1ec] sm:$0xf]
        %v667 = vld [vmem:[%s527 + $0x1f0] sm:$0xf]
        %v668 = vld [vmem:[%s527 + $0x1f4] sm:$0xf]
        %v669 = vld [vmem:[%s527 + $0x1f8] sm:$0xf]
        %v670 = vld [vmem:[%s527 + $0x1fc] sm:$0xf]
        %v671 = vld [vmem:[%s527 + $0x200] sm:$0xf]
        %v672 = vld [vmem:[%s527 + $0x204] sm:$0xf]
        %v673 = vld [vmem:[%s527 + $0x208] sm:$0xf]
        %v674 = vld [vmem:[%s527 + $0x20c] sm:$0xf]
        %v675 = vld [vmem:[%s527 + $0x210] sm:$0xf]
        %v676 = vld [vmem:[%s527 + $0x214] sm:$0xf]
        %v677 = vld [vmem:[%s527 + $0x218] sm:$0xf]
        %v678 = vld [vmem:[%s527 + $0x21c] sm:$0xf]
        %v679 = vld [vmem:[%s527 + $0x220] sm:$0xf]
        %v680 = vld [vmem:[%s527 + $0x224] sm:$0xf]
        %v681 = vld [vmem:[%s527 + $0x228] sm:$0xf]
        %v682 = vld [vmem:[%s527 + $0x22c] sm:$0xf]
        %v683 = vld [vmem:[%s527 + $0x230] sm:$0xf]
        %v684 = vld [vmem:[%s527 + $0x234] sm:$0xf]
        %v685 = vld [vmem:[%s527 + $0x238] sm:$0xf]
        %v686 = vld [vmem:[%s527 + $0x23c] sm:$0xf]
        %v687 = vld [vmem:[%s527 + $0x240] sm:$0xf]
        %v688 = vld [vmem:[%s527 + $0x244] sm:$0xf]
        %v689 = vld [vmem:[%s527 + $0x248] sm:$0xf]
        %v690 = vld [vmem:[%s527 + $0x24c] sm:$0xf]
        %v691 = vld [vmem:[%s527 + $0x250] sm:$0xf]
        %v692 = vld [vmem:[%s527 + $0x254] sm:$0xf]
        %v693 = vld [vmem:[%s527 + $0x258] sm:$0xf]
        %v694 = vld [vmem:[%s527 + $0x25c] sm:$0xf]
        %v695 = vld [vmem:[%s527 + $0x260] sm:$0xf]
        %v696 = vld [vmem:[%s527 + $0x264] sm:$0xf]
        %v697 = vld [vmem:[%s527 + $0x268] sm:$0xf]
        %v698 = vld [vmem:[%s527 + $0x26c] sm:$0xf]
        %v699 = vld [vmem:[%s527 + $0x270] sm:$0xf]
        %v700 = vld [vmem:[%s527 + $0x274] sm:$0xf]
        %v701 = vld [vmem:[%s527 + $0x278] sm:$0xf]
        %v702 = vld [vmem:[%s527 + $0x27c] sm:$0xf]
        %v703 = vld [vmem:[%s533] sm:$0xf]
        %v704 = vld [vmem:[%s533 + $0x4] sm:$0xf]
        %v705 = vld [vmem:[%s533 + $0x8] sm:$0xf]
        %v706 = vld [vmem:[%s533 + $0xc] sm:$0xf]
        %v707 = vld [vmem:[%s533 + $0x10] sm:$0xf]
        %v708 = vld [vmem:[%s533 + $0x14] sm:$0xf]
        %v709 = vld [vmem:[%s533 + $0x18] sm:$0xf]
        %v710 = vld [vmem:[%s533 + $0x1c] sm:$0xf]
        %v711 = vld [vmem:[%s533 + $0x20] sm:$0xf]
        %v712 = vld [vmem:[%s533 + $0x24] sm:$0xf]
        %v713 = vld [vmem:[%s533 + $0x28] sm:$0xf]
        %v714 = vld [vmem:[%s533 + $0x2c] sm:$0xf]
        %v715 = vld [vmem:[%s533 + $0x30] sm:$0xf]
        %v716 = vld [vmem:[%s533 + $0x34] sm:$0xf]
        %v717 = vld [vmem:[%s533 + $0x38] sm:$0xf]
        %v718 = vld [vmem:[%s533 + $0x3c] sm:$0xf]
        %v719 = vld [vmem:[%s533 + $0x40] sm:$0xf]
        %v720 = vld [vmem:[%s533 + $0x44] sm:$0xf]
        %v721 = vld [vmem:[%s533 + $0x48] sm:$0xf]
        %v722 = vld [vmem:[%s533 + $0x4c] sm:$0xf]
        %v723 = vld [vmem:[%s533 + $0x50] sm:$0xf]
        %v724 = vld [vmem:[%s533 + $0x54] sm:$0xf]
        %v725 = vld [vmem:[%s533 + $0x58] sm:$0xf]
        %v726 = vld [vmem:[%s533 + $0x5c] sm:$0xf]
        %v727 = vld [vmem:[%s533 + $0x60] sm:$0xf]
        %v728 = vld [vmem:[%s533 + $0x64] sm:$0xf]
        %v729 = vld [vmem:[%s533 + $0x68] sm:$0xf]
        %v730 = vld [vmem:[%s533 + $0x6c] sm:$0xf]
        %v731 = vld [vmem:[%s533 + $0x70] sm:$0xf]
        %v732 = vld [vmem:[%s533 + $0x74] sm:$0xf]
        %v733 = vld [vmem:[%s533 + $0x78] sm:$0xf]
        %v734 = vld [vmem:[%s533 + $0x7c] sm:$0xf]
        %v735 = vld [vmem:[%s533 + $0x80] sm:$0xf]
        %v736 = vld [vmem:[%s533 + $0x84] sm:$0xf]
        %v737 = vld [vmem:[%s533 + $0x88] sm:$0xf]
        %v738 = vld [vmem:[%s533 + $0x8c] sm:$0xf]
        %v739 = vld [vmem:[%s533 + $0x90] sm:$0xf]
        %v740 = vld [vmem:[%s533 + $0x94] sm:$0xf]
        %v741 = vld [vmem:[%s533 + $0x98] sm:$0xf]
        %v742 = vld [vmem:[%s533 + $0x9c] sm:$0xf]
        %v743 = vld [vmem:[%s533 + $0xa0] sm:$0xf]
        %v744 = vld [vmem:[%s533 + $0xa4] sm:$0xf]
        %v745 = vld [vmem:[%s533 + $0xa8] sm:$0xf]
        %v746 = vld [vmem:[%s533 + $0xac] sm:$0xf]
        %v747 = vld [vmem:[%s533 + $0xb0] sm:$0xf]
        %v748 = vld [vmem:[%s533 + $0xb4] sm:$0xf]
        %v749 = vld [vmem:[%s533 + $0xb8] sm:$0xf]
        %v750 = vld [vmem:[%s533 + $0xbc] sm:$0xf]
        %v751 = vld [vmem:[%s533 + $0xc0] sm:$0xf]
        %v752 = vld [vmem:[%s533 + $0xc4] sm:$0xf]
        %v753 = vld [vmem:[%s533 + $0xc8] sm:$0xf]
        %v754 = vld [vmem:[%s533 + $0xcc] sm:$0xf]
        %v755 = vld [vmem:[%s533 + $0xd0] sm:$0xf]
        %v756 = vld [vmem:[%s533 + $0xd4] sm:$0xf]
        %v757 = vld [vmem:[%s533 + $0xd8] sm:$0xf]
        %v758 = vld [vmem:[%s533 + $0xdc] sm:$0xf]
        %v759 = vld [vmem:[%s533 + $0xe0] sm:$0xf]
        %v760 = vld [vmem:[%s533 + $0xe4] sm:$0xf]
        %v761 = vld [vmem:[%s533 + $0xe8] sm:$0xf]
        %v762 = vld [vmem:[%s533 + $0xec] sm:$0xf]
        %v763 = vld [vmem:[%s533 + $0xf0] sm:$0xf]
        %v764 = vld [vmem:[%s533 + $0xf4] sm:$0xf]
        %v765 = vld [vmem:[%s533 + $0xf8] sm:$0xf]
        %v766 = vld [vmem:[%s533 + $0xfc] sm:$0xf]
        %v767 = vld [vmem:[%s533 + $0x100] sm:$0xf]
        %v768 = vld [vmem:[%s533 + $0x104] sm:$0xf]
        %v769 = vld [vmem:[%s533 + $0x108] sm:$0xf]
        %v770 = vld [vmem:[%s533 + $0x10c] sm:$0xf]
        %v771 = vld [vmem:[%s533 + $0x110] sm:$0xf]
        %v772 = vld [vmem:[%s533 + $0x114] sm:$0xf]
        %v773 = vld [vmem:[%s533 + $0x118] sm:$0xf]
        %v774 = vld [vmem:[%s533 + $0x11c] sm:$0xf]
        %v775 = vld [vmem:[%s533 + $0x120] sm:$0xf]
        %v776 = vld [vmem:[%s533 + $0x124] sm:$0xf]
        %v777 = vld [vmem:[%s533 + $0x128] sm:$0xf]
        %v778 = vld [vmem:[%s533 + $0x12c] sm:$0xf]
        %v779 = vld [vmem:[%s533 + $0x130] sm:$0xf]
        %v780 = vld [vmem:[%s533 + $0x134] sm:$0xf]
        %v781 = vld [vmem:[%s533 + $0x138] sm:$0xf]
        %v782 = vld [vmem:[%s533 + $0x13c] sm:$0xf]
        %v783 = vld [vmem:[%s533 + $0x140] sm:$0xf]
        %v784 = vld [vmem:[%s533 + $0x144] sm:$0xf]
        %v785 = vld [vmem:[%s533 + $0x148] sm:$0xf]
        %v786 = vld [vmem:[%s533 + $0x14c] sm:$0xf]
        %v787 = vld [vmem:[%s533 + $0x150] sm:$0xf]
        %v788 = vld [vmem:[%s533 + $0x154] sm:$0xf]
        %v789 = vld [vmem:[%s533 + $0x158] sm:$0xf]
        %v790 = vld [vmem:[%s533 + $0x15c] sm:$0xf]
        %v791 = vld [vmem:[%s533 + $0x160] sm:$0xf]
        %v792 = vld [vmem:[%s533 + $0x164] sm:$0xf]
        %v793 = vld [vmem:[%s533 + $0x168] sm:$0xf]
        %v794 = vld [vmem:[%s533 + $0x16c] sm:$0xf]
        %v795 = vld [vmem:[%s533 + $0x170] sm:$0xf]
        %v796 = vld [vmem:[%s533 + $0x174] sm:$0xf]
        %v797 = vld [vmem:[%s533 + $0x178] sm:$0xf]
        %v798 = vld [vmem:[%s533 + $0x17c] sm:$0xf]
        %v799 = vld [vmem:[%s533 + $0x180] sm:$0xf]
        %v800 = vld [vmem:[%s533 + $0x184] sm:$0xf]
        %v801 = vld [vmem:[%s533 + $0x188] sm:$0xf]
        %v802 = vld [vmem:[%s533 + $0x18c] sm:$0xf]
        %v803 = vld [vmem:[%s533 + $0x190] sm:$0xf]
        %v804 = vld [vmem:[%s533 + $0x194] sm:$0xf]
        %v805 = vld [vmem:[%s533 + $0x198] sm:$0xf]
        %v806 = vld [vmem:[%s533 + $0x19c] sm:$0xf]
        %v807 = vld [vmem:[%s533 + $0x1a0] sm:$0xf]
        %v808 = vld [vmem:[%s533 + $0x1a4] sm:$0xf]
        %v809 = vld [vmem:[%s533 + $0x1a8] sm:$0xf]
        %v810 = vld [vmem:[%s533 + $0x1ac] sm:$0xf]
        %v811 = vld [vmem:[%s533 + $0x1b0] sm:$0xf]
        %v812 = vld [vmem:[%s533 + $0x1b4] sm:$0xf]
        %v813 = vld [vmem:[%s533 + $0x1b8] sm:$0xf]
        %v814 = vld [vmem:[%s533 + $0x1bc] sm:$0xf]
        %v815 = vld [vmem:[%s533 + $0x1c0] sm:$0xf]
        %v816 = vld [vmem:[%s533 + $0x1c4] sm:$0xf]
        %v817 = vld [vmem:[%s533 + $0x1c8] sm:$0xf]
        %v818 = vld [vmem:[%s533 + $0x1cc] sm:$0xf]
        %v819 = vld [vmem:[%s533 + $0x1d0] sm:$0xf]
        %v820 = vld [vmem:[%s533 + $0x1d4] sm:$0xf]
        %v821 = vld [vmem:[%s533 + $0x1d8] sm:$0xf]
        %v822 = vld [vmem:[%s533 + $0x1dc] sm:$0xf]
        %v823 = vld [vmem:[%s533 + $0x1e0] sm:$0xf]
        %v824 = vld [vmem:[%s533 + $0x1e4] sm:$0xf]
        %v825 = vld [vmem:[%s533 + $0x1e8] sm:$0xf]
        %v826 = vld [vmem:[%s533 + $0x1ec] sm:$0xf]
        %v827 = vld [vmem:[%s533 + $0x1f0] sm:$0xf]
        %v828 = vld [vmem:[%s533 + $0x1f4] sm:$0xf]
        %v829 = vld [vmem:[%s533 + $0x1f8] sm:$0xf]
        %v830 = vld [vmem:[%s533 + $0x1fc] sm:$0xf]
        %v831 = vld [vmem:[%s533 + $0x200] sm:$0xf]
        %v832 = vld [vmem:[%s533 + $0x204] sm:$0xf]
        %v833 = vld [vmem:[%s533 + $0x208] sm:$0xf]
        %v834 = vld [vmem:[%s533 + $0x20c] sm:$0xf]
        %v835 = vld [vmem:[%s533 + $0x210] sm:$0xf]
        %v836 = vld [vmem:[%s533 + $0x214] sm:$0xf]
        %v837 = vld [vmem:[%s533 + $0x218] sm:$0xf]
        %v838 = vld [vmem:[%s533 + $0x21c] sm:$0xf]
        %v839 = vld [vmem:[%s533 + $0x220] sm:$0xf]
        %v840 = vld [vmem:[%s533 + $0x224] sm:$0xf]
        %v841 = vld [vmem:[%s533 + $0x228] sm:$0xf]
        %v842 = vld [vmem:[%s533 + $0x22c] sm:$0xf]
        %v843 = vld [vmem:[%s533 + $0x230] sm:$0xf]
        %v844 = vld [vmem:[%s533 + $0x234] sm:$0xf]
        %v845 = vld [vmem:[%s533 + $0x238] sm:$0xf]
        %v846 = vld [vmem:[%s533 + $0x23c] sm:$0xf]
        %v847 = vld [vmem:[%s533 + $0x240] sm:$0xf]
        %v848 = vld [vmem:[%s533 + $0x244] sm:$0xf]
        %v849 = vld [vmem:[%s533 + $0x248] sm:$0xf]
        %v850 = vld [vmem:[%s533 + $0x24c] sm:$0xf]
        %v851 = vld [vmem:[%s533 + $0x250] sm:$0xf]
        %v852 = vld [vmem:[%s533 + $0x254] sm:$0xf]
        %v853 = vld [vmem:[%s533 + $0x258] sm:$0xf]
        %v854 = vld [vmem:[%s533 + $0x25c] sm:$0xf]
        %v855 = vld [vmem:[%s533 + $0x260] sm:$0xf]
        %v856 = vld [vmem:[%s533 + $0x264] sm:$0xf]
        %v857 = vld [vmem:[%s533 + $0x268] sm:$0xf]
        %v858 = vld [vmem:[%s533 + $0x26c] sm:$0xf]
        %v859 = vld [vmem:[%s533 + $0x270] sm:$0xf]
        %v860 = vld [vmem:[%s533 + $0x274] sm:$0xf]
        %v861 = vld [vmem:[%s533 + $0x278] sm:$0xf]
        %v862 = vld [vmem:[%s533 + $0x27c] sm:$0xf]
        %v863 = vld [vmem:[%s539] sm:$0xf]
        %v864 = vld [vmem:[%s539 + $0x4] sm:$0xf]
        %v865 = vld [vmem:[%s539 + $0x8] sm:$0xf]
        %v866 = vld [vmem:[%s539 + $0xc] sm:$0xf]
        %v867 = vld [vmem:[%s539 + $0x10] sm:$0xf]
        %v868 = vld [vmem:[%s539 + $0x14] sm:$0xf]
        %v869 = vld [vmem:[%s539 + $0x18] sm:$0xf]
        %v870 = vld [vmem:[%s539 + $0x1c] sm:$0xf]
        %v871 = vld [vmem:[%s539 + $0x20] sm:$0xf]
        %v872 = vld [vmem:[%s539 + $0x24] sm:$0xf]
        %v873 = vld [vmem:[%s539 + $0x28] sm:$0xf]
        %v874 = vld [vmem:[%s539 + $0x2c] sm:$0xf]
        %v875 = vld [vmem:[%s539 + $0x30] sm:$0xf]
        %v876 = vld [vmem:[%s539 + $0x34] sm:$0xf]
        %v877 = vld [vmem:[%s539 + $0x38] sm:$0xf]
        %v878 = vld [vmem:[%s539 + $0x3c] sm:$0xf]
        %v879 = vld [vmem:[%s539 + $0x40] sm:$0xf]
        %v880 = vld [vmem:[%s539 + $0x44] sm:$0xf]
        %v881 = vld [vmem:[%s539 + $0x48] sm:$0xf]
        %v882 = vld [vmem:[%s539 + $0x4c] sm:$0xf]
        %v883 = vld [vmem:[%s539 + $0x50] sm:$0xf]
        %v884 = vld [vmem:[%s539 + $0x54] sm:$0xf]
        %v885 = vld [vmem:[%s539 + $0x58] sm:$0xf]
        %v886 = vld [vmem:[%s539 + $0x5c] sm:$0xf]
        %v887 = vld [vmem:[%s539 + $0x60] sm:$0xf]
        %v888 = vld [vmem:[%s539 + $0x64] sm:$0xf]
        %v889 = vld [vmem:[%s539 + $0x68] sm:$0xf]
        %v890 = vld [vmem:[%s539 + $0x6c] sm:$0xf]
        %v891 = vld [vmem:[%s539 + $0x70] sm:$0xf]
        %v892 = vld [vmem:[%s539 + $0x74] sm:$0xf]
        %v893 = vld [vmem:[%s539 + $0x78] sm:$0xf]
        %v894 = vld [vmem:[%s539 + $0x7c] sm:$0xf]
        %v895 = vld [vmem:[%s539 + $0x80] sm:$0xf]
        %v896 = vld [vmem:[%s539 + $0x84] sm:$0xf]
        %v897 = vld [vmem:[%s539 + $0x88] sm:$0xf]
        %v898 = vld [vmem:[%s539 + $0x8c] sm:$0xf]
        %v899 = vld [vmem:[%s539 + $0x90] sm:$0xf]
        %v900 = vld [vmem:[%s539 + $0x94] sm:$0xf]
        %v901 = vld [vmem:[%s539 + $0x98] sm:$0xf]
        %v902 = vld [vmem:[%s539 + $0x9c] sm:$0xf]
        %v903 = vld [vmem:[%s539 + $0xa0] sm:$0xf]
        %v904 = vld [vmem:[%s539 + $0xa4] sm:$0xf]
        %v905 = vld [vmem:[%s539 + $0xa8] sm:$0xf]
        %v906 = vld [vmem:[%s539 + $0xac] sm:$0xf]
        %v907 = vld [vmem:[%s539 + $0xb0] sm:$0xf]
        %v908 = vld [vmem:[%s539 + $0xb4] sm:$0xf]
        %v909 = vld [vmem:[%s539 + $0xb8] sm:$0xf]
        %v910 = vld [vmem:[%s539 + $0xbc] sm:$0xf]
        %v911 = vld [vmem:[%s539 + $0xc0] sm:$0xf]
        %v912 = vld [vmem:[%s539 + $0xc4] sm:$0xf]
        %v913 = vld [vmem:[%s539 + $0xc8] sm:$0xf]
        %v914 = vld [vmem:[%s539 + $0xcc] sm:$0xf]
        %v915 = vld [vmem:[%s539 + $0xd0] sm:$0xf]
        %v916 = vld [vmem:[%s539 + $0xd4] sm:$0xf]
        %v917 = vld [vmem:[%s539 + $0xd8] sm:$0xf]
        %v918 = vld [vmem:[%s539 + $0xdc] sm:$0xf]
        %v919 = vld [vmem:[%s539 + $0xe0] sm:$0xf]
        %v920 = vld [vmem:[%s539 + $0xe4] sm:$0xf]
        %v921 = vld [vmem:[%s539 + $0xe8] sm:$0xf]
        %v922 = vld [vmem:[%s539 + $0xec] sm:$0xf]
        %v923 = vld [vmem:[%s539 + $0xf0] sm:$0xf]
        %v924 = vld [vmem:[%s539 + $0xf4] sm:$0xf]
        %v925 = vld [vmem:[%s539 + $0xf8] sm:$0xf]
        %v926 = vld [vmem:[%s539 + $0xfc] sm:$0xf]
        %v927 = vld [vmem:[%s539 + $0x100] sm:$0xf]
        %v928 = vld [vmem:[%s539 + $0x104] sm:$0xf]
        %v929 = vld [vmem:[%s539 + $0x108] sm:$0xf]
        %v930 = vld [vmem:[%s539 + $0x10c] sm:$0xf]
        %v931 = vld [vmem:[%s539 + $0x110] sm:$0xf]
        %v932 = vld [vmem:[%s539 + $0x114] sm:$0xf]
        %v933 = vld [vmem:[%s539 + $0x118] sm:$0xf]
        %v934 = vld [vmem:[%s539 + $0x11c] sm:$0xf]
        %v935 = vld [vmem:[%s539 + $0x120] sm:$0xf]
        %v936 = vld [vmem:[%s539 + $0x124] sm:$0xf]
        %v937 = vld [vmem:[%s539 + $0x128] sm:$0xf]
        %v938 = vld [vmem:[%s539 + $0x12c] sm:$0xf]
        %v939 = vld [vmem:[%s539 + $0x130] sm:$0xf]
        %v940 = vld [vmem:[%s539 + $0x134] sm:$0xf]
        %v941 = vld [vmem:[%s539 + $0x138] sm:$0xf]
        %v942 = vld [vmem:[%s539 + $0x13c] sm:$0xf]
        %v943 = vld [vmem:[%s539 + $0x140] sm:$0xf]
        %v944 = vld [vmem:[%s539 + $0x144] sm:$0xf]
        %v945 = vld [vmem:[%s539 + $0x148] sm:$0xf]
        %v946 = vld [vmem:[%s539 + $0x14c] sm:$0xf]
        %v947 = vld [vmem:[%s539 + $0x150] sm:$0xf]
        %v948 = vld [vmem:[%s539 + $0x154] sm:$0xf]
        %v949 = vld [vmem:[%s539 + $0x158] sm:$0xf]
        %v950 = vld [vmem:[%s539 + $0x15c] sm:$0xf]
        %v951 = vld [vmem:[%s539 + $0x160] sm:$0xf]
        %v952 = vld [vmem:[%s539 + $0x164] sm:$0xf]
        %v953 = vld [vmem:[%s539 + $0x168] sm:$0xf]
        %v954 = vld [vmem:[%s539 + $0x16c] sm:$0xf]
        %v955 = vld [vmem:[%s539 + $0x170] sm:$0xf]
        %v956 = vld [vmem:[%s539 + $0x174] sm:$0xf]
        %v957 = vld [vmem:[%s539 + $0x178] sm:$0xf]
        %v958 = vld [vmem:[%s539 + $0x17c] sm:$0xf]
        %v959 = vld [vmem:[%s539 + $0x180] sm:$0xf]
        %v960 = vld [vmem:[%s539 + $0x184] sm:$0xf]
        %v961 = vld [vmem:[%s539 + $0x188] sm:$0xf]
        %v962 = vld [vmem:[%s539 + $0x18c] sm:$0xf]
        %v963 = vld [vmem:[%s539 + $0x190] sm:$0xf]
        %v964 = vld [vmem:[%s539 + $0x194] sm:$0xf]
        %v965 = vld [vmem:[%s539 + $0x198] sm:$0xf]
        %v966 = vld [vmem:[%s539 + $0x19c] sm:$0xf]
        %v967 = vld [vmem:[%s539 + $0x1a0] sm:$0xf]
        %v968 = vld [vmem:[%s539 + $0x1a4] sm:$0xf]
        %v969 = vld [vmem:[%s539 + $0x1a8] sm:$0xf]
        %v970 = vld [vmem:[%s539 + $0x1ac] sm:$0xf]
        %v971 = vld [vmem:[%s539 + $0x1b0] sm:$0xf]
        %v972 = vld [vmem:[%s539 + $0x1b4] sm:$0xf]
        %v973 = vld [vmem:[%s539 + $0x1b8] sm:$0xf]
        %v974 = vld [vmem:[%s539 + $0x1bc] sm:$0xf]
        %v975 = vld [vmem:[%s539 + $0x1c0] sm:$0xf]
        %v976 = vld [vmem:[%s539 + $0x1c4] sm:$0xf]
        %v977 = vld [vmem:[%s539 + $0x1c8] sm:$0xf]
        %v978 = vld [vmem:[%s539 + $0x1cc] sm:$0xf]
        %v979 = vld [vmem:[%s539 + $0x1d0] sm:$0xf]
        %v980 = vld [vmem:[%s539 + $0x1d4] sm:$0xf]
        %v981 = vld [vmem:[%s539 + $0x1d8] sm:$0xf]
        %v982 = vld [vmem:[%s539 + $0x1dc] sm:$0xf]
        %v983 = vld [vmem:[%s539 + $0x1e0] sm:$0xf]
        %v984 = vld [vmem:[%s539 + $0x1e4] sm:$0xf]
        %v985 = vld [vmem:[%s539 + $0x1e8] sm:$0xf]
        %v986 = vld [vmem:[%s539 + $0x1ec] sm:$0xf]
        %v987 = vld [vmem:[%s539 + $0x1f0] sm:$0xf]
        %v988 = vld [vmem:[%s539 + $0x1f4] sm:$0xf]
        %v989 = vld [vmem:[%s539 + $0x1f8] sm:$0xf]
        %v990 = vld [vmem:[%s539 + $0x1fc] sm:$0xf]
        %v991 = vld [vmem:[%s539 + $0x200] sm:$0xf]
        %v992 = vld [vmem:[%s539 + $0x204] sm:$0xf]
        %v993 = vld [vmem:[%s539 + $0x208] sm:$0xf]
        %v994 = vld [vmem:[%s539 + $0x20c] sm:$0xf]
        %v995 = vld [vmem:[%s539 + $0x210] sm:$0xf]
        %v996 = vld [vmem:[%s539 + $0x214] sm:$0xf]
        %v997 = vld [vmem:[%s539 + $0x218] sm:$0xf]
        %v998 = vld [vmem:[%s539 + $0x21c] sm:$0xf]
        %v999 = vld [vmem:[%s539 + $0x220] sm:$0xf]
        %v1000 = vld [vmem:[%s539 + $0x224] sm:$0xf]
        %v1001 = vld [vmem:[%s539 + $0x228] sm:$0xf]
        %v1002 = vld [vmem:[%s539 + $0x22c] sm:$0xf]
        %v1003 = vld [vmem:[%s539 + $0x230] sm:$0xf]
        %v1004 = vld [vmem:[%s539 + $0x234] sm:$0xf]
        %v1005 = vld [vmem:[%s539 + $0x238] sm:$0xf]
        %v1006 = vld [vmem:[%s539 + $0x23c] sm:$0xf]
        %v1007 = vld [vmem:[%s539 + $0x240] sm:$0xf]
        %v1008 = vld [vmem:[%s539 + $0x244] sm:$0xf]
        %v1009 = vld [vmem:[%s539 + $0x248] sm:$0xf]
        %v1010 = vld [vmem:[%s539 + $0x24c] sm:$0xf]
        %v1011 = vld [vmem:[%s539 + $0x250] sm:$0xf]
        %v1012 = vld [vmem:[%s539 + $0x254] sm:$0xf]
        %v1013 = vld [vmem:[%s539 + $0x258] sm:$0xf]
        %v1014 = vld [vmem:[%s539 + $0x25c] sm:$0xf]
        %v1015 = vld [vmem:[%s539 + $0x260] sm:$0xf]
        %v1016 = vld [vmem:[%s539 + $0x264] sm:$0xf]
        %v1017 = vld [vmem:[%s539 + $0x268] sm:$0xf]
        %v1018 = vld [vmem:[%s539 + $0x26c] sm:$0xf]
        %v1019 = vld [vmem:[%s539 + $0x270] sm:$0xf]
        %v1020 = vld [vmem:[%s539 + $0x274] sm:$0xf]
        %v1021 = vld [vmem:[%s539 + $0x278] sm:$0xf]
        %v1022 = vld [vmem:[%s539 + $0x27c] sm:$0xf]
        %v1023 = vunpack.c.l.bf16 %v543
        %v1024 = vunpack.c.l.bf16 %v544
        %v1025 = vunpack.c.l.bf16 %v545
        %v1026 = vunpack.c.l.bf16 %v546
        %v1027 = vunpack.c.l.bf16 %v547
        %v1028 = vunpack.c.l.bf16 %v548
        %v1029 = vunpack.c.l.bf16 %v549
        %v1030 = vunpack.c.l.bf16 %v550
        %v1031 = vunpack.c.l.bf16 %v551
        %v1032 = vunpack.c.l.bf16 %v552
        %v1033 = vunpack.c.l.bf16 %v553
        %v1034 = vunpack.c.l.bf16 %v554
        %v1035 = vunpack.c.l.bf16 %v555
        %v1036 = vunpack.c.l.bf16 %v556
        %v1037 = vunpack.c.l.bf16 %v557
        %v1038 = vunpack.c.l.bf16 %v558
        %v1039 = vunpack.c.l.bf16 %v559
        %v1040 = vunpack.c.l.bf16 %v560
        %v1041 = vunpack.c.l.bf16 %v561
        %v1042 = vunpack.c.l.bf16 %v562
        %v1043 = vunpack.c.l.bf16 %v563
        %v1044 = vunpack.c.l.bf16 %v564
        %v1045 = vunpack.c.l.bf16 %v565
        %v1046 = vunpack.c.l.bf16 %v566
        %v1047 = vunpack.c.l.bf16 %v567
        %v1048 = vunpack.c.l.bf16 %v568
        %v1049 = vunpack.c.l.bf16 %v569
        %v1050 = vunpack.c.l.bf16 %v570
        %v1051 = vunpack.c.l.bf16 %v571
        %v1052 = vunpack.c.l.bf16 %v572
        %v1053 = vunpack.c.l.bf16 %v573
        %v1054 = vunpack.c.l.bf16 %v574
        %v1055 = vunpack.c.l.bf16 %v575
        %v1056 = vunpack.c.l.bf16 %v576
        %v1057 = vunpack.c.l.bf16 %v577
        %v1058 = vunpack.c.l.bf16 %v578
        %v1059 = vunpack.c.l.bf16 %v579
        %v1060 = vunpack.c.l.bf16 %v580
        %v1061 = vunpack.c.l.bf16 %v581
        %v1062 = vunpack.c.l.bf16 %v582
        %v1063 = vunpack.c.l.bf16 %v583
        %v1064 = vunpack.c.l.bf16 %v584
        %v1065 = vunpack.c.l.bf16 %v585
        %v1066 = vunpack.c.l.bf16 %v586
        %v1067 = vunpack.c.l.bf16 %v587
        %v1068 = vunpack.c.l.bf16 %v588
        %v1069 = vunpack.c.l.bf16 %v589
        %v1070 = vunpack.c.l.bf16 %v590
        %v1071 = vunpack.c.l.bf16 %v591
        %v1072 = vunpack.c.l.bf16 %v592
        %v1073 = vunpack.c.l.bf16 %v593
        %v1074 = vunpack.c.l.bf16 %v594
        %v1075 = vunpack.c.l.bf16 %v595
        %v1076 = vunpack.c.l.bf16 %v596
        %v1077 = vunpack.c.l.bf16 %v597
        %v1078 = vunpack.c.l.bf16 %v598
        %v1079 = vunpack.c.l.bf16 %v599
        %v1080 = vunpack.c.l.bf16 %v600
        %v1081 = vunpack.c.l.bf16 %v601
        %v1082 = vunpack.c.l.bf16 %v602
        %v1083 = vunpack.c.l.bf16 %v603
        %v1084 = vunpack.c.l.bf16 %v604
        %v1085 = vunpack.c.l.bf16 %v605
        %v1086 = vunpack.c.l.bf16 %v606
        %v1087 = vunpack.c.l.bf16 %v607
        %v1088 = vunpack.c.l.bf16 %v608
        %v1089 = vunpack.c.l.bf16 %v609
        %v1090 = vunpack.c.l.bf16 %v610
        %v1091 = vunpack.c.l.bf16 %v611
        %v1092 = vunpack.c.l.bf16 %v612
        %v1093 = vunpack.c.l.bf16 %v613
        %v1094 = vunpack.c.l.bf16 %v614
        %v1095 = vunpack.c.l.bf16 %v615
        %v1096 = vunpack.c.l.bf16 %v616
        %v1097 = vunpack.c.l.bf16 %v617
        %v1098 = vunpack.c.l.bf16 %v618
        %v1099 = vunpack.c.l.bf16 %v619
        %v1100 = vunpack.c.l.bf16 %v620
        %v1101 = vunpack.c.l.bf16 %v621
        %v1102 = vunpack.c.l.bf16 %v622
        %v1103 = vunpack.c.l.bf16 %v623
        %v1104 = vunpack.c.l.bf16 %v624
        %v1105 = vunpack.c.l.bf16 %v625
        %v1106 = vunpack.c.l.bf16 %v626
        %v1107 = vunpack.c.l.bf16 %v627
        %v1108 = vunpack.c.l.bf16 %v628
        %v1109 = vunpack.c.l.bf16 %v629
        %v1110 = vunpack.c.l.bf16 %v630
        %v1111 = vunpack.c.l.bf16 %v631
        %v1112 = vunpack.c.l.bf16 %v632
        %v1113 = vunpack.c.l.bf16 %v633
        %v1114 = vunpack.c.l.bf16 %v634
        %v1115 = vunpack.c.l.bf16 %v635
        %v1116 = vunpack.c.l.bf16 %v636
        %v1117 = vunpack.c.l.bf16 %v637
        %v1118 = vunpack.c.l.bf16 %v638
        %v1119 = vunpack.c.l.bf16 %v639
        %v1120 = vunpack.c.l.bf16 %v640
        %v1121 = vunpack.c.l.bf16 %v641
        %v1122 = vunpack.c.l.bf16 %v642
        %v1123 = vunpack.c.l.bf16 %v643
        %v1124 = vunpack.c.l.bf16 %v644
        %v1125 = vunpack.c.l.bf16 %v645
        %v1126 = vunpack.c.l.bf16 %v646
        %v1127 = vunpack.c.l.bf16 %v647
        %v1128 = vunpack.c.l.bf16 %v648
        %v1129 = vunpack.c.l.bf16 %v649
        %v1130 = vunpack.c.l.bf16 %v650
        %v1131 = vunpack.c.l.bf16 %v651
        %v1132 = vunpack.c.l.bf16 %v652
        %v1133 = vunpack.c.l.bf16 %v653
        %v1134 = vunpack.c.l.bf16 %v654
        %v1135 = vunpack.c.l.bf16 %v655
        %v1136 = vunpack.c.l.bf16 %v656
        %v1137 = vunpack.c.l.bf16 %v657
        %v1138 = vunpack.c.l.bf16 %v658
        %v1139 = vunpack.c.l.bf16 %v659
        %v1140 = vunpack.c.l.bf16 %v660
        %v1141 = vunpack.c.l.bf16 %v661
        %v1142 = vunpack.c.l.bf16 %v662
        %v1143 = vunpack.c.l.bf16 %v663
        %v1144 = vunpack.c.l.bf16 %v664
        %v1145 = vunpack.c.l.bf16 %v665
        %v1146 = vunpack.c.l.bf16 %v666
        %v1147 = vunpack.c.l.bf16 %v667
        %v1148 = vunpack.c.l.bf16 %v668
        %v1149 = vunpack.c.l.bf16 %v669
        %v1150 = vunpack.c.l.bf16 %v670
        %v1151 = vunpack.c.l.bf16 %v671
        %v1152 = vunpack.c.l.bf16 %v672
        %v1153 = vunpack.c.l.bf16 %v673
        %v1154 = vunpack.c.l.bf16 %v674
        %v1155 = vunpack.c.l.bf16 %v675
        %v1156 = vunpack.c.l.bf16 %v676
        %v1157 = vunpack.c.l.bf16 %v677
        %v1158 = vunpack.c.l.bf16 %v678
        %v1159 = vunpack.c.l.bf16 %v679
        %v1160 = vunpack.c.l.bf16 %v680
        %v1161 = vunpack.c.l.bf16 %v681
        %v1162 = vunpack.c.l.bf16 %v682
        %v1163 = vunpack.c.l.bf16 %v683
        %v1164 = vunpack.c.l.bf16 %v684
        %v1165 = vunpack.c.l.bf16 %v685
        %v1166 = vunpack.c.l.bf16 %v686
        %v1167 = vunpack.c.l.bf16 %v687
        %v1168 = vunpack.c.l.bf16 %v688
        %v1169 = vunpack.c.l.bf16 %v689
        %v1170 = vunpack.c.l.bf16 %v690
        %v1171 = vunpack.c.l.bf16 %v691
        %v1172 = vunpack.c.l.bf16 %v692
        %v1173 = vunpack.c.l.bf16 %v693
        %v1174 = vunpack.c.l.bf16 %v694
        %v1175 = vunpack.c.l.bf16 %v695
        %v1176 = vunpack.c.l.bf16 %v696
        %v1177 = vunpack.c.l.bf16 %v697
        %v1178 = vunpack.c.l.bf16 %v698
        %v1179 = vunpack.c.l.bf16 %v699
        %v1180 = vunpack.c.l.bf16 %v700
        %v1181 = vunpack.c.l.bf16 %v701
        %v1182 = vunpack.c.l.bf16 %v702
        %v1183 = vunpack.c.l.bf16 %v863
        %v1184 = vunpack.c.l.bf16 %v864
        %v1185 = vunpack.c.l.bf16 %v865
        %v1186 = vunpack.c.l.bf16 %v866
        %v1187 = vunpack.c.l.bf16 %v867
        %v1188 = vunpack.c.l.bf16 %v868
        %v1189 = vunpack.c.l.bf16 %v869
        %v1190 = vunpack.c.l.bf16 %v870
        %v1191 = vunpack.c.l.bf16 %v871
        %v1192 = vunpack.c.l.bf16 %v872
        %v1193 = vunpack.c.l.bf16 %v873
        %v1194 = vunpack.c.l.bf16 %v874
        %v1195 = vunpack.c.l.bf16 %v875
        %v1196 = vunpack.c.l.bf16 %v876
        %v1197 = vunpack.c.l.bf16 %v877
        %v1198 = vunpack.c.l.bf16 %v878
        %v1199 = vunpack.c.l.bf16 %v879
        %v1200 = vunpack.c.l.bf16 %v880
        %v1201 = vunpack.c.l.bf16 %v881
        %v1202 = vunpack.c.l.bf16 %v882
        %v1203 = vunpack.c.l.bf16 %v883
        %v1204 = vunpack.c.l.bf16 %v884
        %v1205 = vunpack.c.l.bf16 %v885
        %v1206 = vunpack.c.l.bf16 %v886
        %v1207 = vunpack.c.l.bf16 %v887
        %v1208 = vunpack.c.l.bf16 %v888
        %v1209 = vunpack.c.l.bf16 %v889
        %v1210 = vunpack.c.l.bf16 %v890
        %v1211 = vunpack.c.l.bf16 %v891
        %v1212 = vunpack.c.l.bf16 %v892
        %v1213 = vunpack.c.l.bf16 %v893
        %v1214 = vunpack.c.l.bf16 %v894
        %v1215 = vunpack.c.l.bf16 %v895
        %v1216 = vunpack.c.l.bf16 %v896
        %v1217 = vunpack.c.l.bf16 %v897
        %v1218 = vunpack.c.l.bf16 %v898
        %v1219 = vunpack.c.l.bf16 %v899
        %v1220 = vunpack.c.l.bf16 %v900
        %v1221 = vunpack.c.l.bf16 %v901
        %v1222 = vunpack.c.l.bf16 %v902
        %v1223 = vunpack.c.l.bf16 %v903
        %v1224 = vunpack.c.l.bf16 %v904
        %v1225 = vunpack.c.l.bf16 %v905
        %v1226 = vunpack.c.l.bf16 %v906
        %v1227 = vunpack.c.l.bf16 %v907
        %v1228 = vunpack.c.l.bf16 %v908
        %v1229 = vunpack.c.l.bf16 %v909
        %v1230 = vunpack.c.l.bf16 %v910
        %v1231 = vunpack.c.l.bf16 %v911
        %v1232 = vunpack.c.l.bf16 %v912
        %v1233 = vunpack.c.l.bf16 %v913
        %v1234 = vunpack.c.l.bf16 %v914
        %v1235 = vunpack.c.l.bf16 %v915
        %v1236 = vunpack.c.l.bf16 %v916
        %v1237 = vunpack.c.l.bf16 %v917
        %v1238 = vunpack.c.l.bf16 %v918
        %v1239 = vunpack.c.l.bf16 %v919
        %v1240 = vunpack.c.l.bf16 %v920
        %v1241 = vunpack.c.l.bf16 %v921
        %v1242 = vunpack.c.l.bf16 %v922
        %v1243 = vunpack.c.l.bf16 %v923
        %v1244 = vunpack.c.l.bf16 %v924
        %v1245 = vunpack.c.l.bf16 %v925
        %v1246 = vunpack.c.l.bf16 %v926
        %v1247 = vunpack.c.l.bf16 %v927
        %v1248 = vunpack.c.l.bf16 %v928
        %v1249 = vunpack.c.l.bf16 %v929
        %v1250 = vunpack.c.l.bf16 %v930
        %v1251 = vunpack.c.l.bf16 %v931
        %v1252 = vunpack.c.l.bf16 %v932
        %v1253 = vunpack.c.l.bf16 %v933
        %v1254 = vunpack.c.l.bf16 %v934
        %v1255 = vunpack.c.l.bf16 %v935
        %v1256 = vunpack.c.l.bf16 %v936
        %v1257 = vunpack.c.l.bf16 %v937
        %v1258 = vunpack.c.l.bf16 %v938
        %v1259 = vunpack.c.l.bf16 %v939
        %v1260 = vunpack.c.l.bf16 %v940
        %v1261 = vunpack.c.l.bf16 %v941
        %v1262 = vunpack.c.l.bf16 %v942
        %v1263 = vunpack.c.l.bf16 %v943
        %v1264 = vunpack.c.l.bf16 %v944
        %v1265 = vunpack.c.l.bf16 %v945
        %v1266 = vunpack.c.l.bf16 %v946
        %v1267 = vunpack.c.l.bf16 %v947
        %v1268 = vunpack.c.l.bf16 %v948
        %v1269 = vunpack.c.l.bf16 %v949
        %v1270 = vunpack.c.l.bf16 %v950
        %v1271 = vunpack.c.l.bf16 %v951
        %v1272 = vunpack.c.l.bf16 %v952
        %v1273 = vunpack.c.l.bf16 %v953
        %v1274 = vunpack.c.l.bf16 %v954
        %v1275 = vunpack.c.l.bf16 %v955
        %v1276 = vunpack.c.l.bf16 %v956
        %v1277 = vunpack.c.l.bf16 %v957
        %v1278 = vunpack.c.l.bf16 %v958
        %v1279 = vunpack.c.l.bf16 %v959
        %v1280 = vunpack.c.l.bf16 %v960
        %v1281 = vunpack.c.l.bf16 %v961
        %v1282 = vunpack.c.l.bf16 %v962
        %v1283 = vunpack.c.l.bf16 %v963
        %v1284 = vunpack.c.l.bf16 %v964
        %v1285 = vunpack.c.l.bf16 %v965
        %v1286 = vunpack.c.l.bf16 %v966
        %v1287 = vunpack.c.l.bf16 %v967
        %v1288 = vunpack.c.l.bf16 %v968
        %v1289 = vunpack.c.l.bf16 %v969
        %v1290 = vunpack.c.l.bf16 %v970
        %v1291 = vunpack.c.l.bf16 %v971
        %v1292 = vunpack.c.l.bf16 %v972
        %v1293 = vunpack.c.l.bf16 %v973
        %v1294 = vunpack.c.l.bf16 %v974
        %v1295 = vunpack.c.l.bf16 %v975
        %v1296 = vunpack.c.l.bf16 %v976
        %v1297 = vunpack.c.l.bf16 %v977
        %v1298 = vunpack.c.l.bf16 %v978
        %v1299 = vunpack.c.l.bf16 %v979
        %v1300 = vunpack.c.l.bf16 %v980
        %v1301 = vunpack.c.l.bf16 %v981
        %v1302 = vunpack.c.l.bf16 %v982
        %v1303 = vunpack.c.l.bf16 %v983
        %v1304 = vunpack.c.l.bf16 %v984
        %v1305 = vunpack.c.l.bf16 %v985
        %v1306 = vunpack.c.l.bf16 %v986
        %v1307 = vunpack.c.l.bf16 %v987
        %v1308 = vunpack.c.l.bf16 %v988
        %v1309 = vunpack.c.l.bf16 %v989
        %v1310 = vunpack.c.l.bf16 %v990
        %v1311 = vunpack.c.l.bf16 %v991
        %v1312 = vunpack.c.l.bf16 %v992
        %v1313 = vunpack.c.l.bf16 %v993
        %v1314 = vunpack.c.l.bf16 %v994
        %v1315 = vunpack.c.l.bf16 %v995
        %v1316 = vunpack.c.l.bf16 %v996
        %v1317 = vunpack.c.l.bf16 %v997
        %v1318 = vunpack.c.l.bf16 %v998
        %v1319 = vunpack.c.l.bf16 %v999
        %v1320 = vunpack.c.l.bf16 %v1000
        %v1321 = vunpack.c.l.bf16 %v1001
        %v1322 = vunpack.c.l.bf16 %v1002
        %v1323 = vunpack.c.l.bf16 %v1003
        %v1324 = vunpack.c.l.bf16 %v1004
        %v1325 = vunpack.c.l.bf16 %v1005
        %v1326 = vunpack.c.l.bf16 %v1006
        %v1327 = vunpack.c.l.bf16 %v1007
        %v1328 = vunpack.c.l.bf16 %v1008
        %v1329 = vunpack.c.l.bf16 %v1009
        %v1330 = vunpack.c.l.bf16 %v1010
        %v1331 = vunpack.c.l.bf16 %v1011
        %v1332 = vunpack.c.l.bf16 %v1012
        %v1333 = vunpack.c.l.bf16 %v1013
        %v1334 = vunpack.c.l.bf16 %v1014
        %v1335 = vunpack.c.l.bf16 %v1015
        %v1336 = vunpack.c.l.bf16 %v1016
        %v1337 = vunpack.c.l.bf16 %v1017
        %v1338 = vunpack.c.l.bf16 %v1018
        %v1339 = vunpack.c.l.bf16 %v1019
        %v1340 = vunpack.c.l.bf16 %v1020
        %v1341 = vunpack.c.l.bf16 %v1021
        %v1342 = vunpack.c.l.bf16 %v1022
        %v1343 = vmul.f32 %v1023, %v1183
        %v1344 = vmul.f32 %v1024, %v1184
        %v1345 = vmul.f32 %v1025, %v1185
        %v1346 = vmul.f32 %v1026, %v1186
        %v1347 = vmul.f32 %v1027, %v1187
        %v1348 = vmul.f32 %v1028, %v1188
        %v1349 = vmul.f32 %v1029, %v1189
        %v1350 = vmul.f32 %v1030, %v1190
        %v1351 = vmul.f32 %v1031, %v1191
        %v1352 = vmul.f32 %v1032, %v1192
        %v1353 = vmul.f32 %v1033, %v1193
        %v1354 = vmul.f32 %v1034, %v1194
        %v1355 = vmul.f32 %v1035, %v1195
        %v1356 = vmul.f32 %v1036, %v1196
        %v1357 = vmul.f32 %v1037, %v1197
        %v1358 = vmul.f32 %v1038, %v1198
        %v1359 = vmul.f32 %v1039, %v1199
        %v1360 = vmul.f32 %v1040, %v1200
        %v1361 = vmul.f32 %v1041, %v1201
        %v1362 = vmul.f32 %v1042, %v1202
        %v1363 = vmul.f32 %v1043, %v1203
        %v1364 = vmul.f32 %v1044, %v1204
        %v1365 = vmul.f32 %v1045, %v1205
        %v1366 = vmul.f32 %v1046, %v1206
        %v1367 = vmul.f32 %v1047, %v1207
        %v1368 = vmul.f32 %v1048, %v1208
        %v1369 = vmul.f32 %v1049, %v1209
        %v1370 = vmul.f32 %v1050, %v1210
        %v1371 = vmul.f32 %v1051, %v1211
        %v1372 = vmul.f32 %v1052, %v1212
        %v1373 = vmul.f32 %v1053, %v1213
        %v1374 = vmul.f32 %v1054, %v1214
        %v1375 = vmul.f32 %v1055, %v1215
        %v1376 = vmul.f32 %v1056, %v1216
        %v1377 = vmul.f32 %v1057, %v1217
        %v1378 = vmul.f32 %v1058, %v1218
        %v1379 = vmul.f32 %v1059, %v1219
        %v1380 = vmul.f32 %v1060, %v1220
        %v1381 = vmul.f32 %v1061, %v1221
        %v1382 = vmul.f32 %v1062, %v1222
        %v1383 = vmul.f32 %v1063, %v1223
        %v1384 = vmul.f32 %v1064, %v1224
        %v1385 = vmul.f32 %v1065, %v1225
        %v1386 = vmul.f32 %v1066, %v1226
        %v1387 = vmul.f32 %v1067, %v1227
        %v1388 = vmul.f32 %v1068, %v1228
        %v1389 = vmul.f32 %v1069, %v1229
        %v1390 = vmul.f32 %v1070, %v1230
        %v1391 = vmul.f32 %v1071, %v1231
        %v1392 = vmul.f32 %v1072, %v1232
        %v1393 = vmul.f32 %v1073, %v1233
        %v1394 = vmul.f32 %v1074, %v1234
        %v1395 = vmul.f32 %v1075, %v1235
        %v1396 = vmul.f32 %v1076, %v1236
        %v1397 = vmul.f32 %v1077, %v1237
        %v1398 = vmul.f32 %v1078, %v1238
        %v1399 = vmul.f32 %v1079, %v1239
        %v1400 = vmul.f32 %v1080, %v1240
        %v1401 = vmul.f32 %v1081, %v1241
        %v1402 = vmul.f32 %v1082, %v1242
        %v1403 = vmul.f32 %v1083, %v1243
        %v1404 = vmul.f32 %v1084, %v1244
        %v1405 = vmul.f32 %v1085, %v1245
        %v1406 = vmul.f32 %v1086, %v1246
        %v1407 = vmul.f32 %v1087, %v1247
        %v1408 = vmul.f32 %v1088, %v1248
        %v1409 = vmul.f32 %v1089, %v1249
        %v1410 = vmul.f32 %v1090, %v1250
        %v1411 = vmul.f32 %v1091, %v1251
        %v1412 = vmul.f32 %v1092, %v1252
        %v1413 = vmul.f32 %v1093, %v1253
        %v1414 = vmul.f32 %v1094, %v1254
        %v1415 = vmul.f32 %v1095, %v1255
        %v1416 = vmul.f32 %v1096, %v1256
        %v1417 = vmul.f32 %v1097, %v1257
        %v1418 = vmul.f32 %v1098, %v1258
        %v1419 = vmul.f32 %v1099, %v1259
        %v1420 = vmul.f32 %v1100, %v1260
        %v1421 = vmul.f32 %v1101, %v1261
        %v1422 = vmul.f32 %v1102, %v1262
        %v1423 = vmul.f32 %v1103, %v1263
        %v1424 = vmul.f32 %v1104, %v1264
        %v1425 = vmul.f32 %v1105, %v1265
        %v1426 = vmul.f32 %v1106, %v1266
        %v1427 = vmul.f32 %v1107, %v1267
        %v1428 = vmul.f32 %v1108, %v1268
        %v1429 = vmul.f32 %v1109, %v1269
        %v1430 = vmul.f32 %v1110, %v1270
        %v1431 = vmul.f32 %v1111, %v1271
        %v1432 = vmul.f32 %v1112, %v1272
        %v1433 = vmul.f32 %v1113, %v1273
        %v1434 = vmul.f32 %v1114, %v1274
        %v1435 = vmul.f32 %v1115, %v1275
        %v1436 = vmul.f32 %v1116, %v1276
        %v1437 = vmul.f32 %v1117, %v1277
        %v1438 = vmul.f32 %v1118, %v1278
        %v1439 = vmul.f32 %v1119, %v1279
        %v1440 = vmul.f32 %v1120, %v1280
        %v1441 = vmul.f32 %v1121, %v1281
        %v1442 = vmul.f32 %v1122, %v1282
        %v1443 = vmul.f32 %v1123, %v1283
        %v1444 = vmul.f32 %v1124, %v1284
        %v1445 = vmul.f32 %v1125, %v1285
        %v1446 = vmul.f32 %v1126, %v1286
        %v1447 = vmul.f32 %v1127, %v1287
        %v1448 = vmul.f32 %v1128, %v1288
        %v1449 = vmul.f32 %v1129, %v1289
        %v1450 = vmul.f32 %v1130, %v1290
        %v1451 = vmul.f32 %v1131, %v1291
        %v1452 = vmul.f32 %v1132, %v1292
        %v1453 = vmul.f32 %v1133, %v1293
        %v1454 = vmul.f32 %v1134, %v1294
        %v1455 = vmul.f32 %v1135, %v1295
        %v1456 = vmul.f32 %v1136, %v1296
        %v1457 = vmul.f32 %v1137, %v1297
        %v1458 = vmul.f32 %v1138, %v1298
        %v1459 = vmul.f32 %v1139, %v1299
        %v1460 = vmul.f32 %v1140, %v1300
        %v1461 = vmul.f32 %v1141, %v1301
        %v1462 = vmul.f32 %v1142, %v1302
        %v1463 = vmul.f32 %v1143, %v1303
        %v1464 = vmul.f32 %v1144, %v1304
        %v1465 = vmul.f32 %v1145, %v1305
        %v1466 = vmul.f32 %v1146, %v1306
        %v1467 = vmul.f32 %v1147, %v1307
        %v1468 = vmul.f32 %v1148, %v1308
        %v1469 = vmul.f32 %v1149, %v1309
        %v1470 = vmul.f32 %v1150, %v1310
        %v1471 = vmul.f32 %v1151, %v1311
        %v1472 = vmul.f32 %v1152, %v1312
        %v1473 = vmul.f32 %v1153, %v1313
        %v1474 = vmul.f32 %v1154, %v1314
        %v1475 = vmul.f32 %v1155, %v1315
        %v1476 = vmul.f32 %v1156, %v1316
        %v1477 = vmul.f32 %v1157, %v1317
        %v1478 = vmul.f32 %v1158, %v1318
        %v1479 = vmul.f32 %v1159, %v1319
        %v1480 = vmul.f32 %v1160, %v1320
        %v1481 = vmul.f32 %v1161, %v1321
        %v1482 = vmul.f32 %v1162, %v1322
        %v1483 = vmul.f32 %v1163, %v1323
        %v1484 = vmul.f32 %v1164, %v1324
        %v1485 = vmul.f32 %v1165, %v1325
        %v1486 = vmul.f32 %v1166, %v1326
        %v1487 = vmul.f32 %v1167, %v1327
        %v1488 = vmul.f32 %v1168, %v1328
        %v1489 = vmul.f32 %v1169, %v1329
        %v1490 = vmul.f32 %v1170, %v1330
        %v1491 = vmul.f32 %v1171, %v1331
        %v1492 = vmul.f32 %v1172, %v1332
        %v1493 = vmul.f32 %v1173, %v1333
        %v1494 = vmul.f32 %v1174, %v1334
        %v1495 = vmul.f32 %v1175, %v1335
        %v1496 = vmul.f32 %v1176, %v1336
        %v1497 = vmul.f32 %v1177, %v1337
        %v1498 = vmul.f32 %v1178, %v1338
        %v1499 = vmul.f32 %v1179, %v1339
        %v1500 = vmul.f32 %v1180, %v1340
        %v1501 = vmul.f32 %v1181, %v1341
        %v1502 = vmul.f32 %v1182, %v1342
        %v1503 = vpack.c.bf16 %v1344, %v1343
        %v1504 = vpack.c.bf16 %v1346, %v1345
        %v1505 = vpack.c.bf16 %v1348, %v1347
        %v1506 = vpack.c.bf16 %v1350, %v1349
        %v1507 = vpack.c.bf16 %v1352, %v1351
        %v1508 = vpack.c.bf16 %v1354, %v1353
        %v1509 = vpack.c.bf16 %v1356, %v1355
        %v1510 = vpack.c.bf16 %v1358, %v1357
        %v1511 = vpack.c.bf16 %v1360, %v1359
        %v1512 = vpack.c.bf16 %v1362, %v1361
        %v1513 = vpack.c.bf16 %v1364, %v1363
        %v1514 = vpack.c.bf16 %v1366, %v1365
        %v1515 = vpack.c.bf16 %v1368, %v1367
        %v1516 = vpack.c.bf16 %v1370, %v1369
        %v1517 = vpack.c.bf16 %v1372, %v1371
        %v1518 = vpack.c.bf16 %v1374, %v1373
        %v1519 = vpack.c.bf16 %v1376, %v1375
        %v1520 = vpack.c.bf16 %v1378, %v1377
        %v1521 = vpack.c.bf16 %v1380, %v1379
        %v1522 = vpack.c.bf16 %v1382, %v1381
        %v1523 = vpack.c.bf16 %v1384, %v1383
        %v1524 = vpack.c.bf16 %v1386, %v1385
        %v1525 = vpack.c.bf16 %v1388, %v1387
        %v1526 = vpack.c.bf16 %v1390, %v1389
        %v1527 = vpack.c.bf16 %v1392, %v1391
        %v1528 = vpack.c.bf16 %v1394, %v1393
        %v1529 = vpack.c.bf16 %v1396, %v1395
        %v1530 = vpack.c.bf16 %v1398, %v1397
        %v1531 = vpack.c.bf16 %v1400, %v1399
        %v1532 = vpack.c.bf16 %v1402, %v1401
        %v1533 = vpack.c.bf16 %v1404, %v1403
        %v1534 = vpack.c.bf16 %v1406, %v1405
        %v1535 = vpack.c.bf16 %v1408, %v1407
        %v1536 = vpack.c.bf16 %v1410, %v1409
        %v1537 = vpack.c.bf16 %v1412, %v1411
        %v1538 = vpack.c.bf16 %v1414, %v1413
        %v1539 = vpack.c.bf16 %v1416, %v1415
        %v1540 = vpack.c.bf16 %v1418, %v1417
        %v1541 = vpack.c.bf16 %v1420, %v1419
        %v1542 = vpack.c.bf16 %v1422, %v1421
        %v1543 = vpack.c.bf16 %v1424, %v1423
        %v1544 = vpack.c.bf16 %v1426, %v1425
        %v1545 = vpack.c.bf16 %v1428, %v1427
        %v1546 = vpack.c.bf16 %v1430, %v1429
        %v1547 = vpack.c.bf16 %v1432, %v1431
        %v1548 = vpack.c.bf16 %v1434, %v1433
        %v1549 = vpack.c.bf16 %v1436, %v1435
        %v1550 = vpack.c.bf16 %v1438, %v1437
        %v1551 = vpack.c.bf16 %v1440, %v1439
        %v1552 = vpack.c.bf16 %v1442, %v1441
        %v1553 = vpack.c.bf16 %v1444, %v1443
        %v1554 = vpack.c.bf16 %v1446, %v1445
        %v1555 = vpack.c.bf16 %v1448, %v1447
        %v1556 = vpack.c.bf16 %v1450, %v1449
        %v1557 = vpack.c.bf16 %v1452, %v1451
        %v1558 = vpack.c.bf16 %v1454, %v1453
        %v1559 = vpack.c.bf16 %v1456, %v1455
        %v1560 = vpack.c.bf16 %v1458, %v1457
        %v1561 = vpack.c.bf16 %v1460, %v1459
        %v1562 = vpack.c.bf16 %v1462, %v1461
        %v1563 = vpack.c.bf16 %v1464, %v1463
        %v1564 = vpack.c.bf16 %v1466, %v1465
        %v1565 = vpack.c.bf16 %v1468, %v1467
        %v1566 = vpack.c.bf16 %v1470, %v1469
        %v1567 = vpack.c.bf16 %v1472, %v1471
        %v1568 = vpack.c.bf16 %v1474, %v1473
        %v1569 = vpack.c.bf16 %v1476, %v1475
        %v1570 = vpack.c.bf16 %v1478, %v1477
        %v1571 = vpack.c.bf16 %v1480, %v1479
        %v1572 = vpack.c.bf16 %v1482, %v1481
        %v1573 = vpack.c.bf16 %v1484, %v1483
        %v1574 = vpack.c.bf16 %v1486, %v1485
        %v1575 = vpack.c.bf16 %v1488, %v1487
        %v1576 = vpack.c.bf16 %v1490, %v1489
        %v1577 = vpack.c.bf16 %v1492, %v1491
        %v1578 = vpack.c.bf16 %v1494, %v1493
        %v1579 = vpack.c.bf16 %v1496, %v1495
        %v1580 = vpack.c.bf16 %v1498, %v1497
        %v1581 = vpack.c.bf16 %v1500, %v1499
        %v1582 = vpack.c.bf16 %v1502, %v1501
        %v1583 = vld [vmem:[%s3] sm:$0xf]
        %v1584 = vld [vmem:[%s3 + $0x4] sm:$0xf]
        %v1585 = vld [vmem:[%s3 + $0x8] sm:$0xf]
        %v1586 = vld [vmem:[%s3 + $0xc] sm:$0xf]
        %v1587 = vld [vmem:[%s3 + $0x10] sm:$0xf]
        %v1588 = vld [vmem:[%s3 + $0x14] sm:$0xf]
        %v1589 = vld [vmem:[%s3 + $0x18] sm:$0xf]
        %v1590 = vld [vmem:[%s3 + $0x1c] sm:$0xf]
        %v1591 = vld [vmem:[%s3 + $0x20] sm:$0xf]
        %v1592 = vld [vmem:[%s3 + $0x24] sm:$0xf]
        %v1593 = vld [vmem:[%s3 + $0x28] sm:$0xf]
        %v1594 = vld [vmem:[%s3 + $0x2c] sm:$0xf]
        %v1595 = vld [vmem:[%s3 + $0x30] sm:$0xf]
        %v1596 = vld [vmem:[%s3 + $0x34] sm:$0xf]
        %v1597 = vld [vmem:[%s3 + $0x38] sm:$0xf]
        %v1598 = vld [vmem:[%s3 + $0x3c] sm:$0xf]
        %v1599 = vld [vmem:[%s3 + $0x40] sm:$0xf]
        %v1600 = vld [vmem:[%s3 + $0x44] sm:$0xf]
        %v1601 = vld [vmem:[%s3 + $0x48] sm:$0xf]
        %v1602 = vld [vmem:[%s3 + $0x4c] sm:$0xf]
        %v1603 = vld [vmem:[%s3 + $0x50] sm:$0xf]
        %v1604 = vld [vmem:[%s3 + $0x54] sm:$0xf]
        %v1605 = vld [vmem:[%s3 + $0x58] sm:$0xf]
        %v1606 = vld [vmem:[%s3 + $0x5c] sm:$0xf]
        %v1607 = vld [vmem:[%s3 + $0x60] sm:$0xf]
        %v1608 = vld [vmem:[%s3 + $0x64] sm:$0xf]
        %v1609 = vld [vmem:[%s3 + $0x68] sm:$0xf]
        %v1610 = vld [vmem:[%s3 + $0x6c] sm:$0xf]
        %v1611 = vld [vmem:[%s3 + $0x70] sm:$0xf]
        %v1612 = vld [vmem:[%s3 + $0x74] sm:$0xf]
        %v1613 = vld [vmem:[%s3 + $0x78] sm:$0xf]
        %v1614 = vld [vmem:[%s3 + $0x7c] sm:$0xf]
        %v1615 = vld [vmem:[%s4] sm:$0xf]
        %v1616 = vld [vmem:[%s4 + $0x4] sm:$0xf]
        %v1617 = vld [vmem:[%s4 + $0x8] sm:$0xf]
        %v1618 = vld [vmem:[%s4 + $0xc] sm:$0xf]
        %v1619 = vld [vmem:[%s4 + $0x10] sm:$0xf]
        %v1620 = vld [vmem:[%s4 + $0x14] sm:$0xf]
        %v1621 = vld [vmem:[%s4 + $0x18] sm:$0xf]
        %v1622 = vld [vmem:[%s4 + $0x1c] sm:$0xf]
        %v1623 = vld [vmem:[%s4 + $0x20] sm:$0xf]
        %v1624 = vld [vmem:[%s4 + $0x24] sm:$0xf]
        %v1625 = vld [vmem:[%s4 + $0x28] sm:$0xf]
        %v1626 = vld [vmem:[%s4 + $0x2c] sm:$0xf]
        %v1627 = vld [vmem:[%s4 + $0x30] sm:$0xf]
        %v1628 = vld [vmem:[%s4 + $0x34] sm:$0xf]
        %v1629 = vld [vmem:[%s4 + $0x38] sm:$0xf]
        %v1630 = vld [vmem:[%s4 + $0x3c] sm:$0xf]
        %v1631 = vld [vmem:[%s4 + $0x40] sm:$0xf]
        %v1632 = vld [vmem:[%s4 + $0x44] sm:$0xf]
        %v1633 = vld [vmem:[%s4 + $0x48] sm:$0xf]
        %v1634 = vld [vmem:[%s4 + $0x4c] sm:$0xf]
        %v1635 = vld [vmem:[%s4 + $0x50] sm:$0xf]
        %v1636 = vld [vmem:[%s4 + $0x54] sm:$0xf]
        %v1637 = vld [vmem:[%s4 + $0x58] sm:$0xf]
        %v1638 = vld [vmem:[%s4 + $0x5c] sm:$0xf]
        %v1639 = vld [vmem:[%s4 + $0x60] sm:$0xf]
        %v1640 = vld [vmem:[%s4 + $0x64] sm:$0xf]
        %v1641 = vld [vmem:[%s4 + $0x68] sm:$0xf]
        %v1642 = vld [vmem:[%s4 + $0x6c] sm:$0xf]
        %v1643 = vld [vmem:[%s4 + $0x70] sm:$0xf]
        %v1644 = vld [vmem:[%s4 + $0x74] sm:$0xf]
        %v1645 = vld [vmem:[%s4 + $0x78] sm:$0xf]
        %v1646 = vld [vmem:[%s4 + $0x7c] sm:$0xf]
        %v1679 = vunpack.c.l.b16 %v1615
        %v1680 = vunpack.c.l.b16 %v1616
        %v1681 = vunpack.c.l.b16 %v1617
        %v1682 = vunpack.c.l.b16 %v1618
        %v1683 = vunpack.c.l.b16 %v1619
        %v1684 = vunpack.c.l.b16 %v1620
        %v1685 = vunpack.c.l.b16 %v1621
        %v1686 = vunpack.c.l.b16 %v1622
        %v1687 = vunpack.c.l.b16 %v1623
        %v1688 = vunpack.c.l.b16 %v1624
        %v1689 = vunpack.c.l.b16 %v1625
        %v1690 = vunpack.c.l.b16 %v1626
        %v1691 = vunpack.c.l.b16 %v1627
        %v1692 = vunpack.c.l.b16 %v1628
        %v1693 = vunpack.c.l.b16 %v1629
        %v1694 = vunpack.c.l.b16 %v1630
        %v1695 = vunpack.c.l.b16 %v1631
        %v1696 = vunpack.c.l.b16 %v1632
        %v1697 = vunpack.c.l.b16 %v1633
        %v1698 = vunpack.c.l.b16 %v1634
        %v1699 = vunpack.c.l.b16 %v1635
        %v1700 = vunpack.c.l.b16 %v1636
        %v1701 = vunpack.c.l.b16 %v1637
        %v1702 = vunpack.c.l.b16 %v1638
        %v1703 = vunpack.c.l.b16 %v1639
        %v1704 = vunpack.c.l.b16 %v1640
        %v1705 = vunpack.c.l.b16 %v1641
        %v1706 = vunpack.c.l.b16 %v1642
        %v1707 = vunpack.c.l.b16 %v1643
        %v1708 = vunpack.c.l.b16 %v1644
        %v1709 = vunpack.c.l.b16 %v1645
        %v1710 = vunpack.c.l.b16 %v1646
        %v1711 = vpack.c.b16 %v1680, %v1679
        %v1712 = vpack.c.b16 %v1682, %v1681
        %v1713 = vpack.c.b16 %v1684, %v1683
        %v1714 = vpack.c.b16 %v1686, %v1685
        %v1715 = vpack.c.b16 %v1688, %v1687
        %v1716 = vpack.c.b16 %v1690, %v1689
        %v1717 = vpack.c.b16 %v1692, %v1691
        %v1718 = vpack.c.b16 %v1694, %v1693
        %v1719 = vpack.c.b16 %v1696, %v1695
        %v1720 = vpack.c.b16 %v1698, %v1697
        %v1721 = vpack.c.b16 %v1700, %v1699
        %v1722 = vpack.c.b16 %v1702, %v1701
        %v1723 = vpack.c.b16 %v1704, %v1703
        %v1724 = vpack.c.b16 %v1706, %v1705
        %v1725 = vpack.c.b16 %v1708, %v1707
        %v1726 = vpack.c.b16 %v1710, %v1709
        %v1887 = vunpack.c.l.b16 %v863
        %v1888 = vunpack.c.l.b16 %v864
        %v1889 = vunpack.c.l.b16 %v865
        %v1890 = vunpack.c.l.b16 %v866
        %v1891 = vunpack.c.l.b16 %v867
        %v1892 = vunpack.c.l.b16 %v868
        %v1893 = vunpack.c.l.b16 %v869
        %v1894 = vunpack.c.l.b16 %v870
        %v1895 = vunpack.c.l.b16 %v871
        %v1896 = vunpack.c.l.b16 %v872
        %v1897 = vunpack.c.l.b16 %v873
        %v1898 = vunpack.c.l.b16 %v874
        %v1899 = vunpack.c.l.b16 %v875
        %v1900 = vunpack.c.l.b16 %v876
        %v1901 = vunpack.c.l.b16 %v877
        %v1902 = vunpack.c.l.b16 %v878
        %v1903 = vunpack.c.l.b16 %v879
        %v1904 = vunpack.c.l.b16 %v880
        %v1905 = vunpack.c.l.b16 %v881
        %v1906 = vunpack.c.l.b16 %v882
        %v1907 = vunpack.c.l.b16 %v883
        %v1908 = vunpack.c.l.b16 %v884
        %v1909 = vunpack.c.l.b16 %v885
        %v1910 = vunpack.c.l.b16 %v886
        %v1911 = vunpack.c.l.b16 %v887
        %v1912 = vunpack.c.l.b16 %v888
        %v1913 = vunpack.c.l.b16 %v889
        %v1914 = vunpack.c.l.b16 %v890
        %v1915 = vunpack.c.l.b16 %v891
        %v1916 = vunpack.c.l.b16 %v892
        %v1917 = vunpack.c.l.b16 %v893
        %v1918 = vunpack.c.l.b16 %v894
        %v1919 = vunpack.c.l.b16 %v895
        %v1920 = vunpack.c.l.b16 %v896
        %v1921 = vunpack.c.l.b16 %v897
        %v1922 = vunpack.c.l.b16 %v898
        %v1923 = vunpack.c.l.b16 %v899
        %v1924 = vunpack.c.l.b16 %v900
        %v1925 = vunpack.c.l.b16 %v901
        %v1926 = vunpack.c.l.b16 %v902
        %v1927 = vunpack.c.l.b16 %v903
        %v1928 = vunpack.c.l.b16 %v904
        %v1929 = vunpack.c.l.b16 %v905
        %v1930 = vunpack.c.l.b16 %v906
        %v1931 = vunpack.c.l.b16 %v907
        %v1932 = vunpack.c.l.b16 %v908
        %v1933 = vunpack.c.l.b16 %v909
        %v1934 = vunpack.c.l.b16 %v910
        %v1935 = vunpack.c.l.b16 %v911
        %v1936 = vunpack.c.l.b16 %v912
        %v1937 = vunpack.c.l.b16 %v913
        %v1938 = vunpack.c.l.b16 %v914
        %v1939 = vunpack.c.l.b16 %v915
        %v1940 = vunpack.c.l.b16 %v916
        %v1941 = vunpack.c.l.b16 %v917
        %v1942 = vunpack.c.l.b16 %v918
        %v1943 = vunpack.c.l.b16 %v919
        %v1944 = vunpack.c.l.b16 %v920
        %v1945 = vunpack.c.l.b16 %v921
        %v1946 = vunpack.c.l.b16 %v922
        %v1947 = vunpack.c.l.b16 %v923
        %v1948 = vunpack.c.l.b16 %v924
        %v1949 = vunpack.c.l.b16 %v925
        %v1950 = vunpack.c.l.b16 %v926
        %v1951 = vunpack.c.l.b16 %v927
        %v1952 = vunpack.c.l.b16 %v928
        %v1953 = vunpack.c.l.b16 %v929
        %v1954 = vunpack.c.l.b16 %v930
        %v1955 = vunpack.c.l.b16 %v931
        %v1956 = vunpack.c.l.b16 %v932
        %v1957 = vunpack.c.l.b16 %v933
        %v1958 = vunpack.c.l.b16 %v934
        %v1959 = vunpack.c.l.b16 %v935
        %v1960 = vunpack.c.l.b16 %v936
        %v1961 = vunpack.c.l.b16 %v937
        %v1962 = vunpack.c.l.b16 %v938
        %v1963 = vunpack.c.l.b16 %v939
        %v1964 = vunpack.c.l.b16 %v940
        %v1965 = vunpack.c.l.b16 %v941
        %v1966 = vunpack.c.l.b16 %v942
        %v1967 = vunpack.c.l.b16 %v943
        %v1968 = vunpack.c.l.b16 %v944
        %v1969 = vunpack.c.l.b16 %v945
        %v1970 = vunpack.c.l.b16 %v946
        %v1971 = vunpack.c.l.b16 %v947
        %v1972 = vunpack.c.l.b16 %v948
        %v1973 = vunpack.c.l.b16 %v949
        %v1974 = vunpack.c.l.b16 %v950
        %v1975 = vunpack.c.l.b16 %v951
        %v1976 = vunpack.c.l.b16 %v952
        %v1977 = vunpack.c.l.b16 %v953
        %v1978 = vunpack.c.l.b16 %v954
        %v1979 = vunpack.c.l.b16 %v955
        %v1980 = vunpack.c.l.b16 %v956
        %v1981 = vunpack.c.l.b16 %v957
        %v1982 = vunpack.c.l.b16 %v958
        %v1983 = vunpack.c.l.b16 %v959
        %v1984 = vunpack.c.l.b16 %v960
        %v1985 = vunpack.c.l.b16 %v961
        %v1986 = vunpack.c.l.b16 %v962
        %v1987 = vunpack.c.l.b16 %v963
        %v1988 = vunpack.c.l.b16 %v964
        %v1989 = vunpack.c.l.b16 %v965
        %v1990 = vunpack.c.l.b16 %v966
        %v1991 = vunpack.c.l.b16 %v967
        %v1992 = vunpack.c.l.b16 %v968
        %v1993 = vunpack.c.l.b16 %v969
        %v1994 = vunpack.c.l.b16 %v970
        %v1995 = vunpack.c.l.b16 %v971
        %v1996 = vunpack.c.l.b16 %v972
        %v1997 = vunpack.c.l.b16 %v973
        %v1998 = vunpack.c.l.b16 %v974
        %v1999 = vunpack.c.l.b16 %v975
        %v2000 = vunpack.c.l.b16 %v976
        %v2001 = vunpack.c.l.b16 %v977
        %v2002 = vunpack.c.l.b16 %v978
        %v2003 = vunpack.c.l.b16 %v979
        %v2004 = vunpack.c.l.b16 %v980
        %v2005 = vunpack.c.l.b16 %v981
        %v2006 = vunpack.c.l.b16 %v982
        %v2007 = vunpack.c.l.b16 %v983
        %v2008 = vunpack.c.l.b16 %v984
        %v2009 = vunpack.c.l.b16 %v985
        %v2010 = vunpack.c.l.b16 %v986
        %v2011 = vunpack.c.l.b16 %v987
        %v2012 = vunpack.c.l.b16 %v988
        %v2013 = vunpack.c.l.b16 %v989
        %v2014 = vunpack.c.l.b16 %v990
        %v2015 = vunpack.c.l.b16 %v991
        %v2016 = vunpack.c.l.b16 %v992
        %v2017 = vunpack.c.l.b16 %v993
        %v2018 = vunpack.c.l.b16 %v994
        %v2019 = vunpack.c.l.b16 %v995
        %v2020 = vunpack.c.l.b16 %v996
        %v2021 = vunpack.c.l.b16 %v997
        %v2022 = vunpack.c.l.b16 %v998
        %v2023 = vunpack.c.l.b16 %v999
        %v2024 = vunpack.c.l.b16 %v1000
        %v2025 = vunpack.c.l.b16 %v1001
        %v2026 = vunpack.c.l.b16 %v1002
        %v2027 = vunpack.c.l.b16 %v1003
        %v2028 = vunpack.c.l.b16 %v1004
        %v2029 = vunpack.c.l.b16 %v1005
        %v2030 = vunpack.c.l.b16 %v1006
        %v2031 = vunpack.c.l.b16 %v1007
        %v2032 = vunpack.c.l.b16 %v1008
        %v2033 = vunpack.c.l.b16 %v1009
        %v2034 = vunpack.c.l.b16 %v1010
        %v2035 = vunpack.c.l.b16 %v1011
        %v2036 = vunpack.c.l.b16 %v1012
        %v2037 = vunpack.c.l.b16 %v1013
        %v2038 = vunpack.c.l.b16 %v1014
        %v2039 = vunpack.c.l.b16 %v1015
        %v2040 = vunpack.c.l.b16 %v1016
        %v2041 = vunpack.c.l.b16 %v1017
        %v2042 = vunpack.c.l.b16 %v1018
        %v2043 = vunpack.c.l.b16 %v1019
        %v2044 = vunpack.c.l.b16 %v1020
        %v2045 = vunpack.c.l.b16 %v1021
        %v2046 = vunpack.c.l.b16 %v1022
        %v2047 = vpack.c.b16 %v1888, %v1887
        %v2048 = vpack.c.b16 %v1890, %v1889
        %v2049 = vpack.c.b16 %v1892, %v1891
        %v2050 = vpack.c.b16 %v1894, %v1893
        %v2051 = vpack.c.b16 %v1896, %v1895
        %v2052 = vpack.c.b16 %v1898, %v1897
        %v2053 = vpack.c.b16 %v1900, %v1899
        %v2054 = vpack.c.b16 %v1902, %v1901
        %v2055 = vpack.c.b16 %v1904, %v1903
        %v2056 = vpack.c.b16 %v1906, %v1905
        %v2057 = vpack.c.b16 %v1908, %v1907
        %v2058 = vpack.c.b16 %v1910, %v1909
        %v2059 = vpack.c.b16 %v1912, %v1911
        %v2060 = vpack.c.b16 %v1914, %v1913
        %v2061 = vpack.c.b16 %v1916, %v1915
        %v2062 = vpack.c.b16 %v1918, %v1917
        %v2063 = vpack.c.b16 %v1920, %v1919
        %v2064 = vpack.c.b16 %v1922, %v1921
        %v2065 = vpack.c.b16 %v1924, %v1923
        %v2066 = vpack.c.b16 %v1926, %v1925
        %v2067 = vpack.c.b16 %v1928, %v1927
        %v2068 = vpack.c.b16 %v1930, %v1929
        %v2069 = vpack.c.b16 %v1932, %v1931
        %v2070 = vpack.c.b16 %v1934, %v1933
        %v2071 = vpack.c.b16 %v1936, %v1935
        %v2072 = vpack.c.b16 %v1938, %v1937
        %v2073 = vpack.c.b16 %v1940, %v1939
        %v2074 = vpack.c.b16 %v1942, %v1941
        %v2075 = vpack.c.b16 %v1944, %v1943
        %v2076 = vpack.c.b16 %v1946, %v1945
        %v2077 = vpack.c.b16 %v1948, %v1947
        %v2078 = vpack.c.b16 %v1950, %v1949
        %v2079 = vpack.c.b16 %v1952, %v1951
        %v2080 = vpack.c.b16 %v1954, %v1953
        %v2081 = vpack.c.b16 %v1956, %v1955
        %v2082 = vpack.c.b16 %v1958, %v1957
        %v2083 = vpack.c.b16 %v1960, %v1959
        %v2084 = vpack.c.b16 %v1962, %v1961
        %v2085 = vpack.c.b16 %v1964, %v1963
        %v2086 = vpack.c.b16 %v1966, %v1965
        %v2087 = vpack.c.b16 %v1968, %v1967
        %v2088 = vpack.c.b16 %v1970, %v1969
        %v2089 = vpack.c.b16 %v1972, %v1971
        %v2090 = vpack.c.b16 %v1974, %v1973
        %v2091 = vpack.c.b16 %v1976, %v1975
        %v2092 = vpack.c.b16 %v1978, %v1977
        %v2093 = vpack.c.b16 %v1980, %v1979
        %v2094 = vpack.c.b16 %v1982, %v1981
        %v2095 = vpack.c.b16 %v1984, %v1983
        %v2096 = vpack.c.b16 %v1986, %v1985
        %v2097 = vpack.c.b16 %v1988, %v1987
        %v2098 = vpack.c.b16 %v1990, %v1989
        %v2099 = vpack.c.b16 %v1992, %v1991
        %v2100 = vpack.c.b16 %v1994, %v1993
        %v2101 = vpack.c.b16 %v1996, %v1995
        %v2102 = vpack.c.b16 %v1998, %v1997
        %v2103 = vpack.c.b16 %v2000, %v1999
        %v2104 = vpack.c.b16 %v2002, %v2001
        %v2105 = vpack.c.b16 %v2004, %v2003
        %v2106 = vpack.c.b16 %v2006, %v2005
        %v2107 = vpack.c.b16 %v2008, %v2007
        %v2108 = vpack.c.b16 %v2010, %v2009
        %v2109 = vpack.c.b16 %v2012, %v2011
        %v2110 = vpack.c.b16 %v2014, %v2013
        %v2111 = vpack.c.b16 %v2016, %v2015
        %v2112 = vpack.c.b16 %v2018, %v2017
        %v2113 = vpack.c.b16 %v2020, %v2019
        %v2114 = vpack.c.b16 %v2022, %v2021
        %v2115 = vpack.c.b16 %v2024, %v2023
        %v2116 = vpack.c.b16 %v2026, %v2025
        %v2117 = vpack.c.b16 %v2028, %v2027
        %v2118 = vpack.c.b16 %v2030, %v2029
        %v2119 = vpack.c.b16 %v2032, %v2031
        %v2120 = vpack.c.b16 %v2034, %v2033
        %v2121 = vpack.c.b16 %v2036, %v2035
        %v2122 = vpack.c.b16 %v2038, %v2037
        %v2123 = vpack.c.b16 %v2040, %v2039
        %v2124 = vpack.c.b16 %v2042, %v2041
        %v2125 = vpack.c.b16 %v2044, %v2043
        %v2126 = vpack.c.b16 %v2046, %v2045
        %vm2127 = vcmask 261120
        %v2129 = vsel %vm2127, %v1711, 0
        %v2132 = vsel %vm2127, %v1712, 0
        %v2135 = vsel %vm2127, %v1713, 0
        %v2138 = vsel %vm2127, %v1714, 0
        %v2141 = vsel %vm2127, %v1715, 0
        %v2144 = vsel %vm2127, %v1716, 0
        %v2147 = vsel %vm2127, %v1717, 0
        %v2150 = vsel %vm2127, %v1718, 0
        %v2153 = vsel %vm2127, %v1719, 0
        %v2156 = vsel %vm2127, %v1720, 0
        %v2159 = vsel %vm2127, %v1721, 0
        %v2162 = vsel %vm2127, %v1722, 0
        %v2165 = vsel %vm2127, %v1723, 0
        %v2168 = vsel %vm2127, %v1724, 0
        %v2171 = vsel %vm2127, %v1725, 0
        %v2174 = vsel %vm2127, %v1726, 0
        %v2177 = vsel %vm2127, %v2047, 0
        %v2180 = vsel %vm2127, %v2048, 0
        %v2183 = vsel %vm2127, %v2049, 0
        %v2186 = vsel %vm2127, %v2050, 0
        %v2189 = vsel %vm2127, %v2051, 0
        %v2192 = vsel %vm2127, %v2052, 0
        %v2195 = vsel %vm2127, %v2053, 0
        %v2198 = vsel %vm2127, %v2054, 0
        %v2201 = vsel %vm2127, %v2055, 0
        %v2204 = vsel %vm2127, %v2056, 0
        %v2207 = vsel %vm2127, %v2057, 0
        %v2210 = vsel %vm2127, %v2058, 0
        %v2213 = vsel %vm2127, %v2059, 0
        %v2216 = vsel %vm2127, %v2060, 0
        %v2219 = vsel %vm2127, %v2061, 0
        %v2222 = vsel %vm2127, %v2062, 0
        %v2225 = vsel %vm2127, %v2063, 0
        %v2228 = vsel %vm2127, %v2064, 0
        %v2231 = vsel %vm2127, %v2065, 0
        %v2234 = vsel %vm2127, %v2066, 0
        %v2237 = vsel %vm2127, %v2067, 0
        %v2240 = vsel %vm2127, %v2068, 0
        %v2243 = vsel %vm2127, %v2069, 0
        %v2246 = vsel %vm2127, %v2070, 0
        %v2249 = vsel %vm2127, %v2071, 0
        %v2252 = vsel %vm2127, %v2072, 0
        %v2255 = vsel %vm2127, %v2073, 0
        %v2258 = vsel %vm2127, %v2074, 0
        %v2261 = vsel %vm2127, %v2075, 0
        %v2264 = vsel %vm2127, %v2076, 0
        %v2267 = vsel %vm2127, %v2077, 0
        %v2270 = vsel %vm2127, %v2078, 0
        %v2273 = vsel %vm2127, %v2079, 0
        %v2276 = vsel %vm2127, %v2080, 0
        %v2279 = vsel %vm2127, %v2081, 0
        %v2282 = vsel %vm2127, %v2082, 0
        %v2285 = vsel %vm2127, %v2083, 0
        %v2288 = vsel %vm2127, %v2084, 0
        %v2291 = vsel %vm2127, %v2085, 0
        %v2294 = vsel %vm2127, %v2086, 0
        %v2297 = vsel %vm2127, %v2087, 0
        %v2300 = vsel %vm2127, %v2088, 0
        %v2303 = vsel %vm2127, %v2089, 0
        %v2306 = vsel %vm2127, %v2090, 0
        %v2309 = vsel %vm2127, %v2091, 0
        %v2312 = vsel %vm2127, %v2092, 0
        %v2315 = vsel %vm2127, %v2093, 0
        %v2318 = vsel %vm2127, %v2094, 0
        %v2321 = vsel %vm2127, %v2095, 0
        %v2324 = vsel %vm2127, %v2096, 0
        %v2327 = vsel %vm2127, %v2097, 0
        %v2330 = vsel %vm2127, %v2098, 0
        %v2333 = vsel %vm2127, %v2099, 0
        %v2336 = vsel %vm2127, %v2100, 0
        %v2339 = vsel %vm2127, %v2101, 0
        %v2342 = vsel %vm2127, %v2102, 0
        %v2345 = vsel %vm2127, %v2103, 0
        %v2348 = vsel %vm2127, %v2104, 0
        %v2351 = vsel %vm2127, %v2105, 0
        %v2354 = vsel %vm2127, %v2106, 0
        %v2357 = vsel %vm2127, %v2107, 0
        %v2360 = vsel %vm2127, %v2108, 0
        %v2363 = vsel %vm2127, %v2109, 0
        %v2366 = vsel %vm2127, %v2110, 0
        %v2369 = vsel %vm2127, %v2111, 0
        %v2372 = vsel %vm2127, %v2112, 0
        %v2375 = vsel %vm2127, %v2113, 0
        %v2378 = vsel %vm2127, %v2114, 0
        %v2381 = vsel %vm2127, %v2115, 0
        %v2384 = vsel %vm2127, %v2116, 0
        %v2387 = vsel %vm2127, %v2117, 0
        %v2390 = vsel %vm2127, %v2118, 0
        %v2393 = vsel %vm2127, %v2119, 0
        %v2396 = vsel %vm2127, %v2120, 0
        %v2399 = vsel %vm2127, %v2121, 0
        %v2402 = vsel %vm2127, %v2122, 0
        %v2405 = vsel %vm2127, %v2123, 0
        %v2408 = vsel %vm2127, %v2124, 0
        %v2411 = vsel %vm2127, %v2125, 0
        %v2414 = vsel %vm2127, %v2126, 0
        %2416 = vmatprep.subr.bf16.mxu0 0
        %2417 = vmatpush1.bf16.xpose.msra.mxu0 %v2198
        %2418 = vmatprep.subr.bf16.mxu0 0
        %2419 = vmatpush1.bf16.xpose.msra.mxu0 %v2195
        %2420 = vmatprep.subr.bf16.mxu0 0
        %2421 = vmatpush1.bf16.xpose.msra.mxu0 %v2192
        %2422 = vmatprep.subr.bf16.mxu0 0
        %2423 = vmatpush1.bf16.xpose.msra.mxu0 %v2189
        %2424 = vmatprep.subr.bf16.mxu0 0
        %2425 = vmatpush1.bf16.xpose.msra.mxu0 %v2186
        %2426 = vmatprep.subr.bf16.mxu0 0
        %2427 = vmatpush1.bf16.xpose.msra.mxu0 %v2183
        %2428 = vmatprep.subr.bf16.mxu0 0
        %2429 = vmatpush1.bf16.xpose.msra.mxu0 %v2180
        %2430 = vmatprep.subr.bf16.mxu0 0
        %2431 = vmatpush1.bf16.xpose.msra.mxu0 %v2177
        %2432 = vmatprep.subr.bf16.mxu0 0
        %2433 = vmatpush2.bf16.xpose.msra.mxu0 %v2222
        %2434 = vmatprep.subr.bf16.mxu0 0
        %2435 = vmatpush2.bf16.xpose.msra.mxu0 %v2219
        %2436 = vmatprep.subr.bf16.mxu0 0
        %2437 = vmatpush2.bf16.xpose.msra.mxu0 %v2216
        %2438 = vmatprep.subr.bf16.mxu0 0
        %2439 = vmatpush2.bf16.xpose.msra.mxu0 %v2213
        %2440 = vmatprep.subr.bf16.mxu0 0
        %2441 = vmatpush2.bf16.xpose.msra.mxu0 %v2210
        %2442 = vmatprep.subr.bf16.mxu0 0
        %2443 = vmatpush2.bf16.xpose.msra.mxu0 %v2207
        %2444 = vmatprep.subr.bf16.mxu0 0
        %2445 = vmatpush2.bf16.xpose.msra.mxu0 %v2204
        %2446 = vmatprep.subr.bf16.mxu0 0
        %2447 = vmatpush2.bf16.xpose.msra.mxu0 %v2201
        %2448 = vmatprep.mubr.bf16.mxu0 0
        %2449 = vmatmul.mubr.bf16.gmra.mxu0 %v2129
        %v2450 = vpop.f32.mrf.mxu0
        %v2451 = vadd.f32 0.0, %v2450
        %v2452 = vpop.f32.mrf.mxu0
        %v2453 = vadd.f32 0.0, %v2452
        %v2454 = vpop.f32.mrf.mxu0
        %v2455 = vadd.f32 0.0, %v2454
        %v2456 = vpop.f32.mrf.mxu0
        %v2457 = vadd.f32 0.0, %v2456
        %2458 = vmatprep.mubr.bf16.mxu0 0
        %2459 = vmatmul.mubr.bf16.gmra.mxu0 %v2132
        %v2460 = vpop.f32.mrf.mxu0
        %v2461 = vadd.f32 0.0, %v2460
        %v2462 = vpop.f32.mrf.mxu0
        %v2463 = vadd.f32 0.0, %v2462
        %v2464 = vpop.f32.mrf.mxu0
        %v2465 = vadd.f32 0.0, %v2464
        %v2466 = vpop.f32.mrf.mxu0
        %v2467 = vadd.f32 0.0, %v2466
        %2468 = vmatprep.mubr.bf16.mxu0 0
        %2469 = vmatmul.mubr.bf16.gmra.mxu0 %v2135
        %v2470 = vpop.f32.mrf.mxu0
        %v2471 = vadd.f32 0.0, %v2470
        %v2472 = vpop.f32.mrf.mxu0
        %v2473 = vadd.f32 0.0, %v2472
        %v2474 = vpop.f32.mrf.mxu0
        %v2475 = vadd.f32 0.0, %v2474
        %v2476 = vpop.f32.mrf.mxu0
        %v2477 = vadd.f32 0.0, %v2476
        %2478 = vmatprep.mubr.bf16.mxu0 0
        %2479 = vmatmul.mubr.bf16.gmra.mxu0 %v2138
        %v2480 = vpop.f32.mrf.mxu0
        %v2481 = vadd.f32 0.0, %v2480
        %v2482 = vpop.f32.mrf.mxu0
        %v2483 = vadd.f32 0.0, %v2482
        %v2484 = vpop.f32.mrf.mxu0
        %v2485 = vadd.f32 0.0, %v2484
        %v2486 = vpop.f32.mrf.mxu0
        %v2487 = vadd.f32 0.0, %v2486
        %2488 = vmatprep.mubr.bf16.mxu0 0
        %2489 = vmatmul.mubr.bf16.gmra.mxu0 %v2141
        %v2490 = vpop.f32.mrf.mxu0
        %v2491 = vadd.f32 0.0, %v2490
        %v2492 = vpop.f32.mrf.mxu0
        %v2493 = vadd.f32 0.0, %v2492
        %v2494 = vpop.f32.mrf.mxu0
        %v2495 = vadd.f32 0.0, %v2494
        %v2496 = vpop.f32.mrf.mxu0
        %v2497 = vadd.f32 0.0, %v2496
        %2498 = vmatprep.mubr.bf16.mxu0 0
        %2499 = vmatmul.mubr.bf16.gmra.mxu0 %v2144
        %v2500 = vpop.f32.mrf.mxu0
        %v2501 = vadd.f32 0.0, %v2500
        %v2502 = vpop.f32.mrf.mxu0
        %v2503 = vadd.f32 0.0, %v2502
        %v2504 = vpop.f32.mrf.mxu0
        %v2505 = vadd.f32 0.0, %v2504
        %v2506 = vpop.f32.mrf.mxu0
        %v2507 = vadd.f32 0.0, %v2506
        %2508 = vmatprep.mubr.bf16.mxu0 0
        %2509 = vmatmul.mubr.bf16.gmra.mxu0 %v2147
        %v2510 = vpop.f32.mrf.mxu0
        %v2511 = vadd.f32 0.0, %v2510
        %v2512 = vpop.f32.mrf.mxu0
        %v2513 = vadd.f32 0.0, %v2512
        %v2514 = vpop.f32.mrf.mxu0
        %v2515 = vadd.f32 0.0, %v2514
        %v2516 = vpop.f32.mrf.mxu0
        %v2517 = vadd.f32 0.0, %v2516
        %2518 = vmatprep.mubr.bf16.mxu0 0
        %2519 = vmatmul.mubr.bf16.gmra.mxu0 %v2150
        %v2520 = vpop.f32.mrf.mxu0
        %v2521 = vadd.f32 0.0, %v2520
        %v2522 = vpop.f32.mrf.mxu0
        %v2523 = vadd.f32 0.0, %v2522
        %v2524 = vpop.f32.mrf.mxu0
        %v2525 = vadd.f32 0.0, %v2524
        %v2526 = vpop.f32.mrf.mxu0
        %v2527 = vadd.f32 0.0, %v2526
        %2528 = vmatprep.mubr.bf16.mxu0 0
        %2529 = vmatmul.mubr.bf16.gmra.mxu0 %v2153
        %v2530 = vpop.f32.mrf.mxu0
        %v2531 = vadd.f32 0.0, %v2530
        %v2532 = vpop.f32.mrf.mxu0
        %v2533 = vadd.f32 0.0, %v2532
        %v2534 = vpop.f32.mrf.mxu0
        %v2535 = vadd.f32 0.0, %v2534
        %v2536 = vpop.f32.mrf.mxu0
        %v2537 = vadd.f32 0.0, %v2536
        %2538 = vmatprep.mubr.bf16.mxu0 0
        %2539 = vmatmul.mubr.bf16.gmra.mxu0 %v2156
        %v2540 = vpop.f32.mrf.mxu0
        %v2541 = vadd.f32 0.0, %v2540
        %v2542 = vpop.f32.mrf.mxu0
        %v2543 = vadd.f32 0.0, %v2542
        %v2544 = vpop.f32.mrf.mxu0
        %v2545 = vadd.f32 0.0, %v2544
        %v2546 = vpop.f32.mrf.mxu0
        %v2547 = vadd.f32 0.0, %v2546
        %2548 = vmatprep.mubr.bf16.mxu0 0
        %2549 = vmatmul.mubr.bf16.gmra.mxu0 %v2159
        %v2550 = vpop.f32.mrf.mxu0
        %v2551 = vadd.f32 0.0, %v2550
        %v2552 = vpop.f32.mrf.mxu0
        %v2553 = vadd.f32 0.0, %v2552
        %v2554 = vpop.f32.mrf.mxu0
        %v2555 = vadd.f32 0.0, %v2554
        %v2556 = vpop.f32.mrf.mxu0
        %v2557 = vadd.f32 0.0, %v2556
        %2558 = vmatprep.mubr.bf16.mxu0 0
        %2559 = vmatmul.mubr.bf16.gmra.mxu0 %v2162
        %v2560 = vpop.f32.mrf.mxu0
        %v2561 = vadd.f32 0.0, %v2560
        %v2562 = vpop.f32.mrf.mxu0
        %v2563 = vadd.f32 0.0, %v2562
        %v2564 = vpop.f32.mrf.mxu0
        %v2565 = vadd.f32 0.0, %v2564
        %v2566 = vpop.f32.mrf.mxu0
        %v2567 = vadd.f32 0.0, %v2566
        %2568 = vmatprep.mubr.bf16.mxu0 0
        %2569 = vmatmul.mubr.bf16.gmra.mxu0 %v2165
        %v2570 = vpop.f32.mrf.mxu0
        %v2571 = vadd.f32 0.0, %v2570
        %v2572 = vpop.f32.mrf.mxu0
        %v2573 = vadd.f32 0.0, %v2572
        %v2574 = vpop.f32.mrf.mxu0
        %v2575 = vadd.f32 0.0, %v2574
        %v2576 = vpop.f32.mrf.mxu0
        %v2577 = vadd.f32 0.0, %v2576
        %2578 = vmatprep.mubr.bf16.mxu0 0
        %2579 = vmatmul.mubr.bf16.gmra.mxu0 %v2168
        %v2580 = vpop.f32.mrf.mxu0
        %v2581 = vadd.f32 0.0, %v2580
        %v2582 = vpop.f32.mrf.mxu0
        %v2583 = vadd.f32 0.0, %v2582
        %v2584 = vpop.f32.mrf.mxu0
        %v2585 = vadd.f32 0.0, %v2584
        %v2586 = vpop.f32.mrf.mxu0
        %v2587 = vadd.f32 0.0, %v2586
        %2588 = vmatprep.mubr.bf16.mxu0 0
        %2589 = vmatmul.mubr.bf16.gmra.mxu0 %v2171
        %v2590 = vpop.f32.mrf.mxu0
        %v2591 = vadd.f32 0.0, %v2590
        %v2592 = vpop.f32.mrf.mxu0
        %v2593 = vadd.f32 0.0, %v2592
        %v2594 = vpop.f32.mrf.mxu0
        %v2595 = vadd.f32 0.0, %v2594
        %v2596 = vpop.f32.mrf.mxu0
        %v2597 = vadd.f32 0.0, %v2596
        %2598 = vmatprep.mubr.bf16.mxu0 0
        %2599 = vmatmul.mubr.bf16.gmra.mxu0 %v2174
        %v2600 = vpop.f32.mrf.mxu0
        %v2601 = vadd.f32 0.0, %v2600
        %v2602 = vpop.f32.mrf.mxu0
        %v2603 = vadd.f32 0.0, %v2602
        %v2604 = vpop.f32.mrf.mxu0
        %v2605 = vadd.f32 0.0, %v2604
        %v2606 = vpop.f32.mrf.mxu0
        %v2607 = vadd.f32 0.0, %v2606
        %2608 = vdwg.mxu0
        %2609 = vmatprep.subr.bf16.mxu0 0
        %2610 = vmatpush1.bf16.xpose.msra.mxu0 %v2246
        %2611 = vmatprep.subr.bf16.mxu0 0
        %2612 = vmatpush1.bf16.xpose.msra.mxu0 %v2243
        %2613 = vmatprep.subr.bf16.mxu0 0
        %2614 = vmatpush1.bf16.xpose.msra.mxu0 %v2240
        %2615 = vmatprep.subr.bf16.mxu0 0
        %2616 = vmatpush1.bf16.xpose.msra.mxu0 %v2237
        %2617 = vmatprep.subr.bf16.mxu0 0
        %2618 = vmatpush1.bf16.xpose.msra.mxu0 %v2234
        %2619 = vmatprep.subr.bf16.mxu0 0
        %2620 = vmatpush1.bf16.xpose.msra.mxu0 %v2231
        %2621 = vmatprep.subr.bf16.mxu0 0
        %2622 = vmatpush1.bf16.xpose.msra.mxu0 %v2228
        %2623 = vmatprep.subr.bf16.mxu0 0
        %2624 = vmatpush1.bf16.xpose.msra.mxu0 %v2225
        %2625 = vmatprep.subr.bf16.mxu0 0
        %2626 = vmatpush2.bf16.xpose.msra.mxu0 %v2270
        %2627 = vmatprep.subr.bf16.mxu0 0
        %2628 = vmatpush2.bf16.xpose.msra.mxu0 %v2267
        %2629 = vmatprep.subr.bf16.mxu0 0
        %2630 = vmatpush2.bf16.xpose.msra.mxu0 %v2264
        %2631 = vmatprep.subr.bf16.mxu0 0
        %2632 = vmatpush2.bf16.xpose.msra.mxu0 %v2261
        %2633 = vmatprep.subr.bf16.mxu0 0
        %2634 = vmatpush2.bf16.xpose.msra.mxu0 %v2258
        %2635 = vmatprep.subr.bf16.mxu0 0
        %2636 = vmatpush2.bf16.xpose.msra.mxu0 %v2255
        %2637 = vmatprep.subr.bf16.mxu0 0
        %2638 = vmatpush2.bf16.xpose.msra.mxu0 %v2252
        %2639 = vmatprep.subr.bf16.mxu0 0
        %2640 = vmatpush2.bf16.xpose.msra.mxu0 %v2249
        %2641 = vmatprep.mubr.bf16.mxu0 0
        %2642 = vmatmul.mubr.bf16.gmra.mxu0 %v2129
        %v2643 = vpop.f32.mrf.mxu0
        %v2644 = vadd.f32 0.0, %v2643
        %v2645 = vpop.f32.mrf.mxu0
        %v2646 = vadd.f32 0.0, %v2645
        %v2647 = vpop.f32.mrf.mxu0
        %v2648 = vadd.f32 0.0, %v2647
        %v2649 = vpop.f32.mrf.mxu0
        %v2650 = vadd.f32 0.0, %v2649
        %2651 = vmatprep.mubr.bf16.mxu0 0
        %2652 = vmatmul.mubr.bf16.gmra.mxu0 %v2132
        %v2653 = vpop.f32.mrf.mxu0
        %v2654 = vadd.f32 0.0, %v2653
        %v2655 = vpop.f32.mrf.mxu0
        %v2656 = vadd.f32 0.0, %v2655
        %v2657 = vpop.f32.mrf.mxu0
        %v2658 = vadd.f32 0.0, %v2657
        %v2659 = vpop.f32.mrf.mxu0
        %v2660 = vadd.f32 0.0, %v2659
        %2661 = vmatprep.mubr.bf16.mxu0 0
        %2662 = vmatmul.mubr.bf16.gmra.mxu0 %v2135
        %v2663 = vpop.f32.mrf.mxu0
        %v2664 = vadd.f32 0.0, %v2663
        %v2665 = vpop.f32.mrf.mxu0
        %v2666 = vadd.f32 0.0, %v2665
        %v2667 = vpop.f32.mrf.mxu0
        %v2668 = vadd.f32 0.0, %v2667
        %v2669 = vpop.f32.mrf.mxu0
        %v2670 = vadd.f32 0.0, %v2669
        %2671 = vmatprep.mubr.bf16.mxu0 0
        %2672 = vmatmul.mubr.bf16.gmra.mxu0 %v2138
        %v2673 = vpop.f32.mrf.mxu0
        %v2674 = vadd.f32 0.0, %v2673
        %v2675 = vpop.f32.mrf.mxu0
        %v2676 = vadd.f32 0.0, %v2675
        %v2677 = vpop.f32.mrf.mxu0
        %v2678 = vadd.f32 0.0, %v2677
        %v2679 = vpop.f32.mrf.mxu0
        %v2680 = vadd.f32 0.0, %v2679
        %2681 = vmatprep.mubr.bf16.mxu0 0
        %2682 = vmatmul.mubr.bf16.gmra.mxu0 %v2141
        %v2683 = vpop.f32.mrf.mxu0
        %v2684 = vadd.f32 0.0, %v2683
        %v2685 = vpop.f32.mrf.mxu0
        %v2686 = vadd.f32 0.0, %v2685
        %v2687 = vpop.f32.mrf.mxu0
        %v2688 = vadd.f32 0.0, %v2687
        %v2689 = vpop.f32.mrf.mxu0
        %v2690 = vadd.f32 0.0, %v2689
        %2691 = vmatprep.mubr.bf16.mxu0 0
        %2692 = vmatmul.mubr.bf16.gmra.mxu0 %v2144
        %v2693 = vpop.f32.mrf.mxu0
        %v2694 = vadd.f32 0.0, %v2693
        %v2695 = vpop.f32.mrf.mxu0
        %v2696 = vadd.f32 0.0, %v2695
        %v2697 = vpop.f32.mrf.mxu0
        %v2698 = vadd.f32 0.0, %v2697
        %v2699 = vpop.f32.mrf.mxu0
        %v2700 = vadd.f32 0.0, %v2699
        %2701 = vmatprep.mubr.bf16.mxu0 0
        %2702 = vmatmul.mubr.bf16.gmra.mxu0 %v2147
        %v2703 = vpop.f32.mrf.mxu0
        %v2704 = vadd.f32 0.0, %v2703
        %v2705 = vpop.f32.mrf.mxu0
        %v2706 = vadd.f32 0.0, %v2705
        %v2707 = vpop.f32.mrf.mxu0
        %v2708 = vadd.f32 0.0, %v2707
        %v2709 = vpop.f32.mrf.mxu0
        %v2710 = vadd.f32 0.0, %v2709
        %2711 = vmatprep.mubr.bf16.mxu0 0
        %2712 = vmatmul.mubr.bf16.gmra.mxu0 %v2150
        %v2713 = vpop.f32.mrf.mxu0
        %v2714 = vadd.f32 0.0, %v2713
        %v2715 = vpop.f32.mrf.mxu0
        %v2716 = vadd.f32 0.0, %v2715
        %v2717 = vpop.f32.mrf.mxu0
        %v2718 = vadd.f32 0.0, %v2717
        %v2719 = vpop.f32.mrf.mxu0
        %v2720 = vadd.f32 0.0, %v2719
        %2721 = vmatprep.mubr.bf16.mxu0 0
        %2722 = vmatmul.mubr.bf16.gmra.mxu0 %v2153
        %v2723 = vpop.f32.mrf.mxu0
        %v2724 = vadd.f32 0.0, %v2723
        %v2725 = vpop.f32.mrf.mxu0
        %v2726 = vadd.f32 0.0, %v2725
        %v2727 = vpop.f32.mrf.mxu0
        %v2728 = vadd.f32 0.0, %v2727
        %v2729 = vpop.f32.mrf.mxu0
        %v2730 = vadd.f32 0.0, %v2729
        %2731 = vmatprep.mubr.bf16.mxu0 0
        %2732 = vmatmul.mubr.bf16.gmra.mxu0 %v2156
        %v2733 = vpop.f32.mrf.mxu0
        %v2734 = vadd.f32 0.0, %v2733
        %v2735 = vpop.f32.mrf.mxu0
        %v2736 = vadd.f32 0.0, %v2735
        %v2737 = vpop.f32.mrf.mxu0
        %v2738 = vadd.f32 0.0, %v2737
        %v2739 = vpop.f32.mrf.mxu0
        %v2740 = vadd.f32 0.0, %v2739
        %2741 = vmatprep.mubr.bf16.mxu0 0
        %2742 = vmatmul.mubr.bf16.gmra.mxu0 %v2159
        %v2743 = vpop.f32.mrf.mxu0
        %v2744 = vadd.f32 0.0, %v2743
        %v2745 = vpop.f32.mrf.mxu0
        %v2746 = vadd.f32 0.0, %v2745
        %v2747 = vpop.f32.mrf.mxu0
        %v2748 = vadd.f32 0.0, %v2747
        %v2749 = vpop.f32.mrf.mxu0
        %v2750 = vadd.f32 0.0, %v2749
        %2751 = vmatprep.mubr.bf16.mxu0 0
        %2752 = vmatmul.mubr.bf16.gmra.mxu0 %v2162
        %v2753 = vpop.f32.mrf.mxu0
        %v2754 = vadd.f32 0.0, %v2753
        %v2755 = vpop.f32.mrf.mxu0
        %v2756 = vadd.f32 0.0, %v2755
        %v2757 = vpop.f32.mrf.mxu0
        %v2758 = vadd.f32 0.0, %v2757
        %v2759 = vpop.f32.mrf.mxu0
        %v2760 = vadd.f32 0.0, %v2759
        %2761 = vmatprep.mubr.bf16.mxu0 0
        %2762 = vmatmul.mubr.bf16.gmra.mxu0 %v2165
        %v2763 = vpop.f32.mrf.mxu0
        %v2764 = vadd.f32 0.0, %v2763
        %v2765 = vpop.f32.mrf.mxu0
        %v2766 = vadd.f32 0.0, %v2765
        %v2767 = vpop.f32.mrf.mxu0
        %v2768 = vadd.f32 0.0, %v2767
        %v2769 = vpop.f32.mrf.mxu0
        %v2770 = vadd.f32 0.0, %v2769
        %2771 = vmatprep.mubr.bf16.mxu0 0
        %2772 = vmatmul.mubr.bf16.gmra.mxu0 %v2168
        %v2773 = vpop.f32.mrf.mxu0
        %v2774 = vadd.f32 0.0, %v2773
        %v2775 = vpop.f32.mrf.mxu0
        %v2776 = vadd.f32 0.0, %v2775
        %v2777 = vpop.f32.mrf.mxu0
        %v2778 = vadd.f32 0.0, %v2777
        %v2779 = vpop.f32.mrf.mxu0
        %v2780 = vadd.f32 0.0, %v2779
        %2781 = vmatprep.mubr.bf16.mxu0 0
        %2782 = vmatmul.mubr.bf16.gmra.mxu0 %v2171
        %v2783 = vpop.f32.mrf.mxu0
        %v2784 = vadd.f32 0.0, %v2783
        %v2785 = vpop.f32.mrf.mxu0
        %v2786 = vadd.f32 0.0, %v2785
        %v2787 = vpop.f32.mrf.mxu0
        %v2788 = vadd.f32 0.0, %v2787
        %v2789 = vpop.f32.mrf.mxu0
        %v2790 = vadd.f32 0.0, %v2789
        %2791 = vmatprep.mubr.bf16.mxu0 0
        %2792 = vmatmul.mubr.bf16.gmra.mxu0 %v2174
        %v2793 = vpop.f32.mrf.mxu0
        %v2794 = vadd.f32 0.0, %v2793
        %v2795 = vpop.f32.mrf.mxu0
        %v2796 = vadd.f32 0.0, %v2795
        %v2797 = vpop.f32.mrf.mxu0
        %v2798 = vadd.f32 0.0, %v2797
        %v2799 = vpop.f32.mrf.mxu0
        %v2800 = vadd.f32 0.0, %v2799
        %2801 = vdwg.mxu0
        %2802 = vmatprep.subr.bf16.mxu0 0
        %2803 = vmatpush1.bf16.xpose.msra.mxu0 %v2294
        %2804 = vmatprep.subr.bf16.mxu0 0
        %2805 = vmatpush1.bf16.xpose.msra.mxu0 %v2291
        %2806 = vmatprep.subr.bf16.mxu0 0
        %2807 = vmatpush1.bf16.xpose.msra.mxu0 %v2288
        %2808 = vmatprep.subr.bf16.mxu0 0
        %2809 = vmatpush1.bf16.xpose.msra.mxu0 %v2285
        %2810 = vmatprep.subr.bf16.mxu0 0
        %2811 = vmatpush1.bf16.xpose.msra.mxu0 %v2282
        %2812 = vmatprep.subr.bf16.mxu0 0
        %2813 = vmatpush1.bf16.xpose.msra.mxu0 %v2279
        %2814 = vmatprep.subr.bf16.mxu0 0
        %2815 = vmatpush1.bf16.xpose.msra.mxu0 %v2276
        %2816 = vmatprep.subr.bf16.mxu0 0
        %2817 = vmatpush1.bf16.xpose.msra.mxu0 %v2273
        %2818 = vmatprep.subr.bf16.mxu0 0
        %2819 = vmatpush2.bf16.xpose.msra.mxu0 %v2318
        %2820 = vmatprep.subr.bf16.mxu0 0
        %2821 = vmatpush2.bf16.xpose.msra.mxu0 %v2315
        %2822 = vmatprep.subr.bf16.mxu0 0
        %2823 = vmatpush2.bf16.xpose.msra.mxu0 %v2312
        %2824 = vmatprep.subr.bf16.mxu0 0
        %2825 = vmatpush2.bf16.xpose.msra.mxu0 %v2309
        %2826 = vmatprep.subr.bf16.mxu0 0
        %2827 = vmatpush2.bf16.xpose.msra.mxu0 %v2306
        %2828 = vmatprep.subr.bf16.mxu0 0
        %2829 = vmatpush2.bf16.xpose.msra.mxu0 %v2303
        %2830 = vmatprep.subr.bf16.mxu0 0
        %2831 = vmatpush2.bf16.xpose.msra.mxu0 %v2300
        %2832 = vmatprep.subr.bf16.mxu0 0
        %2833 = vmatpush2.bf16.xpose.msra.mxu0 %v2297
        %2834 = vmatprep.mubr.bf16.mxu0 0
        %2835 = vmatmul.mubr.bf16.gmra.mxu0 %v2129
        %v2836 = vpop.f32.mrf.mxu0
        %v2837 = vadd.f32 0.0, %v2836
        %v2838 = vpop.f32.mrf.mxu0
        %v2839 = vadd.f32 0.0, %v2838
        %v2840 = vpop.f32.mrf.mxu0
        %v2841 = vadd.f32 0.0, %v2840
        %v2842 = vpop.f32.mrf.mxu0
        %v2843 = vadd.f32 0.0, %v2842
        %2844 = vmatprep.mubr.bf16.mxu0 0
        %2845 = vmatmul.mubr.bf16.gmra.mxu0 %v2132
        %v2846 = vpop.f32.mrf.mxu0
        %v2847 = vadd.f32 0.0, %v2846
        %v2848 = vpop.f32.mrf.mxu0
        %v2849 = vadd.f32 0.0, %v2848
        %v2850 = vpop.f32.mrf.mxu0
        %v2851 = vadd.f32 0.0, %v2850
        %v2852 = vpop.f32.mrf.mxu0
        %v2853 = vadd.f32 0.0, %v2852
        %2854 = vmatprep.mubr.bf16.mxu0 0
        %2855 = vmatmul.mubr.bf16.gmra.mxu0 %v2135
        %v2856 = vpop.f32.mrf.mxu0
        %v2857 = vadd.f32 0.0, %v2856
        %v2858 = vpop.f32.mrf.mxu0
        %v2859 = vadd.f32 0.0, %v2858
        %v2860 = vpop.f32.mrf.mxu0
        %v2861 = vadd.f32 0.0, %v2860
        %v2862 = vpop.f32.mrf.mxu0
        %v2863 = vadd.f32 0.0, %v2862
        %2864 = vmatprep.mubr.bf16.mxu0 0
        %2865 = vmatmul.mubr.bf16.gmra.mxu0 %v2138
        %v2866 = vpop.f32.mrf.mxu0
        %v2867 = vadd.f32 0.0, %v2866
        %v2868 = vpop.f32.mrf.mxu0
        %v2869 = vadd.f32 0.0, %v2868
        %v2870 = vpop.f32.mrf.mxu0
        %v2871 = vadd.f32 0.0, %v2870
        %v2872 = vpop.f32.mrf.mxu0
        %v2873 = vadd.f32 0.0, %v2872
        %2874 = vmatprep.mubr.bf16.mxu0 0
        %2875 = vmatmul.mubr.bf16.gmra.mxu0 %v2141
        %v2876 = vpop.f32.mrf.mxu0
        %v2877 = vadd.f32 0.0, %v2876
        %v2878 = vpop.f32.mrf.mxu0
        %v2879 = vadd.f32 0.0, %v2878
        %v2880 = vpop.f32.mrf.mxu0
        %v2881 = vadd.f32 0.0, %v2880
        %v2882 = vpop.f32.mrf.mxu0
        %v2883 = vadd.f32 0.0, %v2882
        %2884 = vmatprep.mubr.bf16.mxu0 0
        %2885 = vmatmul.mubr.bf16.gmra.mxu0 %v2144
        %v2886 = vpop.f32.mrf.mxu0
        %v2887 = vadd.f32 0.0, %v2886
        %v2888 = vpop.f32.mrf.mxu0
        %v2889 = vadd.f32 0.0, %v2888
        %v2890 = vpop.f32.mrf.mxu0
        %v2891 = vadd.f32 0.0, %v2890
        %v2892 = vpop.f32.mrf.mxu0
        %v2893 = vadd.f32 0.0, %v2892
        %2894 = vmatprep.mubr.bf16.mxu0 0
        %2895 = vmatmul.mubr.bf16.gmra.mxu0 %v2147
        %v2896 = vpop.f32.mrf.mxu0
        %v2897 = vadd.f32 0.0, %v2896
        %v2898 = vpop.f32.mrf.mxu0
        %v2899 = vadd.f32 0.0, %v2898
        %v2900 = vpop.f32.mrf.mxu0
        %v2901 = vadd.f32 0.0, %v2900
        %v2902 = vpop.f32.mrf.mxu0
        %v2903 = vadd.f32 0.0, %v2902
        %2904 = vmatprep.mubr.bf16.mxu0 0
        %2905 = vmatmul.mubr.bf16.gmra.mxu0 %v2150
        %v2906 = vpop.f32.mrf.mxu0
        %v2907 = vadd.f32 0.0, %v2906
        %v2908 = vpop.f32.mrf.mxu0
        %v2909 = vadd.f32 0.0, %v2908
        %v2910 = vpop.f32.mrf.mxu0
        %v2911 = vadd.f32 0.0, %v2910
        %v2912 = vpop.f32.mrf.mxu0
        %v2913 = vadd.f32 0.0, %v2912
        %2914 = vmatprep.mubr.bf16.mxu0 0
        %2915 = vmatmul.mubr.bf16.gmra.mxu0 %v2153
        %v2916 = vpop.f32.mrf.mxu0
        %v2917 = vadd.f32 0.0, %v2916
        %v2918 = vpop.f32.mrf.mxu0
        %v2919 = vadd.f32 0.0, %v2918
        %v2920 = vpop.f32.mrf.mxu0
        %v2921 = vadd.f32 0.0, %v2920
        %v2922 = vpop.f32.mrf.mxu0
        %v2923 = vadd.f32 0.0, %v2922
        %2924 = vmatprep.mubr.bf16.mxu0 0
        %2925 = vmatmul.mubr.bf16.gmra.mxu0 %v2156
        %v2926 = vpop.f32.mrf.mxu0
        %v2927 = vadd.f32 0.0, %v2926
        %v2928 = vpop.f32.mrf.mxu0
        %v2929 = vadd.f32 0.0, %v2928
        %v2930 = vpop.f32.mrf.mxu0
        %v2931 = vadd.f32 0.0, %v2930
        %v2932 = vpop.f32.mrf.mxu0
        %v2933 = vadd.f32 0.0, %v2932
        %2934 = vmatprep.mubr.bf16.mxu0 0
        %2935 = vmatmul.mubr.bf16.gmra.mxu0 %v2159
        %v2936 = vpop.f32.mrf.mxu0
        %v2937 = vadd.f32 0.0, %v2936
        %v2938 = vpop.f32.mrf.mxu0
        %v2939 = vadd.f32 0.0, %v2938
        %v2940 = vpop.f32.mrf.mxu0
        %v2941 = vadd.f32 0.0, %v2940
        %v2942 = vpop.f32.mrf.mxu0
        %v2943 = vadd.f32 0.0, %v2942
        %2944 = vmatprep.mubr.bf16.mxu0 0
        %2945 = vmatmul.mubr.bf16.gmra.mxu0 %v2162
        %v2946 = vpop.f32.mrf.mxu0
        %v2947 = vadd.f32 0.0, %v2946
        %v2948 = vpop.f32.mrf.mxu0
        %v2949 = vadd.f32 0.0, %v2948
        %v2950 = vpop.f32.mrf.mxu0
        %v2951 = vadd.f32 0.0, %v2950
        %v2952 = vpop.f32.mrf.mxu0
        %v2953 = vadd.f32 0.0, %v2952
        %2954 = vmatprep.mubr.bf16.mxu0 0
        %2955 = vmatmul.mubr.bf16.gmra.mxu0 %v2165
        %v2956 = vpop.f32.mrf.mxu0
        %v2957 = vadd.f32 0.0, %v2956
        %v2958 = vpop.f32.mrf.mxu0
        %v2959 = vadd.f32 0.0, %v2958
        %v2960 = vpop.f32.mrf.mxu0
        %v2961 = vadd.f32 0.0, %v2960
        %v2962 = vpop.f32.mrf.mxu0
        %v2963 = vadd.f32 0.0, %v2962
        %2964 = vmatprep.mubr.bf16.mxu0 0
        %2965 = vmatmul.mubr.bf16.gmra.mxu0 %v2168
        %v2966 = vpop.f32.mrf.mxu0
        %v2967 = vadd.f32 0.0, %v2966
        %v2968 = vpop.f32.mrf.mxu0
        %v2969 = vadd.f32 0.0, %v2968
        %v2970 = vpop.f32.mrf.mxu0
        %v2971 = vadd.f32 0.0, %v2970
        %v2972 = vpop.f32.mrf.mxu0
        %v2973 = vadd.f32 0.0, %v2972
        %2974 = vmatprep.mubr.bf16.mxu0 0
        %2975 = vmatmul.mubr.bf16.gmra.mxu0 %v2171
        %v2976 = vpop.f32.mrf.mxu0
        %v2977 = vadd.f32 0.0, %v2976
        %v2978 = vpop.f32.mrf.mxu0
        %v2979 = vadd.f32 0.0, %v2978
        %v2980 = vpop.f32.mrf.mxu0
        %v2981 = vadd.f32 0.0, %v2980
        %v2982 = vpop.f32.mrf.mxu0
        %v2983 = vadd.f32 0.0, %v2982
        %2984 = vmatprep.mubr.bf16.mxu0 0
        %2985 = vmatmul.mubr.bf16.gmra.mxu0 %v2174
        %v2986 = vpop.f32.mrf.mxu0
        %v2987 = vadd.f32 0.0, %v2986
        %v2988 = vpop.f32.mrf.mxu0
        %v2989 = vadd.f32 0.0, %v2988
        %v2990 = vpop.f32.mrf.mxu0
        %v2991 = vadd.f32 0.0, %v2990
        %v2992 = vpop.f32.mrf.mxu0
        %v2993 = vadd.f32 0.0, %v2992
        %2994 = vdwg.mxu0
        %2995 = vmatprep.subr.bf16.mxu0 0
        %2996 = vmatpush1.bf16.xpose.msra.mxu0 %v2342
        %2997 = vmatprep.subr.bf16.mxu0 0
        %2998 = vmatpush1.bf16.xpose.msra.mxu0 %v2339
        %2999 = vmatprep.subr.bf16.mxu0 0
        %3000 = vmatpush1.bf16.xpose.msra.mxu0 %v2336
        %3001 = vmatprep.subr.bf16.mxu0 0
        %3002 = vmatpush1.bf16.xpose.msra.mxu0 %v2333
        %3003 = vmatprep.subr.bf16.mxu0 0
        %3004 = vmatpush1.bf16.xpose.msra.mxu0 %v2330
        %3005 = vmatprep.subr.bf16.mxu0 0
        %3006 = vmatpush1.bf16.xpose.msra.mxu0 %v2327
        %3007 = vmatprep.subr.bf16.mxu0 0
        %3008 = vmatpush1.bf16.xpose.msra.mxu0 %v2324
        %3009 = vmatprep.subr.bf16.mxu0 0
        %3010 = vmatpush1.bf16.xpose.msra.mxu0 %v2321
        %3011 = vmatprep.subr.bf16.mxu0 0
        %3012 = vmatpush2.bf16.xpose.msra.mxu0 %v2366
        %3013 = vmatprep.subr.bf16.mxu0 0
        %3014 = vmatpush2.bf16.xpose.msra.mxu0 %v2363
        %3015 = vmatprep.subr.bf16.mxu0 0
        %3016 = vmatpush2.bf16.xpose.msra.mxu0 %v2360
        %3017 = vmatprep.subr.bf16.mxu0 0
        %3018 = vmatpush2.bf16.xpose.msra.mxu0 %v2357
        %3019 = vmatprep.subr.bf16.mxu0 0
        %3020 = vmatpush2.bf16.xpose.msra.mxu0 %v2354
        %3021 = vmatprep.subr.bf16.mxu0 0
        %3022 = vmatpush2.bf16.xpose.msra.mxu0 %v2351
        %3023 = vmatprep.subr.bf16.mxu0 0
        %3024 = vmatpush2.bf16.xpose.msra.mxu0 %v2348
        %3025 = vmatprep.subr.bf16.mxu0 0
        %3026 = vmatpush2.bf16.xpose.msra.mxu0 %v2345
        %3027 = vmatprep.mubr.bf16.mxu0 0
        %3028 = vmatmul.mubr.bf16.gmra.mxu0 %v2129
        %v3029 = vpop.f32.mrf.mxu0
        %v3030 = vadd.f32 0.0, %v3029
        %v3031 = vpop.f32.mrf.mxu0
        %v3032 = vadd.f32 0.0, %v3031
        %v3033 = vpop.f32.mrf.mxu0
        %v3034 = vadd.f32 0.0, %v3033
        %v3035 = vpop.f32.mrf.mxu0
        %v3036 = vadd.f32 0.0, %v3035
        %3037 = vmatprep.mubr.bf16.mxu0 0
        %3038 = vmatmul.mubr.bf16.gmra.mxu0 %v2132
        %v3039 = vpop.f32.mrf.mxu0
        %v3040 = vadd.f32 0.0, %v3039
        %v3041 = vpop.f32.mrf.mxu0
        %v3042 = vadd.f32 0.0, %v3041
        %v3043 = vpop.f32.mrf.mxu0
        %v3044 = vadd.f32 0.0, %v3043
        %v3045 = vpop.f32.mrf.mxu0
        %v3046 = vadd.f32 0.0, %v3045
        %3047 = vmatprep.mubr.bf16.mxu0 0
        %3048 = vmatmul.mubr.bf16.gmra.mxu0 %v2135
        %v3049 = vpop.f32.mrf.mxu0
        %v3050 = vadd.f32 0.0, %v3049
        %v3051 = vpop.f32.mrf.mxu0
        %v3052 = vadd.f32 0.0, %v3051
        %v3053 = vpop.f32.mrf.mxu0
        %v3054 = vadd.f32 0.0, %v3053
        %v3055 = vpop.f32.mrf.mxu0
        %v3056 = vadd.f32 0.0, %v3055
        %3057 = vmatprep.mubr.bf16.mxu0 0
        %3058 = vmatmul.mubr.bf16.gmra.mxu0 %v2138
        %v3059 = vpop.f32.mrf.mxu0
        %v3060 = vadd.f32 0.0, %v3059
        %v3061 = vpop.f32.mrf.mxu0
        %v3062 = vadd.f32 0.0, %v3061
        %v3063 = vpop.f32.mrf.mxu0
        %v3064 = vadd.f32 0.0, %v3063
        %v3065 = vpop.f32.mrf.mxu0
        %v3066 = vadd.f32 0.0, %v3065
        %3067 = vmatprep.mubr.bf16.mxu0 0
        %3068 = vmatmul.mubr.bf16.gmra.mxu0 %v2141
        %v3069 = vpop.f32.mrf.mxu0
        %v3070 = vadd.f32 0.0, %v3069
        %v3071 = vpop.f32.mrf.mxu0
        %v3072 = vadd.f32 0.0, %v3071
        %v3073 = vpop.f32.mrf.mxu0
        %v3074 = vadd.f32 0.0, %v3073
        %v3075 = vpop.f32.mrf.mxu0
        %v3076 = vadd.f32 0.0, %v3075
        %3077 = vmatprep.mubr.bf16.mxu0 0
        %3078 = vmatmul.mubr.bf16.gmra.mxu0 %v2144
        %v3079 = vpop.f32.mrf.mxu0
        %v3080 = vadd.f32 0.0, %v3079
        %v3081 = vpop.f32.mrf.mxu0
        %v3082 = vadd.f32 0.0, %v3081
        %v3083 = vpop.f32.mrf.mxu0
        %v3084 = vadd.f32 0.0, %v3083
        %v3085 = vpop.f32.mrf.mxu0
        %v3086 = vadd.f32 0.0, %v3085
        %3087 = vmatprep.mubr.bf16.mxu0 0
        %3088 = vmatmul.mubr.bf16.gmra.mxu0 %v2147
        %v3089 = vpop.f32.mrf.mxu0
        %v3090 = vadd.f32 0.0, %v3089
        %v3091 = vpop.f32.mrf.mxu0
        %v3092 = vadd.f32 0.0, %v3091
        %v3093 = vpop.f32.mrf.mxu0
        %v3094 = vadd.f32 0.0, %v3093
        %v3095 = vpop.f32.mrf.mxu0
        %v3096 = vadd.f32 0.0, %v3095
        %3097 = vmatprep.mubr.bf16.mxu0 0
        %3098 = vmatmul.mubr.bf16.gmra.mxu0 %v2150
        %v3099 = vpop.f32.mrf.mxu0
        %v3100 = vadd.f32 0.0, %v3099
        %v3101 = vpop.f32.mrf.mxu0
        %v3102 = vadd.f32 0.0, %v3101
        %v3103 = vpop.f32.mrf.mxu0
        %v3104 = vadd.f32 0.0, %v3103
        %v3105 = vpop.f32.mrf.mxu0
        %v3106 = vadd.f32 0.0, %v3105
        %3107 = vmatprep.mubr.bf16.mxu0 0
        %3108 = vmatmul.mubr.bf16.gmra.mxu0 %v2153
        %v3109 = vpop.f32.mrf.mxu0
        %v3110 = vadd.f32 0.0, %v3109
        %v3111 = vpop.f32.mrf.mxu0
        %v3112 = vadd.f32 0.0, %v3111
        %v3113 = vpop.f32.mrf.mxu0
        %v3114 = vadd.f32 0.0, %v3113
        %v3115 = vpop.f32.mrf.mxu0
        %v3116 = vadd.f32 0.0, %v3115
        %3117 = vmatprep.mubr.bf16.mxu0 0
        %3118 = vmatmul.mubr.bf16.gmra.mxu0 %v2156
        %v3119 = vpop.f32.mrf.mxu0
        %v3120 = vadd.f32 0.0, %v3119
        %v3121 = vpop.f32.mrf.mxu0
        %v3122 = vadd.f32 0.0, %v3121
        %v3123 = vpop.f32.mrf.mxu0
        %v3124 = vadd.f32 0.0, %v3123
        %v3125 = vpop.f32.mrf.mxu0
        %v3126 = vadd.f32 0.0, %v3125
        %3127 = vmatprep.mubr.bf16.mxu0 0
        %3128 = vmatmul.mubr.bf16.gmra.mxu0 %v2159
        %v3129 = vpop.f32.mrf.mxu0
        %v3130 = vadd.f32 0.0, %v3129
        %v3131 = vpop.f32.mrf.mxu0
        %v3132 = vadd.f32 0.0, %v3131
        %v3133 = vpop.f32.mrf.mxu0
        %v3134 = vadd.f32 0.0, %v3133
        %v3135 = vpop.f32.mrf.mxu0
        %v3136 = vadd.f32 0.0, %v3135
        %3137 = vmatprep.mubr.bf16.mxu0 0
        %3138 = vmatmul.mubr.bf16.gmra.mxu0 %v2162
        %v3139 = vpop.f32.mrf.mxu0
        %v3140 = vadd.f32 0.0, %v3139
        %v3141 = vpop.f32.mrf.mxu0
        %v3142 = vadd.f32 0.0, %v3141
        %v3143 = vpop.f32.mrf.mxu0
        %v3144 = vadd.f32 0.0, %v3143
        %v3145 = vpop.f32.mrf.mxu0
        %v3146 = vadd.f32 0.0, %v3145
        %3147 = vmatprep.mubr.bf16.mxu0 0
        %3148 = vmatmul.mubr.bf16.gmra.mxu0 %v2165
        %v3149 = vpop.f32.mrf.mxu0
        %v3150 = vadd.f32 0.0, %v3149
        %v3151 = vpop.f32.mrf.mxu0
        %v3152 = vadd.f32 0.0, %v3151
        %v3153 = vpop.f32.mrf.mxu0
        %v3154 = vadd.f32 0.0, %v3153
        %v3155 = vpop.f32.mrf.mxu0
        %v3156 = vadd.f32 0.0, %v3155
        %3157 = vmatprep.mubr.bf16.mxu0 0
        %3158 = vmatmul.mubr.bf16.gmra.mxu0 %v2168
        %v3159 = vpop.f32.mrf.mxu0
        %v3160 = vadd.f32 0.0, %v3159
        %v3161 = vpop.f32.mrf.mxu0
        %v3162 = vadd.f32 0.0, %v3161
        %v3163 = vpop.f32.mrf.mxu0
        %v3164 = vadd.f32 0.0, %v3163
        %v3165 = vpop.f32.mrf.mxu0
        %v3166 = vadd.f32 0.0, %v3165
        %3167 = vmatprep.mubr.bf16.mxu0 0
        %3168 = vmatmul.mubr.bf16.gmra.mxu0 %v2171
        %v3169 = vpop.f32.mrf.mxu0
        %v3170 = vadd.f32 0.0, %v3169
        %v3171 = vpop.f32.mrf.mxu0
        %v3172 = vadd.f32 0.0, %v3171
        %v3173 = vpop.f32.mrf.mxu0
        %v3174 = vadd.f32 0.0, %v3173
        %v3175 = vpop.f32.mrf.mxu0
        %v3176 = vadd.f32 0.0, %v3175
        %3177 = vmatprep.mubr.bf16.mxu0 0
        %3178 = vmatmul.mubr.bf16.gmra.mxu0 %v2174
        %v3179 = vpop.f32.mrf.mxu0
        %v3180 = vadd.f32 0.0, %v3179
        %v3181 = vpop.f32.mrf.mxu0
        %v3182 = vadd.f32 0.0, %v3181
        %v3183 = vpop.f32.mrf.mxu0
        %v3184 = vadd.f32 0.0, %v3183
        %v3185 = vpop.f32.mrf.mxu0
        %v3186 = vadd.f32 0.0, %v3185
        %3187 = vdwg.mxu0
        %3188 = vmatprep.subr.bf16.mxu0 0
        %3189 = vmatpush1.bf16.xpose.msra.mxu0 %v2390
        %3190 = vmatprep.subr.bf16.mxu0 0
        %3191 = vmatpush1.bf16.xpose.msra.mxu0 %v2387
        %3192 = vmatprep.subr.bf16.mxu0 0
        %3193 = vmatpush1.bf16.xpose.msra.mxu0 %v2384
        %3194 = vmatprep.subr.bf16.mxu0 0
        %3195 = vmatpush1.bf16.xpose.msra.mxu0 %v2381
        %3196 = vmatprep.subr.bf16.mxu0 0
        %3197 = vmatpush1.bf16.xpose.msra.mxu0 %v2378
        %3198 = vmatprep.subr.bf16.mxu0 0
        %3199 = vmatpush1.bf16.xpose.msra.mxu0 %v2375
        %3200 = vmatprep.subr.bf16.mxu0 0
        %3201 = vmatpush1.bf16.xpose.msra.mxu0 %v2372
        %3202 = vmatprep.subr.bf16.mxu0 0
        %3203 = vmatpush1.bf16.xpose.msra.mxu0 %v2369
        %3204 = vmatprep.subr.bf16.mxu0 0
        %3205 = vmatpush2.bf16.xpose.msra.mxu0 %v2414
        %3206 = vmatprep.subr.bf16.mxu0 0
        %3207 = vmatpush2.bf16.xpose.msra.mxu0 %v2411
        %3208 = vmatprep.subr.bf16.mxu0 0
        %3209 = vmatpush2.bf16.xpose.msra.mxu0 %v2408
        %3210 = vmatprep.subr.bf16.mxu0 0
        %3211 = vmatpush2.bf16.xpose.msra.mxu0 %v2405
        %3212 = vmatprep.subr.bf16.mxu0 0
        %3213 = vmatpush2.bf16.xpose.msra.mxu0 %v2402
        %3214 = vmatprep.subr.bf16.mxu0 0
        %3215 = vmatpush2.bf16.xpose.msra.mxu0 %v2399
        %3216 = vmatprep.subr.bf16.mxu0 0
        %3217 = vmatpush2.bf16.xpose.msra.mxu0 %v2396
        %3218 = vmatprep.subr.bf16.mxu0 0
        %3219 = vmatpush2.bf16.xpose.msra.mxu0 %v2393
        %3220 = vmatprep.mubr.bf16.mxu0 0
        %3221 = vmatmul.mubr.bf16.gmra.mxu0 %v2129
        %v3222 = vpop.f32.mrf.mxu0
        %v3223 = vadd.f32 0.0, %v3222
        %v3224 = vpop.f32.mrf.mxu0
        %v3225 = vadd.f32 0.0, %v3224
        %v3226 = vpop.f32.mrf.mxu0
        %v3227 = vadd.f32 0.0, %v3226
        %v3228 = vpop.f32.mrf.mxu0
        %v3229 = vadd.f32 0.0, %v3228
        %3230 = vmatprep.mubr.bf16.mxu0 0
        %3231 = vmatmul.mubr.bf16.gmra.mxu0 %v2132
        %v3232 = vpop.f32.mrf.mxu0
        %v3233 = vadd.f32 0.0, %v3232
        %v3234 = vpop.f32.mrf.mxu0
        %v3235 = vadd.f32 0.0, %v3234
        %v3236 = vpop.f32.mrf.mxu0
        %v3237 = vadd.f32 0.0, %v3236
        %v3238 = vpop.f32.mrf.mxu0
        %v3239 = vadd.f32 0.0, %v3238
        %3240 = vmatprep.mubr.bf16.mxu0 0
        %3241 = vmatmul.mubr.bf16.gmra.mxu0 %v2135
        %v3242 = vpop.f32.mrf.mxu0
        %v3243 = vadd.f32 0.0, %v3242
        %v3244 = vpop.f32.mrf.mxu0
        %v3245 = vadd.f32 0.0, %v3244
        %v3246 = vpop.f32.mrf.mxu0
        %v3247 = vadd.f32 0.0, %v3246
        %v3248 = vpop.f32.mrf.mxu0
        %v3249 = vadd.f32 0.0, %v3248
        %3250 = vmatprep.mubr.bf16.mxu0 0
        %3251 = vmatmul.mubr.bf16.gmra.mxu0 %v2138
        %v3252 = vpop.f32.mrf.mxu0
        %v3253 = vadd.f32 0.0, %v3252
        %v3254 = vpop.f32.mrf.mxu0
        %v3255 = vadd.f32 0.0, %v3254
        %v3256 = vpop.f32.mrf.mxu0
        %v3257 = vadd.f32 0.0, %v3256
        %v3258 = vpop.f32.mrf.mxu0
        %v3259 = vadd.f32 0.0, %v3258
        %3260 = vmatprep.mubr.bf16.mxu0 0
        %3261 = vmatmul.mubr.bf16.gmra.mxu0 %v2141
        %v3262 = vpop.f32.mrf.mxu0
        %v3263 = vadd.f32 0.0, %v3262
        %v3264 = vpop.f32.mrf.mxu0
        %v3265 = vadd.f32 0.0, %v3264
        %v3266 = vpop.f32.mrf.mxu0
        %v3267 = vadd.f32 0.0, %v3266
        %v3268 = vpop.f32.mrf.mxu0
        %v3269 = vadd.f32 0.0, %v3268
        %3270 = vmatprep.mubr.bf16.mxu0 0
        %3271 = vmatmul.mubr.bf16.gmra.mxu0 %v2144
        %v3272 = vpop.f32.mrf.mxu0
        %v3273 = vadd.f32 0.0, %v3272
        %v3274 = vpop.f32.mrf.mxu0
        %v3275 = vadd.f32 0.0, %v3274
        %v3276 = vpop.f32.mrf.mxu0
        %v3277 = vadd.f32 0.0, %v3276
        %v3278 = vpop.f32.mrf.mxu0
        %v3279 = vadd.f32 0.0, %v3278
        %3280 = vmatprep.mubr.bf16.mxu0 0
        %3281 = vmatmul.mubr.bf16.gmra.mxu0 %v2147
        %v3282 = vpop.f32.mrf.mxu0
        %v3283 = vadd.f32 0.0, %v3282
        %v3284 = vpop.f32.mrf.mxu0
        %v3285 = vadd.f32 0.0, %v3284
        %v3286 = vpop.f32.mrf.mxu0
        %v3287 = vadd.f32 0.0, %v3286
        %v3288 = vpop.f32.mrf.mxu0
        %v3289 = vadd.f32 0.0, %v3288
        %3290 = vmatprep.mubr.bf16.mxu0 0
        %3291 = vmatmul.mubr.bf16.gmra.mxu0 %v2150
        %v3292 = vpop.f32.mrf.mxu0
        %v3293 = vadd.f32 0.0, %v3292
        %v3294 = vpop.f32.mrf.mxu0
        %v3295 = vadd.f32 0.0, %v3294
        %v3296 = vpop.f32.mrf.mxu0
        %v3297 = vadd.f32 0.0, %v3296
        %v3298 = vpop.f32.mrf.mxu0
        %v3299 = vadd.f32 0.0, %v3298
        %3300 = vmatprep.mubr.bf16.mxu0 0
        %3301 = vmatmul.mubr.bf16.gmra.mxu0 %v2153
        %v3302 = vpop.f32.mrf.mxu0
        %v3303 = vadd.f32 0.0, %v3302
        %v3304 = vpop.f32.mrf.mxu0
        %v3305 = vadd.f32 0.0, %v3304
        %v3306 = vpop.f32.mrf.mxu0
        %v3307 = vadd.f32 0.0, %v3306
        %v3308 = vpop.f32.mrf.mxu0
        %v3309 = vadd.f32 0.0, %v3308
        %3310 = vmatprep.mubr.bf16.mxu0 0
        %3311 = vmatmul.mubr.bf16.gmra.mxu0 %v2156
        %v3312 = vpop.f32.mrf.mxu0
        %v3313 = vadd.f32 0.0, %v3312
        %v3314 = vpop.f32.mrf.mxu0
        %v3315 = vadd.f32 0.0, %v3314
        %v3316 = vpop.f32.mrf.mxu0
        %v3317 = vadd.f32 0.0, %v3316
        %v3318 = vpop.f32.mrf.mxu0
        %v3319 = vadd.f32 0.0, %v3318
        %3320 = vmatprep.mubr.bf16.mxu0 0
        %3321 = vmatmul.mubr.bf16.gmra.mxu0 %v2159
        %v3322 = vpop.f32.mrf.mxu0
        %v3323 = vadd.f32 0.0, %v3322
        %v3324 = vpop.f32.mrf.mxu0
        %v3325 = vadd.f32 0.0, %v3324
        %v3326 = vpop.f32.mrf.mxu0
        %v3327 = vadd.f32 0.0, %v3326
        %v3328 = vpop.f32.mrf.mxu0
        %v3329 = vadd.f32 0.0, %v3328
        %3330 = vmatprep.mubr.bf16.mxu0 0
        %3331 = vmatmul.mubr.bf16.gmra.mxu0 %v2162
        %v3332 = vpop.f32.mrf.mxu0
        %v3333 = vadd.f32 0.0, %v3332
        %v3334 = vpop.f32.mrf.mxu0
        %v3335 = vadd.f32 0.0, %v3334
        %v3336 = vpop.f32.mrf.mxu0
        %v3337 = vadd.f32 0.0, %v3336
        %v3338 = vpop.f32.mrf.mxu0
        %v3339 = vadd.f32 0.0, %v3338
        %3340 = vmatprep.mubr.bf16.mxu0 0
        %3341 = vmatmul.mubr.bf16.gmra.mxu0 %v2165
        %v3342 = vpop.f32.mrf.mxu0
        %v3343 = vadd.f32 0.0, %v3342
        %v3344 = vpop.f32.mrf.mxu0
        %v3345 = vadd.f32 0.0, %v3344
        %v3346 = vpop.f32.mrf.mxu0
        %v3347 = vadd.f32 0.0, %v3346
        %v3348 = vpop.f32.mrf.mxu0
        %v3349 = vadd.f32 0.0, %v3348
        %3350 = vmatprep.mubr.bf16.mxu0 0
        %3351 = vmatmul.mubr.bf16.gmra.mxu0 %v2168
        %v3352 = vpop.f32.mrf.mxu0
        %v3353 = vadd.f32 0.0, %v3352
        %v3354 = vpop.f32.mrf.mxu0
        %v3355 = vadd.f32 0.0, %v3354
        %v3356 = vpop.f32.mrf.mxu0
        %v3357 = vadd.f32 0.0, %v3356
        %v3358 = vpop.f32.mrf.mxu0
        %v3359 = vadd.f32 0.0, %v3358
        %3360 = vmatprep.mubr.bf16.mxu0 0
        %3361 = vmatmul.mubr.bf16.gmra.mxu0 %v2171
        %v3362 = vpop.f32.mrf.mxu0
        %v3363 = vadd.f32 0.0, %v3362
        %v3364 = vpop.f32.mrf.mxu0
        %v3365 = vadd.f32 0.0, %v3364
        %v3366 = vpop.f32.mrf.mxu0
        %v3367 = vadd.f32 0.0, %v3366
        %v3368 = vpop.f32.mrf.mxu0
        %v3369 = vadd.f32 0.0, %v3368
        %3370 = vmatprep.mubr.bf16.mxu0 0
        %3371 = vmatmul.mubr.bf16.gmra.mxu0 %v2174
        %v3372 = vpop.f32.mrf.mxu0
        %v3373 = vadd.f32 0.0, %v3372
        %v3374 = vpop.f32.mrf.mxu0
        %v3375 = vadd.f32 0.0, %v3374
        %v3376 = vpop.f32.mrf.mxu0
        %v3377 = vadd.f32 0.0, %v3376
        %v3378 = vpop.f32.mrf.mxu0
        %v3379 = vadd.f32 0.0, %v3378
        %3380 = vdwg.mxu0
        %v3413 = vunpack.c.l.b16 %v1583
        %v3414 = vunpack.c.l.b16 %v1584
        %v3415 = vunpack.c.l.b16 %v1585
        %v3416 = vunpack.c.l.b16 %v1586
        %v3417 = vunpack.c.l.b16 %v1587
        %v3418 = vunpack.c.l.b16 %v1588
        %v3419 = vunpack.c.l.b16 %v1589
        %v3420 = vunpack.c.l.b16 %v1590
        %v3421 = vunpack.c.l.b16 %v1591
        %v3422 = vunpack.c.l.b16 %v1592
        %v3423 = vunpack.c.l.b16 %v1593
        %v3424 = vunpack.c.l.b16 %v1594
        %v3425 = vunpack.c.l.b16 %v1595
        %v3426 = vunpack.c.l.b16 %v1596
        %v3427 = vunpack.c.l.b16 %v1597
        %v3428 = vunpack.c.l.b16 %v1598
        %v3429 = vunpack.c.l.b16 %v1599
        %v3430 = vunpack.c.l.b16 %v1600
        %v3431 = vunpack.c.l.b16 %v1601
        %v3432 = vunpack.c.l.b16 %v1602
        %v3433 = vunpack.c.l.b16 %v1603
        %v3434 = vunpack.c.l.b16 %v1604
        %v3435 = vunpack.c.l.b16 %v1605
        %v3436 = vunpack.c.l.b16 %v1606
        %v3437 = vunpack.c.l.b16 %v1607
        %v3438 = vunpack.c.l.b16 %v1608
        %v3439 = vunpack.c.l.b16 %v1609
        %v3440 = vunpack.c.l.b16 %v1610
        %v3441 = vunpack.c.l.b16 %v1611
        %v3442 = vunpack.c.l.b16 %v1612
        %v3443 = vunpack.c.l.b16 %v1613
        %v3444 = vunpack.c.l.b16 %v1614
        %v3445 = vpack.c.b16 %v3414, %v3413
        %v3446 = vpack.c.b16 %v3416, %v3415
        %v3447 = vpack.c.b16 %v3418, %v3417
        %v3448 = vpack.c.b16 %v3420, %v3419
        %v3449 = vpack.c.b16 %v3422, %v3421
        %v3450 = vpack.c.b16 %v3424, %v3423
        %v3451 = vpack.c.b16 %v3426, %v3425
        %v3452 = vpack.c.b16 %v3428, %v3427
        %v3453 = vpack.c.b16 %v3430, %v3429
        %v3454 = vpack.c.b16 %v3432, %v3431
        %v3455 = vpack.c.b16 %v3434, %v3433
        %v3456 = vpack.c.b16 %v3436, %v3435
        %v3457 = vpack.c.b16 %v3438, %v3437
        %v3458 = vpack.c.b16 %v3440, %v3439
        %v3459 = vpack.c.b16 %v3442, %v3441
        %v3460 = vpack.c.b16 %v3444, %v3443
        %v3621 = vunpack.c.l.b16 %v703
        %v3622 = vunpack.c.l.b16 %v704
        %v3623 = vunpack.c.l.b16 %v705
        %v3624 = vunpack.c.l.b16 %v706
        %v3625 = vunpack.c.l.b16 %v707
        %v3626 = vunpack.c.l.b16 %v708
        %v3627 = vunpack.c.l.b16 %v709
        %v3628 = vunpack.c.l.b16 %v710
        %v3629 = vunpack.c.l.b16 %v711
        %v3630 = vunpack.c.l.b16 %v712
        %v3631 = vunpack.c.l.b16 %v713
        %v3632 = vunpack.c.l.b16 %v714
        %v3633 = vunpack.c.l.b16 %v715
        %v3634 = vunpack.c.l.b16 %v716
        %v3635 = vunpack.c.l.b16 %v717
        %v3636 = vunpack.c.l.b16 %v718
        %v3637 = vunpack.c.l.b16 %v719
        %v3638 = vunpack.c.l.b16 %v720
        %v3639 = vunpack.c.l.b16 %v721
        %v3640 = vunpack.c.l.b16 %v722
        %v3641 = vunpack.c.l.b16 %v723
        %v3642 = vunpack.c.l.b16 %v724
        %v3643 = vunpack.c.l.b16 %v725
        %v3644 = vunpack.c.l.b16 %v726
        %v3645 = vunpack.c.l.b16 %v727
        %v3646 = vunpack.c.l.b16 %v728
        %v3647 = vunpack.c.l.b16 %v729
        %v3648 = vunpack.c.l.b16 %v730
        %v3649 = vunpack.c.l.b16 %v731
        %v3650 = vunpack.c.l.b16 %v732
        %v3651 = vunpack.c.l.b16 %v733
        %v3652 = vunpack.c.l.b16 %v734
        %v3653 = vunpack.c.l.b16 %v735
        %v3654 = vunpack.c.l.b16 %v736
        %v3655 = vunpack.c.l.b16 %v737
        %v3656 = vunpack.c.l.b16 %v738
        %v3657 = vunpack.c.l.b16 %v739
        %v3658 = vunpack.c.l.b16 %v740
        %v3659 = vunpack.c.l.b16 %v741
        %v3660 = vunpack.c.l.b16 %v742
        %v3661 = vunpack.c.l.b16 %v743
        %v3662 = vunpack.c.l.b16 %v744
        %v3663 = vunpack.c.l.b16 %v745
        %v3664 = vunpack.c.l.b16 %v746
        %v3665 = vunpack.c.l.b16 %v747
        %v3666 = vunpack.c.l.b16 %v748
        %v3667 = vunpack.c.l.b16 %v749
        %v3668 = vunpack.c.l.b16 %v750
        %v3669 = vunpack.c.l.b16 %v751
        %v3670 = vunpack.c.l.b16 %v752
        %v3671 = vunpack.c.l.b16 %v753
        %v3672 = vunpack.c.l.b16 %v754
        %v3673 = vunpack.c.l.b16 %v755
        %v3674 = vunpack.c.l.b16 %v756
        %v3675 = vunpack.c.l.b16 %v757
        %v3676 = vunpack.c.l.b16 %v758
        %v3677 = vunpack.c.l.b16 %v759
        %v3678 = vunpack.c.l.b16 %v760
        %v3679 = vunpack.c.l.b16 %v761
        %v3680 = vunpack.c.l.b16 %v762
        %v3681 = vunpack.c.l.b16 %v763
        %v3682 = vunpack.c.l.b16 %v764
        %v3683 = vunpack.c.l.b16 %v765
        %v3684 = vunpack.c.l.b16 %v766
        %v3685 = vunpack.c.l.b16 %v767
        %v3686 = vunpack.c.l.b16 %v768
        %v3687 = vunpack.c.l.b16 %v769
        %v3688 = vunpack.c.l.b16 %v770
        %v3689 = vunpack.c.l.b16 %v771
        %v3690 = vunpack.c.l.b16 %v772
        %v3691 = vunpack.c.l.b16 %v773
        %v3692 = vunpack.c.l.b16 %v774
        %v3693 = vunpack.c.l.b16 %v775
        %v3694 = vunpack.c.l.b16 %v776
        %v3695 = vunpack.c.l.b16 %v777
        %v3696 = vunpack.c.l.b16 %v778
        %v3697 = vunpack.c.l.b16 %v779
        %v3698 = vunpack.c.l.b16 %v780
        %v3699 = vunpack.c.l.b16 %v781
        %v3700 = vunpack.c.l.b16 %v782
        %v3701 = vunpack.c.l.b16 %v783
        %v3702 = vunpack.c.l.b16 %v784
        %v3703 = vunpack.c.l.b16 %v785
        %v3704 = vunpack.c.l.b16 %v786
        %v3705 = vunpack.c.l.b16 %v787
        %v3706 = vunpack.c.l.b16 %v788
        %v3707 = vunpack.c.l.b16 %v789
        %v3708 = vunpack.c.l.b16 %v790
        %v3709 = vunpack.c.l.b16 %v791
        %v3710 = vunpack.c.l.b16 %v792
        %v3711 = vunpack.c.l.b16 %v793
        %v3712 = vunpack.c.l.b16 %v794
        %v3713 = vunpack.c.l.b16 %v795
        %v3714 = vunpack.c.l.b16 %v796
        %v3715 = vunpack.c.l.b16 %v797
        %v3716 = vunpack.c.l.b16 %v798
        %v3717 = vunpack.c.l.b16 %v799
        %v3718 = vunpack.c.l.b16 %v800
        %v3719 = vunpack.c.l.b16 %v801
        %v3720 = vunpack.c.l.b16 %v802
        %v3721 = vunpack.c.l.b16 %v803
        %v3722 = vunpack.c.l.b16 %v804
        %v3723 = vunpack.c.l.b16 %v805
        %v3724 = vunpack.c.l.b16 %v806
        %v3725 = vunpack.c.l.b16 %v807
        %v3726 = vunpack.c.l.b16 %v808
        %v3727 = vunpack.c.l.b16 %v809
        %v3728 = vunpack.c.l.b16 %v810
        %v3729 = vunpack.c.l.b16 %v811
        %v3730 = vunpack.c.l.b16 %v812
        %v3731 = vunpack.c.l.b16 %v813
        %v3732 = vunpack.c.l.b16 %v814
        %v3733 = vunpack.c.l.b16 %v815
        %v3734 = vunpack.c.l.b16 %v816
        %v3735 = vunpack.c.l.b16 %v817
        %v3736 = vunpack.c.l.b16 %v818
        %v3737 = vunpack.c.l.b16 %v819
        %v3738 = vunpack.c.l.b16 %v820
        %v3739 = vunpack.c.l.b16 %v821
        %v3740 = vunpack.c.l.b16 %v822
        %v3741 = vunpack.c.l.b16 %v823
        %v3742 = vunpack.c.l.b16 %v824
        %v3743 = vunpack.c.l.b16 %v825
        %v3744 = vunpack.c.l.b16 %v826
        %v3745 = vunpack.c.l.b16 %v827
        %v3746 = vunpack.c.l.b16 %v828
        %v3747 = vunpack.c.l.b16 %v829
        %v3748 = vunpack.c.l.b16 %v830
        %v3749 = vunpack.c.l.b16 %v831
        %v3750 = vunpack.c.l.b16 %v832
        %v3751 = vunpack.c.l.b16 %v833
        %v3752 = vunpack.c.l.b16 %v834
        %v3753 = vunpack.c.l.b16 %v835
        %v3754 = vunpack.c.l.b16 %v836
        %v3755 = vunpack.c.l.b16 %v837
        %v3756 = vunpack.c.l.b16 %v838
        %v3757 = vunpack.c.l.b16 %v839
        %v3758 = vunpack.c.l.b16 %v840
        %v3759 = vunpack.c.l.b16 %v841
        %v3760 = vunpack.c.l.b16 %v842
        %v3761 = vunpack.c.l.b16 %v843
        %v3762 = vunpack.c.l.b16 %v844
        %v3763 = vunpack.c.l.b16 %v845
        %v3764 = vunpack.c.l.b16 %v846
        %v3765 = vunpack.c.l.b16 %v847
        %v3766 = vunpack.c.l.b16 %v848
        %v3767 = vunpack.c.l.b16 %v849
        %v3768 = vunpack.c.l.b16 %v850
        %v3769 = vunpack.c.l.b16 %v851
        %v3770 = vunpack.c.l.b16 %v852
        %v3771 = vunpack.c.l.b16 %v853
        %v3772 = vunpack.c.l.b16 %v854
        %v3773 = vunpack.c.l.b16 %v855
        %v3774 = vunpack.c.l.b16 %v856
        %v3775 = vunpack.c.l.b16 %v857
        %v3776 = vunpack.c.l.b16 %v858
        %v3777 = vunpack.c.l.b16 %v859
        %v3778 = vunpack.c.l.b16 %v860
        %v3779 = vunpack.c.l.b16 %v861
        %v3780 = vunpack.c.l.b16 %v862
        %v3781 = vpack.c.b16 %v3622, %v3621
        %v3782 = vpack.c.b16 %v3624, %v3623
        %v3783 = vpack.c.b16 %v3626, %v3625
        %v3784 = vpack.c.b16 %v3628, %v3627
        %v3785 = vpack.c.b16 %v3630, %v3629
        %v3786 = vpack.c.b16 %v3632, %v3631
        %v3787 = vpack.c.b16 %v3634, %v3633
        %v3788 = vpack.c.b16 %v3636, %v3635
        %v3789 = vpack.c.b16 %v3638, %v3637
        %v3790 = vpack.c.b16 %v3640, %v3639
        %v3791 = vpack.c.b16 %v3642, %v3641
        %v3792 = vpack.c.b16 %v3644, %v3643
        %v3793 = vpack.c.b16 %v3646, %v3645
        %v3794 = vpack.c.b16 %v3648, %v3647
        %v3795 = vpack.c.b16 %v3650, %v3649
        %v3796 = vpack.c.b16 %v3652, %v3651
        %v3797 = vpack.c.b16 %v3654, %v3653
        %v3798 = vpack.c.b16 %v3656, %v3655
        %v3799 = vpack.c.b16 %v3658, %v3657
        %v3800 = vpack.c.b16 %v3660, %v3659
        %v3801 = vpack.c.b16 %v3662, %v3661
        %v3802 = vpack.c.b16 %v3664, %v3663
        %v3803 = vpack.c.b16 %v3666, %v3665
        %v3804 = vpack.c.b16 %v3668, %v3667
        %v3805 = vpack.c.b16 %v3670, %v3669
        %v3806 = vpack.c.b16 %v3672, %v3671
        %v3807 = vpack.c.b16 %v3674, %v3673
        %v3808 = vpack.c.b16 %v3676, %v3675
        %v3809 = vpack.c.b16 %v3678, %v3677
        %v3810 = vpack.c.b16 %v3680, %v3679
        %v3811 = vpack.c.b16 %v3682, %v3681
        %v3812 = vpack.c.b16 %v3684, %v3683
        %v3813 = vpack.c.b16 %v3686, %v3685
        %v3814 = vpack.c.b16 %v3688, %v3687
        %v3815 = vpack.c.b16 %v3690, %v3689
        %v3816 = vpack.c.b16 %v3692, %v3691
        %v3817 = vpack.c.b16 %v3694, %v3693
        %v3818 = vpack.c.b16 %v3696, %v3695
        %v3819 = vpack.c.b16 %v3698, %v3697
        %v3820 = vpack.c.b16 %v3700, %v3699
        %v3821 = vpack.c.b16 %v3702, %v3701
        %v3822 = vpack.c.b16 %v3704, %v3703
        %v3823 = vpack.c.b16 %v3706, %v3705
        %v3824 = vpack.c.b16 %v3708, %v3707
        %v3825 = vpack.c.b16 %v3710, %v3709
        %v3826 = vpack.c.b16 %v3712, %v3711
        %v3827 = vpack.c.b16 %v3714, %v3713
        %v3828 = vpack.c.b16 %v3716, %v3715
        %v3829 = vpack.c.b16 %v3718, %v3717
        %v3830 = vpack.c.b16 %v3720, %v3719
        %v3831 = vpack.c.b16 %v3722, %v3721
        %v3832 = vpack.c.b16 %v3724, %v3723
        %v3833 = vpack.c.b16 %v3726, %v3725
        %v3834 = vpack.c.b16 %v3728, %v3727
        %v3835 = vpack.c.b16 %v3730, %v3729
        %v3836 = vpack.c.b16 %v3732, %v3731
        %v3837 = vpack.c.b16 %v3734, %v3733
        %v3838 = vpack.c.b16 %v3736, %v3735
        %v3839 = vpack.c.b16 %v3738, %v3737
        %v3840 = vpack.c.b16 %v3740, %v3739
        %v3841 = vpack.c.b16 %v3742, %v3741
        %v3842 = vpack.c.b16 %v3744, %v3743
        %v3843 = vpack.c.b16 %v3746, %v3745
        %v3844 = vpack.c.b16 %v3748, %v3747
        %v3845 = vpack.c.b16 %v3750, %v3749
        %v3846 = vpack.c.b16 %v3752, %v3751
        %v3847 = vpack.c.b16 %v3754, %v3753
        %v3848 = vpack.c.b16 %v3756, %v3755
        %v3849 = vpack.c.b16 %v3758, %v3757
        %v3850 = vpack.c.b16 %v3760, %v3759
        %v3851 = vpack.c.b16 %v3762, %v3761
        %v3852 = vpack.c.b16 %v3764, %v3763
        %v3853 = vpack.c.b16 %v3766, %v3765
        %v3854 = vpack.c.b16 %v3768, %v3767
        %v3855 = vpack.c.b16 %v3770, %v3769
        %v3856 = vpack.c.b16 %v3772, %v3771
        %v3857 = vpack.c.b16 %v3774, %v3773
        %v3858 = vpack.c.b16 %v3776, %v3775
        %v3859 = vpack.c.b16 %v3778, %v3777
        %v3860 = vpack.c.b16 %v3780, %v3779
        %v3862 = vsel %vm2127, %v3445, 0
        %v3865 = vsel %vm2127, %v3446, 0
        %v3868 = vsel %vm2127, %v3447, 0
        %v3871 = vsel %vm2127, %v3448, 0
        %v3874 = vsel %vm2127, %v3449, 0
        %v3877 = vsel %vm2127, %v3450, 0
        %v3880 = vsel %vm2127, %v3451, 0
        %v3883 = vsel %vm2127, %v3452, 0
        %v3886 = vsel %vm2127, %v3453, 0
        %v3889 = vsel %vm2127, %v3454, 0
        %v3892 = vsel %vm2127, %v3455, 0
        %v3895 = vsel %vm2127, %v3456, 0
        %v3898 = vsel %vm2127, %v3457, 0
        %v3901 = vsel %vm2127, %v3458, 0
        %v3904 = vsel %vm2127, %v3459, 0
        %v3907 = vsel %vm2127, %v3460, 0
        %v3910 = vsel %vm2127, %v3781, 0
        %v3913 = vsel %vm2127, %v3782, 0
        %v3916 = vsel %vm2127, %v3783, 0
        %v3919 = vsel %vm2127, %v3784, 0
        %v3922 = vsel %vm2127, %v3785, 0
        %v3925 = vsel %vm2127, %v3786, 0
        %v3928 = vsel %vm2127, %v3787, 0
        %v3931 = vsel %vm2127, %v3788, 0
        %v3934 = vsel %vm2127, %v3789, 0
        %v3937 = vsel %vm2127, %v3790, 0
        %v3940 = vsel %vm2127, %v3791, 0
        %v3943 = vsel %vm2127, %v3792, 0
        %v3946 = vsel %vm2127, %v3793, 0
        %v3949 = vsel %vm2127, %v3794, 0
        %v3952 = vsel %vm2127, %v3795, 0
        %v3955 = vsel %vm2127, %v3796, 0
        %v3958 = vsel %vm2127, %v3797, 0
        %v3961 = vsel %vm2127, %v3798, 0
        %v3964 = vsel %vm2127, %v3799, 0
        %v3967 = vsel %vm2127, %v3800, 0
        %v3970 = vsel %vm2127, %v3801, 0
        %v3973 = vsel %vm2127, %v3802, 0
        %v3976 = vsel %vm2127, %v3803, 0
        %v3979 = vsel %vm2127, %v3804, 0
        %v3982 = vsel %vm2127, %v3805, 0
        %v3985 = vsel %vm2127, %v3806, 0
        %v3988 = vsel %vm2127, %v3807, 0
        %v3991 = vsel %vm2127, %v3808, 0
        %v3994 = vsel %vm2127, %v3809, 0
        %v3997 = vsel %vm2127, %v3810, 0
        %v4000 = vsel %vm2127, %v3811, 0
        %v4003 = vsel %vm2127, %v3812, 0
        %v4006 = vsel %vm2127, %v3813, 0
        %v4009 = vsel %vm2127, %v3814, 0
        %v4012 = vsel %vm2127, %v3815, 0
        %v4015 = vsel %vm2127, %v3816, 0
        %v4018 = vsel %vm2127, %v3817, 0
        %v4021 = vsel %vm2127, %v3818, 0
        %v4024 = vsel %vm2127, %v3819, 0
        %v4027 = vsel %vm2127, %v3820, 0
        %v4030 = vsel %vm2127, %v3821, 0
        %v4033 = vsel %vm2127, %v3822, 0
        %v4036 = vsel %vm2127, %v3823, 0
        %v4039 = vsel %vm2127, %v3824, 0
        %v4042 = vsel %vm2127, %v3825, 0
        %v4045 = vsel %vm2127, %v3826, 0
        %v4048 = vsel %vm2127, %v3827, 0
        %v4051 = vsel %vm2127, %v3828, 0
        %v4054 = vsel %vm2127, %v3829, 0
        %v4057 = vsel %vm2127, %v3830, 0
        %v4060 = vsel %vm2127, %v3831, 0
        %v4063 = vsel %vm2127, %v3832, 0
        %v4066 = vsel %vm2127, %v3833, 0
        %v4069 = vsel %vm2127, %v3834, 0
        %v4072 = vsel %vm2127, %v3835, 0
        %v4075 = vsel %vm2127, %v3836, 0
        %v4078 = vsel %vm2127, %v3837, 0
        %v4081 = vsel %vm2127, %v3838, 0
        %v4084 = vsel %vm2127, %v3839, 0
        %v4087 = vsel %vm2127, %v3840, 0
        %v4090 = vsel %vm2127, %v3841, 0
        %v4093 = vsel %vm2127, %v3842, 0
        %v4096 = vsel %vm2127, %v3843, 0
        %v4099 = vsel %vm2127, %v3844, 0
        %v4102 = vsel %vm2127, %v3845, 0
        %v4105 = vsel %vm2127, %v3846, 0
        %v4108 = vsel %vm2127, %v3847, 0
        %v4111 = vsel %vm2127, %v3848, 0
        %v4114 = vsel %vm2127, %v3849, 0
        %v4117 = vsel %vm2127, %v3850, 0
        %v4120 = vsel %vm2127, %v3851, 0
        %v4123 = vsel %vm2127, %v3852, 0
        %v4126 = vsel %vm2127, %v3853, 0
        %v4129 = vsel %vm2127, %v3854, 0
        %v4132 = vsel %vm2127, %v3855, 0
        %v4135 = vsel %vm2127, %v3856, 0
        %v4138 = vsel %vm2127, %v3857, 0
        %v4141 = vsel %vm2127, %v3858, 0
        %v4144 = vsel %vm2127, %v3859, 0
        %v4147 = vsel %vm2127, %v3860, 0
        %4149 = vmatprep.subr.bf16.mxu0 0
        %4150 = vmatpush1.bf16.xpose.msra.mxu0 %v3931
        %4151 = vmatprep.subr.bf16.mxu0 0
        %4152 = vmatpush1.bf16.xpose.msra.mxu0 %v3928
        %4153 = vmatprep.subr.bf16.mxu0 0
        %4154 = vmatpush1.bf16.xpose.msra.mxu0 %v3925
        %4155 = vmatprep.subr.bf16.mxu0 0
        %4156 = vmatpush1.bf16.xpose.msra.mxu0 %v3922
        %4157 = vmatprep.subr.bf16.mxu0 0
        %4158 = vmatpush1.bf16.xpose.msra.mxu0 %v3919
        %4159 = vmatprep.subr.bf16.mxu0 0
        %4160 = vmatpush1.bf16.xpose.msra.mxu0 %v3916
        %4161 = vmatprep.subr.bf16.mxu0 0
        %4162 = vmatpush1.bf16.xpose.msra.mxu0 %v3913
        %4163 = vmatprep.subr.bf16.mxu0 0
        %4164 = vmatpush1.bf16.xpose.msra.mxu0 %v3910
        %4165 = vmatprep.subr.bf16.mxu0 0
        %4166 = vmatpush2.bf16.xpose.msra.mxu0 %v3955
        %4167 = vmatprep.subr.bf16.mxu0 0
        %4168 = vmatpush2.bf16.xpose.msra.mxu0 %v3952
        %4169 = vmatprep.subr.bf16.mxu0 0
        %4170 = vmatpush2.bf16.xpose.msra.mxu0 %v3949
        %4171 = vmatprep.subr.bf16.mxu0 0
        %4172 = vmatpush2.bf16.xpose.msra.mxu0 %v3946
        %4173 = vmatprep.subr.bf16.mxu0 0
        %4174 = vmatpush2.bf16.xpose.msra.mxu0 %v3943
        %4175 = vmatprep.subr.bf16.mxu0 0
        %4176 = vmatpush2.bf16.xpose.msra.mxu0 %v3940
        %4177 = vmatprep.subr.bf16.mxu0 0
        %4178 = vmatpush2.bf16.xpose.msra.mxu0 %v3937
        %4179 = vmatprep.subr.bf16.mxu0 0
        %4180 = vmatpush2.bf16.xpose.msra.mxu0 %v3934
        %4181 = vmatprep.mubr.bf16.mxu0 0
        %4182 = vmatmul.mubr.bf16.gmra.mxu0 %v3862
        %v4183 = vpop.f32.mrf.mxu0
        %v4184 = vadd.f32 %v2451, %v4183
        %v4185 = vpop.f32.mrf.mxu0
        %v4186 = vadd.f32 %v2453, %v4185
        %v4187 = vpop.f32.mrf.mxu0
        %v4188 = vadd.f32 %v2455, %v4187
        %v4189 = vpop.f32.mrf.mxu0
        %v4190 = vadd.f32 %v2457, %v4189
        %4191 = vmatprep.mubr.bf16.mxu0 0
        %4192 = vmatmul.mubr.bf16.gmra.mxu0 %v3865
        %v4193 = vpop.f32.mrf.mxu0
        %v4194 = vadd.f32 %v2461, %v4193
        %v4195 = vpop.f32.mrf.mxu0
        %v4196 = vadd.f32 %v2463, %v4195
        %v4197 = vpop.f32.mrf.mxu0
        %v4198 = vadd.f32 %v2465, %v4197
        %v4199 = vpop.f32.mrf.mxu0
        %v4200 = vadd.f32 %v2467, %v4199
        %4201 = vmatprep.mubr.bf16.mxu0 0
        %4202 = vmatmul.mubr.bf16.gmra.mxu0 %v3868
        %v4203 = vpop.f32.mrf.mxu0
        %v4204 = vadd.f32 %v2471, %v4203
        %v4205 = vpop.f32.mrf.mxu0
        %v4206 = vadd.f32 %v2473, %v4205
        %v4207 = vpop.f32.mrf.mxu0
        %v4208 = vadd.f32 %v2475, %v4207
        %v4209 = vpop.f32.mrf.mxu0
        %v4210 = vadd.f32 %v2477, %v4209
        %4211 = vmatprep.mubr.bf16.mxu0 0
        %4212 = vmatmul.mubr.bf16.gmra.mxu0 %v3871
        %v4213 = vpop.f32.mrf.mxu0
        %v4214 = vadd.f32 %v2481, %v4213
        %v4215 = vpop.f32.mrf.mxu0
        %v4216 = vadd.f32 %v2483, %v4215
        %v4217 = vpop.f32.mrf.mxu0
        %v4218 = vadd.f32 %v2485, %v4217
        %v4219 = vpop.f32.mrf.mxu0
        %v4220 = vadd.f32 %v2487, %v4219
        %4221 = vmatprep.mubr.bf16.mxu0 0
        %4222 = vmatmul.mubr.bf16.gmra.mxu0 %v3874
        %v4223 = vpop.f32.mrf.mxu0
        %v4224 = vadd.f32 %v2491, %v4223
        %v4225 = vpop.f32.mrf.mxu0
        %v4226 = vadd.f32 %v2493, %v4225
        %v4227 = vpop.f32.mrf.mxu0
        %v4228 = vadd.f32 %v2495, %v4227
        %v4229 = vpop.f32.mrf.mxu0
        %v4230 = vadd.f32 %v2497, %v4229
        %4231 = vmatprep.mubr.bf16.mxu0 0
        %4232 = vmatmul.mubr.bf16.gmra.mxu0 %v3877
        %v4233 = vpop.f32.mrf.mxu0
        %v4234 = vadd.f32 %v2501, %v4233
        %v4235 = vpop.f32.mrf.mxu0
        %v4236 = vadd.f32 %v2503, %v4235
        %v4237 = vpop.f32.mrf.mxu0
        %v4238 = vadd.f32 %v2505, %v4237
        %v4239 = vpop.f32.mrf.mxu0
        %v4240 = vadd.f32 %v2507, %v4239
        %4241 = vmatprep.mubr.bf16.mxu0 0
        %4242 = vmatmul.mubr.bf16.gmra.mxu0 %v3880
        %v4243 = vpop.f32.mrf.mxu0
        %v4244 = vadd.f32 %v2511, %v4243
        %v4245 = vpop.f32.mrf.mxu0
        %v4246 = vadd.f32 %v2513, %v4245
        %v4247 = vpop.f32.mrf.mxu0
        %v4248 = vadd.f32 %v2515, %v4247
        %v4249 = vpop.f32.mrf.mxu0
        %v4250 = vadd.f32 %v2517, %v4249
        %4251 = vmatprep.mubr.bf16.mxu0 0
        %4252 = vmatmul.mubr.bf16.gmra.mxu0 %v3883
        %v4253 = vpop.f32.mrf.mxu0
        %v4254 = vadd.f32 %v2521, %v4253
        %v4255 = vpop.f32.mrf.mxu0
        %v4256 = vadd.f32 %v2523, %v4255
        %v4257 = vpop.f32.mrf.mxu0
        %v4258 = vadd.f32 %v2525, %v4257
        %v4259 = vpop.f32.mrf.mxu0
        %v4260 = vadd.f32 %v2527, %v4259
        %4261 = vmatprep.mubr.bf16.mxu0 0
        %4262 = vmatmul.mubr.bf16.gmra.mxu0 %v3886
        %v4263 = vpop.f32.mrf.mxu0
        %v4264 = vadd.f32 %v2531, %v4263
        %v4265 = vpop.f32.mrf.mxu0
        %v4266 = vadd.f32 %v2533, %v4265
        %v4267 = vpop.f32.mrf.mxu0
        %v4268 = vadd.f32 %v2535, %v4267
        %v4269 = vpop.f32.mrf.mxu0
        %v4270 = vadd.f32 %v2537, %v4269
        %4271 = vmatprep.mubr.bf16.mxu0 0
        %4272 = vmatmul.mubr.bf16.gmra.mxu0 %v3889
        %v4273 = vpop.f32.mrf.mxu0
        %v4274 = vadd.f32 %v2541, %v4273
        %v4275 = vpop.f32.mrf.mxu0
        %v4276 = vadd.f32 %v2543, %v4275
        %v4277 = vpop.f32.mrf.mxu0
        %v4278 = vadd.f32 %v2545, %v4277
        %v4279 = vpop.f32.mrf.mxu0
        %v4280 = vadd.f32 %v2547, %v4279
        %4281 = vmatprep.mubr.bf16.mxu0 0
        %4282 = vmatmul.mubr.bf16.gmra.mxu0 %v3892
        %v4283 = vpop.f32.mrf.mxu0
        %v4284 = vadd.f32 %v2551, %v4283
        %v4285 = vpop.f32.mrf.mxu0
        %v4286 = vadd.f32 %v2553, %v4285
        %v4287 = vpop.f32.mrf.mxu0
        %v4288 = vadd.f32 %v2555, %v4287
        %v4289 = vpop.f32.mrf.mxu0
        %v4290 = vadd.f32 %v2557, %v4289
        %4291 = vmatprep.mubr.bf16.mxu0 0
        %4292 = vmatmul.mubr.bf16.gmra.mxu0 %v3895
        %v4293 = vpop.f32.mrf.mxu0
        %v4294 = vadd.f32 %v2561, %v4293
        %v4295 = vpop.f32.mrf.mxu0
        %v4296 = vadd.f32 %v2563, %v4295
        %v4297 = vpop.f32.mrf.mxu0
        %v4298 = vadd.f32 %v2565, %v4297
        %v4299 = vpop.f32.mrf.mxu0
        %v4300 = vadd.f32 %v2567, %v4299
        %4301 = vmatprep.mubr.bf16.mxu0 0
        %4302 = vmatmul.mubr.bf16.gmra.mxu0 %v3898
        %v4303 = vpop.f32.mrf.mxu0
        %v4304 = vadd.f32 %v2571, %v4303
        %v4305 = vpop.f32.mrf.mxu0
        %v4306 = vadd.f32 %v2573, %v4305
        %v4307 = vpop.f32.mrf.mxu0
        %v4308 = vadd.f32 %v2575, %v4307
        %v4309 = vpop.f32.mrf.mxu0
        %v4310 = vadd.f32 %v2577, %v4309
        %4311 = vmatprep.mubr.bf16.mxu0 0
        %4312 = vmatmul.mubr.bf16.gmra.mxu0 %v3901
        %v4313 = vpop.f32.mrf.mxu0
        %v4314 = vadd.f32 %v2581, %v4313
        %v4315 = vpop.f32.mrf.mxu0
        %v4316 = vadd.f32 %v2583, %v4315
        %v4317 = vpop.f32.mrf.mxu0
        %v4318 = vadd.f32 %v2585, %v4317
        %v4319 = vpop.f32.mrf.mxu0
        %v4320 = vadd.f32 %v2587, %v4319
        %4321 = vmatprep.mubr.bf16.mxu0 0
        %4322 = vmatmul.mubr.bf16.gmra.mxu0 %v3904
        %v4323 = vpop.f32.mrf.mxu0
        %v4324 = vadd.f32 %v2591, %v4323
        %v4325 = vpop.f32.mrf.mxu0
        %v4326 = vadd.f32 %v2593, %v4325
        %v4327 = vpop.f32.mrf.mxu0
        %v4328 = vadd.f32 %v2595, %v4327
        %v4329 = vpop.f32.mrf.mxu0
        %v4330 = vadd.f32 %v2597, %v4329
        %4331 = vmatprep.mubr.bf16.mxu0 0
        %4332 = vmatmul.mubr.bf16.gmra.mxu0 %v3907
        %v4333 = vpop.f32.mrf.mxu0
        %v4334 = vadd.f32 %v2601, %v4333
        %v4335 = vpop.f32.mrf.mxu0
        %v4336 = vadd.f32 %v2603, %v4335
        %v4337 = vpop.f32.mrf.mxu0
        %v4338 = vadd.f32 %v2605, %v4337
        %v4339 = vpop.f32.mrf.mxu0
        %v4340 = vadd.f32 %v2607, %v4339
        %4341 = vdwg.mxu0
        %4342 = vmatprep.subr.bf16.mxu0 0
        %4343 = vmatpush1.bf16.xpose.msra.mxu0 %v3979
        %4344 = vmatprep.subr.bf16.mxu0 0
        %4345 = vmatpush1.bf16.xpose.msra.mxu0 %v3976
        %4346 = vmatprep.subr.bf16.mxu0 0
        %4347 = vmatpush1.bf16.xpose.msra.mxu0 %v3973
        %4348 = vmatprep.subr.bf16.mxu0 0
        %4349 = vmatpush1.bf16.xpose.msra.mxu0 %v3970
        %4350 = vmatprep.subr.bf16.mxu0 0
        %4351 = vmatpush1.bf16.xpose.msra.mxu0 %v3967
        %4352 = vmatprep.subr.bf16.mxu0 0
        %4353 = vmatpush1.bf16.xpose.msra.mxu0 %v3964
        %4354 = vmatprep.subr.bf16.mxu0 0
        %4355 = vmatpush1.bf16.xpose.msra.mxu0 %v3961
        %4356 = vmatprep.subr.bf16.mxu0 0
        %4357 = vmatpush1.bf16.xpose.msra.mxu0 %v3958
        %4358 = vmatprep.subr.bf16.mxu0 0
        %4359 = vmatpush2.bf16.xpose.msra.mxu0 %v4003
        %4360 = vmatprep.subr.bf16.mxu0 0
        %4361 = vmatpush2.bf16.xpose.msra.mxu0 %v4000
        %4362 = vmatprep.subr.bf16.mxu0 0
        %4363 = vmatpush2.bf16.xpose.msra.mxu0 %v3997
        %4364 = vmatprep.subr.bf16.mxu0 0
        %4365 = vmatpush2.bf16.xpose.msra.mxu0 %v3994
        %4366 = vmatprep.subr.bf16.mxu0 0
        %4367 = vmatpush2.bf16.xpose.msra.mxu0 %v3991
        %4368 = vmatprep.subr.bf16.mxu0 0
        %4369 = vmatpush2.bf16.xpose.msra.mxu0 %v3988
        %4370 = vmatprep.subr.bf16.mxu0 0
        %4371 = vmatpush2.bf16.xpose.msra.mxu0 %v3985
        %4372 = vmatprep.subr.bf16.mxu0 0
        %4373 = vmatpush2.bf16.xpose.msra.mxu0 %v3982
        %4374 = vmatprep.mubr.bf16.mxu0 0
        %4375 = vmatmul.mubr.bf16.gmra.mxu0 %v3862
        %v4376 = vpop.f32.mrf.mxu0
        %v4377 = vadd.f32 %v2644, %v4376
        %v4378 = vpop.f32.mrf.mxu0
        %v4379 = vadd.f32 %v2646, %v4378
        %v4380 = vpop.f32.mrf.mxu0
        %v4381 = vadd.f32 %v2648, %v4380
        %v4382 = vpop.f32.mrf.mxu0
        %v4383 = vadd.f32 %v2650, %v4382
        %4384 = vmatprep.mubr.bf16.mxu0 0
        %4385 = vmatmul.mubr.bf16.gmra.mxu0 %v3865
        %v4386 = vpop.f32.mrf.mxu0
        %v4387 = vadd.f32 %v2654, %v4386
        %v4388 = vpop.f32.mrf.mxu0
        %v4389 = vadd.f32 %v2656, %v4388
        %v4390 = vpop.f32.mrf.mxu0
        %v4391 = vadd.f32 %v2658, %v4390
        %v4392 = vpop.f32.mrf.mxu0
        %v4393 = vadd.f32 %v2660, %v4392
        %4394 = vmatprep.mubr.bf16.mxu0 0
        %4395 = vmatmul.mubr.bf16.gmra.mxu0 %v3868
        %v4396 = vpop.f32.mrf.mxu0
        %v4397 = vadd.f32 %v2664, %v4396
        %v4398 = vpop.f32.mrf.mxu0
        %v4399 = vadd.f32 %v2666, %v4398
        %v4400 = vpop.f32.mrf.mxu0
        %v4401 = vadd.f32 %v2668, %v4400
        %v4402 = vpop.f32.mrf.mxu0
        %v4403 = vadd.f32 %v2670, %v4402
        %4404 = vmatprep.mubr.bf16.mxu0 0
        %4405 = vmatmul.mubr.bf16.gmra.mxu0 %v3871
        %v4406 = vpop.f32.mrf.mxu0
        %v4407 = vadd.f32 %v2674, %v4406
        %v4408 = vpop.f32.mrf.mxu0
        %v4409 = vadd.f32 %v2676, %v4408
        %v4410 = vpop.f32.mrf.mxu0
        %v4411 = vadd.f32 %v2678, %v4410
        %v4412 = vpop.f32.mrf.mxu0
        %v4413 = vadd.f32 %v2680, %v4412
        %4414 = vmatprep.mubr.bf16.mxu0 0
        %4415 = vmatmul.mubr.bf16.gmra.mxu0 %v3874
        %v4416 = vpop.f32.mrf.mxu0
        %v4417 = vadd.f32 %v2684, %v4416
        %v4418 = vpop.f32.mrf.mxu0
        %v4419 = vadd.f32 %v2686, %v4418
        %v4420 = vpop.f32.mrf.mxu0
        %v4421 = vadd.f32 %v2688, %v4420
        %v4422 = vpop.f32.mrf.mxu0
        %v4423 = vadd.f32 %v2690, %v4422
        %4424 = vmatprep.mubr.bf16.mxu0 0
        %4425 = vmatmul.mubr.bf16.gmra.mxu0 %v3877
        %v4426 = vpop.f32.mrf.mxu0
        %v4427 = vadd.f32 %v2694, %v4426
        %v4428 = vpop.f32.mrf.mxu0
        %v4429 = vadd.f32 %v2696, %v4428
        %v4430 = vpop.f32.mrf.mxu0
        %v4431 = vadd.f32 %v2698, %v4430
        %v4432 = vpop.f32.mrf.mxu0
        %v4433 = vadd.f32 %v2700, %v4432
        %4434 = vmatprep.mubr.bf16.mxu0 0
        %4435 = vmatmul.mubr.bf16.gmra.mxu0 %v3880
        %v4436 = vpop.f32.mrf.mxu0
        %v4437 = vadd.f32 %v2704, %v4436
        %v4438 = vpop.f32.mrf.mxu0
        %v4439 = vadd.f32 %v2706, %v4438
        %v4440 = vpop.f32.mrf.mxu0
        %v4441 = vadd.f32 %v2708, %v4440
        %v4442 = vpop.f32.mrf.mxu0
        %v4443 = vadd.f32 %v2710, %v4442
        %4444 = vmatprep.mubr.bf16.mxu0 0
        %4445 = vmatmul.mubr.bf16.gmra.mxu0 %v3883
        %v4446 = vpop.f32.mrf.mxu0
        %v4447 = vadd.f32 %v2714, %v4446
        %v4448 = vpop.f32.mrf.mxu0
        %v4449 = vadd.f32 %v2716, %v4448
        %v4450 = vpop.f32.mrf.mxu0
        %v4451 = vadd.f32 %v2718, %v4450
        %v4452 = vpop.f32.mrf.mxu0
        %v4453 = vadd.f32 %v2720, %v4452
        %4454 = vmatprep.mubr.bf16.mxu0 0
        %4455 = vmatmul.mubr.bf16.gmra.mxu0 %v3886
        %v4456 = vpop.f32.mrf.mxu0
        %v4457 = vadd.f32 %v2724, %v4456
        %v4458 = vpop.f32.mrf.mxu0
        %v4459 = vadd.f32 %v2726, %v4458
        %v4460 = vpop.f32.mrf.mxu0
        %v4461 = vadd.f32 %v2728, %v4460
        %v4462 = vpop.f32.mrf.mxu0
        %v4463 = vadd.f32 %v2730, %v4462
        %4464 = vmatprep.mubr.bf16.mxu0 0
        %4465 = vmatmul.mubr.bf16.gmra.mxu0 %v3889
        %v4466 = vpop.f32.mrf.mxu0
        %v4467 = vadd.f32 %v2734, %v4466
        %v4468 = vpop.f32.mrf.mxu0
        %v4469 = vadd.f32 %v2736, %v4468
        %v4470 = vpop.f32.mrf.mxu0
        %v4471 = vadd.f32 %v2738, %v4470
        %v4472 = vpop.f32.mrf.mxu0
        %v4473 = vadd.f32 %v2740, %v4472
        %4474 = vmatprep.mubr.bf16.mxu0 0
        %4475 = vmatmul.mubr.bf16.gmra.mxu0 %v3892
        %v4476 = vpop.f32.mrf.mxu0
        %v4477 = vadd.f32 %v2744, %v4476
        %v4478 = vpop.f32.mrf.mxu0
        %v4479 = vadd.f32 %v2746, %v4478
        %v4480 = vpop.f32.mrf.mxu0
        %v4481 = vadd.f32 %v2748, %v4480
        %v4482 = vpop.f32.mrf.mxu0
        %v4483 = vadd.f32 %v2750, %v4482
        %4484 = vmatprep.mubr.bf16.mxu0 0
        %4485 = vmatmul.mubr.bf16.gmra.mxu0 %v3895
        %v4486 = vpop.f32.mrf.mxu0
        %v4487 = vadd.f32 %v2754, %v4486
        %v4488 = vpop.f32.mrf.mxu0
        %v4489 = vadd.f32 %v2756, %v4488
        %v4490 = vpop.f32.mrf.mxu0
        %v4491 = vadd.f32 %v2758, %v4490
        %v4492 = vpop.f32.mrf.mxu0
        %v4493 = vadd.f32 %v2760, %v4492
        %4494 = vmatprep.mubr.bf16.mxu0 0
        %4495 = vmatmul.mubr.bf16.gmra.mxu0 %v3898
        %v4496 = vpop.f32.mrf.mxu0
        %v4497 = vadd.f32 %v2764, %v4496
        %v4498 = vpop.f32.mrf.mxu0
        %v4499 = vadd.f32 %v2766, %v4498
        %v4500 = vpop.f32.mrf.mxu0
        %v4501 = vadd.f32 %v2768, %v4500
        %v4502 = vpop.f32.mrf.mxu0
        %v4503 = vadd.f32 %v2770, %v4502
        %4504 = vmatprep.mubr.bf16.mxu0 0
        %4505 = vmatmul.mubr.bf16.gmra.mxu0 %v3901
        %v4506 = vpop.f32.mrf.mxu0
        %v4507 = vadd.f32 %v2774, %v4506
        %v4508 = vpop.f32.mrf.mxu0
        %v4509 = vadd.f32 %v2776, %v4508
        %v4510 = vpop.f32.mrf.mxu0
        %v4511 = vadd.f32 %v2778, %v4510
        %v4512 = vpop.f32.mrf.mxu0
        %v4513 = vadd.f32 %v2780, %v4512
        %4514 = vmatprep.mubr.bf16.mxu0 0
        %4515 = vmatmul.mubr.bf16.gmra.mxu0 %v3904
        %v4516 = vpop.f32.mrf.mxu0
        %v4517 = vadd.f32 %v2784, %v4516
        %v4518 = vpop.f32.mrf.mxu0
        %v4519 = vadd.f32 %v2786, %v4518
        %v4520 = vpop.f32.mrf.mxu0
        %v4521 = vadd.f32 %v2788, %v4520
        %v4522 = vpop.f32.mrf.mxu0
        %v4523 = vadd.f32 %v2790, %v4522
        %4524 = vmatprep.mubr.bf16.mxu0 0
        %4525 = vmatmul.mubr.bf16.gmra.mxu0 %v3907
        %v4526 = vpop.f32.mrf.mxu0
        %v4527 = vadd.f32 %v2794, %v4526
        %v4528 = vpop.f32.mrf.mxu0
        %v4529 = vadd.f32 %v2796, %v4528
        %v4530 = vpop.f32.mrf.mxu0
        %v4531 = vadd.f32 %v2798, %v4530
        %v4532 = vpop.f32.mrf.mxu0
        %v4533 = vadd.f32 %v2800, %v4532
        %4534 = vdwg.mxu0
        %4535 = vmatprep.subr.bf16.mxu0 0
        %4536 = vmatpush1.bf16.xpose.msra.mxu0 %v4027
        %4537 = vmatprep.subr.bf16.mxu0 0
        %4538 = vmatpush1.bf16.xpose.msra.mxu0 %v4024
        %4539 = vmatprep.subr.bf16.mxu0 0
        %4540 = vmatpush1.bf16.xpose.msra.mxu0 %v4021
        %4541 = vmatprep.subr.bf16.mxu0 0
        %4542 = vmatpush1.bf16.xpose.msra.mxu0 %v4018
        %4543 = vmatprep.subr.bf16.mxu0 0
        %4544 = vmatpush1.bf16.xpose.msra.mxu0 %v4015
        %4545 = vmatprep.subr.bf16.mxu0 0
        %4546 = vmatpush1.bf16.xpose.msra.mxu0 %v4012
        %4547 = vmatprep.subr.bf16.mxu0 0
        %4548 = vmatpush1.bf16.xpose.msra.mxu0 %v4009
        %4549 = vmatprep.subr.bf16.mxu0 0
        %4550 = vmatpush1.bf16.xpose.msra.mxu0 %v4006
        %4551 = vmatprep.subr.bf16.mxu0 0
        %4552 = vmatpush2.bf16.xpose.msra.mxu0 %v4051
        %4553 = vmatprep.subr.bf16.mxu0 0
        %4554 = vmatpush2.bf16.xpose.msra.mxu0 %v4048
        %4555 = vmatprep.subr.bf16.mxu0 0
        %4556 = vmatpush2.bf16.xpose.msra.mxu0 %v4045
        %4557 = vmatprep.subr.bf16.mxu0 0
        %4558 = vmatpush2.bf16.xpose.msra.mxu0 %v4042
        %4559 = vmatprep.subr.bf16.mxu0 0
        %4560 = vmatpush2.bf16.xpose.msra.mxu0 %v4039
        %4561 = vmatprep.subr.bf16.mxu0 0
        %4562 = vmatpush2.bf16.xpose.msra.mxu0 %v4036
        %4563 = vmatprep.subr.bf16.mxu0 0
        %4564 = vmatpush2.bf16.xpose.msra.mxu0 %v4033
        %4565 = vmatprep.subr.bf16.mxu0 0
        %4566 = vmatpush2.bf16.xpose.msra.mxu0 %v4030
        %4567 = vmatprep.mubr.bf16.mxu0 0
        %4568 = vmatmul.mubr.bf16.gmra.mxu0 %v3862
        %v4569 = vpop.f32.mrf.mxu0
        %v4570 = vadd.f32 %v2837, %v4569
        %v4571 = vpop.f32.mrf.mxu0
        %v4572 = vadd.f32 %v2839, %v4571
        %v4573 = vpop.f32.mrf.mxu0
        %v4574 = vadd.f32 %v2841, %v4573
        %v4575 = vpop.f32.mrf.mxu0
        %v4576 = vadd.f32 %v2843, %v4575
        %4577 = vmatprep.mubr.bf16.mxu0 0
        %4578 = vmatmul.mubr.bf16.gmra.mxu0 %v3865
        %v4579 = vpop.f32.mrf.mxu0
        %v4580 = vadd.f32 %v2847, %v4579
        %v4581 = vpop.f32.mrf.mxu0
        %v4582 = vadd.f32 %v2849, %v4581
        %v4583 = vpop.f32.mrf.mxu0
        %v4584 = vadd.f32 %v2851, %v4583
        %v4585 = vpop.f32.mrf.mxu0
        %v4586 = vadd.f32 %v2853, %v4585
        %4587 = vmatprep.mubr.bf16.mxu0 0
        %4588 = vmatmul.mubr.bf16.gmra.mxu0 %v3868
        %v4589 = vpop.f32.mrf.mxu0
        %v4590 = vadd.f32 %v2857, %v4589
        %v4591 = vpop.f32.mrf.mxu0
        %v4592 = vadd.f32 %v2859, %v4591
        %v4593 = vpop.f32.mrf.mxu0
        %v4594 = vadd.f32 %v2861, %v4593
        %v4595 = vpop.f32.mrf.mxu0
        %v4596 = vadd.f32 %v2863, %v4595
        %4597 = vmatprep.mubr.bf16.mxu0 0
        %4598 = vmatmul.mubr.bf16.gmra.mxu0 %v3871
        %v4599 = vpop.f32.mrf.mxu0
        %v4600 = vadd.f32 %v2867, %v4599
        %v4601 = vpop.f32.mrf.mxu0
        %v4602 = vadd.f32 %v2869, %v4601
        %v4603 = vpop.f32.mrf.mxu0
        %v4604 = vadd.f32 %v2871, %v4603
        %v4605 = vpop.f32.mrf.mxu0
        %v4606 = vadd.f32 %v2873, %v4605
        %4607 = vmatprep.mubr.bf16.mxu0 0
        %4608 = vmatmul.mubr.bf16.gmra.mxu0 %v3874
        %v4609 = vpop.f32.mrf.mxu0
        %v4610 = vadd.f32 %v2877, %v4609
        %v4611 = vpop.f32.mrf.mxu0
        %v4612 = vadd.f32 %v2879, %v4611
        %v4613 = vpop.f32.mrf.mxu0
        %v4614 = vadd.f32 %v2881, %v4613
        %v4615 = vpop.f32.mrf.mxu0
        %v4616 = vadd.f32 %v2883, %v4615
        %4617 = vmatprep.mubr.bf16.mxu0 0
        %4618 = vmatmul.mubr.bf16.gmra.mxu0 %v3877
        %v4619 = vpop.f32.mrf.mxu0
        %v4620 = vadd.f32 %v2887, %v4619
        %v4621 = vpop.f32.mrf.mxu0
        %v4622 = vadd.f32 %v2889, %v4621
        %v4623 = vpop.f32.mrf.mxu0
        %v4624 = vadd.f32 %v2891, %v4623
        %v4625 = vpop.f32.mrf.mxu0
        %v4626 = vadd.f32 %v2893, %v4625
        %4627 = vmatprep.mubr.bf16.mxu0 0
        %4628 = vmatmul.mubr.bf16.gmra.mxu0 %v3880
        %v4629 = vpop.f32.mrf.mxu0
        %v4630 = vadd.f32 %v2897, %v4629
        %v4631 = vpop.f32.mrf.mxu0
        %v4632 = vadd.f32 %v2899, %v4631
        %v4633 = vpop.f32.mrf.mxu0
        %v4634 = vadd.f32 %v2901, %v4633
        %v4635 = vpop.f32.mrf.mxu0
        %v4636 = vadd.f32 %v2903, %v4635
        %4637 = vmatprep.mubr.bf16.mxu0 0
        %4638 = vmatmul.mubr.bf16.gmra.mxu0 %v3883
        %v4639 = vpop.f32.mrf.mxu0
        %v4640 = vadd.f32 %v2907, %v4639
        %v4641 = vpop.f32.mrf.mxu0
        %v4642 = vadd.f32 %v2909, %v4641
        %v4643 = vpop.f32.mrf.mxu0
        %v4644 = vadd.f32 %v2911, %v4643
        %v4645 = vpop.f32.mrf.mxu0
        %v4646 = vadd.f32 %v2913, %v4645
        %4647 = vmatprep.mubr.bf16.mxu0 0
        %4648 = vmatmul.mubr.bf16.gmra.mxu0 %v3886
        %v4649 = vpop.f32.mrf.mxu0
        %v4650 = vadd.f32 %v2917, %v4649
        %v4651 = vpop.f32.mrf.mxu0
        %v4652 = vadd.f32 %v2919, %v4651
        %v4653 = vpop.f32.mrf.mxu0
        %v4654 = vadd.f32 %v2921, %v4653
        %v4655 = vpop.f32.mrf.mxu0
        %v4656 = vadd.f32 %v2923, %v4655
        %4657 = vmatprep.mubr.bf16.mxu0 0
        %4658 = vmatmul.mubr.bf16.gmra.mxu0 %v3889
        %v4659 = vpop.f32.mrf.mxu0
        %v4660 = vadd.f32 %v2927, %v4659
        %v4661 = vpop.f32.mrf.mxu0
        %v4662 = vadd.f32 %v2929, %v4661
        %v4663 = vpop.f32.mrf.mxu0
        %v4664 = vadd.f32 %v2931, %v4663
        %v4665 = vpop.f32.mrf.mxu0
        %v4666 = vadd.f32 %v2933, %v4665
        %4667 = vmatprep.mubr.bf16.mxu0 0
        %4668 = vmatmul.mubr.bf16.gmra.mxu0 %v3892
        %v4669 = vpop.f32.mrf.mxu0
        %v4670 = vadd.f32 %v2937, %v4669
        %v4671 = vpop.f32.mrf.mxu0
        %v4672 = vadd.f32 %v2939, %v4671
        %v4673 = vpop.f32.mrf.mxu0
        %v4674 = vadd.f32 %v2941, %v4673
        %v4675 = vpop.f32.mrf.mxu0
        %v4676 = vadd.f32 %v2943, %v4675
        %4677 = vmatprep.mubr.bf16.mxu0 0
        %4678 = vmatmul.mubr.bf16.gmra.mxu0 %v3895
        %v4679 = vpop.f32.mrf.mxu0
        %v4680 = vadd.f32 %v2947, %v4679
        %v4681 = vpop.f32.mrf.mxu0
        %v4682 = vadd.f32 %v2949, %v4681
        %v4683 = vpop.f32.mrf.mxu0
        %v4684 = vadd.f32 %v2951, %v4683
        %v4685 = vpop.f32.mrf.mxu0
        %v4686 = vadd.f32 %v2953, %v4685
        %4687 = vmatprep.mubr.bf16.mxu0 0
        %4688 = vmatmul.mubr.bf16.gmra.mxu0 %v3898
        %v4689 = vpop.f32.mrf.mxu0
        %v4690 = vadd.f32 %v2957, %v4689
        %v4691 = vpop.f32.mrf.mxu0
        %v4692 = vadd.f32 %v2959, %v4691
        %v4693 = vpop.f32.mrf.mxu0
        %v4694 = vadd.f32 %v2961, %v4693
        %v4695 = vpop.f32.mrf.mxu0
        %v4696 = vadd.f32 %v2963, %v4695
        %4697 = vmatprep.mubr.bf16.mxu0 0
        %4698 = vmatmul.mubr.bf16.gmra.mxu0 %v3901
        %v4699 = vpop.f32.mrf.mxu0
        %v4700 = vadd.f32 %v2967, %v4699
        %v4701 = vpop.f32.mrf.mxu0
        %v4702 = vadd.f32 %v2969, %v4701
        %v4703 = vpop.f32.mrf.mxu0
        %v4704 = vadd.f32 %v2971, %v4703
        %v4705 = vpop.f32.mrf.mxu0
        %v4706 = vadd.f32 %v2973, %v4705
        %4707 = vmatprep.mubr.bf16.mxu0 0
        %4708 = vmatmul.mubr.bf16.gmra.mxu0 %v3904
        %v4709 = vpop.f32.mrf.mxu0
        %v4710 = vadd.f32 %v2977, %v4709
        %v4711 = vpop.f32.mrf.mxu0
        %v4712 = vadd.f32 %v2979, %v4711
        %v4713 = vpop.f32.mrf.mxu0
        %v4714 = vadd.f32 %v2981, %v4713
        %v4715 = vpop.f32.mrf.mxu0
        %v4716 = vadd.f32 %v2983, %v4715
        %4717 = vmatprep.mubr.bf16.mxu0 0
        %4718 = vmatmul.mubr.bf16.gmra.mxu0 %v3907
        %v4719 = vpop.f32.mrf.mxu0
        %v4720 = vadd.f32 %v2987, %v4719
        %v4721 = vpop.f32.mrf.mxu0
        %v4722 = vadd.f32 %v2989, %v4721
        %v4723 = vpop.f32.mrf.mxu0
        %v4724 = vadd.f32 %v2991, %v4723
        %v4725 = vpop.f32.mrf.mxu0
        %v4726 = vadd.f32 %v2993, %v4725
        %4727 = vdwg.mxu0
        %4728 = vmatprep.subr.bf16.mxu0 0
        %4729 = vmatpush1.bf16.xpose.msra.mxu0 %v4075
        %4730 = vmatprep.subr.bf16.mxu0 0
        %4731 = vmatpush1.bf16.xpose.msra.mxu0 %v4072
        %4732 = vmatprep.subr.bf16.mxu0 0
        %4733 = vmatpush1.bf16.xpose.msra.mxu0 %v4069
        %4734 = vmatprep.subr.bf16.mxu0 0
        %4735 = vmatpush1.bf16.xpose.msra.mxu0 %v4066
        %4736 = vmatprep.subr.bf16.mxu0 0
        %4737 = vmatpush1.bf16.xpose.msra.mxu0 %v4063
        %4738 = vmatprep.subr.bf16.mxu0 0
        %4739 = vmatpush1.bf16.xpose.msra.mxu0 %v4060
        %4740 = vmatprep.subr.bf16.mxu0 0
        %4741 = vmatpush1.bf16.xpose.msra.mxu0 %v4057
        %4742 = vmatprep.subr.bf16.mxu0 0
        %4743 = vmatpush1.bf16.xpose.msra.mxu0 %v4054
        %4744 = vmatprep.subr.bf16.mxu0 0
        %4745 = vmatpush2.bf16.xpose.msra.mxu0 %v4099
        %4746 = vmatprep.subr.bf16.mxu0 0
        %4747 = vmatpush2.bf16.xpose.msra.mxu0 %v4096
        %4748 = vmatprep.subr.bf16.mxu0 0
        %4749 = vmatpush2.bf16.xpose.msra.mxu0 %v4093
        %4750 = vmatprep.subr.bf16.mxu0 0
        %4751 = vmatpush2.bf16.xpose.msra.mxu0 %v4090
        %4752 = vmatprep.subr.bf16.mxu0 0
        %4753 = vmatpush2.bf16.xpose.msra.mxu0 %v4087
        %4754 = vmatprep.subr.bf16.mxu0 0
        %4755 = vmatpush2.bf16.xpose.msra.mxu0 %v4084
        %4756 = vmatprep.subr.bf16.mxu0 0
        %4757 = vmatpush2.bf16.xpose.msra.mxu0 %v4081
        %4758 = vmatprep.subr.bf16.mxu0 0
        %4759 = vmatpush2.bf16.xpose.msra.mxu0 %v4078
        %4760 = vmatprep.mubr.bf16.mxu0 0
        %4761 = vmatmul.mubr.bf16.gmra.mxu0 %v3862
        %v4762 = vpop.f32.mrf.mxu0
        %v4763 = vadd.f32 %v3030, %v4762
        %v4764 = vpop.f32.mrf.mxu0
        %v4765 = vadd.f32 %v3032, %v4764
        %v4766 = vpop.f32.mrf.mxu0
        %v4767 = vadd.f32 %v3034, %v4766
        %v4768 = vpop.f32.mrf.mxu0
        %v4769 = vadd.f32 %v3036, %v4768
        %4770 = vmatprep.mubr.bf16.mxu0 0
        %4771 = vmatmul.mubr.bf16.gmra.mxu0 %v3865
        %v4772 = vpop.f32.mrf.mxu0
        %v4773 = vadd.f32 %v3040, %v4772
        %v4774 = vpop.f32.mrf.mxu0
        %v4775 = vadd.f32 %v3042, %v4774
        %v4776 = vpop.f32.mrf.mxu0
        %v4777 = vadd.f32 %v3044, %v4776
        %v4778 = vpop.f32.mrf.mxu0
        %v4779 = vadd.f32 %v3046, %v4778
        %4780 = vmatprep.mubr.bf16.mxu0 0
        %4781 = vmatmul.mubr.bf16.gmra.mxu0 %v3868
        %v4782 = vpop.f32.mrf.mxu0
        %v4783 = vadd.f32 %v3050, %v4782
        %v4784 = vpop.f32.mrf.mxu0
        %v4785 = vadd.f32 %v3052, %v4784
        %v4786 = vpop.f32.mrf.mxu0
        %v4787 = vadd.f32 %v3054, %v4786
        %v4788 = vpop.f32.mrf.mxu0
        %v4789 = vadd.f32 %v3056, %v4788
        %4790 = vmatprep.mubr.bf16.mxu0 0
        %4791 = vmatmul.mubr.bf16.gmra.mxu0 %v3871
        %v4792 = vpop.f32.mrf.mxu0
        %v4793 = vadd.f32 %v3060, %v4792
        %v4794 = vpop.f32.mrf.mxu0
        %v4795 = vadd.f32 %v3062, %v4794
        %v4796 = vpop.f32.mrf.mxu0
        %v4797 = vadd.f32 %v3064, %v4796
        %v4798 = vpop.f32.mrf.mxu0
        %v4799 = vadd.f32 %v3066, %v4798
        %4800 = vmatprep.mubr.bf16.mxu0 0
        %4801 = vmatmul.mubr.bf16.gmra.mxu0 %v3874
        %v4802 = vpop.f32.mrf.mxu0
        %v4803 = vadd.f32 %v3070, %v4802
        %v4804 = vpop.f32.mrf.mxu0
        %v4805 = vadd.f32 %v3072, %v4804
        %v4806 = vpop.f32.mrf.mxu0
        %v4807 = vadd.f32 %v3074, %v4806
        %v4808 = vpop.f32.mrf.mxu0
        %v4809 = vadd.f32 %v3076, %v4808
        %4810 = vmatprep.mubr.bf16.mxu0 0
        %4811 = vmatmul.mubr.bf16.gmra.mxu0 %v3877
        %v4812 = vpop.f32.mrf.mxu0
        %v4813 = vadd.f32 %v3080, %v4812
        %v4814 = vpop.f32.mrf.mxu0
        %v4815 = vadd.f32 %v3082, %v4814
        %v4816 = vpop.f32.mrf.mxu0
        %v4817 = vadd.f32 %v3084, %v4816
        %v4818 = vpop.f32.mrf.mxu0
        %v4819 = vadd.f32 %v3086, %v4818
        %4820 = vmatprep.mubr.bf16.mxu0 0
        %4821 = vmatmul.mubr.bf16.gmra.mxu0 %v3880
        %v4822 = vpop.f32.mrf.mxu0
        %v4823 = vadd.f32 %v3090, %v4822
        %v4824 = vpop.f32.mrf.mxu0
        %v4825 = vadd.f32 %v3092, %v4824
        %v4826 = vpop.f32.mrf.mxu0
        %v4827 = vadd.f32 %v3094, %v4826
        %v4828 = vpop.f32.mrf.mxu0
        %v4829 = vadd.f32 %v3096, %v4828
        %4830 = vmatprep.mubr.bf16.mxu0 0
        %4831 = vmatmul.mubr.bf16.gmra.mxu0 %v3883
        %v4832 = vpop.f32.mrf.mxu0
        %v4833 = vadd.f32 %v3100, %v4832
        %v4834 = vpop.f32.mrf.mxu0
        %v4835 = vadd.f32 %v3102, %v4834
        %v4836 = vpop.f32.mrf.mxu0
        %v4837 = vadd.f32 %v3104, %v4836
        %v4838 = vpop.f32.mrf.mxu0
        %v4839 = vadd.f32 %v3106, %v4838
        %4840 = vmatprep.mubr.bf16.mxu0 0
        %4841 = vmatmul.mubr.bf16.gmra.mxu0 %v3886
        %v4842 = vpop.f32.mrf.mxu0
        %v4843 = vadd.f32 %v3110, %v4842
        %v4844 = vpop.f32.mrf.mxu0
        %v4845 = vadd.f32 %v3112, %v4844
        %v4846 = vpop.f32.mrf.mxu0
        %v4847 = vadd.f32 %v3114, %v4846
        %v4848 = vpop.f32.mrf.mxu0
        %v4849 = vadd.f32 %v3116, %v4848
        %4850 = vmatprep.mubr.bf16.mxu0 0
        %4851 = vmatmul.mubr.bf16.gmra.mxu0 %v3889
        %v4852 = vpop.f32.mrf.mxu0
        %v4853 = vadd.f32 %v3120, %v4852
        %v4854 = vpop.f32.mrf.mxu0
        %v4855 = vadd.f32 %v3122, %v4854
        %v4856 = vpop.f32.mrf.mxu0
        %v4857 = vadd.f32 %v3124, %v4856
        %v4858 = vpop.f32.mrf.mxu0
        %v4859 = vadd.f32 %v3126, %v4858
        %4860 = vmatprep.mubr.bf16.mxu0 0
        %4861 = vmatmul.mubr.bf16.gmra.mxu0 %v3892
        %v4862 = vpop.f32.mrf.mxu0
        %v4863 = vadd.f32 %v3130, %v4862
        %v4864 = vpop.f32.mrf.mxu0
        %v4865 = vadd.f32 %v3132, %v4864
        %v4866 = vpop.f32.mrf.mxu0
        %v4867 = vadd.f32 %v3134, %v4866
        %v4868 = vpop.f32.mrf.mxu0
        %v4869 = vadd.f32 %v3136, %v4868
        %4870 = vmatprep.mubr.bf16.mxu0 0
        %4871 = vmatmul.mubr.bf16.gmra.mxu0 %v3895
        %v4872 = vpop.f32.mrf.mxu0
        %v4873 = vadd.f32 %v3140, %v4872
        %v4874 = vpop.f32.mrf.mxu0
        %v4875 = vadd.f32 %v3142, %v4874
        %v4876 = vpop.f32.mrf.mxu0
        %v4877 = vadd.f32 %v3144, %v4876
        %v4878 = vpop.f32.mrf.mxu0
        %v4879 = vadd.f32 %v3146, %v4878
        %4880 = vmatprep.mubr.bf16.mxu0 0
        %4881 = vmatmul.mubr.bf16.gmra.mxu0 %v3898
        %v4882 = vpop.f32.mrf.mxu0
        %v4883 = vadd.f32 %v3150, %v4882
        %v4884 = vpop.f32.mrf.mxu0
        %v4885 = vadd.f32 %v3152, %v4884
        %v4886 = vpop.f32.mrf.mxu0
        %v4887 = vadd.f32 %v3154, %v4886
        %v4888 = vpop.f32.mrf.mxu0
        %v4889 = vadd.f32 %v3156, %v4888
        %4890 = vmatprep.mubr.bf16.mxu0 0
        %4891 = vmatmul.mubr.bf16.gmra.mxu0 %v3901
        %v4892 = vpop.f32.mrf.mxu0
        %v4893 = vadd.f32 %v3160, %v4892
        %v4894 = vpop.f32.mrf.mxu0
        %v4895 = vadd.f32 %v3162, %v4894
        %v4896 = vpop.f32.mrf.mxu0
        %v4897 = vadd.f32 %v3164, %v4896
        %v4898 = vpop.f32.mrf.mxu0
        %v4899 = vadd.f32 %v3166, %v4898
        %4900 = vmatprep.mubr.bf16.mxu0 0
        %4901 = vmatmul.mubr.bf16.gmra.mxu0 %v3904
        %v4902 = vpop.f32.mrf.mxu0
        %v4903 = vadd.f32 %v3170, %v4902
        %v4904 = vpop.f32.mrf.mxu0
        %v4905 = vadd.f32 %v3172, %v4904
        %v4906 = vpop.f32.mrf.mxu0
        %v4907 = vadd.f32 %v3174, %v4906
        %v4908 = vpop.f32.mrf.mxu0
        %v4909 = vadd.f32 %v3176, %v4908
        %4910 = vmatprep.mubr.bf16.mxu0 0
        %4911 = vmatmul.mubr.bf16.gmra.mxu0 %v3907
        %v4912 = vpop.f32.mrf.mxu0
        %v4913 = vadd.f32 %v3180, %v4912
        %v4914 = vpop.f32.mrf.mxu0
        %v4915 = vadd.f32 %v3182, %v4914
        %v4916 = vpop.f32.mrf.mxu0
        %v4917 = vadd.f32 %v3184, %v4916
        %v4918 = vpop.f32.mrf.mxu0
        %v4919 = vadd.f32 %v3186, %v4918
        %4920 = vdwg.mxu0
        %4921 = vmatprep.subr.bf16.mxu0 0
        %4922 = vmatpush1.bf16.xpose.msra.mxu0 %v4123
        %4923 = vmatprep.subr.bf16.mxu0 0
        %4924 = vmatpush1.bf16.xpose.msra.mxu0 %v4120
        %4925 = vmatprep.subr.bf16.mxu0 0
        %4926 = vmatpush1.bf16.xpose.msra.mxu0 %v4117
        %4927 = vmatprep.subr.bf16.mxu0 0
        %4928 = vmatpush1.bf16.xpose.msra.mxu0 %v4114
        %4929 = vmatprep.subr.bf16.mxu0 0
        %4930 = vmatpush1.bf16.xpose.msra.mxu0 %v4111
        %4931 = vmatprep.subr.bf16.mxu0 0
        %4932 = vmatpush1.bf16.xpose.msra.mxu0 %v4108
        %4933 = vmatprep.subr.bf16.mxu0 0
        %4934 = vmatpush1.bf16.xpose.msra.mxu0 %v4105
        %4935 = vmatprep.subr.bf16.mxu0 0
        %4936 = vmatpush1.bf16.xpose.msra.mxu0 %v4102
        %4937 = vmatprep.subr.bf16.mxu0 0
        %4938 = vmatpush2.bf16.xpose.msra.mxu0 %v4147
        %4939 = vmatprep.subr.bf16.mxu0 0
        %4940 = vmatpush2.bf16.xpose.msra.mxu0 %v4144
        %4941 = vmatprep.subr.bf16.mxu0 0
        %4942 = vmatpush2.bf16.xpose.msra.mxu0 %v4141
        %4943 = vmatprep.subr.bf16.mxu0 0
        %4944 = vmatpush2.bf16.xpose.msra.mxu0 %v4138
        %4945 = vmatprep.subr.bf16.mxu0 0
        %4946 = vmatpush2.bf16.xpose.msra.mxu0 %v4135
        %4947 = vmatprep.subr.bf16.mxu0 0
        %4948 = vmatpush2.bf16.xpose.msra.mxu0 %v4132
        %4949 = vmatprep.subr.bf16.mxu0 0
        %4950 = vmatpush2.bf16.xpose.msra.mxu0 %v4129
        %4951 = vmatprep.subr.bf16.mxu0 0
        %4952 = vmatpush2.bf16.xpose.msra.mxu0 %v4126
        %4953 = vmatprep.mubr.bf16.mxu0 0
        %4954 = vmatmul.mubr.bf16.gmra.mxu0 %v3862
        %v4955 = vpop.f32.mrf.mxu0
        %v4956 = vadd.f32 %v3223, %v4955
        %v4957 = vpop.f32.mrf.mxu0
        %v4958 = vadd.f32 %v3225, %v4957
        %v4959 = vpop.f32.mrf.mxu0
        %v4960 = vadd.f32 %v3227, %v4959
        %v4961 = vpop.f32.mrf.mxu0
        %v4962 = vadd.f32 %v3229, %v4961
        %4963 = vmatprep.mubr.bf16.mxu0 0
        %4964 = vmatmul.mubr.bf16.gmra.mxu0 %v3865
        %v4965 = vpop.f32.mrf.mxu0
        %v4966 = vadd.f32 %v3233, %v4965
        %v4967 = vpop.f32.mrf.mxu0
        %v4968 = vadd.f32 %v3235, %v4967
        %v4969 = vpop.f32.mrf.mxu0
        %v4970 = vadd.f32 %v3237, %v4969
        %v4971 = vpop.f32.mrf.mxu0
        %v4972 = vadd.f32 %v3239, %v4971
        %4973 = vmatprep.mubr.bf16.mxu0 0
        %4974 = vmatmul.mubr.bf16.gmra.mxu0 %v3868
        %v4975 = vpop.f32.mrf.mxu0
        %v4976 = vadd.f32 %v3243, %v4975
        %v4977 = vpop.f32.mrf.mxu0
        %v4978 = vadd.f32 %v3245, %v4977
        %v4979 = vpop.f32.mrf.mxu0
        %v4980 = vadd.f32 %v3247, %v4979
        %v4981 = vpop.f32.mrf.mxu0
        %v4982 = vadd.f32 %v3249, %v4981
        %4983 = vmatprep.mubr.bf16.mxu0 0
        %4984 = vmatmul.mubr.bf16.gmra.mxu0 %v3871
        %v4985 = vpop.f32.mrf.mxu0
        %v4986 = vadd.f32 %v3253, %v4985
        %v4987 = vpop.f32.mrf.mxu0
        %v4988 = vadd.f32 %v3255, %v4987
        %v4989 = vpop.f32.mrf.mxu0
        %v4990 = vadd.f32 %v3257, %v4989
        %v4991 = vpop.f32.mrf.mxu0
        %v4992 = vadd.f32 %v3259, %v4991
        %4993 = vmatprep.mubr.bf16.mxu0 0
        %4994 = vmatmul.mubr.bf16.gmra.mxu0 %v3874
        %v4995 = vpop.f32.mrf.mxu0
        %v4996 = vadd.f32 %v3263, %v4995
        %v4997 = vpop.f32.mrf.mxu0
        %v4998 = vadd.f32 %v3265, %v4997
        %v4999 = vpop.f32.mrf.mxu0
        %v5000 = vadd.f32 %v3267, %v4999
        %v5001 = vpop.f32.mrf.mxu0
        %v5002 = vadd.f32 %v3269, %v5001
        %5003 = vmatprep.mubr.bf16.mxu0 0
        %5004 = vmatmul.mubr.bf16.gmra.mxu0 %v3877
        %v5005 = vpop.f32.mrf.mxu0
        %v5006 = vadd.f32 %v3273, %v5005
        %v5007 = vpop.f32.mrf.mxu0
        %v5008 = vadd.f32 %v3275, %v5007
        %v5009 = vpop.f32.mrf.mxu0
        %v5010 = vadd.f32 %v3277, %v5009
        %v5011 = vpop.f32.mrf.mxu0
        %v5012 = vadd.f32 %v3279, %v5011
        %5013 = vmatprep.mubr.bf16.mxu0 0
        %5014 = vmatmul.mubr.bf16.gmra.mxu0 %v3880
        %v5015 = vpop.f32.mrf.mxu0
        %v5016 = vadd.f32 %v3283, %v5015
        %v5017 = vpop.f32.mrf.mxu0
        %v5018 = vadd.f32 %v3285, %v5017
        %v5019 = vpop.f32.mrf.mxu0
        %v5020 = vadd.f32 %v3287, %v5019
        %v5021 = vpop.f32.mrf.mxu0
        %v5022 = vadd.f32 %v3289, %v5021
        %5023 = vmatprep.mubr.bf16.mxu0 0
        %5024 = vmatmul.mubr.bf16.gmra.mxu0 %v3883
        %v5025 = vpop.f32.mrf.mxu0
        %v5026 = vadd.f32 %v3293, %v5025
        %v5027 = vpop.f32.mrf.mxu0
        %v5028 = vadd.f32 %v3295, %v5027
        %v5029 = vpop.f32.mrf.mxu0
        %v5030 = vadd.f32 %v3297, %v5029
        %v5031 = vpop.f32.mrf.mxu0
        %v5032 = vadd.f32 %v3299, %v5031
        %5033 = vmatprep.mubr.bf16.mxu0 0
        %5034 = vmatmul.mubr.bf16.gmra.mxu0 %v3886
        %v5035 = vpop.f32.mrf.mxu0
        %v5036 = vadd.f32 %v3303, %v5035
        %v5037 = vpop.f32.mrf.mxu0
        %v5038 = vadd.f32 %v3305, %v5037
        %v5039 = vpop.f32.mrf.mxu0
        %v5040 = vadd.f32 %v3307, %v5039
        %v5041 = vpop.f32.mrf.mxu0
        %v5042 = vadd.f32 %v3309, %v5041
        %5043 = vmatprep.mubr.bf16.mxu0 0
        %5044 = vmatmul.mubr.bf16.gmra.mxu0 %v3889
        %v5045 = vpop.f32.mrf.mxu0
        %v5046 = vadd.f32 %v3313, %v5045
        %v5047 = vpop.f32.mrf.mxu0
        %v5048 = vadd.f32 %v3315, %v5047
        %v5049 = vpop.f32.mrf.mxu0
        %v5050 = vadd.f32 %v3317, %v5049
        %v5051 = vpop.f32.mrf.mxu0
        %v5052 = vadd.f32 %v3319, %v5051
        %5053 = vmatprep.mubr.bf16.mxu0 0
        %5054 = vmatmul.mubr.bf16.gmra.mxu0 %v3892
        %v5055 = vpop.f32.mrf.mxu0
        %v5056 = vadd.f32 %v3323, %v5055
        %v5057 = vpop.f32.mrf.mxu0
        %v5058 = vadd.f32 %v3325, %v5057
        %v5059 = vpop.f32.mrf.mxu0
        %v5060 = vadd.f32 %v3327, %v5059
        %v5061 = vpop.f32.mrf.mxu0
        %v5062 = vadd.f32 %v3329, %v5061
        %5063 = vmatprep.mubr.bf16.mxu0 0
        %5064 = vmatmul.mubr.bf16.gmra.mxu0 %v3895
        %v5065 = vpop.f32.mrf.mxu0
        %v5066 = vadd.f32 %v3333, %v5065
        %v5067 = vpop.f32.mrf.mxu0
        %v5068 = vadd.f32 %v3335, %v5067
        %v5069 = vpop.f32.mrf.mxu0
        %v5070 = vadd.f32 %v3337, %v5069
        %v5071 = vpop.f32.mrf.mxu0
        %v5072 = vadd.f32 %v3339, %v5071
        %5073 = vmatprep.mubr.bf16.mxu0 0
        %5074 = vmatmul.mubr.bf16.gmra.mxu0 %v3898
        %v5075 = vpop.f32.mrf.mxu0
        %v5076 = vadd.f32 %v3343, %v5075
        %v5077 = vpop.f32.mrf.mxu0
        %v5078 = vadd.f32 %v3345, %v5077
        %v5079 = vpop.f32.mrf.mxu0
        %v5080 = vadd.f32 %v3347, %v5079
        %v5081 = vpop.f32.mrf.mxu0
        %v5082 = vadd.f32 %v3349, %v5081
        %5083 = vmatprep.mubr.bf16.mxu0 0
        %5084 = vmatmul.mubr.bf16.gmra.mxu0 %v3901
        %v5085 = vpop.f32.mrf.mxu0
        %v5086 = vadd.f32 %v3353, %v5085
        %v5087 = vpop.f32.mrf.mxu0
        %v5088 = vadd.f32 %v3355, %v5087
        %v5089 = vpop.f32.mrf.mxu0
        %v5090 = vadd.f32 %v3357, %v5089
        %v5091 = vpop.f32.mrf.mxu0
        %v5092 = vadd.f32 %v3359, %v5091
        %5093 = vmatprep.mubr.bf16.mxu0 0
        %5094 = vmatmul.mubr.bf16.gmra.mxu0 %v3904
        %v5095 = vpop.f32.mrf.mxu0
        %v5096 = vadd.f32 %v3363, %v5095
        %v5097 = vpop.f32.mrf.mxu0
        %v5098 = vadd.f32 %v3365, %v5097
        %v5099 = vpop.f32.mrf.mxu0
        %v5100 = vadd.f32 %v3367, %v5099
        %v5101 = vpop.f32.mrf.mxu0
        %v5102 = vadd.f32 %v3369, %v5101
        %5103 = vmatprep.mubr.bf16.mxu0 0
        %5104 = vmatmul.mubr.bf16.gmra.mxu0 %v3907
        %v5105 = vpop.f32.mrf.mxu0
        %v5106 = vadd.f32 %v3373, %v5105
        %v5107 = vpop.f32.mrf.mxu0
        %v5108 = vadd.f32 %v3375, %v5107
        %v5109 = vpop.f32.mrf.mxu0
        %v5110 = vadd.f32 %v3377, %v5109
        %v5111 = vpop.f32.mrf.mxu0
        %v5112 = vadd.f32 %v3379, %v5111
        %5113 = vdwg.mxu0
        %v5114 = vld [vmem:[%s5] sm:$0xff]
        %v5115 = vld [vmem:[%s5 + $0x8] sm:$0xff]
        %v5116 = vld [vmem:[%s5 + $0x10] sm:$0xff]
        %v5117 = vld [vmem:[%s5 + $0x18] sm:$0xff]
        %v5118 = vld [vmem:[%s5 + $0x20] sm:$0xff]
        %v5119 = vld [vmem:[%s5 + $0x28] sm:$0xff]
        %v5120 = vld [vmem:[%s5 + $0x30] sm:$0xff]
        %v5121 = vld [vmem:[%s5 + $0x38] sm:$0xff]
        %v5122 = vld [vmem:[%s5 + $0x40] sm:$0xff]
        %v5123 = vld [vmem:[%s5 + $0x48] sm:$0xff]
        %v5124 = vld [vmem:[%s5 + $0x50] sm:$0xff]
        %v5125 = vld [vmem:[%s5 + $0x58] sm:$0xff]
        %v5126 = vld [vmem:[%s5 + $0x60] sm:$0xff]
        %v5127 = vld [vmem:[%s5 + $0x68] sm:$0xff]
        %v5128 = vld [vmem:[%s5 + $0x70] sm:$0xff]
        %v5129 = vld [vmem:[%s5 + $0x78] sm:$0xff]
        %v5130 = vld [vmem:[%s5 + $0x80] sm:$0xff]
        %v5131 = vld [vmem:[%s5 + $0x88] sm:$0xff]
        %v5132 = vld [vmem:[%s5 + $0x90] sm:$0xff]
        %v5133 = vld [vmem:[%s5 + $0x98] sm:$0xff]
        %v5134 = vld [vmem:[%s5 + $0xa0] sm:$0xff]
        %v5135 = vld [vmem:[%s5 + $0xa8] sm:$0xff]
        %v5136 = vld [vmem:[%s5 + $0xb0] sm:$0xff]
        %v5137 = vld [vmem:[%s5 + $0xb8] sm:$0xff]
        %v5138 = vld [vmem:[%s5 + $0xc0] sm:$0xff]
        %v5139 = vld [vmem:[%s5 + $0xc8] sm:$0xff]
        %v5140 = vld [vmem:[%s5 + $0xd0] sm:$0xff]
        %v5141 = vld [vmem:[%s5 + $0xd8] sm:$0xff]
        %v5142 = vld [vmem:[%s5 + $0xe0] sm:$0xff]
        %v5143 = vld [vmem:[%s5 + $0xe8] sm:$0xff]
        %v5144 = vld [vmem:[%s5 + $0xf0] sm:$0xff]
        %v5145 = vld [vmem:[%s5 + $0xf8] sm:$0xff]
        %5147 = vset.pattern.permute.xlu0 0
        %5148 = vperm.xlu0 %5147, %v5114
        %v5149 = vpop.permute.xlu0 %5148
        %5152 = vset.pattern.permute.xlu0 0
        %5153 = vperm.xlu0 %5152, %v5115
        %v5154 = vpop.permute.xlu0 %5153
        %5157 = vset.pattern.permute.xlu0 0
        %5158 = vperm.xlu0 %5157, %v5116
        %v5159 = vpop.permute.xlu0 %5158
        %5162 = vset.pattern.permute.xlu0 0
        %5163 = vperm.xlu0 %5162, %v5117
        %v5164 = vpop.permute.xlu0 %5163
        %5167 = vset.pattern.permute.xlu0 0
        %5168 = vperm.xlu0 %5167, %v5118
        %v5169 = vpop.permute.xlu0 %5168
        %5172 = vset.pattern.permute.xlu0 0
        %5173 = vperm.xlu0 %5172, %v5119
        %v5174 = vpop.permute.xlu0 %5173
        %5177 = vset.pattern.permute.xlu0 0
        %5178 = vperm.xlu0 %5177, %v5120
        %v5179 = vpop.permute.xlu0 %5178
        %5182 = vset.pattern.permute.xlu0 0
        %5183 = vperm.xlu0 %5182, %v5121
        %v5184 = vpop.permute.xlu0 %5183
        %5187 = vset.pattern.permute.xlu0 0
        %5188 = vperm.xlu0 %5187, %v5122
        %v5189 = vpop.permute.xlu0 %5188
        %5192 = vset.pattern.permute.xlu0 0
        %5193 = vperm.xlu0 %5192, %v5123
        %v5194 = vpop.permute.xlu0 %5193
        %5197 = vset.pattern.permute.xlu0 0
        %5198 = vperm.xlu0 %5197, %v5124
        %v5199 = vpop.permute.xlu0 %5198
        %5202 = vset.pattern.permute.xlu0 0
        %5203 = vperm.xlu0 %5202, %v5125
        %v5204 = vpop.permute.xlu0 %5203
        %5207 = vset.pattern.permute.xlu0 0
        %5208 = vperm.xlu0 %5207, %v5126
        %v5209 = vpop.permute.xlu0 %5208
        %5212 = vset.pattern.permute.xlu0 0
        %5213 = vperm.xlu0 %5212, %v5127
        %v5214 = vpop.permute.xlu0 %5213
        %5217 = vset.pattern.permute.xlu0 0
        %5218 = vperm.xlu0 %5217, %v5128
        %v5219 = vpop.permute.xlu0 %5218
        %5222 = vset.pattern.permute.xlu0 0
        %5223 = vperm.xlu0 %5222, %v5129
        %v5224 = vpop.permute.xlu0 %5223
        %5227 = vset.pattern.permute.xlu0 0
        %5228 = vperm.xlu0 %5227, %v5130
        %v5229 = vpop.permute.xlu0 %5228
        %5232 = vset.pattern.permute.xlu0 0
        %5233 = vperm.xlu0 %5232, %v5131
        %v5234 = vpop.permute.xlu0 %5233
        %5237 = vset.pattern.permute.xlu0 0
        %5238 = vperm.xlu0 %5237, %v5132
        %v5239 = vpop.permute.xlu0 %5238
        %5242 = vset.pattern.permute.xlu0 0
        %5243 = vperm.xlu0 %5242, %v5133
        %v5244 = vpop.permute.xlu0 %5243
        %5247 = vset.pattern.permute.xlu0 0
        %5248 = vperm.xlu0 %5247, %v5134
        %v5249 = vpop.permute.xlu0 %5248
        %5252 = vset.pattern.permute.xlu0 0
        %5253 = vperm.xlu0 %5252, %v5135
        %v5254 = vpop.permute.xlu0 %5253
        %5257 = vset.pattern.permute.xlu0 0
        %5258 = vperm.xlu0 %5257, %v5136
        %v5259 = vpop.permute.xlu0 %5258
        %5262 = vset.pattern.permute.xlu0 0
        %5263 = vperm.xlu0 %5262, %v5137
        %v5264 = vpop.permute.xlu0 %5263
        %5267 = vset.pattern.permute.xlu0 0
        %5268 = vperm.xlu0 %5267, %v5138
        %v5269 = vpop.permute.xlu0 %5268
        %5272 = vset.pattern.permute.xlu0 0
        %5273 = vperm.xlu0 %5272, %v5139
        %v5274 = vpop.permute.xlu0 %5273
        %5277 = vset.pattern.permute.xlu0 0
        %5278 = vperm.xlu0 %5277, %v5140
        %v5279 = vpop.permute.xlu0 %5278
        %5282 = vset.pattern.permute.xlu0 0
        %5283 = vperm.xlu0 %5282, %v5141
        %v5284 = vpop.permute.xlu0 %5283
        %5287 = vset.pattern.permute.xlu0 0
        %5288 = vperm.xlu0 %5287, %v5142
        %v5289 = vpop.permute.xlu0 %5288
        %5292 = vset.pattern.permute.xlu0 0
        %5293 = vperm.xlu0 %5292, %v5143
        %v5294 = vpop.permute.xlu0 %5293
        %5297 = vset.pattern.permute.xlu0 0
        %5298 = vperm.xlu0 %5297, %v5144
        %v5299 = vpop.permute.xlu0 %5298
        %5302 = vset.pattern.permute.xlu0 0
        %5303 = vperm.xlu0 %5302, %v5145
        %v5304 = vpop.permute.xlu0 %5303
        %v5306 = vadd.f32 %v4184, %v5149
        %v5307 = vadd.f32 %v4186, %v5149
        %v5308 = vadd.f32 %v4377, %v5149
        %v5309 = vadd.f32 %v4379, %v5149
        %v5310 = vadd.f32 %v4570, %v5149
        %v5311 = vadd.f32 %v4572, %v5149
        %v5312 = vadd.f32 %v4763, %v5149
        %v5313 = vadd.f32 %v4765, %v5149
        %v5314 = vadd.f32 %v4956, %v5149
        %v5315 = vadd.f32 %v4958, %v5149
        %v5316 = vadd.f32 %v4188, %v5154
        %v5317 = vadd.f32 %v4190, %v5154
        %v5318 = vadd.f32 %v4381, %v5154
        %v5319 = vadd.f32 %v4383, %v5154
        %v5320 = vadd.f32 %v4574, %v5154
        %v5321 = vadd.f32 %v4576, %v5154
        %v5322 = vadd.f32 %v4767, %v5154
        %v5323 = vadd.f32 %v4769, %v5154
        %v5324 = vadd.f32 %v4960, %v5154
        %v5325 = vadd.f32 %v4962, %v5154
        %v5326 = vadd.f32 %v4194, %v5159
        %v5327 = vadd.f32 %v4196, %v5159
        %v5328 = vadd.f32 %v4387, %v5159
        %v5329 = vadd.f32 %v4389, %v5159
        %v5330 = vadd.f32 %v4580, %v5159
        %v5331 = vadd.f32 %v4582, %v5159
        %v5332 = vadd.f32 %v4773, %v5159
        %v5333 = vadd.f32 %v4775, %v5159
        %v5334 = vadd.f32 %v4966, %v5159
        %v5335 = vadd.f32 %v4968, %v5159
        %v5336 = vadd.f32 %v4198, %v5164
        %v5337 = vadd.f32 %v4200, %v5164
        %v5338 = vadd.f32 %v4391, %v5164
        %v5339 = vadd.f32 %v4393, %v5164
        %v5340 = vadd.f32 %v4584, %v5164
        %v5341 = vadd.f32 %v4586, %v5164
        %v5342 = vadd.f32 %v4777, %v5164
        %v5343 = vadd.f32 %v4779, %v5164
        %v5344 = vadd.f32 %v4970, %v5164
        %v5345 = vadd.f32 %v4972, %v5164
        %v5346 = vadd.f32 %v4204, %v5169
        %v5347 = vadd.f32 %v4206, %v5169
        %v5348 = vadd.f32 %v4397, %v5169
        %v5349 = vadd.f32 %v4399, %v5169
        %v5350 = vadd.f32 %v4590, %v5169
        %v5351 = vadd.f32 %v4592, %v5169
        %v5352 = vadd.f32 %v4783, %v5169
        %v5353 = vadd.f32 %v4785, %v5169
        %v5354 = vadd.f32 %v4976, %v5169
        %v5355 = vadd.f32 %v4978, %v5169
        %v5356 = vadd.f32 %v4208, %v5174
        %v5357 = vadd.f32 %v4210, %v5174
        %v5358 = vadd.f32 %v4401, %v5174
        %v5359 = vadd.f32 %v4403, %v5174
        %v5360 = vadd.f32 %v4594, %v5174
        %v5361 = vadd.f32 %v4596, %v5174
        %v5362 = vadd.f32 %v4787, %v5174
        %v5363 = vadd.f32 %v4789, %v5174
        %v5364 = vadd.f32 %v4980, %v5174
        %v5365 = vadd.f32 %v4982, %v5174
        %v5366 = vadd.f32 %v4214, %v5179
        %v5367 = vadd.f32 %v4216, %v5179
        %v5368 = vadd.f32 %v4407, %v5179
        %v5369 = vadd.f32 %v4409, %v5179
        %v5370 = vadd.f32 %v4600, %v5179
        %v5371 = vadd.f32 %v4602, %v5179
        %v5372 = vadd.f32 %v4793, %v5179
        %v5373 = vadd.f32 %v4795, %v5179
        %v5374 = vadd.f32 %v4986, %v5179
        %v5375 = vadd.f32 %v4988, %v5179
        %v5376 = vadd.f32 %v4218, %v5184
        %v5377 = vadd.f32 %v4220, %v5184
        %v5378 = vadd.f32 %v4411, %v5184
        %v5379 = vadd.f32 %v4413, %v5184
        %v5380 = vadd.f32 %v4604, %v5184
        %v5381 = vadd.f32 %v4606, %v5184
        %v5382 = vadd.f32 %v4797, %v5184
        %v5383 = vadd.f32 %v4799, %v5184
        %v5384 = vadd.f32 %v4990, %v5184
        %v5385 = vadd.f32 %v4992, %v5184
        %v5386 = vadd.f32 %v4224, %v5189
        %v5387 = vadd.f32 %v4226, %v5189
        %v5388 = vadd.f32 %v4417, %v5189
        %v5389 = vadd.f32 %v4419, %v5189
        %v5390 = vadd.f32 %v4610, %v5189
        %v5391 = vadd.f32 %v4612, %v5189
        %v5392 = vadd.f32 %v4803, %v5189
        %v5393 = vadd.f32 %v4805, %v5189
        %v5394 = vadd.f32 %v4996, %v5189
        %v5395 = vadd.f32 %v4998, %v5189
        %v5396 = vadd.f32 %v4228, %v5194
        %v5397 = vadd.f32 %v4230, %v5194
        %v5398 = vadd.f32 %v4421, %v5194
        %v5399 = vadd.f32 %v4423, %v5194
        %v5400 = vadd.f32 %v4614, %v5194
        %v5401 = vadd.f32 %v4616, %v5194
        %v5402 = vadd.f32 %v4807, %v5194
        %v5403 = vadd.f32 %v4809, %v5194
        %v5404 = vadd.f32 %v5000, %v5194
        %v5405 = vadd.f32 %v5002, %v5194
        %v5406 = vadd.f32 %v4234, %v5199
        %v5407 = vadd.f32 %v4236, %v5199
        %v5408 = vadd.f32 %v4427, %v5199
        %v5409 = vadd.f32 %v4429, %v5199
        %v5410 = vadd.f32 %v4620, %v5199
        %v5411 = vadd.f32 %v4622, %v5199
        %v5412 = vadd.f32 %v4813, %v5199
        %v5413 = vadd.f32 %v4815, %v5199
        %v5414 = vadd.f32 %v5006, %v5199
        %v5415 = vadd.f32 %v5008, %v5199
        %v5416 = vadd.f32 %v4238, %v5204
        %v5417 = vadd.f32 %v4240, %v5204
        %v5418 = vadd.f32 %v4431, %v5204
        %v5419 = vadd.f32 %v4433, %v5204
        %v5420 = vadd.f32 %v4624, %v5204
        %v5421 = vadd.f32 %v4626, %v5204
        %v5422 = vadd.f32 %v4817, %v5204
        %v5423 = vadd.f32 %v4819, %v5204
        %v5424 = vadd.f32 %v5010, %v5204
        %v5425 = vadd.f32 %v5012, %v5204
        %v5426 = vadd.f32 %v4244, %v5209
        %v5427 = vadd.f32 %v4246, %v5209
        %v5428 = vadd.f32 %v4437, %v5209
        %v5429 = vadd.f32 %v4439, %v5209
        %v5430 = vadd.f32 %v4630, %v5209
        %v5431 = vadd.f32 %v4632, %v5209
        %v5432 = vadd.f32 %v4823, %v5209
        %v5433 = vadd.f32 %v4825, %v5209
        %v5434 = vadd.f32 %v5016, %v5209
        %v5435 = vadd.f32 %v5018, %v5209
        %v5436 = vadd.f32 %v4248, %v5214
        %v5437 = vadd.f32 %v4250, %v5214
        %v5438 = vadd.f32 %v4441, %v5214
        %v5439 = vadd.f32 %v4443, %v5214
        %v5440 = vadd.f32 %v4634, %v5214
        %v5441 = vadd.f32 %v4636, %v5214
        %v5442 = vadd.f32 %v4827, %v5214
        %v5443 = vadd.f32 %v4829, %v5214
        %v5444 = vadd.f32 %v5020, %v5214
        %v5445 = vadd.f32 %v5022, %v5214
        %v5446 = vadd.f32 %v4254, %v5219
        %v5447 = vadd.f32 %v4256, %v5219
        %v5448 = vadd.f32 %v4447, %v5219
        %v5449 = vadd.f32 %v4449, %v5219
        %v5450 = vadd.f32 %v4640, %v5219
        %v5451 = vadd.f32 %v4642, %v5219
        %v5452 = vadd.f32 %v4833, %v5219
        %v5453 = vadd.f32 %v4835, %v5219
        %v5454 = vadd.f32 %v5026, %v5219
        %v5455 = vadd.f32 %v5028, %v5219
        %v5456 = vadd.f32 %v4258, %v5224
        %v5457 = vadd.f32 %v4260, %v5224
        %v5458 = vadd.f32 %v4451, %v5224
        %v5459 = vadd.f32 %v4453, %v5224
        %v5460 = vadd.f32 %v4644, %v5224
        %v5461 = vadd.f32 %v4646, %v5224
        %v5462 = vadd.f32 %v4837, %v5224
        %v5463 = vadd.f32 %v4839, %v5224
        %v5464 = vadd.f32 %v5030, %v5224
        %v5465 = vadd.f32 %v5032, %v5224
        %v5466 = vadd.f32 %v4264, %v5229
        %v5467 = vadd.f32 %v4266, %v5229
        %v5468 = vadd.f32 %v4457, %v5229
        %v5469 = vadd.f32 %v4459, %v5229
        %v5470 = vadd.f32 %v4650, %v5229
        %v5471 = vadd.f32 %v4652, %v5229
        %v5472 = vadd.f32 %v4843, %v5229
        %v5473 = vadd.f32 %v4845, %v5229
        %v5474 = vadd.f32 %v5036, %v5229
        %v5475 = vadd.f32 %v5038, %v5229
        %v5476 = vadd.f32 %v4268, %v5234
        %v5477 = vadd.f32 %v4270, %v5234
        %v5478 = vadd.f32 %v4461, %v5234
        %v5479 = vadd.f32 %v4463, %v5234
        %v5480 = vadd.f32 %v4654, %v5234
        %v5481 = vadd.f32 %v4656, %v5234
        %v5482 = vadd.f32 %v4847, %v5234
        %v5483 = vadd.f32 %v4849, %v5234
        %v5484 = vadd.f32 %v5040, %v5234
        %v5485 = vadd.f32 %v5042, %v5234
        %v5486 = vadd.f32 %v4274, %v5239
        %v5487 = vadd.f32 %v4276, %v5239
        %v5488 = vadd.f32 %v4467, %v5239
        %v5489 = vadd.f32 %v4469, %v5239
        %v5490 = vadd.f32 %v4660, %v5239
        %v5491 = vadd.f32 %v4662, %v5239
        %v5492 = vadd.f32 %v4853, %v5239
        %v5493 = vadd.f32 %v4855, %v5239
        %v5494 = vadd.f32 %v5046, %v5239
        %v5495 = vadd.f32 %v5048, %v5239
        %v5496 = vadd.f32 %v4278, %v5244
        %v5497 = vadd.f32 %v4280, %v5244
        %v5498 = vadd.f32 %v4471, %v5244
        %v5499 = vadd.f32 %v4473, %v5244
        %v5500 = vadd.f32 %v4664, %v5244
        %v5501 = vadd.f32 %v4666, %v5244
        %v5502 = vadd.f32 %v4857, %v5244
        %v5503 = vadd.f32 %v4859, %v5244
        %v5504 = vadd.f32 %v5050, %v5244
        %v5505 = vadd.f32 %v5052, %v5244
        %v5506 = vadd.f32 %v4284, %v5249
        %v5507 = vadd.f32 %v4286, %v5249
        %v5508 = vadd.f32 %v4477, %v5249
        %v5509 = vadd.f32 %v4479, %v5249
        %v5510 = vadd.f32 %v4670, %v5249
        %v5511 = vadd.f32 %v4672, %v5249
        %v5512 = vadd.f32 %v4863, %v5249
        %v5513 = vadd.f32 %v4865, %v5249
        %v5514 = vadd.f32 %v5056, %v5249
        %v5515 = vadd.f32 %v5058, %v5249
        %v5516 = vadd.f32 %v4288, %v5254
        %v5517 = vadd.f32 %v4290, %v5254
        %v5518 = vadd.f32 %v4481, %v5254
        %v5519 = vadd.f32 %v4483, %v5254
        %v5520 = vadd.f32 %v4674, %v5254
        %v5521 = vadd.f32 %v4676, %v5254
        %v5522 = vadd.f32 %v4867, %v5254
        %v5523 = vadd.f32 %v4869, %v5254
        %v5524 = vadd.f32 %v5060, %v5254
        %v5525 = vadd.f32 %v5062, %v5254
        %v5526 = vadd.f32 %v4294, %v5259
        %v5527 = vadd.f32 %v4296, %v5259
        %v5528 = vadd.f32 %v4487, %v5259
        %v5529 = vadd.f32 %v4489, %v5259
        %v5530 = vadd.f32 %v4680, %v5259
        %v5531 = vadd.f32 %v4682, %v5259
        %v5532 = vadd.f32 %v4873, %v5259
        %v5533 = vadd.f32 %v4875, %v5259
        %v5534 = vadd.f32 %v5066, %v5259
        %v5535 = vadd.f32 %v5068, %v5259
        %v5536 = vadd.f32 %v4298, %v5264
        %v5537 = vadd.f32 %v4300, %v5264
        %v5538 = vadd.f32 %v4491, %v5264
        %v5539 = vadd.f32 %v4493, %v5264
        %v5540 = vadd.f32 %v4684, %v5264
        %v5541 = vadd.f32 %v4686, %v5264
        %v5542 = vadd.f32 %v4877, %v5264
        %v5543 = vadd.f32 %v4879, %v5264
        %v5544 = vadd.f32 %v5070, %v5264
        %v5545 = vadd.f32 %v5072, %v5264
        %v5546 = vadd.f32 %v4304, %v5269
        %v5547 = vadd.f32 %v4306, %v5269
        %v5548 = vadd.f32 %v4497, %v5269
        %v5549 = vadd.f32 %v4499, %v5269
        %v5550 = vadd.f32 %v4690, %v5269
        %v5551 = vadd.f32 %v4692, %v5269
        %v5552 = vadd.f32 %v4883, %v5269
        %v5553 = vadd.f32 %v4885, %v5269
        %v5554 = vadd.f32 %v5076, %v5269
        %v5555 = vadd.f32 %v5078, %v5269
        %v5556 = vadd.f32 %v4308, %v5274
        %v5557 = vadd.f32 %v4310, %v5274
        %v5558 = vadd.f32 %v4501, %v5274
        %v5559 = vadd.f32 %v4503, %v5274
        %v5560 = vadd.f32 %v4694, %v5274
        %v5561 = vadd.f32 %v4696, %v5274
        %v5562 = vadd.f32 %v4887, %v5274
        %v5563 = vadd.f32 %v4889, %v5274
        %v5564 = vadd.f32 %v5080, %v5274
        %v5565 = vadd.f32 %v5082, %v5274
        %v5566 = vadd.f32 %v4314, %v5279
        %v5567 = vadd.f32 %v4316, %v5279
        %v5568 = vadd.f32 %v4507, %v5279
        %v5569 = vadd.f32 %v4509, %v5279
        %v5570 = vadd.f32 %v4700, %v5279
        %v5571 = vadd.f32 %v4702, %v5279
        %v5572 = vadd.f32 %v4893, %v5279
        %v5573 = vadd.f32 %v4895, %v5279
        %v5574 = vadd.f32 %v5086, %v5279
        %v5575 = vadd.f32 %v5088, %v5279
        %v5576 = vadd.f32 %v4318, %v5284
        %v5577 = vadd.f32 %v4320, %v5284
        %v5578 = vadd.f32 %v4511, %v5284
        %v5579 = vadd.f32 %v4513, %v5284
        %v5580 = vadd.f32 %v4704, %v5284
        %v5581 = vadd.f32 %v4706, %v5284
        %v5582 = vadd.f32 %v4897, %v5284
        %v5583 = vadd.f32 %v4899, %v5284
        %v5584 = vadd.f32 %v5090, %v5284
        %v5585 = vadd.f32 %v5092, %v5284
        %v5586 = vadd.f32 %v4324, %v5289
        %v5587 = vadd.f32 %v4326, %v5289
        %v5588 = vadd.f32 %v4517, %v5289
        %v5589 = vadd.f32 %v4519, %v5289
        %v5590 = vadd.f32 %v4710, %v5289
        %v5591 = vadd.f32 %v4712, %v5289
        %v5592 = vadd.f32 %v4903, %v5289
        %v5593 = vadd.f32 %v4905, %v5289
        %v5594 = vadd.f32 %v5096, %v5289
        %v5595 = vadd.f32 %v5098, %v5289
        %v5596 = vadd.f32 %v4328, %v5294
        %v5597 = vadd.f32 %v4330, %v5294
        %v5598 = vadd.f32 %v4521, %v5294
        %v5599 = vadd.f32 %v4523, %v5294
        %v5600 = vadd.f32 %v4714, %v5294
        %v5601 = vadd.f32 %v4716, %v5294
        %v5602 = vadd.f32 %v4907, %v5294
        %v5603 = vadd.f32 %v4909, %v5294
        %v5604 = vadd.f32 %v5100, %v5294
        %v5605 = vadd.f32 %v5102, %v5294
        %v5606 = vadd.f32 %v4334, %v5299
        %v5607 = vadd.f32 %v4336, %v5299
        %v5608 = vadd.f32 %v4527, %v5299
        %v5609 = vadd.f32 %v4529, %v5299
        %v5610 = vadd.f32 %v4720, %v5299
        %v5611 = vadd.f32 %v4722, %v5299
        %v5612 = vadd.f32 %v4913, %v5299
        %v5613 = vadd.f32 %v4915, %v5299
        %v5614 = vadd.f32 %v5106, %v5299
        %v5615 = vadd.f32 %v5108, %v5299
        %v5616 = vadd.f32 %v4338, %v5304
        %v5617 = vadd.f32 %v4340, %v5304
        %v5618 = vadd.f32 %v4531, %v5304
        %v5619 = vadd.f32 %v4533, %v5304
        %v5620 = vadd.f32 %v4724, %v5304
        %v5621 = vadd.f32 %v4726, %v5304
        %v5622 = vadd.f32 %v4917, %v5304
        %v5623 = vadd.f32 %v4919, %v5304
        %v5624 = vadd.f32 %v5110, %v5304
        %v5625 = vadd.f32 %v5112, %v5304
        %v5626 = vmax.f32 %v5306, 0.0
        %v5627 = vmax.f32 %v5307, 0.0
        %v5628 = vmax.f32 %v5308, 0.0
        %v5629 = vmax.f32 %v5309, 0.0
        %v5630 = vmax.f32 %v5310, 0.0
        %v5631 = vmax.f32 %v5311, 0.0
        %v5632 = vmax.f32 %v5312, 0.0
        %v5633 = vmax.f32 %v5313, 0.0
        %v5634 = vmax.f32 %v5314, 0.0
        %v5635 = vmax.f32 %v5315, 0.0
        %v5636 = vmax.f32 %v5316, 0.0
        %v5637 = vmax.f32 %v5317, 0.0
        %v5638 = vmax.f32 %v5318, 0.0
        %v5639 = vmax.f32 %v5319, 0.0
        %v5640 = vmax.f32 %v5320, 0.0
        %v5641 = vmax.f32 %v5321, 0.0
        %v5642 = vmax.f32 %v5322, 0.0
        %v5643 = vmax.f32 %v5323, 0.0
        %v5644 = vmax.f32 %v5324, 0.0
        %v5645 = vmax.f32 %v5325, 0.0
        %v5646 = vmax.f32 %v5326, 0.0
        %v5647 = vmax.f32 %v5327, 0.0
        %v5648 = vmax.f32 %v5328, 0.0
        %v5649 = vmax.f32 %v5329, 0.0
        %v5650 = vmax.f32 %v5330, 0.0
        %v5651 = vmax.f32 %v5331, 0.0
        %v5652 = vmax.f32 %v5332, 0.0
        %v5653 = vmax.f32 %v5333, 0.0
        %v5654 = vmax.f32 %v5334, 0.0
        %v5655 = vmax.f32 %v5335, 0.0
        %v5656 = vmax.f32 %v5336, 0.0
        %v5657 = vmax.f32 %v5337, 0.0
        %v5658 = vmax.f32 %v5338, 0.0
        %v5659 = vmax.f32 %v5339, 0.0
        %v5660 = vmax.f32 %v5340, 0.0
        %v5661 = vmax.f32 %v5341, 0.0
        %v5662 = vmax.f32 %v5342, 0.0
        %v5663 = vmax.f32 %v5343, 0.0
        %v5664 = vmax.f32 %v5344, 0.0
        %v5665 = vmax.f32 %v5345, 0.0
        %v5666 = vmax.f32 %v5346, 0.0
        %v5667 = vmax.f32 %v5347, 0.0
        %v5668 = vmax.f32 %v5348, 0.0
        %v5669 = vmax.f32 %v5349, 0.0
        %v5670 = vmax.f32 %v5350, 0.0
        %v5671 = vmax.f32 %v5351, 0.0
        %v5672 = vmax.f32 %v5352, 0.0
        %v5673 = vmax.f32 %v5353, 0.0
        %v5674 = vmax.f32 %v5354, 0.0
        %v5675 = vmax.f32 %v5355, 0.0
        %v5676 = vmax.f32 %v5356, 0.0
        %v5677 = vmax.f32 %v5357, 0.0
        %v5678 = vmax.f32 %v5358, 0.0
        %v5679 = vmax.f32 %v5359, 0.0
        %v5680 = vmax.f32 %v5360, 0.0
        %v5681 = vmax.f32 %v5361, 0.0
        %v5682 = vmax.f32 %v5362, 0.0
        %v5683 = vmax.f32 %v5363, 0.0
        %v5684 = vmax.f32 %v5364, 0.0
        %v5685 = vmax.f32 %v5365, 0.0
        %v5686 = vmax.f32 %v5366, 0.0
        %v5687 = vmax.f32 %v5367, 0.0
        %v5688 = vmax.f32 %v5368, 0.0
        %v5689 = vmax.f32 %v5369, 0.0
        %v5690 = vmax.f32 %v5370, 0.0
        %v5691 = vmax.f32 %v5371, 0.0
        %v5692 = vmax.f32 %v5372, 0.0
        %v5693 = vmax.f32 %v5373, 0.0
        %v5694 = vmax.f32 %v5374, 0.0
        %v5695 = vmax.f32 %v5375, 0.0
        %v5696 = vmax.f32 %v5376, 0.0
        %v5697 = vmax.f32 %v5377, 0.0
        %v5698 = vmax.f32 %v5378, 0.0
        %v5699 = vmax.f32 %v5379, 0.0
        %v5700 = vmax.f32 %v5380, 0.0
        %v5701 = vmax.f32 %v5381, 0.0
        %v5702 = vmax.f32 %v5382, 0.0
        %v5703 = vmax.f32 %v5383, 0.0
        %v5704 = vmax.f32 %v5384, 0.0
        %v5705 = vmax.f32 %v5385, 0.0
        %v5706 = vmax.f32 %v5386, 0.0
        %v5707 = vmax.f32 %v5387, 0.0
        %v5708 = vmax.f32 %v5388, 0.0
        %v5709 = vmax.f32 %v5389, 0.0
        %v5710 = vmax.f32 %v5390, 0.0
        %v5711 = vmax.f32 %v5391, 0.0
        %v5712 = vmax.f32 %v5392, 0.0
        %v5713 = vmax.f32 %v5393, 0.0
        %v5714 = vmax.f32 %v5394, 0.0
        %v5715 = vmax.f32 %v5395, 0.0
        %v5716 = vmax.f32 %v5396, 0.0
        %v5717 = vmax.f32 %v5397, 0.0
        %v5718 = vmax.f32 %v5398, 0.0
        %v5719 = vmax.f32 %v5399, 0.0
        %v5720 = vmax.f32 %v5400, 0.0
        %v5721 = vmax.f32 %v5401, 0.0
        %v5722 = vmax.f32 %v5402, 0.0
        %v5723 = vmax.f32 %v5403, 0.0
        %v5724 = vmax.f32 %v5404, 0.0
        %v5725 = vmax.f32 %v5405, 0.0
        %v5726 = vmax.f32 %v5406, 0.0
        %v5727 = vmax.f32 %v5407, 0.0
        %v5728 = vmax.f32 %v5408, 0.0
        %v5729 = vmax.f32 %v5409, 0.0
        %v5730 = vmax.f32 %v5410, 0.0
        %v5731 = vmax.f32 %v5411, 0.0
        %v5732 = vmax.f32 %v5412, 0.0
        %v5733 = vmax.f32 %v5413, 0.0
        %v5734 = vmax.f32 %v5414, 0.0
        %v5735 = vmax.f32 %v5415, 0.0
        %v5736 = vmax.f32 %v5416, 0.0
        %v5737 = vmax.f32 %v5417, 0.0
        %v5738 = vmax.f32 %v5418, 0.0
        %v5739 = vmax.f32 %v5419, 0.0
        %v5740 = vmax.f32 %v5420, 0.0
        %v5741 = vmax.f32 %v5421, 0.0
        %v5742 = vmax.f32 %v5422, 0.0
        %v5743 = vmax.f32 %v5423, 0.0
        %v5744 = vmax.f32 %v5424, 0.0
        %v5745 = vmax.f32 %v5425, 0.0
        %v5746 = vmax.f32 %v5426, 0.0
        %v5747 = vmax.f32 %v5427, 0.0
        %v5748 = vmax.f32 %v5428, 0.0
        %v5749 = vmax.f32 %v5429, 0.0
        %v5750 = vmax.f32 %v5430, 0.0
        %v5751 = vmax.f32 %v5431, 0.0
        %v5752 = vmax.f32 %v5432, 0.0
        %v5753 = vmax.f32 %v5433, 0.0
        %v5754 = vmax.f32 %v5434, 0.0
        %v5755 = vmax.f32 %v5435, 0.0
        %v5756 = vmax.f32 %v5436, 0.0
        %v5757 = vmax.f32 %v5437, 0.0
        %v5758 = vmax.f32 %v5438, 0.0
        %v5759 = vmax.f32 %v5439, 0.0
        %v5760 = vmax.f32 %v5440, 0.0
        %v5761 = vmax.f32 %v5441, 0.0
        %v5762 = vmax.f32 %v5442, 0.0
        %v5763 = vmax.f32 %v5443, 0.0
        %v5764 = vmax.f32 %v5444, 0.0
        %v5765 = vmax.f32 %v5445, 0.0
        %v5766 = vmax.f32 %v5446, 0.0
        %v5767 = vmax.f32 %v5447, 0.0
        %v5768 = vmax.f32 %v5448, 0.0
        %v5769 = vmax.f32 %v5449, 0.0
        %v5770 = vmax.f32 %v5450, 0.0
        %v5771 = vmax.f32 %v5451, 0.0
        %v5772 = vmax.f32 %v5452, 0.0
        %v5773 = vmax.f32 %v5453, 0.0
        %v5774 = vmax.f32 %v5454, 0.0
        %v5775 = vmax.f32 %v5455, 0.0
        %v5776 = vmax.f32 %v5456, 0.0
        %v5777 = vmax.f32 %v5457, 0.0
        %v5778 = vmax.f32 %v5458, 0.0
        %v5779 = vmax.f32 %v5459, 0.0
        %v5780 = vmax.f32 %v5460, 0.0
        %v5781 = vmax.f32 %v5461, 0.0
        %v5782 = vmax.f32 %v5462, 0.0
        %v5783 = vmax.f32 %v5463, 0.0
        %v5784 = vmax.f32 %v5464, 0.0
        %v5785 = vmax.f32 %v5465, 0.0
        %v5786 = vmax.f32 %v5466, 0.0
        %v5787 = vmax.f32 %v5467, 0.0
        %v5788 = vmax.f32 %v5468, 0.0
        %v5789 = vmax.f32 %v5469, 0.0
        %v5790 = vmax.f32 %v5470, 0.0
        %v5791 = vmax.f32 %v5471, 0.0
        %v5792 = vmax.f32 %v5472, 0.0
        %v5793 = vmax.f32 %v5473, 0.0
        %v5794 = vmax.f32 %v5474, 0.0
        %v5795 = vmax.f32 %v5475, 0.0
        %v5796 = vmax.f32 %v5476, 0.0
        %v5797 = vmax.f32 %v5477, 0.0
        %v5798 = vmax.f32 %v5478, 0.0
        %v5799 = vmax.f32 %v5479, 0.0
        %v5800 = vmax.f32 %v5480, 0.0
        %v5801 = vmax.f32 %v5481, 0.0
        %v5802 = vmax.f32 %v5482, 0.0
        %v5803 = vmax.f32 %v5483, 0.0
        %v5804 = vmax.f32 %v5484, 0.0
        %v5805 = vmax.f32 %v5485, 0.0
        %v5806 = vmax.f32 %v5486, 0.0
        %v5807 = vmax.f32 %v5487, 0.0
        %v5808 = vmax.f32 %v5488, 0.0
        %v5809 = vmax.f32 %v5489, 0.0
        %v5810 = vmax.f32 %v5490, 0.0
        %v5811 = vmax.f32 %v5491, 0.0
        %v5812 = vmax.f32 %v5492, 0.0
        %v5813 = vmax.f32 %v5493, 0.0
        %v5814 = vmax.f32 %v5494, 0.0
        %v5815 = vmax.f32 %v5495, 0.0
        %v5816 = vmax.f32 %v5496, 0.0
        %v5817 = vmax.f32 %v5497, 0.0
        %v5818 = vmax.f32 %v5498, 0.0
        %v5819 = vmax.f32 %v5499, 0.0
        %v5820 = vmax.f32 %v5500, 0.0
        %v5821 = vmax.f32 %v5501, 0.0
        %v5822 = vmax.f32 %v5502, 0.0
        %v5823 = vmax.f32 %v5503, 0.0
        %v5824 = vmax.f32 %v5504, 0.0
        %v5825 = vmax.f32 %v5505, 0.0
        %v5826 = vmax.f32 %v5506, 0.0
        %v5827 = vmax.f32 %v5507, 0.0
        %v5828 = vmax.f32 %v5508, 0.0
        %v5829 = vmax.f32 %v5509, 0.0
        %v5830 = vmax.f32 %v5510, 0.0
        %v5831 = vmax.f32 %v5511, 0.0
        %v5832 = vmax.f32 %v5512, 0.0
        %v5833 = vmax.f32 %v5513, 0.0
        %v5834 = vmax.f32 %v5514, 0.0
        %v5835 = vmax.f32 %v5515, 0.0
        %v5836 = vmax.f32 %v5516, 0.0
        %v5837 = vmax.f32 %v5517, 0.0
        %v5838 = vmax.f32 %v5518, 0.0
        %v5839 = vmax.f32 %v5519, 0.0
        %v5840 = vmax.f32 %v5520, 0.0
        %v5841 = vmax.f32 %v5521, 0.0
        %v5842 = vmax.f32 %v5522, 0.0
        %v5843 = vmax.f32 %v5523, 0.0
        %v5844 = vmax.f32 %v5524, 0.0
        %v5845 = vmax.f32 %v5525, 0.0
        %v5846 = vmax.f32 %v5526, 0.0
        %v5847 = vmax.f32 %v5527, 0.0
        %v5848 = vmax.f32 %v5528, 0.0
        %v5849 = vmax.f32 %v5529, 0.0
        %v5850 = vmax.f32 %v5530, 0.0
        %v5851 = vmax.f32 %v5531, 0.0
        %v5852 = vmax.f32 %v5532, 0.0
        %v5853 = vmax.f32 %v5533, 0.0
        %v5854 = vmax.f32 %v5534, 0.0
        %v5855 = vmax.f32 %v5535, 0.0
        %v5856 = vmax.f32 %v5536, 0.0
        %v5857 = vmax.f32 %v5537, 0.0
        %v5858 = vmax.f32 %v5538, 0.0
        %v5859 = vmax.f32 %v5539, 0.0
        %v5860 = vmax.f32 %v5540, 0.0
        %v5861 = vmax.f32 %v5541, 0.0
        %v5862 = vmax.f32 %v5542, 0.0
        %v5863 = vmax.f32 %v5543, 0.0
        %v5864 = vmax.f32 %v5544, 0.0
        %v5865 = vmax.f32 %v5545, 0.0
        %v5866 = vmax.f32 %v5546, 0.0
        %v5867 = vmax.f32 %v5547, 0.0
        %v5868 = vmax.f32 %v5548, 0.0
        %v5869 = vmax.f32 %v5549, 0.0
        %v5870 = vmax.f32 %v5550, 0.0
        %v5871 = vmax.f32 %v5551, 0.0
        %v5872 = vmax.f32 %v5552, 0.0
        %v5873 = vmax.f32 %v5553, 0.0
        %v5874 = vmax.f32 %v5554, 0.0
        %v5875 = vmax.f32 %v5555, 0.0
        %v5876 = vmax.f32 %v5556, 0.0
        %v5877 = vmax.f32 %v5557, 0.0
        %v5878 = vmax.f32 %v5558, 0.0
        %v5879 = vmax.f32 %v5559, 0.0
        %v5880 = vmax.f32 %v5560, 0.0
        %v5881 = vmax.f32 %v5561, 0.0
        %v5882 = vmax.f32 %v5562, 0.0
        %v5883 = vmax.f32 %v5563, 0.0
        %v5884 = vmax.f32 %v5564, 0.0
        %v5885 = vmax.f32 %v5565, 0.0
        %v5886 = vmax.f32 %v5566, 0.0
        %v5887 = vmax.f32 %v5567, 0.0
        %v5888 = vmax.f32 %v5568, 0.0
        %v5889 = vmax.f32 %v5569, 0.0
        %v5890 = vmax.f32 %v5570, 0.0
        %v5891 = vmax.f32 %v5571, 0.0
        %v5892 = vmax.f32 %v5572, 0.0
        %v5893 = vmax.f32 %v5573, 0.0
        %v5894 = vmax.f32 %v5574, 0.0
        %v5895 = vmax.f32 %v5575, 0.0
        %v5896 = vmax.f32 %v5576, 0.0
        %v5897 = vmax.f32 %v5577, 0.0
        %v5898 = vmax.f32 %v5578, 0.0
        %v5899 = vmax.f32 %v5579, 0.0
        %v5900 = vmax.f32 %v5580, 0.0
        %v5901 = vmax.f32 %v5581, 0.0
        %v5902 = vmax.f32 %v5582, 0.0
        %v5903 = vmax.f32 %v5583, 0.0
        %v5904 = vmax.f32 %v5584, 0.0
        %v5905 = vmax.f32 %v5585, 0.0
        %v5906 = vmax.f32 %v5586, 0.0
        %v5907 = vmax.f32 %v5587, 0.0
        %v5908 = vmax.f32 %v5588, 0.0
        %v5909 = vmax.f32 %v5589, 0.0
        %v5910 = vmax.f32 %v5590, 0.0
        %v5911 = vmax.f32 %v5591, 0.0
        %v5912 = vmax.f32 %v5592, 0.0
        %v5913 = vmax.f32 %v5593, 0.0
        %v5914 = vmax.f32 %v5594, 0.0
        %v5915 = vmax.f32 %v5595, 0.0
        %v5916 = vmax.f32 %v5596, 0.0
        %v5917 = vmax.f32 %v5597, 0.0
        %v5918 = vmax.f32 %v5598, 0.0
        %v5919 = vmax.f32 %v5599, 0.0
        %v5920 = vmax.f32 %v5600, 0.0
        %v5921 = vmax.f32 %v5601, 0.0
        %v5922 = vmax.f32 %v5602, 0.0
        %v5923 = vmax.f32 %v5603, 0.0
        %v5924 = vmax.f32 %v5604, 0.0
        %v5925 = vmax.f32 %v5605, 0.0
        %v5926 = vmax.f32 %v5606, 0.0
        %v5927 = vmax.f32 %v5607, 0.0
        %v5928 = vmax.f32 %v5608, 0.0
        %v5929 = vmax.f32 %v5609, 0.0
        %v5930 = vmax.f32 %v5610, 0.0
        %v5931 = vmax.f32 %v5611, 0.0
        %v5932 = vmax.f32 %v5612, 0.0
        %v5933 = vmax.f32 %v5613, 0.0
        %v5934 = vmax.f32 %v5614, 0.0
        %v5935 = vmax.f32 %v5615, 0.0
        %v5936 = vmax.f32 %v5616, 0.0
        %v5937 = vmax.f32 %v5617, 0.0
        %v5938 = vmax.f32 %v5618, 0.0
        %v5939 = vmax.f32 %v5619, 0.0
        %v5940 = vmax.f32 %v5620, 0.0
        %v5941 = vmax.f32 %v5621, 0.0
        %v5942 = vmax.f32 %v5622, 0.0
        %v5943 = vmax.f32 %v5623, 0.0
        %v5944 = vmax.f32 %v5624, 0.0
        %v5945 = vmax.f32 %v5625, 0.0
        %v5946 = vld [vmem:[%s6] sm:$0xff]
        %v5947 = vld [vmem:[%s6 + $0x8] sm:$0xff]
        %v5948 = vld [vmem:[%s6 + $0x10] sm:$0xff]
        %v5949 = vld [vmem:[%s6 + $0x18] sm:$0xff]
        %v5950 = vld [vmem:[%s6 + $0x20] sm:$0xff]
        %v5951 = vld [vmem:[%s6 + $0x28] sm:$0xff]
        %v5952 = vld [vmem:[%s6 + $0x30] sm:$0xff]
        %v5953 = vld [vmem:[%s6 + $0x38] sm:$0xff]
        %v5954 = vld [vmem:[%s6 + $0x40] sm:$0xff]
        %v5955 = vld [vmem:[%s6 + $0x48] sm:$0xff]
        %v5956 = vld [vmem:[%s6 + $0x50] sm:$0xff]
        %v5957 = vld [vmem:[%s6 + $0x58] sm:$0xff]
        %v5958 = vld [vmem:[%s6 + $0x60] sm:$0xff]
        %v5959 = vld [vmem:[%s6 + $0x68] sm:$0xff]
        %v5960 = vld [vmem:[%s6 + $0x70] sm:$0xff]
        %v5961 = vld [vmem:[%s6 + $0x78] sm:$0xff]
        %v5962 = vpack.c.bf16 %v5636, %v5626
        %v5963 = vpack.c.bf16 %v5637, %v5627
        %v5964 = vpack.c.bf16 %v5638, %v5628
        %v5965 = vpack.c.bf16 %v5639, %v5629
        %v5966 = vpack.c.bf16 %v5640, %v5630
        %v5967 = vpack.c.bf16 %v5641, %v5631
        %v5968 = vpack.c.bf16 %v5642, %v5632
        %v5969 = vpack.c.bf16 %v5643, %v5633
        %v5970 = vpack.c.bf16 %v5644, %v5634
        %v5971 = vpack.c.bf16 %v5645, %v5635
        %v5972 = vpack.c.bf16 %v5656, %v5646
        %v5973 = vpack.c.bf16 %v5657, %v5647
        %v5974 = vpack.c.bf16 %v5658, %v5648
        %v5975 = vpack.c.bf16 %v5659, %v5649
        %v5976 = vpack.c.bf16 %v5660, %v5650
        %v5977 = vpack.c.bf16 %v5661, %v5651
        %v5978 = vpack.c.bf16 %v5662, %v5652
        %v5979 = vpack.c.bf16 %v5663, %v5653
        %v5980 = vpack.c.bf16 %v5664, %v5654
        %v5981 = vpack.c.bf16 %v5665, %v5655
        %v5982 = vpack.c.bf16 %v5676, %v5666
        %v5983 = vpack.c.bf16 %v5677, %v5667
        %v5984 = vpack.c.bf16 %v5678, %v5668
        %v5985 = vpack.c.bf16 %v5679, %v5669
        %v5986 = vpack.c.bf16 %v5680, %v5670
        %v5987 = vpack.c.bf16 %v5681, %v5671
        %v5988 = vpack.c.bf16 %v5682, %v5672
        %v5989 = vpack.c.bf16 %v5683, %v5673
        %v5990 = vpack.c.bf16 %v5684, %v5674
        %v5991 = vpack.c.bf16 %v5685, %v5675
        %v5992 = vpack.c.bf16 %v5696, %v5686
        %v5993 = vpack.c.bf16 %v5697, %v5687
        %v5994 = vpack.c.bf16 %v5698, %v5688
        %v5995 = vpack.c.bf16 %v5699, %v5689
        %v5996 = vpack.c.bf16 %v5700, %v5690
        %v5997 = vpack.c.bf16 %v5701, %v5691
        %v5998 = vpack.c.bf16 %v5702, %v5692
        %v5999 = vpack.c.bf16 %v5703, %v5693
        %v6000 = vpack.c.bf16 %v5704, %v5694
        %v6001 = vpack.c.bf16 %v5705, %v5695
        %v6002 = vpack.c.bf16 %v5716, %v5706
        %v6003 = vpack.c.bf16 %v5717, %v5707
        %v6004 = vpack.c.bf16 %v5718, %v5708
        %v6005 = vpack.c.bf16 %v5719, %v5709
        %v6006 = vpack.c.bf16 %v5720, %v5710
        %v6007 = vpack.c.bf16 %v5721, %v5711
        %v6008 = vpack.c.bf16 %v5722, %v5712
        %v6009 = vpack.c.bf16 %v5723, %v5713
        %v6010 = vpack.c.bf16 %v5724, %v5714
        %v6011 = vpack.c.bf16 %v5725, %v5715
        %v6012 = vpack.c.bf16 %v5736, %v5726
        %v6013 = vpack.c.bf16 %v5737, %v5727
        %v6014 = vpack.c.bf16 %v5738, %v5728
        %v6015 = vpack.c.bf16 %v5739, %v5729
        %v6016 = vpack.c.bf16 %v5740, %v5730
        %v6017 = vpack.c.bf16 %v5741, %v5731
        %v6018 = vpack.c.bf16 %v5742, %v5732
        %v6019 = vpack.c.bf16 %v5743, %v5733
        %v6020 = vpack.c.bf16 %v5744, %v5734
        %v6021 = vpack.c.bf16 %v5745, %v5735
        %v6022 = vpack.c.bf16 %v5756, %v5746
        %v6023 = vpack.c.bf16 %v5757, %v5747
        %v6024 = vpack.c.bf16 %v5758, %v5748
        %v6025 = vpack.c.bf16 %v5759, %v5749
        %v6026 = vpack.c.bf16 %v5760, %v5750
        %v6027 = vpack.c.bf16 %v5761, %v5751
        %v6028 = vpack.c.bf16 %v5762, %v5752
        %v6029 = vpack.c.bf16 %v5763, %v5753
        %v6030 = vpack.c.bf16 %v5764, %v5754
        %v6031 = vpack.c.bf16 %v5765, %v5755
        %v6032 = vpack.c.bf16 %v5776, %v5766
        %v6033 = vpack.c.bf16 %v5777, %v5767
        %v6034 = vpack.c.bf16 %v5778, %v5768
        %v6035 = vpack.c.bf16 %v5779, %v5769
        %v6036 = vpack.c.bf16 %v5780, %v5770
        %v6037 = vpack.c.bf16 %v5781, %v5771
        %v6038 = vpack.c.bf16 %v5782, %v5772
        %v6039 = vpack.c.bf16 %v5783, %v5773
        %v6040 = vpack.c.bf16 %v5784, %v5774
        %v6041 = vpack.c.bf16 %v5785, %v5775
        %v6042 = vpack.c.bf16 %v5796, %v5786
        %v6043 = vpack.c.bf16 %v5797, %v5787
        %v6044 = vpack.c.bf16 %v5798, %v5788
        %v6045 = vpack.c.bf16 %v5799, %v5789
        %v6046 = vpack.c.bf16 %v5800, %v5790
        %v6047 = vpack.c.bf16 %v5801, %v5791
        %v6048 = vpack.c.bf16 %v5802, %v5792
        %v6049 = vpack.c.bf16 %v5803, %v5793
        %v6050 = vpack.c.bf16 %v5804, %v5794
        %v6051 = vpack.c.bf16 %v5805, %v5795
        %v6052 = vpack.c.bf16 %v5816, %v5806
        %v6053 = vpack.c.bf16 %v5817, %v5807
        %v6054 = vpack.c.bf16 %v5818, %v5808
        %v6055 = vpack.c.bf16 %v5819, %v5809
        %v6056 = vpack.c.bf16 %v5820, %v5810
        %v6057 = vpack.c.bf16 %v5821, %v5811
        %v6058 = vpack.c.bf16 %v5822, %v5812
        %v6059 = vpack.c.bf16 %v5823, %v5813
        %v6060 = vpack.c.bf16 %v5824, %v5814
        %v6061 = vpack.c.bf16 %v5825, %v5815
        %v6062 = vpack.c.bf16 %v5836, %v5826
        %v6063 = vpack.c.bf16 %v5837, %v5827
        %v6064 = vpack.c.bf16 %v5838, %v5828
        %v6065 = vpack.c.bf16 %v5839, %v5829
        %v6066 = vpack.c.bf16 %v5840, %v5830
        %v6067 = vpack.c.bf16 %v5841, %v5831
        %v6068 = vpack.c.bf16 %v5842, %v5832
        %v6069 = vpack.c.bf16 %v5843, %v5833
        %v6070 = vpack.c.bf16 %v5844, %v5834
        %v6071 = vpack.c.bf16 %v5845, %v5835
        %v6072 = vpack.c.bf16 %v5856, %v5846
        %v6073 = vpack.c.bf16 %v5857, %v5847
        %v6074 = vpack.c.bf16 %v5858, %v5848
        %v6075 = vpack.c.bf16 %v5859, %v5849
        %v6076 = vpack.c.bf16 %v5860, %v5850
        %v6077 = vpack.c.bf16 %v5861, %v5851
        %v6078 = vpack.c.bf16 %v5862, %v5852
        %v6079 = vpack.c.bf16 %v5863, %v5853
        %v6080 = vpack.c.bf16 %v5864, %v5854
        %v6081 = vpack.c.bf16 %v5865, %v5855
        %v6082 = vpack.c.bf16 %v5876, %v5866
        %v6083 = vpack.c.bf16 %v5877, %v5867
        %v6084 = vpack.c.bf16 %v5878, %v5868
        %v6085 = vpack.c.bf16 %v5879, %v5869
        %v6086 = vpack.c.bf16 %v5880, %v5870
        %v6087 = vpack.c.bf16 %v5881, %v5871
        %v6088 = vpack.c.bf16 %v5882, %v5872
        %v6089 = vpack.c.bf16 %v5883, %v5873
        %v6090 = vpack.c.bf16 %v5884, %v5874
        %v6091 = vpack.c.bf16 %v5885, %v5875
        %v6092 = vpack.c.bf16 %v5896, %v5886
        %v6093 = vpack.c.bf16 %v5897, %v5887
        %v6094 = vpack.c.bf16 %v5898, %v5888
        %v6095 = vpack.c.bf16 %v5899, %v5889
        %v6096 = vpack.c.bf16 %v5900, %v5890
        %v6097 = vpack.c.bf16 %v5901, %v5891
        %v6098 = vpack.c.bf16 %v5902, %v5892
        %v6099 = vpack.c.bf16 %v5903, %v5893
        %v6100 = vpack.c.bf16 %v5904, %v5894
        %v6101 = vpack.c.bf16 %v5905, %v5895
        %v6102 = vpack.c.bf16 %v5916, %v5906
        %v6103 = vpack.c.bf16 %v5917, %v5907
        %v6104 = vpack.c.bf16 %v5918, %v5908
        %v6105 = vpack.c.bf16 %v5919, %v5909
        %v6106 = vpack.c.bf16 %v5920, %v5910
        %v6107 = vpack.c.bf16 %v5921, %v5911
        %v6108 = vpack.c.bf16 %v5922, %v5912
        %v6109 = vpack.c.bf16 %v5923, %v5913
        %v6110 = vpack.c.bf16 %v5924, %v5914
        %v6111 = vpack.c.bf16 %v5925, %v5915
        %v6112 = vpack.c.bf16 %v5936, %v5926
        %v6113 = vpack.c.bf16 %v5937, %v5927
        %v6114 = vpack.c.bf16 %v5938, %v5928
        %v6115 = vpack.c.bf16 %v5939, %v5929
        %v6116 = vpack.c.bf16 %v5940, %v5930
        %v6117 = vpack.c.bf16 %v5941, %v5931
        %v6118 = vpack.c.bf16 %v5942, %v5932
        %v6119 = vpack.c.bf16 %v5943, %v5933
        %v6120 = vpack.c.bf16 %v5944, %v5934
        %v6121 = vpack.c.bf16 %v5945, %v5935
        %v6122 = vld [vmem:[%s7] sm:$0xff]
        %v6123 = vld [vmem:[%s7 + $0x8] sm:$0xff]
        %v6124 = vld [vmem:[%s7 + $0x10] sm:$0xff]
        %v6125 = vld [vmem:[%s7 + $0x18] sm:$0xff]
        %v6126 = vld [vmem:[%s7 + $0x20] sm:$0xff]
        %v6127 = vld [vmem:[%s7 + $0x28] sm:$0xff]
        %v6128 = vld [vmem:[%s7 + $0x30] sm:$0xff]
        %v6129 = vld [vmem:[%s7 + $0x38] sm:$0xff]
        %v6130 = vld [vmem:[%s7 + $0x40] sm:$0xff]
        %v6131 = vld [vmem:[%s7 + $0x48] sm:$0xff]
        %v6132 = vld [vmem:[%s7 + $0x50] sm:$0xff]
        %v6133 = vld [vmem:[%s7 + $0x58] sm:$0xff]
        %v6134 = vld [vmem:[%s7 + $0x60] sm:$0xff]
        %v6135 = vld [vmem:[%s7 + $0x68] sm:$0xff]
        %v6136 = vld [vmem:[%s7 + $0x70] sm:$0xff]
        %v6137 = vld [vmem:[%s7 + $0x78] sm:$0xff]
        %6139 = vset.pattern.permute.xlu0 0
        %6140 = vperm.xlu0 %6139, %v6122
        %v6141 = vpop.permute.xlu0 %6140
        %6144 = vset.pattern.permute.xlu0 0
        %6145 = vperm.xlu0 %6144, %v6123
        %v6146 = vpop.permute.xlu0 %6145
        %6149 = vset.pattern.permute.xlu0 0
        %6150 = vperm.xlu0 %6149, %v6124
        %v6151 = vpop.permute.xlu0 %6150
        %6154 = vset.pattern.permute.xlu0 0
        %6155 = vperm.xlu0 %6154, %v6125
        %v6156 = vpop.permute.xlu0 %6155
        %6159 = vset.pattern.permute.xlu0 0
        %6160 = vperm.xlu0 %6159, %v6126
        %v6161 = vpop.permute.xlu0 %6160
        %6164 = vset.pattern.permute.xlu0 0
        %6165 = vperm.xlu0 %6164, %v6127
        %v6166 = vpop.permute.xlu0 %6165
        %6169 = vset.pattern.permute.xlu0 0
        %6170 = vperm.xlu0 %6169, %v6128
        %v6171 = vpop.permute.xlu0 %6170
        %6174 = vset.pattern.permute.xlu0 0
        %6175 = vperm.xlu0 %6174, %v6129
        %v6176 = vpop.permute.xlu0 %6175
        %6179 = vset.pattern.permute.xlu0 0
        %6180 = vperm.xlu0 %6179, %v6130
        %v6181 = vpop.permute.xlu0 %6180
        %6184 = vset.pattern.permute.xlu0 0
        %6185 = vperm.xlu0 %6184, %v6131
        %v6186 = vpop.permute.xlu0 %6185
        %6189 = vset.pattern.permute.xlu0 0
        %6190 = vperm.xlu0 %6189, %v6132
        %v6191 = vpop.permute.xlu0 %6190
        %6194 = vset.pattern.permute.xlu0 0
        %6195 = vperm.xlu0 %6194, %v6133
        %v6196 = vpop.permute.xlu0 %6195
        %6199 = vset.pattern.permute.xlu0 0
        %6200 = vperm.xlu0 %6199, %v6134
        %v6201 = vpop.permute.xlu0 %6200
        %6204 = vset.pattern.permute.xlu0 0
        %6205 = vperm.xlu0 %6204, %v6135
        %v6206 = vpop.permute.xlu0 %6205
        %6209 = vset.pattern.permute.xlu0 0
        %6210 = vperm.xlu0 %6209, %v6136
        %v6211 = vpop.permute.xlu0 %6210
        %6214 = vset.pattern.permute.xlu0 0
        %6215 = vperm.xlu0 %6214, %v6137
        %v6216 = vpop.permute.xlu0 %6215
        %v6234 = vunpack.c.l.b16 %v5946
        %v6235 = vunpack.c.h.b16 %v5946
        %v6236 = vunpack.c.l.b16 %v5947
        %v6237 = vunpack.c.h.b16 %v5947
        %v6238 = vunpack.c.l.b16 %v5948
        %v6239 = vunpack.c.h.b16 %v5948
        %v6240 = vunpack.c.l.b16 %v5949
        %v6241 = vunpack.c.h.b16 %v5949
        %v6242 = vunpack.c.l.b16 %v5950
        %v6243 = vunpack.c.h.b16 %v5950
        %v6244 = vunpack.c.l.b16 %v5951
        %v6245 = vunpack.c.h.b16 %v5951
        %v6246 = vunpack.c.l.b16 %v5952
        %v6247 = vunpack.c.h.b16 %v5952
        %v6248 = vunpack.c.l.b16 %v5953
        %v6249 = vunpack.c.h.b16 %v5953
        %v6250 = vunpack.c.l.b16 %v5954
        %v6251 = vunpack.c.h.b16 %v5954
        %v6252 = vunpack.c.l.b16 %v5955
        %v6253 = vunpack.c.h.b16 %v5955
        %v6254 = vunpack.c.l.b16 %v5956
        %v6255 = vunpack.c.h.b16 %v5956
        %v6256 = vunpack.c.l.b16 %v5957
        %v6257 = vunpack.c.h.b16 %v5957
        %v6258 = vunpack.c.l.b16 %v5958
        %v6259 = vunpack.c.h.b16 %v5958
        %v6260 = vunpack.c.l.b16 %v5959
        %v6261 = vunpack.c.h.b16 %v5959
        %v6262 = vunpack.c.l.b16 %v5960
        %v6263 = vunpack.c.h.b16 %v5960
        %v6264 = vunpack.c.l.b16 %v5961
        %v6265 = vunpack.c.h.b16 %v5961
        %v6266 = vpack.c.b16 %v6236, %v6234
        %v6267 = vpack.c.b16 %v6237, %v6235
        %v6268 = vpack.c.b16 %v6240, %v6238
        %v6269 = vpack.c.b16 %v6241, %v6239
        %v6270 = vpack.c.b16 %v6244, %v6242
        %v6271 = vpack.c.b16 %v6245, %v6243
        %v6272 = vpack.c.b16 %v6248, %v6246
        %v6273 = vpack.c.b16 %v6249, %v6247
        %v6274 = vpack.c.b16 %v6252, %v6250
        %v6275 = vpack.c.b16 %v6253, %v6251
        %v6276 = vpack.c.b16 %v6256, %v6254
        %v6277 = vpack.c.b16 %v6257, %v6255
        %v6278 = vpack.c.b16 %v6260, %v6258
        %v6279 = vpack.c.b16 %v6261, %v6259
        %v6280 = vpack.c.b16 %v6264, %v6262
        %v6281 = vpack.c.b16 %v6265, %v6263
        %6298 = vmatprep.subr.bf16.mxu0 %v6033
        %6299 = vmatpush1.bf16.msra.mxu0 %v6032
        %6300 = vmatprep.subr.bf16.mxu0 %v6023
        %6301 = vmatpush1.bf16.msra.mxu0 %v6022
        %6302 = vmatprep.subr.bf16.mxu0 %v6013
        %6303 = vmatpush1.bf16.msra.mxu0 %v6012
        %6304 = vmatprep.subr.bf16.mxu0 %v6003
        %6305 = vmatpush1.bf16.msra.mxu0 %v6002
        %6306 = vmatprep.subr.bf16.mxu0 %v5993
        %6307 = vmatpush1.bf16.msra.mxu0 %v5992
        %6308 = vmatprep.subr.bf16.mxu0 %v5983
        %6309 = vmatpush1.bf16.msra.mxu0 %v5982
        %6310 = vmatprep.subr.bf16.mxu0 %v5973
        %6311 = vmatpush1.bf16.msra.mxu0 %v5972
        %6312 = vmatprep.subr.bf16.mxu0 %v5963
        %6313 = vmatpush1.bf16.msra.mxu0 %v5962
        %6314 = vmatprep.subr.bf16.mxu0 %v6113
        %6315 = vmatpush2.bf16.msra.mxu0 %v6112
        %6316 = vmatprep.subr.bf16.mxu0 %v6103
        %6317 = vmatpush2.bf16.msra.mxu0 %v6102
        %6318 = vmatprep.subr.bf16.mxu0 %v6093
        %6319 = vmatpush2.bf16.msra.mxu0 %v6092
        %6320 = vmatprep.subr.bf16.mxu0 %v6083
        %6321 = vmatpush2.bf16.msra.mxu0 %v6082
        %6322 = vmatprep.subr.bf16.mxu0 %v6073
        %6323 = vmatpush2.bf16.msra.mxu0 %v6072
        %6324 = vmatprep.subr.bf16.mxu0 %v6063
        %6325 = vmatpush2.bf16.msra.mxu0 %v6062
        %6326 = vmatprep.subr.bf16.mxu0 %v6053
        %6327 = vmatpush2.bf16.msra.mxu0 %v6052
        %6328 = vmatprep.subr.bf16.mxu0 %v6043
        %6329 = vmatpush2.bf16.msra.mxu0 %v6042
        %6330 = vmatprep.mubr.bf16.mxu0 %v6267
        %6331 = vmatmul.mubr.bf16.gmra.mxu0 %v6266
        %v6332 = vpop.f32.mrf.mxu0
        %v6333 = vadd.f32 %v6141, %v6332
        %v6334 = vpop.f32.mrf.mxu0
        %v6335 = vadd.f32 %v6141, %v6334
        %v6336 = vpop.f32.mrf.mxu0
        %v6337 = vadd.f32 %v6146, %v6336
        %v6338 = vpop.f32.mrf.mxu0
        %v6339 = vadd.f32 %v6146, %v6338
        %6340 = vmatprep.mubr.bf16.mxu0 %v6269
        %6341 = vmatmul.mubr.bf16.gmra.mxu0 %v6268
        %v6342 = vpop.f32.mrf.mxu0
        %v6343 = vadd.f32 %v6151, %v6342
        %v6344 = vpop.f32.mrf.mxu0
        %v6345 = vadd.f32 %v6151, %v6344
        %v6346 = vpop.f32.mrf.mxu0
        %v6347 = vadd.f32 %v6156, %v6346
        %v6348 = vpop.f32.mrf.mxu0
        %v6349 = vadd.f32 %v6156, %v6348
        %6350 = vmatprep.mubr.bf16.mxu0 %v6271
        %6351 = vmatmul.mubr.bf16.gmra.mxu0 %v6270
        %v6352 = vpop.f32.mrf.mxu0
        %v6353 = vadd.f32 %v6161, %v6352
        %v6354 = vpop.f32.mrf.mxu0
        %v6355 = vadd.f32 %v6161, %v6354
        %v6356 = vpop.f32.mrf.mxu0
        %v6357 = vadd.f32 %v6166, %v6356
        %v6358 = vpop.f32.mrf.mxu0
        %v6359 = vadd.f32 %v6166, %v6358
        %6360 = vmatprep.mubr.bf16.mxu0 %v6273
        %6361 = vmatmul.mubr.bf16.gmra.mxu0 %v6272
        %v6362 = vpop.f32.mrf.mxu0
        %v6363 = vadd.f32 %v6171, %v6362
        %v6364 = vpop.f32.mrf.mxu0
        %v6365 = vadd.f32 %v6171, %v6364
        %v6366 = vpop.f32.mrf.mxu0
        %v6367 = vadd.f32 %v6176, %v6366
        %v6368 = vpop.f32.mrf.mxu0
        %v6369 = vadd.f32 %v6176, %v6368
        %6370 = vmatprep.mubr.bf16.mxu0 %v6275
        %6371 = vmatmul.mubr.bf16.gmra.mxu0 %v6274
        %v6372 = vpop.f32.mrf.mxu0
        %v6373 = vadd.f32 %v6181, %v6372
        %v6374 = vpop.f32.mrf.mxu0
        %v6375 = vadd.f32 %v6181, %v6374
        %v6376 = vpop.f32.mrf.mxu0
        %v6377 = vadd.f32 %v6186, %v6376
        %v6378 = vpop.f32.mrf.mxu0
        %v6379 = vadd.f32 %v6186, %v6378
        %6380 = vmatprep.mubr.bf16.mxu0 %v6277
        %6381 = vmatmul.mubr.bf16.gmra.mxu0 %v6276
        %v6382 = vpop.f32.mrf.mxu0
        %v6383 = vadd.f32 %v6191, %v6382
        %v6384 = vpop.f32.mrf.mxu0
        %v6385 = vadd.f32 %v6191, %v6384
        %v6386 = vpop.f32.mrf.mxu0
        %v6387 = vadd.f32 %v6196, %v6386
        %v6388 = vpop.f32.mrf.mxu0
        %v6389 = vadd.f32 %v6196, %v6388
        %6390 = vmatprep.mubr.bf16.mxu0 %v6279
        %6391 = vmatmul.mubr.bf16.gmra.mxu0 %v6278
        %v6392 = vpop.f32.mrf.mxu0
        %v6393 = vadd.f32 %v6201, %v6392
        %v6394 = vpop.f32.mrf.mxu0
        %v6395 = vadd.f32 %v6201, %v6394
        %v6396 = vpop.f32.mrf.mxu0
        %v6397 = vadd.f32 %v6206, %v6396
        %v6398 = vpop.f32.mrf.mxu0
        %v6399 = vadd.f32 %v6206, %v6398
        %6400 = vmatprep.mubr.bf16.mxu0 %v6281
        %6401 = vmatmul.mubr.bf16.gmra.mxu0 %v6280
        %v6402 = vpop.f32.mrf.mxu0
        %v6403 = vadd.f32 %v6211, %v6402
        %v6404 = vpop.f32.mrf.mxu0
        %v6405 = vadd.f32 %v6211, %v6404
        %v6406 = vpop.f32.mrf.mxu0
        %v6407 = vadd.f32 %v6216, %v6406
        %v6408 = vpop.f32.mrf.mxu0
        %v6409 = vadd.f32 %v6216, %v6408
        %6410 = vdwg.mxu0
        %6411 = vmatprep.subr.bf16.mxu0 %v6035
        %6412 = vmatpush1.bf16.msra.mxu0 %v6034
        %6413 = vmatprep.subr.bf16.mxu0 %v6025
        %6414 = vmatpush1.bf16.msra.mxu0 %v6024
        %6415 = vmatprep.subr.bf16.mxu0 %v6015
        %6416 = vmatpush1.bf16.msra.mxu0 %v6014
        %6417 = vmatprep.subr.bf16.mxu0 %v6005
        %6418 = vmatpush1.bf16.msra.mxu0 %v6004
        %6419 = vmatprep.subr.bf16.mxu0 %v5995
        %6420 = vmatpush1.bf16.msra.mxu0 %v5994
        %6421 = vmatprep.subr.bf16.mxu0 %v5985
        %6422 = vmatpush1.bf16.msra.mxu0 %v5984
        %6423 = vmatprep.subr.bf16.mxu0 %v5975
        %6424 = vmatpush1.bf16.msra.mxu0 %v5974
        %6425 = vmatprep.subr.bf16.mxu0 %v5965
        %6426 = vmatpush1.bf16.msra.mxu0 %v5964
        %6427 = vmatprep.subr.bf16.mxu0 %v6115
        %6428 = vmatpush2.bf16.msra.mxu0 %v6114
        %6429 = vmatprep.subr.bf16.mxu0 %v6105
        %6430 = vmatpush2.bf16.msra.mxu0 %v6104
        %6431 = vmatprep.subr.bf16.mxu0 %v6095
        %6432 = vmatpush2.bf16.msra.mxu0 %v6094
        %6433 = vmatprep.subr.bf16.mxu0 %v6085
        %6434 = vmatpush2.bf16.msra.mxu0 %v6084
        %6435 = vmatprep.subr.bf16.mxu0 %v6075
        %6436 = vmatpush2.bf16.msra.mxu0 %v6074
        %6437 = vmatprep.subr.bf16.mxu0 %v6065
        %6438 = vmatpush2.bf16.msra.mxu0 %v6064
        %6439 = vmatprep.subr.bf16.mxu0 %v6055
        %6440 = vmatpush2.bf16.msra.mxu0 %v6054
        %6441 = vmatprep.subr.bf16.mxu0 %v6045
        %6442 = vmatpush2.bf16.msra.mxu0 %v6044
        %6443 = vmatprep.mubr.bf16.mxu0 %v6267
        %6444 = vmatmul.mubr.bf16.gmra.mxu0 %v6266
        %v6445 = vpop.f32.mrf.mxu0
        %v6446 = vadd.f32 %v6141, %v6445
        %v6447 = vpop.f32.mrf.mxu0
        %v6448 = vadd.f32 %v6141, %v6447
        %v6449 = vpop.f32.mrf.mxu0
        %v6450 = vadd.f32 %v6146, %v6449
        %v6451 = vpop.f32.mrf.mxu0
        %v6452 = vadd.f32 %v6146, %v6451
        %6453 = vmatprep.mubr.bf16.mxu0 %v6269
        %6454 = vmatmul.mubr.bf16.gmra.mxu0 %v6268
        %v6455 = vpop.f32.mrf.mxu0
        %v6456 = vadd.f32 %v6151, %v6455
        %v6457 = vpop.f32.mrf.mxu0
        %v6458 = vadd.f32 %v6151, %v6457
        %v6459 = vpop.f32.mrf.mxu0
        %v6460 = vadd.f32 %v6156, %v6459
        %v6461 = vpop.f32.mrf.mxu0
        %v6462 = vadd.f32 %v6156, %v6461
        %6463 = vmatprep.mubr.bf16.mxu0 %v6271
        %6464 = vmatmul.mubr.bf16.gmra.mxu0 %v6270
        %v6465 = vpop.f32.mrf.mxu0
        %v6466 = vadd.f32 %v6161, %v6465
        %v6467 = vpop.f32.mrf.mxu0
        %v6468 = vadd.f32 %v6161, %v6467
        %v6469 = vpop.f32.mrf.mxu0
        %v6470 = vadd.f32 %v6166, %v6469
        %v6471 = vpop.f32.mrf.mxu0
        %v6472 = vadd.f32 %v6166, %v6471
        %6473 = vmatprep.mubr.bf16.mxu0 %v6273
        %6474 = vmatmul.mubr.bf16.gmra.mxu0 %v6272
        %v6475 = vpop.f32.mrf.mxu0
        %v6476 = vadd.f32 %v6171, %v6475
        %v6477 = vpop.f32.mrf.mxu0
        %v6478 = vadd.f32 %v6171, %v6477
        %v6479 = vpop.f32.mrf.mxu0
        %v6480 = vadd.f32 %v6176, %v6479
        %v6481 = vpop.f32.mrf.mxu0
        %v6482 = vadd.f32 %v6176, %v6481
        %6483 = vmatprep.mubr.bf16.mxu0 %v6275
        %6484 = vmatmul.mubr.bf16.gmra.mxu0 %v6274
        %v6485 = vpop.f32.mrf.mxu0
        %v6486 = vadd.f32 %v6181, %v6485
        %v6487 = vpop.f32.mrf.mxu0
        %v6488 = vadd.f32 %v6181, %v6487
        %v6489 = vpop.f32.mrf.mxu0
        %v6490 = vadd.f32 %v6186, %v6489
        %v6491 = vpop.f32.mrf.mxu0
        %v6492 = vadd.f32 %v6186, %v6491
        %6493 = vmatprep.mubr.bf16.mxu0 %v6277
        %6494 = vmatmul.mubr.bf16.gmra.mxu0 %v6276
        %v6495 = vpop.f32.mrf.mxu0
        %v6496 = vadd.f32 %v6191, %v6495
        %v6497 = vpop.f32.mrf.mxu0
        %v6498 = vadd.f32 %v6191, %v6497
        %v6499 = vpop.f32.mrf.mxu0
        %v6500 = vadd.f32 %v6196, %v6499
        %v6501 = vpop.f32.mrf.mxu0
        %v6502 = vadd.f32 %v6196, %v6501
        %6503 = vmatprep.mubr.bf16.mxu0 %v6279
        %6504 = vmatmul.mubr.bf16.gmra.mxu0 %v6278
        %v6505 = vpop.f32.mrf.mxu0
        %v6506 = vadd.f32 %v6201, %v6505
        %v6507 = vpop.f32.mrf.mxu0
        %v6508 = vadd.f32 %v6201, %v6507
        %v6509 = vpop.f32.mrf.mxu0
        %v6510 = vadd.f32 %v6206, %v6509
        %v6511 = vpop.f32.mrf.mxu0
        %v6512 = vadd.f32 %v6206, %v6511
        %6513 = vmatprep.mubr.bf16.mxu0 %v6281
        %6514 = vmatmul.mubr.bf16.gmra.mxu0 %v6280
        %v6515 = vpop.f32.mrf.mxu0
        %v6516 = vadd.f32 %v6211, %v6515
        %v6517 = vpop.f32.mrf.mxu0
        %v6518 = vadd.f32 %v6211, %v6517
        %v6519 = vpop.f32.mrf.mxu0
        %v6520 = vadd.f32 %v6216, %v6519
        %v6521 = vpop.f32.mrf.mxu0
        %v6522 = vadd.f32 %v6216, %v6521
        %6523 = vdwg.mxu0
        %6524 = vmatprep.subr.bf16.mxu0 %v6037
        %6525 = vmatpush1.bf16.msra.mxu0 %v6036
        %6526 = vmatprep.subr.bf16.mxu0 %v6027
        %6527 = vmatpush1.bf16.msra.mxu0 %v6026
        %6528 = vmatprep.subr.bf16.mxu0 %v6017
        %6529 = vmatpush1.bf16.msra.mxu0 %v6016
        %6530 = vmatprep.subr.bf16.mxu0 %v6007
        %6531 = vmatpush1.bf16.msra.mxu0 %v6006
        %6532 = vmatprep.subr.bf16.mxu0 %v5997
        %6533 = vmatpush1.bf16.msra.mxu0 %v5996
        %6534 = vmatprep.subr.bf16.mxu0 %v5987
        %6535 = vmatpush1.bf16.msra.mxu0 %v5986
        %6536 = vmatprep.subr.bf16.mxu0 %v5977
        %6537 = vmatpush1.bf16.msra.mxu0 %v5976
        %6538 = vmatprep.subr.bf16.mxu0 %v5967
        %6539 = vmatpush1.bf16.msra.mxu0 %v5966
        %6540 = vmatprep.subr.bf16.mxu0 %v6117
        %6541 = vmatpush2.bf16.msra.mxu0 %v6116
        %6542 = vmatprep.subr.bf16.mxu0 %v6107
        %6543 = vmatpush2.bf16.msra.mxu0 %v6106
        %6544 = vmatprep.subr.bf16.mxu0 %v6097
        %6545 = vmatpush2.bf16.msra.mxu0 %v6096
        %6546 = vmatprep.subr.bf16.mxu0 %v6087
        %6547 = vmatpush2.bf16.msra.mxu0 %v6086
        %6548 = vmatprep.subr.bf16.mxu0 %v6077
        %6549 = vmatpush2.bf16.msra.mxu0 %v6076
        %6550 = vmatprep.subr.bf16.mxu0 %v6067
        %6551 = vmatpush2.bf16.msra.mxu0 %v6066
        %6552 = vmatprep.subr.bf16.mxu0 %v6057
        %6553 = vmatpush2.bf16.msra.mxu0 %v6056
        %6554 = vmatprep.subr.bf16.mxu0 %v6047
        %6555 = vmatpush2.bf16.msra.mxu0 %v6046
        %6556 = vmatprep.mubr.bf16.mxu0 %v6267
        %6557 = vmatmul.mubr.bf16.gmra.mxu0 %v6266
        %v6558 = vpop.f32.mrf.mxu0
        %v6559 = vadd.f32 %v6141, %v6558
        %v6560 = vpop.f32.mrf.mxu0
        %v6561 = vadd.f32 %v6141, %v6560
        %v6562 = vpop.f32.mrf.mxu0
        %v6563 = vadd.f32 %v6146, %v6562
        %v6564 = vpop.f32.mrf.mxu0
        %v6565 = vadd.f32 %v6146, %v6564
        %6566 = vmatprep.mubr.bf16.mxu0 %v6269
        %6567 = vmatmul.mubr.bf16.gmra.mxu0 %v6268
        %v6568 = vpop.f32.mrf.mxu0
        %v6569 = vadd.f32 %v6151, %v6568
        %v6570 = vpop.f32.mrf.mxu0
        %v6571 = vadd.f32 %v6151, %v6570
        %v6572 = vpop.f32.mrf.mxu0
        %v6573 = vadd.f32 %v6156, %v6572
        %v6574 = vpop.f32.mrf.mxu0
        %v6575 = vadd.f32 %v6156, %v6574
        %6576 = vmatprep.mubr.bf16.mxu0 %v6271
        %6577 = vmatmul.mubr.bf16.gmra.mxu0 %v6270
        %v6578 = vpop.f32.mrf.mxu0
        %v6579 = vadd.f32 %v6161, %v6578
        %v6580 = vpop.f32.mrf.mxu0
        %v6581 = vadd.f32 %v6161, %v6580
        %v6582 = vpop.f32.mrf.mxu0
        %v6583 = vadd.f32 %v6166, %v6582
        %v6584 = vpop.f32.mrf.mxu0
        %v6585 = vadd.f32 %v6166, %v6584
        %6586 = vmatprep.mubr.bf16.mxu0 %v6273
        %6587 = vmatmul.mubr.bf16.gmra.mxu0 %v6272
        %v6588 = vpop.f32.mrf.mxu0
        %v6589 = vadd.f32 %v6171, %v6588
        %v6590 = vpop.f32.mrf.mxu0
        %v6591 = vadd.f32 %v6171, %v6590
        %v6592 = vpop.f32.mrf.mxu0
        %v6593 = vadd.f32 %v6176, %v6592
        %v6594 = vpop.f32.mrf.mxu0
        %v6595 = vadd.f32 %v6176, %v6594
        %6596 = vmatprep.mubr.bf16.mxu0 %v6275
        %6597 = vmatmul.mubr.bf16.gmra.mxu0 %v6274
        %v6598 = vpop.f32.mrf.mxu0
        %v6599 = vadd.f32 %v6181, %v6598
        %v6600 = vpop.f32.mrf.mxu0
        %v6601 = vadd.f32 %v6181, %v6600
        %v6602 = vpop.f32.mrf.mxu0
        %v6603 = vadd.f32 %v6186, %v6602
        %v6604 = vpop.f32.mrf.mxu0
        %v6605 = vadd.f32 %v6186, %v6604
        %6606 = vmatprep.mubr.bf16.mxu0 %v6277
        %6607 = vmatmul.mubr.bf16.gmra.mxu0 %v6276
        %v6608 = vpop.f32.mrf.mxu0
        %v6609 = vadd.f32 %v6191, %v6608
        %v6610 = vpop.f32.mrf.mxu0
        %v6611 = vadd.f32 %v6191, %v6610
        %v6612 = vpop.f32.mrf.mxu0
        %v6613 = vadd.f32 %v6196, %v6612
        %v6614 = vpop.f32.mrf.mxu0
        %v6615 = vadd.f32 %v6196, %v6614
        %6616 = vmatprep.mubr.bf16.mxu0 %v6279
        %6617 = vmatmul.mubr.bf16.gmra.mxu0 %v6278
        %v6618 = vpop.f32.mrf.mxu0
        %v6619 = vadd.f32 %v6201, %v6618
        %v6620 = vpop.f32.mrf.mxu0
        %v6621 = vadd.f32 %v6201, %v6620
        %v6622 = vpop.f32.mrf.mxu0
        %v6623 = vadd.f32 %v6206, %v6622
        %v6624 = vpop.f32.mrf.mxu0
        %v6625 = vadd.f32 %v6206, %v6624
        %6626 = vmatprep.mubr.bf16.mxu0 %v6281
        %6627 = vmatmul.mubr.bf16.gmra.mxu0 %v6280
        %v6628 = vpop.f32.mrf.mxu0
        %v6629 = vadd.f32 %v6211, %v6628
        %v6630 = vpop.f32.mrf.mxu0
        %v6631 = vadd.f32 %v6211, %v6630
        %v6632 = vpop.f32.mrf.mxu0
        %v6633 = vadd.f32 %v6216, %v6632
        %v6634 = vpop.f32.mrf.mxu0
        %v6635 = vadd.f32 %v6216, %v6634
        %6636 = vdwg.mxu0
        %6637 = vmatprep.subr.bf16.mxu0 %v6039
        %6638 = vmatpush1.bf16.msra.mxu0 %v6038
        %6639 = vmatprep.subr.bf16.mxu0 %v6029
        %6640 = vmatpush1.bf16.msra.mxu0 %v6028
        %6641 = vmatprep.subr.bf16.mxu0 %v6019
        %6642 = vmatpush1.bf16.msra.mxu0 %v6018
        %6643 = vmatprep.subr.bf16.mxu0 %v6009
        %6644 = vmatpush1.bf16.msra.mxu0 %v6008
        %6645 = vmatprep.subr.bf16.mxu0 %v5999
        %6646 = vmatpush1.bf16.msra.mxu0 %v5998
        %6647 = vmatprep.subr.bf16.mxu0 %v5989
        %6648 = vmatpush1.bf16.msra.mxu0 %v5988
        %6649 = vmatprep.subr.bf16.mxu0 %v5979
        %6650 = vmatpush1.bf16.msra.mxu0 %v5978
        %6651 = vmatprep.subr.bf16.mxu0 %v5969
        %6652 = vmatpush1.bf16.msra.mxu0 %v5968
        %6653 = vmatprep.subr.bf16.mxu0 %v6119
        %6654 = vmatpush2.bf16.msra.mxu0 %v6118
        %6655 = vmatprep.subr.bf16.mxu0 %v6109
        %6656 = vmatpush2.bf16.msra.mxu0 %v6108
        %6657 = vmatprep.subr.bf16.mxu0 %v6099
        %6658 = vmatpush2.bf16.msra.mxu0 %v6098
        %6659 = vmatprep.subr.bf16.mxu0 %v6089
        %6660 = vmatpush2.bf16.msra.mxu0 %v6088
        %6661 = vmatprep.subr.bf16.mxu0 %v6079
        %6662 = vmatpush2.bf16.msra.mxu0 %v6078
        %6663 = vmatprep.subr.bf16.mxu0 %v6069
        %6664 = vmatpush2.bf16.msra.mxu0 %v6068
        %6665 = vmatprep.subr.bf16.mxu0 %v6059
        %6666 = vmatpush2.bf16.msra.mxu0 %v6058
        %6667 = vmatprep.subr.bf16.mxu0 %v6049
        %6668 = vmatpush2.bf16.msra.mxu0 %v6048
        %6669 = vmatprep.mubr.bf16.mxu0 %v6267
        %6670 = vmatmul.mubr.bf16.gmra.mxu0 %v6266
        %v6671 = vpop.f32.mrf.mxu0
        %v6672 = vadd.f32 %v6141, %v6671
        %v6673 = vpop.f32.mrf.mxu0
        %v6674 = vadd.f32 %v6141, %v6673
        %v6675 = vpop.f32.mrf.mxu0
        %v6676 = vadd.f32 %v6146, %v6675
        %v6677 = vpop.f32.mrf.mxu0
        %v6678 = vadd.f32 %v6146, %v6677
        %6679 = vmatprep.mubr.bf16.mxu0 %v6269
        %6680 = vmatmul.mubr.bf16.gmra.mxu0 %v6268
        %v6681 = vpop.f32.mrf.mxu0
        %v6682 = vadd.f32 %v6151, %v6681
        %v6683 = vpop.f32.mrf.mxu0
        %v6684 = vadd.f32 %v6151, %v6683
        %v6685 = vpop.f32.mrf.mxu0
        %v6686 = vadd.f32 %v6156, %v6685
        %v6687 = vpop.f32.mrf.mxu0
        %v6688 = vadd.f32 %v6156, %v6687
        %6689 = vmatprep.mubr.bf16.mxu0 %v6271
        %6690 = vmatmul.mubr.bf16.gmra.mxu0 %v6270
        %v6691 = vpop.f32.mrf.mxu0
        %v6692 = vadd.f32 %v6161, %v6691
        %v6693 = vpop.f32.mrf.mxu0
        %v6694 = vadd.f32 %v6161, %v6693
        %v6695 = vpop.f32.mrf.mxu0
        %v6696 = vadd.f32 %v6166, %v6695
        %v6697 = vpop.f32.mrf.mxu0
        %v6698 = vadd.f32 %v6166, %v6697
        %6699 = vmatprep.mubr.bf16.mxu0 %v6273
        %6700 = vmatmul.mubr.bf16.gmra.mxu0 %v6272
        %v6701 = vpop.f32.mrf.mxu0
        %v6702 = vadd.f32 %v6171, %v6701
        %v6703 = vpop.f32.mrf.mxu0
        %v6704 = vadd.f32 %v6171, %v6703
        %v6705 = vpop.f32.mrf.mxu0
        %v6706 = vadd.f32 %v6176, %v6705
        %v6707 = vpop.f32.mrf.mxu0
        %v6708 = vadd.f32 %v6176, %v6707
        %6709 = vmatprep.mubr.bf16.mxu0 %v6275
        %6710 = vmatmul.mubr.bf16.gmra.mxu0 %v6274
        %v6711 = vpop.f32.mrf.mxu0
        %v6712 = vadd.f32 %v6181, %v6711
        %v6713 = vpop.f32.mrf.mxu0
        %v6714 = vadd.f32 %v6181, %v6713
        %v6715 = vpop.f32.mrf.mxu0
        %v6716 = vadd.f32 %v6186, %v6715
        %v6717 = vpop.f32.mrf.mxu0
        %v6718 = vadd.f32 %v6186, %v6717
        %6719 = vmatprep.mubr.bf16.mxu0 %v6277
        %6720 = vmatmul.mubr.bf16.gmra.mxu0 %v6276
        %v6721 = vpop.f32.mrf.mxu0
        %v6722 = vadd.f32 %v6191, %v6721
        %v6723 = vpop.f32.mrf.mxu0
        %v6724 = vadd.f32 %v6191, %v6723
        %v6725 = vpop.f32.mrf.mxu0
        %v6726 = vadd.f32 %v6196, %v6725
        %v6727 = vpop.f32.mrf.mxu0
        %v6728 = vadd.f32 %v6196, %v6727
        %6729 = vmatprep.mubr.bf16.mxu0 %v6279
        %6730 = vmatmul.mubr.bf16.gmra.mxu0 %v6278
        %v6731 = vpop.f32.mrf.mxu0
        %v6732 = vadd.f32 %v6201, %v6731
        %v6733 = vpop.f32.mrf.mxu0
        %v6734 = vadd.f32 %v6201, %v6733
        %v6735 = vpop.f32.mrf.mxu0
        %v6736 = vadd.f32 %v6206, %v6735
        %v6737 = vpop.f32.mrf.mxu0
        %v6738 = vadd.f32 %v6206, %v6737
        %6739 = vmatprep.mubr.bf16.mxu0 %v6281
        %6740 = vmatmul.mubr.bf16.gmra.mxu0 %v6280
        %v6741 = vpop.f32.mrf.mxu0
        %v6742 = vadd.f32 %v6211, %v6741
        %v6743 = vpop.f32.mrf.mxu0
        %v6744 = vadd.f32 %v6211, %v6743
        %v6745 = vpop.f32.mrf.mxu0
        %v6746 = vadd.f32 %v6216, %v6745
        %v6747 = vpop.f32.mrf.mxu0
        %v6748 = vadd.f32 %v6216, %v6747
        %6749 = vdwg.mxu0
        %6750 = vmatprep.subr.bf16.mxu0 %v6041
        %6751 = vmatpush1.bf16.msra.mxu0 %v6040
        %6752 = vmatprep.subr.bf16.mxu0 %v6031
        %6753 = vmatpush1.bf16.msra.mxu0 %v6030
        %6754 = vmatprep.subr.bf16.mxu0 %v6021
        %6755 = vmatpush1.bf16.msra.mxu0 %v6020
        %6756 = vmatprep.subr.bf16.mxu0 %v6011
        %6757 = vmatpush1.bf16.msra.mxu0 %v6010
        %6758 = vmatprep.subr.bf16.mxu0 %v6001
        %6759 = vmatpush1.bf16.msra.mxu0 %v6000
        %6760 = vmatprep.subr.bf16.mxu0 %v5991
        %6761 = vmatpush1.bf16.msra.mxu0 %v5990
        %6762 = vmatprep.subr.bf16.mxu0 %v5981
        %6763 = vmatpush1.bf16.msra.mxu0 %v5980
        %6764 = vmatprep.subr.bf16.mxu0 %v5971
        %6765 = vmatpush1.bf16.msra.mxu0 %v5970
        %6766 = vmatprep.subr.bf16.mxu0 %v6121
        %6767 = vmatpush2.bf16.msra.mxu0 %v6120
        %6768 = vmatprep.subr.bf16.mxu0 %v6111
        %6769 = vmatpush2.bf16.msra.mxu0 %v6110
        %6770 = vmatprep.subr.bf16.mxu0 %v6101
        %6771 = vmatpush2.bf16.msra.mxu0 %v6100
        %6772 = vmatprep.subr.bf16.mxu0 %v6091
        %6773 = vmatpush2.bf16.msra.mxu0 %v6090
        %6774 = vmatprep.subr.bf16.mxu0 %v6081
        %6775 = vmatpush2.bf16.msra.mxu0 %v6080
        %6776 = vmatprep.subr.bf16.mxu0 %v6071
        %6777 = vmatpush2.bf16.msra.mxu0 %v6070
        %6778 = vmatprep.subr.bf16.mxu0 %v6061
        %6779 = vmatpush2.bf16.msra.mxu0 %v6060
        %6780 = vmatprep.subr.bf16.mxu0 %v6051
        %6781 = vmatpush2.bf16.msra.mxu0 %v6050
        %6782 = vmatprep.mubr.bf16.mxu0 %v6267
        %6783 = vmatmul.mubr.bf16.gmra.mxu0 %v6266
        %v6784 = vpop.f32.mrf.mxu0
        %v6785 = vadd.f32 %v6141, %v6784
        %v6786 = vpop.f32.mrf.mxu0
        %v6787 = vadd.f32 %v6141, %v6786
        %v6788 = vpop.f32.mrf.mxu0
        %v6789 = vadd.f32 %v6146, %v6788
        %v6790 = vpop.f32.mrf.mxu0
        %v6791 = vadd.f32 %v6146, %v6790
        %6792 = vmatprep.mubr.bf16.mxu0 %v6269
        %6793 = vmatmul.mubr.bf16.gmra.mxu0 %v6268
        %v6794 = vpop.f32.mrf.mxu0
        %v6795 = vadd.f32 %v6151, %v6794
        %v6796 = vpop.f32.mrf.mxu0
        %v6797 = vadd.f32 %v6151, %v6796
        %v6798 = vpop.f32.mrf.mxu0
        %v6799 = vadd.f32 %v6156, %v6798
        %v6800 = vpop.f32.mrf.mxu0
        %v6801 = vadd.f32 %v6156, %v6800
        %6802 = vmatprep.mubr.bf16.mxu0 %v6271
        %6803 = vmatmul.mubr.bf16.gmra.mxu0 %v6270
        %v6804 = vpop.f32.mrf.mxu0
        %v6805 = vadd.f32 %v6161, %v6804
        %v6806 = vpop.f32.mrf.mxu0
        %v6807 = vadd.f32 %v6161, %v6806
        %v6808 = vpop.f32.mrf.mxu0
        %v6809 = vadd.f32 %v6166, %v6808
        %v6810 = vpop.f32.mrf.mxu0
        %v6811 = vadd.f32 %v6166, %v6810
        %6812 = vmatprep.mubr.bf16.mxu0 %v6273
        %6813 = vmatmul.mubr.bf16.gmra.mxu0 %v6272
        %v6814 = vpop.f32.mrf.mxu0
        %v6815 = vadd.f32 %v6171, %v6814
        %v6816 = vpop.f32.mrf.mxu0
        %v6817 = vadd.f32 %v6171, %v6816
        %v6818 = vpop.f32.mrf.mxu0
        %v6819 = vadd.f32 %v6176, %v6818
        %v6820 = vpop.f32.mrf.mxu0
        %v6821 = vadd.f32 %v6176, %v6820
        %6822 = vmatprep.mubr.bf16.mxu0 %v6275
        %6823 = vmatmul.mubr.bf16.gmra.mxu0 %v6274
        %v6824 = vpop.f32.mrf.mxu0
        %v6825 = vadd.f32 %v6181, %v6824
        %v6826 = vpop.f32.mrf.mxu0
        %v6827 = vadd.f32 %v6181, %v6826
        %v6828 = vpop.f32.mrf.mxu0
        %v6829 = vadd.f32 %v6186, %v6828
        %v6830 = vpop.f32.mrf.mxu0
        %v6831 = vadd.f32 %v6186, %v6830
        %6832 = vmatprep.mubr.bf16.mxu0 %v6277
        %6833 = vmatmul.mubr.bf16.gmra.mxu0 %v6276
        %v6834 = vpop.f32.mrf.mxu0
        %v6835 = vadd.f32 %v6191, %v6834
        %v6836 = vpop.f32.mrf.mxu0
        %v6837 = vadd.f32 %v6191, %v6836
        %v6838 = vpop.f32.mrf.mxu0
        %v6839 = vadd.f32 %v6196, %v6838
        %v6840 = vpop.f32.mrf.mxu0
        %v6841 = vadd.f32 %v6196, %v6840
        %6842 = vmatprep.mubr.bf16.mxu0 %v6279
        %6843 = vmatmul.mubr.bf16.gmra.mxu0 %v6278
        %v6844 = vpop.f32.mrf.mxu0
        %v6845 = vadd.f32 %v6201, %v6844
        %v6846 = vpop.f32.mrf.mxu0
        %v6847 = vadd.f32 %v6201, %v6846
        %v6848 = vpop.f32.mrf.mxu0
        %v6849 = vadd.f32 %v6206, %v6848
        %v6850 = vpop.f32.mrf.mxu0
        %v6851 = vadd.f32 %v6206, %v6850
        %6852 = vmatprep.mubr.bf16.mxu0 %v6281
        %6853 = vmatmul.mubr.bf16.gmra.mxu0 %v6280
        %v6854 = vpop.f32.mrf.mxu0
        %v6855 = vadd.f32 %v6211, %v6854
        %v6856 = vpop.f32.mrf.mxu0
        %v6857 = vadd.f32 %v6211, %v6856
        %v6858 = vpop.f32.mrf.mxu0
        %v6859 = vadd.f32 %v6216, %v6858
        %v6860 = vpop.f32.mrf.mxu0
        %v6861 = vadd.f32 %v6216, %v6860
        %6862 = vdwg.mxu0
        %v6863 = vmax.f32 %v6333, 0.0
        %v6864 = vmax.f32 %v6335, 0.0
        %v6865 = vmax.f32 %v6446, 0.0
        %v6866 = vmax.f32 %v6448, 0.0
        %v6867 = vmax.f32 %v6559, 0.0
        %v6868 = vmax.f32 %v6561, 0.0
        %v6869 = vmax.f32 %v6672, 0.0
        %v6870 = vmax.f32 %v6674, 0.0
        %v6871 = vmax.f32 %v6785, 0.0
        %v6872 = vmax.f32 %v6787, 0.0
        %v6873 = vmax.f32 %v6337, 0.0
        %v6874 = vmax.f32 %v6339, 0.0
        %v6875 = vmax.f32 %v6450, 0.0
        %v6876 = vmax.f32 %v6452, 0.0
        %v6877 = vmax.f32 %v6563, 0.0
        %v6878 = vmax.f32 %v6565, 0.0
        %v6879 = vmax.f32 %v6676, 0.0
        %v6880 = vmax.f32 %v6678, 0.0
        %v6881 = vmax.f32 %v6789, 0.0
        %v6882 = vmax.f32 %v6791, 0.0
        %v6883 = vmax.f32 %v6343, 0.0
        %v6884 = vmax.f32 %v6345, 0.0
        %v6885 = vmax.f32 %v6456, 0.0
        %v6886 = vmax.f32 %v6458, 0.0
        %v6887 = vmax.f32 %v6569, 0.0
        %v6888 = vmax.f32 %v6571, 0.0
        %v6889 = vmax.f32 %v6682, 0.0
        %v6890 = vmax.f32 %v6684, 0.0
        %v6891 = vmax.f32 %v6795, 0.0
        %v6892 = vmax.f32 %v6797, 0.0
        %v6893 = vmax.f32 %v6347, 0.0
        %v6894 = vmax.f32 %v6349, 0.0
        %v6895 = vmax.f32 %v6460, 0.0
        %v6896 = vmax.f32 %v6462, 0.0
        %v6897 = vmax.f32 %v6573, 0.0
        %v6898 = vmax.f32 %v6575, 0.0
        %v6899 = vmax.f32 %v6686, 0.0
        %v6900 = vmax.f32 %v6688, 0.0
        %v6901 = vmax.f32 %v6799, 0.0
        %v6902 = vmax.f32 %v6801, 0.0
        %v6903 = vmax.f32 %v6353, 0.0
        %v6904 = vmax.f32 %v6355, 0.0
        %v6905 = vmax.f32 %v6466, 0.0
        %v6906 = vmax.f32 %v6468, 0.0
        %v6907 = vmax.f32 %v6579, 0.0
        %v6908 = vmax.f32 %v6581, 0.0
        %v6909 = vmax.f32 %v6692, 0.0
        %v6910 = vmax.f32 %v6694, 0.0
        %v6911 = vmax.f32 %v6805, 0.0
        %v6912 = vmax.f32 %v6807, 0.0
        %v6913 = vmax.f32 %v6357, 0.0
        %v6914 = vmax.f32 %v6359, 0.0
        %v6915 = vmax.f32 %v6470, 0.0
        %v6916 = vmax.f32 %v6472, 0.0
        %v6917 = vmax.f32 %v6583, 0.0
        %v6918 = vmax.f32 %v6585, 0.0
        %v6919 = vmax.f32 %v6696, 0.0
        %v6920 = vmax.f32 %v6698, 0.0
        %v6921 = vmax.f32 %v6809, 0.0
        %v6922 = vmax.f32 %v6811, 0.0
        %v6923 = vmax.f32 %v6363, 0.0
        %v6924 = vmax.f32 %v6365, 0.0
        %v6925 = vmax.f32 %v6476, 0.0
        %v6926 = vmax.f32 %v6478, 0.0
        %v6927 = vmax.f32 %v6589, 0.0
        %v6928 = vmax.f32 %v6591, 0.0
        %v6929 = vmax.f32 %v6702, 0.0
        %v6930 = vmax.f32 %v6704, 0.0
        %v6931 = vmax.f32 %v6815, 0.0
        %v6932 = vmax.f32 %v6817, 0.0
        %v6933 = vmax.f32 %v6367, 0.0
        %v6934 = vmax.f32 %v6369, 0.0
        %v6935 = vmax.f32 %v6480, 0.0
        %v6936 = vmax.f32 %v6482, 0.0
        %v6937 = vmax.f32 %v6593, 0.0
        %v6938 = vmax.f32 %v6595, 0.0
        %v6939 = vmax.f32 %v6706, 0.0
        %v6940 = vmax.f32 %v6708, 0.0
        %v6941 = vmax.f32 %v6819, 0.0
        %v6942 = vmax.f32 %v6821, 0.0
        %v6943 = vmax.f32 %v6373, 0.0
        %v6944 = vmax.f32 %v6375, 0.0
        %v6945 = vmax.f32 %v6486, 0.0
        %v6946 = vmax.f32 %v6488, 0.0
        %v6947 = vmax.f32 %v6599, 0.0
        %v6948 = vmax.f32 %v6601, 0.0
        %v6949 = vmax.f32 %v6712, 0.0
        %v6950 = vmax.f32 %v6714, 0.0
        %v6951 = vmax.f32 %v6825, 0.0
        %v6952 = vmax.f32 %v6827, 0.0
        %v6953 = vmax.f32 %v6377, 0.0
        %v6954 = vmax.f32 %v6379, 0.0
        %v6955 = vmax.f32 %v6490, 0.0
        %v6956 = vmax.f32 %v6492, 0.0
        %v6957 = vmax.f32 %v6603, 0.0
        %v6958 = vmax.f32 %v6605, 0.0
        %v6959 = vmax.f32 %v6716, 0.0
        %v6960 = vmax.f32 %v6718, 0.0
        %v6961 = vmax.f32 %v6829, 0.0
        %v6962 = vmax.f32 %v6831, 0.0
        %v6963 = vmax.f32 %v6383, 0.0
        %v6964 = vmax.f32 %v6385, 0.0
        %v6965 = vmax.f32 %v6496, 0.0
        %v6966 = vmax.f32 %v6498, 0.0
        %v6967 = vmax.f32 %v6609, 0.0
        %v6968 = vmax.f32 %v6611, 0.0
        %v6969 = vmax.f32 %v6722, 0.0
        %v6970 = vmax.f32 %v6724, 0.0
        %v6971 = vmax.f32 %v6835, 0.0
        %v6972 = vmax.f32 %v6837, 0.0
        %v6973 = vmax.f32 %v6387, 0.0
        %v6974 = vmax.f32 %v6389, 0.0
        %v6975 = vmax.f32 %v6500, 0.0
        %v6976 = vmax.f32 %v6502, 0.0
        %v6977 = vmax.f32 %v6613, 0.0
        %v6978 = vmax.f32 %v6615, 0.0
        %v6979 = vmax.f32 %v6726, 0.0
        %v6980 = vmax.f32 %v6728, 0.0
        %v6981 = vmax.f32 %v6839, 0.0
        %v6982 = vmax.f32 %v6841, 0.0
        %v6983 = vmax.f32 %v6393, 0.0
        %v6984 = vmax.f32 %v6395, 0.0
        %v6985 = vmax.f32 %v6506, 0.0
        %v6986 = vmax.f32 %v6508, 0.0
        %v6987 = vmax.f32 %v6619, 0.0
        %v6988 = vmax.f32 %v6621, 0.0
        %v6989 = vmax.f32 %v6732, 0.0
        %v6990 = vmax.f32 %v6734, 0.0
        %v6991 = vmax.f32 %v6845, 0.0
        %v6992 = vmax.f32 %v6847, 0.0
        %v6993 = vmax.f32 %v6397, 0.0
        %v6994 = vmax.f32 %v6399, 0.0
        %v6995 = vmax.f32 %v6510, 0.0
        %v6996 = vmax.f32 %v6512, 0.0
        %v6997 = vmax.f32 %v6623, 0.0
        %v6998 = vmax.f32 %v6625, 0.0
        %v6999 = vmax.f32 %v6736, 0.0
        %v7000 = vmax.f32 %v6738, 0.0
        %v7001 = vmax.f32 %v6849, 0.0
        %v7002 = vmax.f32 %v6851, 0.0
        %v7003 = vmax.f32 %v6403, 0.0
        %v7004 = vmax.f32 %v6405, 0.0
        %v7005 = vmax.f32 %v6516, 0.0
        %v7006 = vmax.f32 %v6518, 0.0
        %v7007 = vmax.f32 %v6629, 0.0
        %v7008 = vmax.f32 %v6631, 0.0
        %v7009 = vmax.f32 %v6742, 0.0
        %v7010 = vmax.f32 %v6744, 0.0
        %v7011 = vmax.f32 %v6855, 0.0
        %v7012 = vmax.f32 %v6857, 0.0
        %v7013 = vmax.f32 %v6407, 0.0
        %v7014 = vmax.f32 %v6409, 0.0
        %v7015 = vmax.f32 %v6520, 0.0
        %v7016 = vmax.f32 %v6522, 0.0
        %v7017 = vmax.f32 %v6633, 0.0
        %v7018 = vmax.f32 %v6635, 0.0
        %v7019 = vmax.f32 %v6746, 0.0
        %v7020 = vmax.f32 %v6748, 0.0
        %v7021 = vmax.f32 %v6859, 0.0
        %v7022 = vmax.f32 %v6861, 0.0
        %v7023 = vld [vmem:[%s8] sm:$0xf]
        %v7024 = vld [vmem:[%s8 + $0x4] sm:$0xf]
        %v7025 = vld [vmem:[%s8 + $0x8] sm:$0xf]
        %v7026 = vld [vmem:[%s8 + $0xc] sm:$0xf]
        %v7027 = vld [vmem:[%s8 + $0x10] sm:$0xf]
        %v7028 = vld [vmem:[%s8 + $0x14] sm:$0xf]
        %v7029 = vld [vmem:[%s8 + $0x18] sm:$0xf]
        %v7030 = vld [vmem:[%s8 + $0x1c] sm:$0xf]
        %v7031 = vld [vmem:[%s8 + $0x20] sm:$0xf]
        %v7032 = vld [vmem:[%s8 + $0x24] sm:$0xf]
        %v7033 = vld [vmem:[%s8 + $0x28] sm:$0xf]
        %v7034 = vld [vmem:[%s8 + $0x2c] sm:$0xf]
        %v7035 = vld [vmem:[%s8 + $0x30] sm:$0xf]
        %v7036 = vld [vmem:[%s8 + $0x34] sm:$0xf]
        %v7037 = vld [vmem:[%s8 + $0x38] sm:$0xf]
        %v7038 = vld [vmem:[%s8 + $0x3c] sm:$0xf]
        %v7039 = vld [vmem:[%s8 + $0x40] sm:$0xf]
        %v7040 = vld [vmem:[%s8 + $0x44] sm:$0xf]
        %v7041 = vld [vmem:[%s8 + $0x48] sm:$0xf]
        %v7042 = vld [vmem:[%s8 + $0x4c] sm:$0xf]
        %v7043 = vld [vmem:[%s8 + $0x50] sm:$0xf]
        %v7044 = vld [vmem:[%s8 + $0x54] sm:$0xf]
        %v7045 = vld [vmem:[%s8 + $0x58] sm:$0xf]
        %v7046 = vld [vmem:[%s8 + $0x5c] sm:$0xf]
        %v7047 = vld [vmem:[%s8 + $0x60] sm:$0xf]
        %v7048 = vld [vmem:[%s8 + $0x64] sm:$0xf]
        %v7049 = vld [vmem:[%s8 + $0x68] sm:$0xf]
        %v7050 = vld [vmem:[%s8 + $0x6c] sm:$0xf]
        %v7051 = vld [vmem:[%s8 + $0x70] sm:$0xf]
        %v7052 = vld [vmem:[%s8 + $0x74] sm:$0xf]
        %v7053 = vld [vmem:[%s8 + $0x78] sm:$0xf]
        %v7054 = vld [vmem:[%s8 + $0x7c] sm:$0xf]
        %v7055 = vld [vmem:[%s9] sm:$0xf]
        %v7056 = vld [vmem:[%s9 + $0x4] sm:$0xf]
        %v7057 = vld [vmem:[%s9 + $0x8] sm:$0xf]
        %v7058 = vld [vmem:[%s9 + $0xc] sm:$0xf]
        %v7059 = vld [vmem:[%s9 + $0x10] sm:$0xf]
        %v7060 = vld [vmem:[%s9 + $0x14] sm:$0xf]
        %v7061 = vld [vmem:[%s9 + $0x18] sm:$0xf]
        %v7062 = vld [vmem:[%s9 + $0x1c] sm:$0xf]
        %v7063 = vld [vmem:[%s9 + $0x20] sm:$0xf]
        %v7064 = vld [vmem:[%s9 + $0x24] sm:$0xf]
        %v7065 = vld [vmem:[%s9 + $0x28] sm:$0xf]
        %v7066 = vld [vmem:[%s9 + $0x2c] sm:$0xf]
        %v7067 = vld [vmem:[%s9 + $0x30] sm:$0xf]
        %v7068 = vld [vmem:[%s9 + $0x34] sm:$0xf]
        %v7069 = vld [vmem:[%s9 + $0x38] sm:$0xf]
        %v7070 = vld [vmem:[%s9 + $0x3c] sm:$0xf]
        %v7071 = vld [vmem:[%s9 + $0x40] sm:$0xf]
        %v7072 = vld [vmem:[%s9 + $0x44] sm:$0xf]
        %v7073 = vld [vmem:[%s9 + $0x48] sm:$0xf]
        %v7074 = vld [vmem:[%s9 + $0x4c] sm:$0xf]
        %v7075 = vld [vmem:[%s9 + $0x50] sm:$0xf]
        %v7076 = vld [vmem:[%s9 + $0x54] sm:$0xf]
        %v7077 = vld [vmem:[%s9 + $0x58] sm:$0xf]
        %v7078 = vld [vmem:[%s9 + $0x5c] sm:$0xf]
        %v7079 = vld [vmem:[%s9 + $0x60] sm:$0xf]
        %v7080 = vld [vmem:[%s9 + $0x64] sm:$0xf]
        %v7081 = vld [vmem:[%s9 + $0x68] sm:$0xf]
        %v7082 = vld [vmem:[%s9 + $0x6c] sm:$0xf]
        %v7083 = vld [vmem:[%s9 + $0x70] sm:$0xf]
        %v7084 = vld [vmem:[%s9 + $0x74] sm:$0xf]
        %v7085 = vld [vmem:[%s9 + $0x78] sm:$0xf]
        %v7086 = vld [vmem:[%s9 + $0x7c] sm:$0xf]
        %v7087 = vpack.c.bf16 %v6873, %v6863
        %v7088 = vpack.c.bf16 %v6874, %v6864
        %v7089 = vpack.c.bf16 %v6875, %v6865
        %v7090 = vpack.c.bf16 %v6876, %v6866
        %v7091 = vpack.c.bf16 %v6877, %v6867
        %v7092 = vpack.c.bf16 %v6878, %v6868
        %v7093 = vpack.c.bf16 %v6879, %v6869
        %v7094 = vpack.c.bf16 %v6880, %v6870
        %v7095 = vpack.c.bf16 %v6881, %v6871
        %v7096 = vpack.c.bf16 %v6882, %v6872
        %v7097 = vpack.c.bf16 %v6893, %v6883
        %v7098 = vpack.c.bf16 %v6894, %v6884
        %v7099 = vpack.c.bf16 %v6895, %v6885
        %v7100 = vpack.c.bf16 %v6896, %v6886
        %v7101 = vpack.c.bf16 %v6897, %v6887
        %v7102 = vpack.c.bf16 %v6898, %v6888
        %v7103 = vpack.c.bf16 %v6899, %v6889
        %v7104 = vpack.c.bf16 %v6900, %v6890
        %v7105 = vpack.c.bf16 %v6901, %v6891
        %v7106 = vpack.c.bf16 %v6902, %v6892
        %v7107 = vpack.c.bf16 %v6913, %v6903
        %v7108 = vpack.c.bf16 %v6914, %v6904
        %v7109 = vpack.c.bf16 %v6915, %v6905
        %v7110 = vpack.c.bf16 %v6916, %v6906
        %v7111 = vpack.c.bf16 %v6917, %v6907
        %v7112 = vpack.c.bf16 %v6918, %v6908
        %v7113 = vpack.c.bf16 %v6919, %v6909
        %v7114 = vpack.c.bf16 %v6920, %v6910
        %v7115 = vpack.c.bf16 %v6921, %v6911
        %v7116 = vpack.c.bf16 %v6922, %v6912
        %v7117 = vpack.c.bf16 %v6933, %v6923
        %v7118 = vpack.c.bf16 %v6934, %v6924
        %v7119 = vpack.c.bf16 %v6935, %v6925
        %v7120 = vpack.c.bf16 %v6936, %v6926
        %v7121 = vpack.c.bf16 %v6937, %v6927
        %v7122 = vpack.c.bf16 %v6938, %v6928
        %v7123 = vpack.c.bf16 %v6939, %v6929
        %v7124 = vpack.c.bf16 %v6940, %v6930
        %v7125 = vpack.c.bf16 %v6941, %v6931
        %v7126 = vpack.c.bf16 %v6942, %v6932
        %v7127 = vpack.c.bf16 %v6953, %v6943
        %v7128 = vpack.c.bf16 %v6954, %v6944
        %v7129 = vpack.c.bf16 %v6955, %v6945
        %v7130 = vpack.c.bf16 %v6956, %v6946
        %v7131 = vpack.c.bf16 %v6957, %v6947
        %v7132 = vpack.c.bf16 %v6958, %v6948
        %v7133 = vpack.c.bf16 %v6959, %v6949
        %v7134 = vpack.c.bf16 %v6960, %v6950
        %v7135 = vpack.c.bf16 %v6961, %v6951
        %v7136 = vpack.c.bf16 %v6962, %v6952
        %v7137 = vpack.c.bf16 %v6973, %v6963
        %v7138 = vpack.c.bf16 %v6974, %v6964
        %v7139 = vpack.c.bf16 %v6975, %v6965
        %v7140 = vpack.c.bf16 %v6976, %v6966
        %v7141 = vpack.c.bf16 %v6977, %v6967
        %v7142 = vpack.c.bf16 %v6978, %v6968
        %v7143 = vpack.c.bf16 %v6979, %v6969
        %v7144 = vpack.c.bf16 %v6980, %v6970
        %v7145 = vpack.c.bf16 %v6981, %v6971
        %v7146 = vpack.c.bf16 %v6982, %v6972
        %v7147 = vpack.c.bf16 %v6993, %v6983
        %v7148 = vpack.c.bf16 %v6994, %v6984
        %v7149 = vpack.c.bf16 %v6995, %v6985
        %v7150 = vpack.c.bf16 %v6996, %v6986
        %v7151 = vpack.c.bf16 %v6997, %v6987
        %v7152 = vpack.c.bf16 %v6998, %v6988
        %v7153 = vpack.c.bf16 %v6999, %v6989
        %v7154 = vpack.c.bf16 %v7000, %v6990
        %v7155 = vpack.c.bf16 %v7001, %v6991
        %v7156 = vpack.c.bf16 %v7002, %v6992
        %v7157 = vpack.c.bf16 %v7013, %v7003
        %v7158 = vpack.c.bf16 %v7014, %v7004
        %v7159 = vpack.c.bf16 %v7015, %v7005
        %v7160 = vpack.c.bf16 %v7016, %v7006
        %v7161 = vpack.c.bf16 %v7017, %v7007
        %v7162 = vpack.c.bf16 %v7018, %v7008
        %v7163 = vpack.c.bf16 %v7019, %v7009
        %v7164 = vpack.c.bf16 %v7020, %v7010
        %v7165 = vpack.c.bf16 %v7021, %v7011
        %v7166 = vpack.c.bf16 %v7022, %v7012
        %v7199 = vunpack.c.l.b16 %v7055
        %v7200 = vunpack.c.l.b16 %v7056
        %v7201 = vunpack.c.l.b16 %v7057
        %v7202 = vunpack.c.l.b16 %v7058
        %v7203 = vunpack.c.l.b16 %v7059
        %v7204 = vunpack.c.l.b16 %v7060
        %v7205 = vunpack.c.l.b16 %v7061
        %v7206 = vunpack.c.l.b16 %v7062
        %v7207 = vunpack.c.l.b16 %v7063
        %v7208 = vunpack.c.l.b16 %v7064
        %v7209 = vunpack.c.l.b16 %v7065
        %v7210 = vunpack.c.l.b16 %v7066
        %v7211 = vunpack.c.l.b16 %v7067
        %v7212 = vunpack.c.l.b16 %v7068
        %v7213 = vunpack.c.l.b16 %v7069
        %v7214 = vunpack.c.l.b16 %v7070
        %v7215 = vunpack.c.l.b16 %v7071
        %v7216 = vunpack.c.l.b16 %v7072
        %v7217 = vunpack.c.l.b16 %v7073
        %v7218 = vunpack.c.l.b16 %v7074
        %v7219 = vunpack.c.l.b16 %v7075
        %v7220 = vunpack.c.l.b16 %v7076
        %v7221 = vunpack.c.l.b16 %v7077
        %v7222 = vunpack.c.l.b16 %v7078
        %v7223 = vunpack.c.l.b16 %v7079
        %v7224 = vunpack.c.l.b16 %v7080
        %v7225 = vunpack.c.l.b16 %v7081
        %v7226 = vunpack.c.l.b16 %v7082
        %v7227 = vunpack.c.l.b16 %v7083
        %v7228 = vunpack.c.l.b16 %v7084
        %v7229 = vunpack.c.l.b16 %v7085
        %v7230 = vunpack.c.l.b16 %v7086
        %v7231 = vpack.c.b16 %v7200, %v7199
        %v7232 = vpack.c.b16 %v7202, %v7201
        %v7233 = vpack.c.b16 %v7204, %v7203
        %v7234 = vpack.c.b16 %v7206, %v7205
        %v7235 = vpack.c.b16 %v7208, %v7207
        %v7236 = vpack.c.b16 %v7210, %v7209
        %v7237 = vpack.c.b16 %v7212, %v7211
        %v7238 = vpack.c.b16 %v7214, %v7213
        %v7239 = vpack.c.b16 %v7216, %v7215
        %v7240 = vpack.c.b16 %v7218, %v7217
        %v7241 = vpack.c.b16 %v7220, %v7219
        %v7242 = vpack.c.b16 %v7222, %v7221
        %v7243 = vpack.c.b16 %v7224, %v7223
        %v7244 = vpack.c.b16 %v7226, %v7225
        %v7245 = vpack.c.b16 %v7228, %v7227
        %v7246 = vpack.c.b16 %v7230, %v7229
        %7263 = vmatprep.subr.bf16.mxu0 %v7158
        %7264 = vmatpush1.bf16.msra.mxu0 %v7157
        %7265 = vmatprep.subr.bf16.mxu0 %v7148
        %7266 = vmatpush1.bf16.msra.mxu0 %v7147
        %7267 = vmatprep.subr.bf16.mxu0 %v7138
        %7268 = vmatpush1.bf16.msra.mxu0 %v7137
        %7269 = vmatprep.subr.bf16.mxu0 %v7128
        %7270 = vmatpush1.bf16.msra.mxu0 %v7127
        %7271 = vmatprep.subr.bf16.mxu0 %v7118
        %7272 = vmatpush1.bf16.msra.mxu0 %v7117
        %7273 = vmatprep.subr.bf16.mxu0 %v7108
        %7274 = vmatpush1.bf16.msra.mxu0 %v7107
        %7275 = vmatprep.subr.bf16.mxu0 %v7098
        %7276 = vmatpush1.bf16.msra.mxu0 %v7097
        %7277 = vmatprep.subr.bf16.mxu0 %v7088
        %7278 = vmatpush1.bf16.msra.mxu0 %v7087
        %7279 = vmatprep.subr.bf16.mxu0 0
        %7280 = vmatpush2.bf16.msra.mxu0 0
        %7281 = vmatprep.subr.bf16.mxu0 0
        %7282 = vmatpush2.bf16.msra.mxu0 0
        %7283 = vmatprep.subr.bf16.mxu0 0
        %7284 = vmatpush2.bf16.msra.mxu0 0
        %7285 = vmatprep.subr.bf16.mxu0 0
        %7286 = vmatpush2.bf16.msra.mxu0 0
        %7287 = vmatprep.subr.bf16.mxu0 0
        %7288 = vmatpush2.bf16.msra.mxu0 0
        %7289 = vmatprep.subr.bf16.mxu0 0
        %7290 = vmatpush2.bf16.msra.mxu0 0
        %7291 = vmatprep.subr.bf16.mxu0 0
        %7292 = vmatpush2.bf16.msra.mxu0 0
        %7293 = vmatprep.subr.bf16.mxu0 0
        %7294 = vmatpush2.bf16.msra.mxu0 0
        %7295 = vmatprep.mubr.bf16.mxu0 0
        %7296 = vmatmul.mubr.bf16.gmra.mxu0 %v7231
        %v7297 = vpop.f32.mrf.mxu0
        %v7298 = vadd.f32 0.0, %v7297
        %v7299 = vpop.f32.mrf.mxu0
        %v7300 = vadd.f32 0.0, %v7299
        %v7301 = vpop.f32.mrf.mxu0
        %v7302 = vadd.f32 0.0, %v7301
        %v7303 = vpop.f32.mrf.mxu0
        %v7304 = vadd.f32 0.0, %v7303
        %7305 = vmatprep.mubr.bf16.mxu0 0
        %7306 = vmatmul.mubr.bf16.gmra.mxu0 %v7232
        %v7307 = vpop.f32.mrf.mxu0
        %v7308 = vadd.f32 0.0, %v7307
        %v7309 = vpop.f32.mrf.mxu0
        %v7310 = vadd.f32 0.0, %v7309
        %v7311 = vpop.f32.mrf.mxu0
        %v7312 = vadd.f32 0.0, %v7311
        %v7313 = vpop.f32.mrf.mxu0
        %v7314 = vadd.f32 0.0, %v7313
        %7315 = vmatprep.mubr.bf16.mxu0 0
        %7316 = vmatmul.mubr.bf16.gmra.mxu0 %v7233
        %v7317 = vpop.f32.mrf.mxu0
        %v7318 = vadd.f32 0.0, %v7317
        %v7319 = vpop.f32.mrf.mxu0
        %v7320 = vadd.f32 0.0, %v7319
        %v7321 = vpop.f32.mrf.mxu0
        %v7322 = vadd.f32 0.0, %v7321
        %v7323 = vpop.f32.mrf.mxu0
        %v7324 = vadd.f32 0.0, %v7323
        %7325 = vmatprep.mubr.bf16.mxu0 0
        %7326 = vmatmul.mubr.bf16.gmra.mxu0 %v7234
        %v7327 = vpop.f32.mrf.mxu0
        %v7328 = vadd.f32 0.0, %v7327
        %v7329 = vpop.f32.mrf.mxu0
        %v7330 = vadd.f32 0.0, %v7329
        %v7331 = vpop.f32.mrf.mxu0
        %v7332 = vadd.f32 0.0, %v7331
        %v7333 = vpop.f32.mrf.mxu0
        %v7334 = vadd.f32 0.0, %v7333
        %7335 = vmatprep.mubr.bf16.mxu0 0
        %7336 = vmatmul.mubr.bf16.gmra.mxu0 %v7235
        %v7337 = vpop.f32.mrf.mxu0
        %v7338 = vadd.f32 0.0, %v7337
        %v7339 = vpop.f32.mrf.mxu0
        %v7340 = vadd.f32 0.0, %v7339
        %v7341 = vpop.f32.mrf.mxu0
        %v7342 = vadd.f32 0.0, %v7341
        %v7343 = vpop.f32.mrf.mxu0
        %v7344 = vadd.f32 0.0, %v7343
        %7345 = vmatprep.mubr.bf16.mxu0 0
        %7346 = vmatmul.mubr.bf16.gmra.mxu0 %v7236
        %v7347 = vpop.f32.mrf.mxu0
        %v7348 = vadd.f32 0.0, %v7347
        %v7349 = vpop.f32.mrf.mxu0
        %v7350 = vadd.f32 0.0, %v7349
        %v7351 = vpop.f32.mrf.mxu0
        %v7352 = vadd.f32 0.0, %v7351
        %v7353 = vpop.f32.mrf.mxu0
        %v7354 = vadd.f32 0.0, %v7353
        %7355 = vmatprep.mubr.bf16.mxu0 0
        %7356 = vmatmul.mubr.bf16.gmra.mxu0 %v7237
        %v7357 = vpop.f32.mrf.mxu0
        %v7358 = vadd.f32 0.0, %v7357
        %v7359 = vpop.f32.mrf.mxu0
        %v7360 = vadd.f32 0.0, %v7359
        %v7361 = vpop.f32.mrf.mxu0
        %v7362 = vadd.f32 0.0, %v7361
        %v7363 = vpop.f32.mrf.mxu0
        %v7364 = vadd.f32 0.0, %v7363
        %7365 = vmatprep.mubr.bf16.mxu0 0
        %7366 = vmatmul.mubr.bf16.gmra.mxu0 %v7238
        %v7367 = vpop.f32.mrf.mxu0
        %v7368 = vadd.f32 0.0, %v7367
        %v7369 = vpop.f32.mrf.mxu0
        %v7370 = vadd.f32 0.0, %v7369
        %v7371 = vpop.f32.mrf.mxu0
        %v7372 = vadd.f32 0.0, %v7371
        %v7373 = vpop.f32.mrf.mxu0
        %v7374 = vadd.f32 0.0, %v7373
        %7375 = vmatprep.mubr.bf16.mxu0 0
        %7376 = vmatmul.mubr.bf16.gmra.mxu0 %v7239
        %v7377 = vpop.f32.mrf.mxu0
        %v7378 = vadd.f32 0.0, %v7377
        %v7379 = vpop.f32.mrf.mxu0
        %v7380 = vadd.f32 0.0, %v7379
        %v7381 = vpop.f32.mrf.mxu0
        %v7382 = vadd.f32 0.0, %v7381
        %v7383 = vpop.f32.mrf.mxu0
        %v7384 = vadd.f32 0.0, %v7383
        %7385 = vmatprep.mubr.bf16.mxu0 0
        %7386 = vmatmul.mubr.bf16.gmra.mxu0 %v7240
        %v7387 = vpop.f32.mrf.mxu0
        %v7388 = vadd.f32 0.0, %v7387
        %v7389 = vpop.f32.mrf.mxu0
        %v7390 = vadd.f32 0.0, %v7389
        %v7391 = vpop.f32.mrf.mxu0
        %v7392 = vadd.f32 0.0, %v7391
        %v7393 = vpop.f32.mrf.mxu0
        %v7394 = vadd.f32 0.0, %v7393
        %7395 = vmatprep.mubr.bf16.mxu0 0
        %7396 = vmatmul.mubr.bf16.gmra.mxu0 %v7241
        %v7397 = vpop.f32.mrf.mxu0
        %v7398 = vadd.f32 0.0, %v7397
        %v7399 = vpop.f32.mrf.mxu0
        %v7400 = vadd.f32 0.0, %v7399
        %v7401 = vpop.f32.mrf.mxu0
        %v7402 = vadd.f32 0.0, %v7401
        %v7403 = vpop.f32.mrf.mxu0
        %v7404 = vadd.f32 0.0, %v7403
        %7405 = vmatprep.mubr.bf16.mxu0 0
        %7406 = vmatmul.mubr.bf16.gmra.mxu0 %v7242
        %v7407 = vpop.f32.mrf.mxu0
        %v7408 = vadd.f32 0.0, %v7407
        %v7409 = vpop.f32.mrf.mxu0
        %v7410 = vadd.f32 0.0, %v7409
        %v7411 = vpop.f32.mrf.mxu0
        %v7412 = vadd.f32 0.0, %v7411
        %v7413 = vpop.f32.mrf.mxu0
        %v7414 = vadd.f32 0.0, %v7413
        %7415 = vmatprep.mubr.bf16.mxu0 0
        %7416 = vmatmul.mubr.bf16.gmra.mxu0 %v7243
        %v7417 = vpop.f32.mrf.mxu0
        %v7418 = vadd.f32 0.0, %v7417
        %v7419 = vpop.f32.mrf.mxu0
        %v7420 = vadd.f32 0.0, %v7419
        %v7421 = vpop.f32.mrf.mxu0
        %v7422 = vadd.f32 0.0, %v7421
        %v7423 = vpop.f32.mrf.mxu0
        %v7424 = vadd.f32 0.0, %v7423
        %7425 = vmatprep.mubr.bf16.mxu0 0
        %7426 = vmatmul.mubr.bf16.gmra.mxu0 %v7244
        %v7427 = vpop.f32.mrf.mxu0
        %v7428 = vadd.f32 0.0, %v7427
        %v7429 = vpop.f32.mrf.mxu0
        %v7430 = vadd.f32 0.0, %v7429
        %v7431 = vpop.f32.mrf.mxu0
        %v7432 = vadd.f32 0.0, %v7431
        %v7433 = vpop.f32.mrf.mxu0
        %v7434 = vadd.f32 0.0, %v7433
        %7435 = vmatprep.mubr.bf16.mxu0 0
        %7436 = vmatmul.mubr.bf16.gmra.mxu0 %v7245
        %v7437 = vpop.f32.mrf.mxu0
        %v7438 = vadd.f32 0.0, %v7437
        %v7439 = vpop.f32.mrf.mxu0
        %v7440 = vadd.f32 0.0, %v7439
        %v7441 = vpop.f32.mrf.mxu0
        %v7442 = vadd.f32 0.0, %v7441
        %v7443 = vpop.f32.mrf.mxu0
        %v7444 = vadd.f32 0.0, %v7443
        %7445 = vmatprep.mubr.bf16.mxu0 0
        %7446 = vmatmul.mubr.bf16.gmra.mxu0 %v7246
        %v7447 = vpop.f32.mrf.mxu0
        %v7448 = vadd.f32 0.0, %v7447
        %v7449 = vpop.f32.mrf.mxu0
        %v7450 = vadd.f32 0.0, %v7449
        %v7451 = vpop.f32.mrf.mxu0
        %v7452 = vadd.f32 0.0, %v7451
        %v7453 = vpop.f32.mrf.mxu0
        %v7454 = vadd.f32 0.0, %v7453
        %7455 = vdwg.mxu0
        %7456 = vmatprep.subr.bf16.mxu0 %v7160
        %7457 = vmatpush1.bf16.msra.mxu0 %v7159
        %7458 = vmatprep.subr.bf16.mxu0 %v7150
        %7459 = vmatpush1.bf16.msra.mxu0 %v7149
        %7460 = vmatprep.subr.bf16.mxu0 %v7140
        %7461 = vmatpush1.bf16.msra.mxu0 %v7139
        %7462 = vmatprep.subr.bf16.mxu0 %v7130
        %7463 = vmatpush1.bf16.msra.mxu0 %v7129
        %7464 = vmatprep.subr.bf16.mxu0 %v7120
        %7465 = vmatpush1.bf16.msra.mxu0 %v7119
        %7466 = vmatprep.subr.bf16.mxu0 %v7110
        %7467 = vmatpush1.bf16.msra.mxu0 %v7109
        %7468 = vmatprep.subr.bf16.mxu0 %v7100
        %7469 = vmatpush1.bf16.msra.mxu0 %v7099
        %7470 = vmatprep.subr.bf16.mxu0 %v7090
        %7471 = vmatpush1.bf16.msra.mxu0 %v7089
        %7472 = vmatprep.subr.bf16.mxu0 0
        %7473 = vmatpush2.bf16.msra.mxu0 0
        %7474 = vmatprep.subr.bf16.mxu0 0
        %7475 = vmatpush2.bf16.msra.mxu0 0
        %7476 = vmatprep.subr.bf16.mxu0 0
        %7477 = vmatpush2.bf16.msra.mxu0 0
        %7478 = vmatprep.subr.bf16.mxu0 0
        %7479 = vmatpush2.bf16.msra.mxu0 0
        %7480 = vmatprep.subr.bf16.mxu0 0
        %7481 = vmatpush2.bf16.msra.mxu0 0
        %7482 = vmatprep.subr.bf16.mxu0 0
        %7483 = vmatpush2.bf16.msra.mxu0 0
        %7484 = vmatprep.subr.bf16.mxu0 0
        %7485 = vmatpush2.bf16.msra.mxu0 0
        %7486 = vmatprep.subr.bf16.mxu0 0
        %7487 = vmatpush2.bf16.msra.mxu0 0
        %7488 = vmatprep.mubr.bf16.mxu0 0
        %7489 = vmatmul.mubr.bf16.gmra.mxu0 %v7231
        %v7490 = vpop.f32.mrf.mxu0
        %v7491 = vadd.f32 0.0, %v7490
        %v7492 = vpop.f32.mrf.mxu0
        %v7493 = vadd.f32 0.0, %v7492
        %v7494 = vpop.f32.mrf.mxu0
        %v7495 = vadd.f32 0.0, %v7494
        %v7496 = vpop.f32.mrf.mxu0
        %v7497 = vadd.f32 0.0, %v7496
        %7498 = vmatprep.mubr.bf16.mxu0 0
        %7499 = vmatmul.mubr.bf16.gmra.mxu0 %v7232
        %v7500 = vpop.f32.mrf.mxu0
        %v7501 = vadd.f32 0.0, %v7500
        %v7502 = vpop.f32.mrf.mxu0
        %v7503 = vadd.f32 0.0, %v7502
        %v7504 = vpop.f32.mrf.mxu0
        %v7505 = vadd.f32 0.0, %v7504
        %v7506 = vpop.f32.mrf.mxu0
        %v7507 = vadd.f32 0.0, %v7506
        %7508 = vmatprep.mubr.bf16.mxu0 0
        %7509 = vmatmul.mubr.bf16.gmra.mxu0 %v7233
        %v7510 = vpop.f32.mrf.mxu0
        %v7511 = vadd.f32 0.0, %v7510
        %v7512 = vpop.f32.mrf.mxu0
        %v7513 = vadd.f32 0.0, %v7512
        %v7514 = vpop.f32.mrf.mxu0
        %v7515 = vadd.f32 0.0, %v7514
        %v7516 = vpop.f32.mrf.mxu0
        %v7517 = vadd.f32 0.0, %v7516
        %7518 = vmatprep.mubr.bf16.mxu0 0
        %7519 = vmatmul.mubr.bf16.gmra.mxu0 %v7234
        %v7520 = vpop.f32.mrf.mxu0
        %v7521 = vadd.f32 0.0, %v7520
        %v7522 = vpop.f32.mrf.mxu0
        %v7523 = vadd.f32 0.0, %v7522
        %v7524 = vpop.f32.mrf.mxu0
        %v7525 = vadd.f32 0.0, %v7524
        %v7526 = vpop.f32.mrf.mxu0
        %v7527 = vadd.f32 0.0, %v7526
        %7528 = vmatprep.mubr.bf16.mxu0 0
        %7529 = vmatmul.mubr.bf16.gmra.mxu0 %v7235
        %v7530 = vpop.f32.mrf.mxu0
        %v7531 = vadd.f32 0.0, %v7530
        %v7532 = vpop.f32.mrf.mxu0
        %v7533 = vadd.f32 0.0, %v7532
        %v7534 = vpop.f32.mrf.mxu0
        %v7535 = vadd.f32 0.0, %v7534
        %v7536 = vpop.f32.mrf.mxu0
        %v7537 = vadd.f32 0.0, %v7536
        %7538 = vmatprep.mubr.bf16.mxu0 0
        %7539 = vmatmul.mubr.bf16.gmra.mxu0 %v7236
        %v7540 = vpop.f32.mrf.mxu0
        %v7541 = vadd.f32 0.0, %v7540
        %v7542 = vpop.f32.mrf.mxu0
        %v7543 = vadd.f32 0.0, %v7542
        %v7544 = vpop.f32.mrf.mxu0
        %v7545 = vadd.f32 0.0, %v7544
        %v7546 = vpop.f32.mrf.mxu0
        %v7547 = vadd.f32 0.0, %v7546
        %7548 = vmatprep.mubr.bf16.mxu0 0
        %7549 = vmatmul.mubr.bf16.gmra.mxu0 %v7237
        %v7550 = vpop.f32.mrf.mxu0
        %v7551 = vadd.f32 0.0, %v7550
        %v7552 = vpop.f32.mrf.mxu0
        %v7553 = vadd.f32 0.0, %v7552
        %v7554 = vpop.f32.mrf.mxu0
        %v7555 = vadd.f32 0.0, %v7554
        %v7556 = vpop.f32.mrf.mxu0
        %v7557 = vadd.f32 0.0, %v7556
        %7558 = vmatprep.mubr.bf16.mxu0 0
        %7559 = vmatmul.mubr.bf16.gmra.mxu0 %v7238
        %v7560 = vpop.f32.mrf.mxu0
        %v7561 = vadd.f32 0.0, %v7560
        %v7562 = vpop.f32.mrf.mxu0
        %v7563 = vadd.f32 0.0, %v7562
        %v7564 = vpop.f32.mrf.mxu0
        %v7565 = vadd.f32 0.0, %v7564
        %v7566 = vpop.f32.mrf.mxu0
        %v7567 = vadd.f32 0.0, %v7566
        %7568 = vmatprep.mubr.bf16.mxu0 0
        %7569 = vmatmul.mubr.bf16.gmra.mxu0 %v7239
        %v7570 = vpop.f32.mrf.mxu0
        %v7571 = vadd.f32 0.0, %v7570
        %v7572 = vpop.f32.mrf.mxu0
        %v7573 = vadd.f32 0.0, %v7572
        %v7574 = vpop.f32.mrf.mxu0
        %v7575 = vadd.f32 0.0, %v7574
        %v7576 = vpop.f32.mrf.mxu0
        %v7577 = vadd.f32 0.0, %v7576
        %7578 = vmatprep.mubr.bf16.mxu0 0
        %7579 = vmatmul.mubr.bf16.gmra.mxu0 %v7240
        %v7580 = vpop.f32.mrf.mxu0
        %v7581 = vadd.f32 0.0, %v7580
        %v7582 = vpop.f32.mrf.mxu0
        %v7583 = vadd.f32 0.0, %v7582
        %v7584 = vpop.f32.mrf.mxu0
        %v7585 = vadd.f32 0.0, %v7584
        %v7586 = vpop.f32.mrf.mxu0
        %v7587 = vadd.f32 0.0, %v7586
        %7588 = vmatprep.mubr.bf16.mxu0 0
        %7589 = vmatmul.mubr.bf16.gmra.mxu0 %v7241
        %v7590 = vpop.f32.mrf.mxu0
        %v7591 = vadd.f32 0.0, %v7590
        %v7592 = vpop.f32.mrf.mxu0
        %v7593 = vadd.f32 0.0, %v7592
        %v7594 = vpop.f32.mrf.mxu0
        %v7595 = vadd.f32 0.0, %v7594
        %v7596 = vpop.f32.mrf.mxu0
        %v7597 = vadd.f32 0.0, %v7596
        %7598 = vmatprep.mubr.bf16.mxu0 0
        %7599 = vmatmul.mubr.bf16.gmra.mxu0 %v7242
        %v7600 = vpop.f32.mrf.mxu0
        %v7601 = vadd.f32 0.0, %v7600
        %v7602 = vpop.f32.mrf.mxu0
        %v7603 = vadd.f32 0.0, %v7602
        %v7604 = vpop.f32.mrf.mxu0
        %v7605 = vadd.f32 0.0, %v7604
        %v7606 = vpop.f32.mrf.mxu0
        %v7607 = vadd.f32 0.0, %v7606
        %7608 = vmatprep.mubr.bf16.mxu0 0
        %7609 = vmatmul.mubr.bf16.gmra.mxu0 %v7243
        %v7610 = vpop.f32.mrf.mxu0
        %v7611 = vadd.f32 0.0, %v7610
        %v7612 = vpop.f32.mrf.mxu0
        %v7613 = vadd.f32 0.0, %v7612
        %v7614 = vpop.f32.mrf.mxu0
        %v7615 = vadd.f32 0.0, %v7614
        %v7616 = vpop.f32.mrf.mxu0
        %v7617 = vadd.f32 0.0, %v7616
        %7618 = vmatprep.mubr.bf16.mxu0 0
        %7619 = vmatmul.mubr.bf16.gmra.mxu0 %v7244
        %v7620 = vpop.f32.mrf.mxu0
        %v7621 = vadd.f32 0.0, %v7620
        %v7622 = vpop.f32.mrf.mxu0
        %v7623 = vadd.f32 0.0, %v7622
        %v7624 = vpop.f32.mrf.mxu0
        %v7625 = vadd.f32 0.0, %v7624
        %v7626 = vpop.f32.mrf.mxu0
        %v7627 = vadd.f32 0.0, %v7626
        %7628 = vmatprep.mubr.bf16.mxu0 0
        %7629 = vmatmul.mubr.bf16.gmra.mxu0 %v7245
        %v7630 = vpop.f32.mrf.mxu0
        %v7631 = vadd.f32 0.0, %v7630
        %v7632 = vpop.f32.mrf.mxu0
        %v7633 = vadd.f32 0.0, %v7632
        %v7634 = vpop.f32.mrf.mxu0
        %v7635 = vadd.f32 0.0, %v7634
        %v7636 = vpop.f32.mrf.mxu0
        %v7637 = vadd.f32 0.0, %v7636
        %7638 = vmatprep.mubr.bf16.mxu0 0
        %7639 = vmatmul.mubr.bf16.gmra.mxu0 %v7246
        %v7640 = vpop.f32.mrf.mxu0
        %v7641 = vadd.f32 0.0, %v7640
        %v7642 = vpop.f32.mrf.mxu0
        %v7643 = vadd.f32 0.0, %v7642
        %v7644 = vpop.f32.mrf.mxu0
        %v7645 = vadd.f32 0.0, %v7644
        %v7646 = vpop.f32.mrf.mxu0
        %v7647 = vadd.f32 0.0, %v7646
        %7648 = vdwg.mxu0
        %7649 = vmatprep.subr.bf16.mxu0 %v7162
        %7650 = vmatpush1.bf16.msra.mxu0 %v7161
        %7651 = vmatprep.subr.bf16.mxu0 %v7152
        %7652 = vmatpush1.bf16.msra.mxu0 %v7151
        %7653 = vmatprep.subr.bf16.mxu0 %v7142
        %7654 = vmatpush1.bf16.msra.mxu0 %v7141
        %7655 = vmatprep.subr.bf16.mxu0 %v7132
        %7656 = vmatpush1.bf16.msra.mxu0 %v7131
        %7657 = vmatprep.subr.bf16.mxu0 %v7122
        %7658 = vmatpush1.bf16.msra.mxu0 %v7121
        %7659 = vmatprep.subr.bf16.mxu0 %v7112
        %7660 = vmatpush1.bf16.msra.mxu0 %v7111
        %7661 = vmatprep.subr.bf16.mxu0 %v7102
        %7662 = vmatpush1.bf16.msra.mxu0 %v7101
        %7663 = vmatprep.subr.bf16.mxu0 %v7092
        %7664 = vmatpush1.bf16.msra.mxu0 %v7091
        %7665 = vmatprep.subr.bf16.mxu0 0
        %7666 = vmatpush2.bf16.msra.mxu0 0
        %7667 = vmatprep.subr.bf16.mxu0 0
        %7668 = vmatpush2.bf16.msra.mxu0 0
        %7669 = vmatprep.subr.bf16.mxu0 0
        %7670 = vmatpush2.bf16.msra.mxu0 0
        %7671 = vmatprep.subr.bf16.mxu0 0
        %7672 = vmatpush2.bf16.msra.mxu0 0
        %7673 = vmatprep.subr.bf16.mxu0 0
        %7674 = vmatpush2.bf16.msra.mxu0 0
        %7675 = vmatprep.subr.bf16.mxu0 0
        %7676 = vmatpush2.bf16.msra.mxu0 0
        %7677 = vmatprep.subr.bf16.mxu0 0
        %7678 = vmatpush2.bf16.msra.mxu0 0
        %7679 = vmatprep.subr.bf16.mxu0 0
        %7680 = vmatpush2.bf16.msra.mxu0 0
        %7681 = vmatprep.mubr.bf16.mxu0 0
        %7682 = vmatmul.mubr.bf16.gmra.mxu0 %v7231
        %v7683 = vpop.f32.mrf.mxu0
        %v7684 = vadd.f32 0.0, %v7683
        %v7685 = vpop.f32.mrf.mxu0
        %v7686 = vadd.f32 0.0, %v7685
        %v7687 = vpop.f32.mrf.mxu0
        %v7688 = vadd.f32 0.0, %v7687
        %v7689 = vpop.f32.mrf.mxu0
        %v7690 = vadd.f32 0.0, %v7689
        %7691 = vmatprep.mubr.bf16.mxu0 0
        %7692 = vmatmul.mubr.bf16.gmra.mxu0 %v7232
        %v7693 = vpop.f32.mrf.mxu0
        %v7694 = vadd.f32 0.0, %v7693
        %v7695 = vpop.f32.mrf.mxu0
        %v7696 = vadd.f32 0.0, %v7695
        %v7697 = vpop.f32.mrf.mxu0
        %v7698 = vadd.f32 0.0, %v7697
        %v7699 = vpop.f32.mrf.mxu0
        %v7700 = vadd.f32 0.0, %v7699
        %7701 = vmatprep.mubr.bf16.mxu0 0
        %7702 = vmatmul.mubr.bf16.gmra.mxu0 %v7233
        %v7703 = vpop.f32.mrf.mxu0
        %v7704 = vadd.f32 0.0, %v7703
        %v7705 = vpop.f32.mrf.mxu0
        %v7706 = vadd.f32 0.0, %v7705
        %v7707 = vpop.f32.mrf.mxu0
        %v7708 = vadd.f32 0.0, %v7707
        %v7709 = vpop.f32.mrf.mxu0
        %v7710 = vadd.f32 0.0, %v7709
        %7711 = vmatprep.mubr.bf16.mxu0 0
        %7712 = vmatmul.mubr.bf16.gmra.mxu0 %v7234
        %v7713 = vpop.f32.mrf.mxu0
        %v7714 = vadd.f32 0.0, %v7713
        %v7715 = vpop.f32.mrf.mxu0
        %v7716 = vadd.f32 0.0, %v7715
        %v7717 = vpop.f32.mrf.mxu0
        %v7718 = vadd.f32 0.0, %v7717
        %v7719 = vpop.f32.mrf.mxu0
        %v7720 = vadd.f32 0.0, %v7719
        %7721 = vmatprep.mubr.bf16.mxu0 0
        %7722 = vmatmul.mubr.bf16.gmra.mxu0 %v7235
        %v7723 = vpop.f32.mrf.mxu0
        %v7724 = vadd.f32 0.0, %v7723
        %v7725 = vpop.f32.mrf.mxu0
        %v7726 = vadd.f32 0.0, %v7725
        %v7727 = vpop.f32.mrf.mxu0
        %v7728 = vadd.f32 0.0, %v7727
        %v7729 = vpop.f32.mrf.mxu0
        %v7730 = vadd.f32 0.0, %v7729
        %7731 = vmatprep.mubr.bf16.mxu0 0
        %7732 = vmatmul.mubr.bf16.gmra.mxu0 %v7236
        %v7733 = vpop.f32.mrf.mxu0
        %v7734 = vadd.f32 0.0, %v7733
        %v7735 = vpop.f32.mrf.mxu0
        %v7736 = vadd.f32 0.0, %v7735
        %v7737 = vpop.f32.mrf.mxu0
        %v7738 = vadd.f32 0.0, %v7737
        %v7739 = vpop.f32.mrf.mxu0
        %v7740 = vadd.f32 0.0, %v7739
        %7741 = vmatprep.mubr.bf16.mxu0 0
        %7742 = vmatmul.mubr.bf16.gmra.mxu0 %v7237
        %v7743 = vpop.f32.mrf.mxu0
        %v7744 = vadd.f32 0.0, %v7743
        %v7745 = vpop.f32.mrf.mxu0
        %v7746 = vadd.f32 0.0, %v7745
        %v7747 = vpop.f32.mrf.mxu0
        %v7748 = vadd.f32 0.0, %v7747
        %v7749 = vpop.f32.mrf.mxu0
        %v7750 = vadd.f32 0.0, %v7749
        %7751 = vmatprep.mubr.bf16.mxu0 0
        %7752 = vmatmul.mubr.bf16.gmra.mxu0 %v7238
        %v7753 = vpop.f32.mrf.mxu0
        %v7754 = vadd.f32 0.0, %v7753
        %v7755 = vpop.f32.mrf.mxu0
        %v7756 = vadd.f32 0.0, %v7755
        %v7757 = vpop.f32.mrf.mxu0
        %v7758 = vadd.f32 0.0, %v7757
        %v7759 = vpop.f32.mrf.mxu0
        %v7760 = vadd.f32 0.0, %v7759
        %7761 = vmatprep.mubr.bf16.mxu0 0
        %7762 = vmatmul.mubr.bf16.gmra.mxu0 %v7239
        %v7763 = vpop.f32.mrf.mxu0
        %v7764 = vadd.f32 0.0, %v7763
        %v7765 = vpop.f32.mrf.mxu0
        %v7766 = vadd.f32 0.0, %v7765
        %v7767 = vpop.f32.mrf.mxu0
        %v7768 = vadd.f32 0.0, %v7767
        %v7769 = vpop.f32.mrf.mxu0
        %v7770 = vadd.f32 0.0, %v7769
        %7771 = vmatprep.mubr.bf16.mxu0 0
        %7772 = vmatmul.mubr.bf16.gmra.mxu0 %v7240
        %v7773 = vpop.f32.mrf.mxu0
        %v7774 = vadd.f32 0.0, %v7773
        %v7775 = vpop.f32.mrf.mxu0
        %v7776 = vadd.f32 0.0, %v7775
        %v7777 = vpop.f32.mrf.mxu0
        %v7778 = vadd.f32 0.0, %v7777
        %v7779 = vpop.f32.mrf.mxu0
        %v7780 = vadd.f32 0.0, %v7779
        %7781 = vmatprep.mubr.bf16.mxu0 0
        %7782 = vmatmul.mubr.bf16.gmra.mxu0 %v7241
        %v7783 = vpop.f32.mrf.mxu0
        %v7784 = vadd.f32 0.0, %v7783
        %v7785 = vpop.f32.mrf.mxu0
        %v7786 = vadd.f32 0.0, %v7785
        %v7787 = vpop.f32.mrf.mxu0
        %v7788 = vadd.f32 0.0, %v7787
        %v7789 = vpop.f32.mrf.mxu0
        %v7790 = vadd.f32 0.0, %v7789
        %7791 = vmatprep.mubr.bf16.mxu0 0
        %7792 = vmatmul.mubr.bf16.gmra.mxu0 %v7242
        %v7793 = vpop.f32.mrf.mxu0
        %v7794 = vadd.f32 0.0, %v7793
        %v7795 = vpop.f32.mrf.mxu0
        %v7796 = vadd.f32 0.0, %v7795
        %v7797 = vpop.f32.mrf.mxu0
        %v7798 = vadd.f32 0.0, %v7797
        %v7799 = vpop.f32.mrf.mxu0
        %v7800 = vadd.f32 0.0, %v7799
        %7801 = vmatprep.mubr.bf16.mxu0 0
        %7802 = vmatmul.mubr.bf16.gmra.mxu0 %v7243
        %v7803 = vpop.f32.mrf.mxu0
        %v7804 = vadd.f32 0.0, %v7803
        %v7805 = vpop.f32.mrf.mxu0
        %v7806 = vadd.f32 0.0, %v7805
        %v7807 = vpop.f32.mrf.mxu0
        %v7808 = vadd.f32 0.0, %v7807
        %v7809 = vpop.f32.mrf.mxu0
        %v7810 = vadd.f32 0.0, %v7809
        %7811 = vmatprep.mubr.bf16.mxu0 0
        %7812 = vmatmul.mubr.bf16.gmra.mxu0 %v7244
        %v7813 = vpop.f32.mrf.mxu0
        %v7814 = vadd.f32 0.0, %v7813
        %v7815 = vpop.f32.mrf.mxu0
        %v7816 = vadd.f32 0.0, %v7815
        %v7817 = vpop.f32.mrf.mxu0
        %v7818 = vadd.f32 0.0, %v7817
        %v7819 = vpop.f32.mrf.mxu0
        %v7820 = vadd.f32 0.0, %v7819
        %7821 = vmatprep.mubr.bf16.mxu0 0
        %7822 = vmatmul.mubr.bf16.gmra.mxu0 %v7245
        %v7823 = vpop.f32.mrf.mxu0
        %v7824 = vadd.f32 0.0, %v7823
        %v7825 = vpop.f32.mrf.mxu0
        %v7826 = vadd.f32 0.0, %v7825
        %v7827 = vpop.f32.mrf.mxu0
        %v7828 = vadd.f32 0.0, %v7827
        %v7829 = vpop.f32.mrf.mxu0
        %v7830 = vadd.f32 0.0, %v7829
        %7831 = vmatprep.mubr.bf16.mxu0 0
        %7832 = vmatmul.mubr.bf16.gmra.mxu0 %v7246
        %v7833 = vpop.f32.mrf.mxu0
        %v7834 = vadd.f32 0.0, %v7833
        %v7835 = vpop.f32.mrf.mxu0
        %v7836 = vadd.f32 0.0, %v7835
        %v7837 = vpop.f32.mrf.mxu0
        %v7838 = vadd.f32 0.0, %v7837
        %v7839 = vpop.f32.mrf.mxu0
        %v7840 = vadd.f32 0.0, %v7839
        %7841 = vdwg.mxu0
        %7842 = vmatprep.subr.bf16.mxu0 %v7164
        %7843 = vmatpush1.bf16.msra.mxu0 %v7163
        %7844 = vmatprep.subr.bf16.mxu0 %v7154
        %7845 = vmatpush1.bf16.msra.mxu0 %v7153
        %7846 = vmatprep.subr.bf16.mxu0 %v7144
        %7847 = vmatpush1.bf16.msra.mxu0 %v7143
        %7848 = vmatprep.subr.bf16.mxu0 %v7134
        %7849 = vmatpush1.bf16.msra.mxu0 %v7133
        %7850 = vmatprep.subr.bf16.mxu0 %v7124
        %7851 = vmatpush1.bf16.msra.mxu0 %v7123
        %7852 = vmatprep.subr.bf16.mxu0 %v7114
        %7853 = vmatpush1.bf16.msra.mxu0 %v7113
        %7854 = vmatprep.subr.bf16.mxu0 %v7104
        %7855 = vmatpush1.bf16.msra.mxu0 %v7103
        %7856 = vmatprep.subr.bf16.mxu0 %v7094
        %7857 = vmatpush1.bf16.msra.mxu0 %v7093
        %7858 = vmatprep.subr.bf16.mxu0 0
        %7859 = vmatpush2.bf16.msra.mxu0 0
        %7860 = vmatprep.subr.bf16.mxu0 0
        %7861 = vmatpush2.bf16.msra.mxu0 0
        %7862 = vmatprep.subr.bf16.mxu0 0
        %7863 = vmatpush2.bf16.msra.mxu0 0
        %7864 = vmatprep.subr.bf16.mxu0 0
        %7865 = vmatpush2.bf16.msra.mxu0 0
        %7866 = vmatprep.subr.bf16.mxu0 0
        %7867 = vmatpush2.bf16.msra.mxu0 0
        %7868 = vmatprep.subr.bf16.mxu0 0
        %7869 = vmatpush2.bf16.msra.mxu0 0
        %7870 = vmatprep.subr.bf16.mxu0 0
        %7871 = vmatpush2.bf16.msra.mxu0 0
        %7872 = vmatprep.subr.bf16.mxu0 0
        %7873 = vmatpush2.bf16.msra.mxu0 0
        %7874 = vmatprep.mubr.bf16.mxu0 0
        %7875 = vmatmul.mubr.bf16.gmra.mxu0 %v7231
        %v7876 = vpop.f32.mrf.mxu0
        %v7877 = vadd.f32 0.0, %v7876
        %v7878 = vpop.f32.mrf.mxu0
        %v7879 = vadd.f32 0.0, %v7878
        %v7880 = vpop.f32.mrf.mxu0
        %v7881 = vadd.f32 0.0, %v7880
        %v7882 = vpop.f32.mrf.mxu0
        %v7883 = vadd.f32 0.0, %v7882
        %7884 = vmatprep.mubr.bf16.mxu0 0
        %7885 = vmatmul.mubr.bf16.gmra.mxu0 %v7232
        %v7886 = vpop.f32.mrf.mxu0
        %v7887 = vadd.f32 0.0, %v7886
        %v7888 = vpop.f32.mrf.mxu0
        %v7889 = vadd.f32 0.0, %v7888
        %v7890 = vpop.f32.mrf.mxu0
        %v7891 = vadd.f32 0.0, %v7890
        %v7892 = vpop.f32.mrf.mxu0
        %v7893 = vadd.f32 0.0, %v7892
        %7894 = vmatprep.mubr.bf16.mxu0 0
        %7895 = vmatmul.mubr.bf16.gmra.mxu0 %v7233
        %v7896 = vpop.f32.mrf.mxu0
        %v7897 = vadd.f32 0.0, %v7896
        %v7898 = vpop.f32.mrf.mxu0
        %v7899 = vadd.f32 0.0, %v7898
        %v7900 = vpop.f32.mrf.mxu0
        %v7901 = vadd.f32 0.0, %v7900
        %v7902 = vpop.f32.mrf.mxu0
        %v7903 = vadd.f32 0.0, %v7902
        %7904 = vmatprep.mubr.bf16.mxu0 0
        %7905 = vmatmul.mubr.bf16.gmra.mxu0 %v7234
        %v7906 = vpop.f32.mrf.mxu0
        %v7907 = vadd.f32 0.0, %v7906
        %v7908 = vpop.f32.mrf.mxu0
        %v7909 = vadd.f32 0.0, %v7908
        %v7910 = vpop.f32.mrf.mxu0
        %v7911 = vadd.f32 0.0, %v7910
        %v7912 = vpop.f32.mrf.mxu0
        %v7913 = vadd.f32 0.0, %v7912
        %7914 = vmatprep.mubr.bf16.mxu0 0
        %7915 = vmatmul.mubr.bf16.gmra.mxu0 %v7235
        %v7916 = vpop.f32.mrf.mxu0
        %v7917 = vadd.f32 0.0, %v7916
        %v7918 = vpop.f32.mrf.mxu0
        %v7919 = vadd.f32 0.0, %v7918
        %v7920 = vpop.f32.mrf.mxu0
        %v7921 = vadd.f32 0.0, %v7920
        %v7922 = vpop.f32.mrf.mxu0
        %v7923 = vadd.f32 0.0, %v7922
        %7924 = vmatprep.mubr.bf16.mxu0 0
        %7925 = vmatmul.mubr.bf16.gmra.mxu0 %v7236
        %v7926 = vpop.f32.mrf.mxu0
        %v7927 = vadd.f32 0.0, %v7926
        %v7928 = vpop.f32.mrf.mxu0
        %v7929 = vadd.f32 0.0, %v7928
        %v7930 = vpop.f32.mrf.mxu0
        %v7931 = vadd.f32 0.0, %v7930
        %v7932 = vpop.f32.mrf.mxu0
        %v7933 = vadd.f32 0.0, %v7932
        %7934 = vmatprep.mubr.bf16.mxu0 0
        %7935 = vmatmul.mubr.bf16.gmra.mxu0 %v7237
        %v7936 = vpop.f32.mrf.mxu0
        %v7937 = vadd.f32 0.0, %v7936
        %v7938 = vpop.f32.mrf.mxu0
        %v7939 = vadd.f32 0.0, %v7938
        %v7940 = vpop.f32.mrf.mxu0
        %v7941 = vadd.f32 0.0, %v7940
        %v7942 = vpop.f32.mrf.mxu0
        %v7943 = vadd.f32 0.0, %v7942
        %7944 = vmatprep.mubr.bf16.mxu0 0
        %7945 = vmatmul.mubr.bf16.gmra.mxu0 %v7238
        %v7946 = vpop.f32.mrf.mxu0
        %v7947 = vadd.f32 0.0, %v7946
        %v7948 = vpop.f32.mrf.mxu0
        %v7949 = vadd.f32 0.0, %v7948
        %v7950 = vpop.f32.mrf.mxu0
        %v7951 = vadd.f32 0.0, %v7950
        %v7952 = vpop.f32.mrf.mxu0
        %v7953 = vadd.f32 0.0, %v7952
        %7954 = vmatprep.mubr.bf16.mxu0 0
        %7955 = vmatmul.mubr.bf16.gmra.mxu0 %v7239
        %v7956 = vpop.f32.mrf.mxu0
        %v7957 = vadd.f32 0.0, %v7956
        %v7958 = vpop.f32.mrf.mxu0
        %v7959 = vadd.f32 0.0, %v7958
        %v7960 = vpop.f32.mrf.mxu0
        %v7961 = vadd.f32 0.0, %v7960
        %v7962 = vpop.f32.mrf.mxu0
        %v7963 = vadd.f32 0.0, %v7962
        %7964 = vmatprep.mubr.bf16.mxu0 0
        %7965 = vmatmul.mubr.bf16.gmra.mxu0 %v7240
        %v7966 = vpop.f32.mrf.mxu0
        %v7967 = vadd.f32 0.0, %v7966
        %v7968 = vpop.f32.mrf.mxu0
        %v7969 = vadd.f32 0.0, %v7968
        %v7970 = vpop.f32.mrf.mxu0
        %v7971 = vadd.f32 0.0, %v7970
        %v7972 = vpop.f32.mrf.mxu0
        %v7973 = vadd.f32 0.0, %v7972
        %7974 = vmatprep.mubr.bf16.mxu0 0
        %7975 = vmatmul.mubr.bf16.gmra.mxu0 %v7241
        %v7976 = vpop.f32.mrf.mxu0
        %v7977 = vadd.f32 0.0, %v7976
        %v7978 = vpop.f32.mrf.mxu0
        %v7979 = vadd.f32 0.0, %v7978
        %v7980 = vpop.f32.mrf.mxu0
        %v7981 = vadd.f32 0.0, %v7980
        %v7982 = vpop.f32.mrf.mxu0
        %v7983 = vadd.f32 0.0, %v7982
        %7984 = vmatprep.mubr.bf16.mxu0 0
        %7985 = vmatmul.mubr.bf16.gmra.mxu0 %v7242
        %v7986 = vpop.f32.mrf.mxu0
        %v7987 = vadd.f32 0.0, %v7986
        %v7988 = vpop.f32.mrf.mxu0
        %v7989 = vadd.f32 0.0, %v7988
        %v7990 = vpop.f32.mrf.mxu0
        %v7991 = vadd.f32 0.0, %v7990
        %v7992 = vpop.f32.mrf.mxu0
        %v7993 = vadd.f32 0.0, %v7992
        %7994 = vmatprep.mubr.bf16.mxu0 0
        %7995 = vmatmul.mubr.bf16.gmra.mxu0 %v7243
        %v7996 = vpop.f32.mrf.mxu0
        %v7997 = vadd.f32 0.0, %v7996
        %v7998 = vpop.f32.mrf.mxu0
        %v7999 = vadd.f32 0.0, %v7998
        %v8000 = vpop.f32.mrf.mxu0
        %v8001 = vadd.f32 0.0, %v8000
        %v8002 = vpop.f32.mrf.mxu0
        %v8003 = vadd.f32 0.0, %v8002
        %8004 = vmatprep.mubr.bf16.mxu0 0
        %8005 = vmatmul.mubr.bf16.gmra.mxu0 %v7244
        %v8006 = vpop.f32.mrf.mxu0
        %v8007 = vadd.f32 0.0, %v8006
        %v8008 = vpop.f32.mrf.mxu0
        %v8009 = vadd.f32 0.0, %v8008
        %v8010 = vpop.f32.mrf.mxu0
        %v8011 = vadd.f32 0.0, %v8010
        %v8012 = vpop.f32.mrf.mxu0
        %v8013 = vadd.f32 0.0, %v8012
        %8014 = vmatprep.mubr.bf16.mxu0 0
        %8015 = vmatmul.mubr.bf16.gmra.mxu0 %v7245
        %v8016 = vpop.f32.mrf.mxu0
        %v8017 = vadd.f32 0.0, %v8016
        %v8018 = vpop.f32.mrf.mxu0
        %v8019 = vadd.f32 0.0, %v8018
        %v8020 = vpop.f32.mrf.mxu0
        %v8021 = vadd.f32 0.0, %v8020
        %v8022 = vpop.f32.mrf.mxu0
        %v8023 = vadd.f32 0.0, %v8022
        %8024 = vmatprep.mubr.bf16.mxu0 0
        %8025 = vmatmul.mubr.bf16.gmra.mxu0 %v7246
        %v8026 = vpop.f32.mrf.mxu0
        %v8027 = vadd.f32 0.0, %v8026
        %v8028 = vpop.f32.mrf.mxu0
        %v8029 = vadd.f32 0.0, %v8028
        %v8030 = vpop.f32.mrf.mxu0
        %v8031 = vadd.f32 0.0, %v8030
        %v8032 = vpop.f32.mrf.mxu0
        %v8033 = vadd.f32 0.0, %v8032
        %8034 = vdwg.mxu0
        %8035 = vmatprep.subr.bf16.mxu0 %v7166
        %8036 = vmatpush1.bf16.msra.mxu0 %v7165
        %8037 = vmatprep.subr.bf16.mxu0 %v7156
        %8038 = vmatpush1.bf16.msra.mxu0 %v7155
        %8039 = vmatprep.subr.bf16.mxu0 %v7146
        %8040 = vmatpush1.bf16.msra.mxu0 %v7145
        %8041 = vmatprep.subr.bf16.mxu0 %v7136
        %8042 = vmatpush1.bf16.msra.mxu0 %v7135
        %8043 = vmatprep.subr.bf16.mxu0 %v7126
        %8044 = vmatpush1.bf16.msra.mxu0 %v7125
        %8045 = vmatprep.subr.bf16.mxu0 %v7116
        %8046 = vmatpush1.bf16.msra.mxu0 %v7115
        %8047 = vmatprep.subr.bf16.mxu0 %v7106
        %8048 = vmatpush1.bf16.msra.mxu0 %v7105
        %8049 = vmatprep.subr.bf16.mxu0 %v7096
        %8050 = vmatpush1.bf16.msra.mxu0 %v7095
        %8051 = vmatprep.subr.bf16.mxu0 0
        %8052 = vmatpush2.bf16.msra.mxu0 0
        %8053 = vmatprep.subr.bf16.mxu0 0
        %8054 = vmatpush2.bf16.msra.mxu0 0
        %8055 = vmatprep.subr.bf16.mxu0 0
        %8056 = vmatpush2.bf16.msra.mxu0 0
        %8057 = vmatprep.subr.bf16.mxu0 0
        %8058 = vmatpush2.bf16.msra.mxu0 0
        %8059 = vmatprep.subr.bf16.mxu0 0
        %8060 = vmatpush2.bf16.msra.mxu0 0
        %8061 = vmatprep.subr.bf16.mxu0 0
        %8062 = vmatpush2.bf16.msra.mxu0 0
        %8063 = vmatprep.subr.bf16.mxu0 0
        %8064 = vmatpush2.bf16.msra.mxu0 0
        %8065 = vmatprep.subr.bf16.mxu0 0
        %8066 = vmatpush2.bf16.msra.mxu0 0
        %8067 = vmatprep.mubr.bf16.mxu0 0
        %8068 = vmatmul.mubr.bf16.gmra.mxu0 %v7231
        %v8069 = vpop.f32.mrf.mxu0
        %v8070 = vadd.f32 0.0, %v8069
        %v8071 = vpop.f32.mrf.mxu0
        %v8072 = vadd.f32 0.0, %v8071
        %v8073 = vpop.f32.mrf.mxu0
        %v8074 = vadd.f32 0.0, %v8073
        %v8075 = vpop.f32.mrf.mxu0
        %v8076 = vadd.f32 0.0, %v8075
        %8077 = vmatprep.mubr.bf16.mxu0 0
        %8078 = vmatmul.mubr.bf16.gmra.mxu0 %v7232
        %v8079 = vpop.f32.mrf.mxu0
        %v8080 = vadd.f32 0.0, %v8079
        %v8081 = vpop.f32.mrf.mxu0
        %v8082 = vadd.f32 0.0, %v8081
        %v8083 = vpop.f32.mrf.mxu0
        %v8084 = vadd.f32 0.0, %v8083
        %v8085 = vpop.f32.mrf.mxu0
        %v8086 = vadd.f32 0.0, %v8085
        %8087 = vmatprep.mubr.bf16.mxu0 0
        %8088 = vmatmul.mubr.bf16.gmra.mxu0 %v7233
        %v8089 = vpop.f32.mrf.mxu0
        %v8090 = vadd.f32 0.0, %v8089
        %v8091 = vpop.f32.mrf.mxu0
        %v8092 = vadd.f32 0.0, %v8091
        %v8093 = vpop.f32.mrf.mxu0
        %v8094 = vadd.f32 0.0, %v8093
        %v8095 = vpop.f32.mrf.mxu0
        %v8096 = vadd.f32 0.0, %v8095
        %8097 = vmatprep.mubr.bf16.mxu0 0
        %8098 = vmatmul.mubr.bf16.gmra.mxu0 %v7234
        %v8099 = vpop.f32.mrf.mxu0
        %v8100 = vadd.f32 0.0, %v8099
        %v8101 = vpop.f32.mrf.mxu0
        %v8102 = vadd.f32 0.0, %v8101
        %v8103 = vpop.f32.mrf.mxu0
        %v8104 = vadd.f32 0.0, %v8103
        %v8105 = vpop.f32.mrf.mxu0
        %v8106 = vadd.f32 0.0, %v8105
        %8107 = vmatprep.mubr.bf16.mxu0 0
        %8108 = vmatmul.mubr.bf16.gmra.mxu0 %v7235
        %v8109 = vpop.f32.mrf.mxu0
        %v8110 = vadd.f32 0.0, %v8109
        %v8111 = vpop.f32.mrf.mxu0
        %v8112 = vadd.f32 0.0, %v8111
        %v8113 = vpop.f32.mrf.mxu0
        %v8114 = vadd.f32 0.0, %v8113
        %v8115 = vpop.f32.mrf.mxu0
        %v8116 = vadd.f32 0.0, %v8115
        %8117 = vmatprep.mubr.bf16.mxu0 0
        %8118 = vmatmul.mubr.bf16.gmra.mxu0 %v7236
        %v8119 = vpop.f32.mrf.mxu0
        %v8120 = vadd.f32 0.0, %v8119
        %v8121 = vpop.f32.mrf.mxu0
        %v8122 = vadd.f32 0.0, %v8121
        %v8123 = vpop.f32.mrf.mxu0
        %v8124 = vadd.f32 0.0, %v8123
        %v8125 = vpop.f32.mrf.mxu0
        %v8126 = vadd.f32 0.0, %v8125
        %8127 = vmatprep.mubr.bf16.mxu0 0
        %8128 = vmatmul.mubr.bf16.gmra.mxu0 %v7237
        %v8129 = vpop.f32.mrf.mxu0
        %v8130 = vadd.f32 0.0, %v8129
        %v8131 = vpop.f32.mrf.mxu0
        %v8132 = vadd.f32 0.0, %v8131
        %v8133 = vpop.f32.mrf.mxu0
        %v8134 = vadd.f32 0.0, %v8133
        %v8135 = vpop.f32.mrf.mxu0
        %v8136 = vadd.f32 0.0, %v8135
        %8137 = vmatprep.mubr.bf16.mxu0 0
        %8138 = vmatmul.mubr.bf16.gmra.mxu0 %v7238
        %v8139 = vpop.f32.mrf.mxu0
        %v8140 = vadd.f32 0.0, %v8139
        %v8141 = vpop.f32.mrf.mxu0
        %v8142 = vadd.f32 0.0, %v8141
        %v8143 = vpop.f32.mrf.mxu0
        %v8144 = vadd.f32 0.0, %v8143
        %v8145 = vpop.f32.mrf.mxu0
        %v8146 = vadd.f32 0.0, %v8145
        %8147 = vmatprep.mubr.bf16.mxu0 0
        %8148 = vmatmul.mubr.bf16.gmra.mxu0 %v7239
        %v8149 = vpop.f32.mrf.mxu0
        %v8150 = vadd.f32 0.0, %v8149
        %v8151 = vpop.f32.mrf.mxu0
        %v8152 = vadd.f32 0.0, %v8151
        %v8153 = vpop.f32.mrf.mxu0
        %v8154 = vadd.f32 0.0, %v8153
        %v8155 = vpop.f32.mrf.mxu0
        %v8156 = vadd.f32 0.0, %v8155
        %8157 = vmatprep.mubr.bf16.mxu0 0
        %8158 = vmatmul.mubr.bf16.gmra.mxu0 %v7240
        %v8159 = vpop.f32.mrf.mxu0
        %v8160 = vadd.f32 0.0, %v8159
        %v8161 = vpop.f32.mrf.mxu0
        %v8162 = vadd.f32 0.0, %v8161
        %v8163 = vpop.f32.mrf.mxu0
        %v8164 = vadd.f32 0.0, %v8163
        %v8165 = vpop.f32.mrf.mxu0
        %v8166 = vadd.f32 0.0, %v8165
        %8167 = vmatprep.mubr.bf16.mxu0 0
        %8168 = vmatmul.mubr.bf16.gmra.mxu0 %v7241
        %v8169 = vpop.f32.mrf.mxu0
        %v8170 = vadd.f32 0.0, %v8169
        %v8171 = vpop.f32.mrf.mxu0
        %v8172 = vadd.f32 0.0, %v8171
        %v8173 = vpop.f32.mrf.mxu0
        %v8174 = vadd.f32 0.0, %v8173
        %v8175 = vpop.f32.mrf.mxu0
        %v8176 = vadd.f32 0.0, %v8175
        %8177 = vmatprep.mubr.bf16.mxu0 0
        %8178 = vmatmul.mubr.bf16.gmra.mxu0 %v7242
        %v8179 = vpop.f32.mrf.mxu0
        %v8180 = vadd.f32 0.0, %v8179
        %v8181 = vpop.f32.mrf.mxu0
        %v8182 = vadd.f32 0.0, %v8181
        %v8183 = vpop.f32.mrf.mxu0
        %v8184 = vadd.f32 0.0, %v8183
        %v8185 = vpop.f32.mrf.mxu0
        %v8186 = vadd.f32 0.0, %v8185
        %8187 = vmatprep.mubr.bf16.mxu0 0
        %8188 = vmatmul.mubr.bf16.gmra.mxu0 %v7243
        %v8189 = vpop.f32.mrf.mxu0
        %v8190 = vadd.f32 0.0, %v8189
        %v8191 = vpop.f32.mrf.mxu0
        %v8192 = vadd.f32 0.0, %v8191
        %v8193 = vpop.f32.mrf.mxu0
        %v8194 = vadd.f32 0.0, %v8193
        %v8195 = vpop.f32.mrf.mxu0
        %v8196 = vadd.f32 0.0, %v8195
        %8197 = vmatprep.mubr.bf16.mxu0 0
        %8198 = vmatmul.mubr.bf16.gmra.mxu0 %v7244
        %v8199 = vpop.f32.mrf.mxu0
        %v8200 = vadd.f32 0.0, %v8199
        %v8201 = vpop.f32.mrf.mxu0
        %v8202 = vadd.f32 0.0, %v8201
        %v8203 = vpop.f32.mrf.mxu0
        %v8204 = vadd.f32 0.0, %v8203
        %v8205 = vpop.f32.mrf.mxu0
        %v8206 = vadd.f32 0.0, %v8205
        %8207 = vmatprep.mubr.bf16.mxu0 0
        %8208 = vmatmul.mubr.bf16.gmra.mxu0 %v7245
        %v8209 = vpop.f32.mrf.mxu0
        %v8210 = vadd.f32 0.0, %v8209
        %v8211 = vpop.f32.mrf.mxu0
        %v8212 = vadd.f32 0.0, %v8211
        %v8213 = vpop.f32.mrf.mxu0
        %v8214 = vadd.f32 0.0, %v8213
        %v8215 = vpop.f32.mrf.mxu0
        %v8216 = vadd.f32 0.0, %v8215
        %8217 = vmatprep.mubr.bf16.mxu0 0
        %8218 = vmatmul.mubr.bf16.gmra.mxu0 %v7246
        %v8219 = vpop.f32.mrf.mxu0
        %v8220 = vadd.f32 0.0, %v8219
        %v8221 = vpop.f32.mrf.mxu0
        %v8222 = vadd.f32 0.0, %v8221
        %v8223 = vpop.f32.mrf.mxu0
        %v8224 = vadd.f32 0.0, %v8223
        %v8225 = vpop.f32.mrf.mxu0
        %v8226 = vadd.f32 0.0, %v8225
        %8227 = vdwg.mxu0
        %v8260 = vunpack.c.l.b16 %v7023
        %v8261 = vunpack.c.l.b16 %v7024
        %v8262 = vunpack.c.l.b16 %v7025
        %v8263 = vunpack.c.l.b16 %v7026
        %v8264 = vunpack.c.l.b16 %v7027
        %v8265 = vunpack.c.l.b16 %v7028
        %v8266 = vunpack.c.l.b16 %v7029
        %v8267 = vunpack.c.l.b16 %v7030
        %v8268 = vunpack.c.l.b16 %v7031
        %v8269 = vunpack.c.l.b16 %v7032
        %v8270 = vunpack.c.l.b16 %v7033
        %v8271 = vunpack.c.l.b16 %v7034
        %v8272 = vunpack.c.l.b16 %v7035
        %v8273 = vunpack.c.l.b16 %v7036
        %v8274 = vunpack.c.l.b16 %v7037
        %v8275 = vunpack.c.l.b16 %v7038
        %v8276 = vunpack.c.l.b16 %v7039
        %v8277 = vunpack.c.l.b16 %v7040
        %v8278 = vunpack.c.l.b16 %v7041
        %v8279 = vunpack.c.l.b16 %v7042
        %v8280 = vunpack.c.l.b16 %v7043
        %v8281 = vunpack.c.l.b16 %v7044
        %v8282 = vunpack.c.l.b16 %v7045
        %v8283 = vunpack.c.l.b16 %v7046
        %v8284 = vunpack.c.l.b16 %v7047
        %v8285 = vunpack.c.l.b16 %v7048
        %v8286 = vunpack.c.l.b16 %v7049
        %v8287 = vunpack.c.l.b16 %v7050
        %v8288 = vunpack.c.l.b16 %v7051
        %v8289 = vunpack.c.l.b16 %v7052
        %v8290 = vunpack.c.l.b16 %v7053
        %v8291 = vunpack.c.l.b16 %v7054
        %v8292 = vpack.c.b16 %v8261, %v8260
        %v8293 = vpack.c.b16 %v8263, %v8262
        %v8294 = vpack.c.b16 %v8265, %v8264
        %v8295 = vpack.c.b16 %v8267, %v8266
        %v8296 = vpack.c.b16 %v8269, %v8268
        %v8297 = vpack.c.b16 %v8271, %v8270
        %v8298 = vpack.c.b16 %v8273, %v8272
        %v8299 = vpack.c.b16 %v8275, %v8274
        %v8300 = vpack.c.b16 %v8277, %v8276
        %v8301 = vpack.c.b16 %v8279, %v8278
        %v8302 = vpack.c.b16 %v8281, %v8280
        %v8303 = vpack.c.b16 %v8283, %v8282
        %v8304 = vpack.c.b16 %v8285, %v8284
        %v8305 = vpack.c.b16 %v8287, %v8286
        %v8306 = vpack.c.b16 %v8289, %v8288
        %v8307 = vpack.c.b16 %v8291, %v8290
        %v8309 = vsel %vm2127, %v8292, 0
        %v8312 = vsel %vm2127, %v8293, 0
        %v8315 = vsel %vm2127, %v8294, 0
        %v8318 = vsel %vm2127, %v8295, 0
        %v8321 = vsel %vm2127, %v8296, 0
        %v8324 = vsel %vm2127, %v8297, 0
        %v8327 = vsel %vm2127, %v8298, 0
        %v8330 = vsel %vm2127, %v8299, 0
        %v8333 = vsel %vm2127, %v8300, 0
        %v8336 = vsel %vm2127, %v8301, 0
        %v8339 = vsel %vm2127, %v8302, 0
        %v8342 = vsel %vm2127, %v8303, 0
        %v8345 = vsel %vm2127, %v8304, 0
        %v8348 = vsel %vm2127, %v8305, 0
        %v8351 = vsel %vm2127, %v8306, 0
        %v8354 = vsel %vm2127, %v8307, 0
        %v8357 = vsel %vm2127, %v1503, 0
        %v8360 = vsel %vm2127, %v1504, 0
        %v8363 = vsel %vm2127, %v1505, 0
        %v8366 = vsel %vm2127, %v1506, 0
        %v8369 = vsel %vm2127, %v1507, 0
        %v8372 = vsel %vm2127, %v1508, 0
        %v8375 = vsel %vm2127, %v1509, 0
        %v8378 = vsel %vm2127, %v1510, 0
        %v8381 = vsel %vm2127, %v1511, 0
        %v8384 = vsel %vm2127, %v1512, 0
        %v8387 = vsel %vm2127, %v1513, 0
        %v8390 = vsel %vm2127, %v1514, 0
        %v8393 = vsel %vm2127, %v1515, 0
        %v8396 = vsel %vm2127, %v1516, 0
        %v8399 = vsel %vm2127, %v1517, 0
        %v8402 = vsel %vm2127, %v1518, 0
        %v8405 = vsel %vm2127, %v1519, 0
        %v8408 = vsel %vm2127, %v1520, 0
        %v8411 = vsel %vm2127, %v1521, 0
        %v8414 = vsel %vm2127, %v1522, 0
        %v8417 = vsel %vm2127, %v1523, 0
        %v8420 = vsel %vm2127, %v1524, 0
        %v8423 = vsel %vm2127, %v1525, 0
        %v8426 = vsel %vm2127, %v1526, 0
        %v8429 = vsel %vm2127, %v1527, 0
        %v8432 = vsel %vm2127, %v1528, 0
        %v8435 = vsel %vm2127, %v1529, 0
        %v8438 = vsel %vm2127, %v1530, 0
        %v8441 = vsel %vm2127, %v1531, 0
        %v8444 = vsel %vm2127, %v1532, 0
        %v8447 = vsel %vm2127, %v1533, 0
        %v8450 = vsel %vm2127, %v1534, 0
        %v8453 = vsel %vm2127, %v1535, 0
        %v8456 = vsel %vm2127, %v1536, 0
        %v8459 = vsel %vm2127, %v1537, 0
        %v8462 = vsel %vm2127, %v1538, 0
        %v8465 = vsel %vm2127, %v1539, 0
        %v8468 = vsel %vm2127, %v1540, 0
        %v8471 = vsel %vm2127, %v1541, 0
        %v8474 = vsel %vm2127, %v1542, 0
        %v8477 = vsel %vm2127, %v1543, 0
        %v8480 = vsel %vm2127, %v1544, 0
        %v8483 = vsel %vm2127, %v1545, 0
        %v8486 = vsel %vm2127, %v1546, 0
        %v8489 = vsel %vm2127, %v1547, 0
        %v8492 = vsel %vm2127, %v1548, 0
        %v8495 = vsel %vm2127, %v1549, 0
        %v8498 = vsel %vm2127, %v1550, 0
        %v8501 = vsel %vm2127, %v1551, 0
        %v8504 = vsel %vm2127, %v1552, 0
        %v8507 = vsel %vm2127, %v1553, 0
        %v8510 = vsel %vm2127, %v1554, 0
        %v8513 = vsel %vm2127, %v1555, 0
        %v8516 = vsel %vm2127, %v1556, 0
        %v8519 = vsel %vm2127, %v1557, 0
        %v8522 = vsel %vm2127, %v1558, 0
        %v8525 = vsel %vm2127, %v1559, 0
        %v8528 = vsel %vm2127, %v1560, 0
        %v8531 = vsel %vm2127, %v1561, 0
        %v8534 = vsel %vm2127, %v1562, 0
        %v8537 = vsel %vm2127, %v1563, 0
        %v8540 = vsel %vm2127, %v1564, 0
        %v8543 = vsel %vm2127, %v1565, 0
        %v8546 = vsel %vm2127, %v1566, 0
        %v8549 = vsel %vm2127, %v1567, 0
        %v8552 = vsel %vm2127, %v1568, 0
        %v8555 = vsel %vm2127, %v1569, 0
        %v8558 = vsel %vm2127, %v1570, 0
        %v8561 = vsel %vm2127, %v1571, 0
        %v8564 = vsel %vm2127, %v1572, 0
        %v8567 = vsel %vm2127, %v1573, 0
        %v8570 = vsel %vm2127, %v1574, 0
        %v8573 = vsel %vm2127, %v1575, 0
        %v8576 = vsel %vm2127, %v1576, 0
        %v8579 = vsel %vm2127, %v1577, 0
        %v8582 = vsel %vm2127, %v1578, 0
        %v8585 = vsel %vm2127, %v1579, 0
        %v8588 = vsel %vm2127, %v1580, 0
        %v8591 = vsel %vm2127, %v1581, 0
        %v8594 = vsel %vm2127, %v1582, 0
        %8596 = vmatprep.subr.bf16.mxu0 0
        %8597 = vmatpush1.bf16.xpose.msra.mxu0 %v8378
        %8598 = vmatprep.subr.bf16.mxu0 0
        %8599 = vmatpush1.bf16.xpose.msra.mxu0 %v8375
        %8600 = vmatprep.subr.bf16.mxu0 0
        %8601 = vmatpush1.bf16.xpose.msra.mxu0 %v8372
        %8602 = vmatprep.subr.bf16.mxu0 0
        %8603 = vmatpush1.bf16.xpose.msra.mxu0 %v8369
        %8604 = vmatprep.subr.bf16.mxu0 0
        %8605 = vmatpush1.bf16.xpose.msra.mxu0 %v8366
        %8606 = vmatprep.subr.bf16.mxu0 0
        %8607 = vmatpush1.bf16.xpose.msra.mxu0 %v8363
        %8608 = vmatprep.subr.bf16.mxu0 0
        %8609 = vmatpush1.bf16.xpose.msra.mxu0 %v8360
        %8610 = vmatprep.subr.bf16.mxu0 0
        %8611 = vmatpush1.bf16.xpose.msra.mxu0 %v8357
        %8612 = vmatprep.subr.bf16.mxu0 0
        %8613 = vmatpush2.bf16.xpose.msra.mxu0 %v8402
        %8614 = vmatprep.subr.bf16.mxu0 0
        %8615 = vmatpush2.bf16.xpose.msra.mxu0 %v8399
        %8616 = vmatprep.subr.bf16.mxu0 0
        %8617 = vmatpush2.bf16.xpose.msra.mxu0 %v8396
        %8618 = vmatprep.subr.bf16.mxu0 0
        %8619 = vmatpush2.bf16.xpose.msra.mxu0 %v8393
        %8620 = vmatprep.subr.bf16.mxu0 0
        %8621 = vmatpush2.bf16.xpose.msra.mxu0 %v8390
        %8622 = vmatprep.subr.bf16.mxu0 0
        %8623 = vmatpush2.bf16.xpose.msra.mxu0 %v8387
        %8624 = vmatprep.subr.bf16.mxu0 0
        %8625 = vmatpush2.bf16.xpose.msra.mxu0 %v8384
        %8626 = vmatprep.subr.bf16.mxu0 0
        %8627 = vmatpush2.bf16.xpose.msra.mxu0 %v8381
        %8628 = vmatprep.mubr.bf16.mxu0 0
        %8629 = vmatmul.mubr.bf16.gmra.mxu0 %v8309
        %v8630 = vpop.f32.mrf.mxu0
        %v8631 = vadd.f32 %v7298, %v8630
        %v8632 = vpop.f32.mrf.mxu0
        %v8633 = vadd.f32 %v7300, %v8632
        %v8634 = vpop.f32.mrf.mxu0
        %v8635 = vadd.f32 %v7302, %v8634
        %v8636 = vpop.f32.mrf.mxu0
        %v8637 = vadd.f32 %v7304, %v8636
        %8638 = vmatprep.mubr.bf16.mxu0 0
        %8639 = vmatmul.mubr.bf16.gmra.mxu0 %v8312
        %v8640 = vpop.f32.mrf.mxu0
        %v8641 = vadd.f32 %v7308, %v8640
        %v8642 = vpop.f32.mrf.mxu0
        %v8643 = vadd.f32 %v7310, %v8642
        %v8644 = vpop.f32.mrf.mxu0
        %v8645 = vadd.f32 %v7312, %v8644
        %v8646 = vpop.f32.mrf.mxu0
        %v8647 = vadd.f32 %v7314, %v8646
        %8648 = vmatprep.mubr.bf16.mxu0 0
        %8649 = vmatmul.mubr.bf16.gmra.mxu0 %v8315
        %v8650 = vpop.f32.mrf.mxu0
        %v8651 = vadd.f32 %v7318, %v8650
        %v8652 = vpop.f32.mrf.mxu0
        %v8653 = vadd.f32 %v7320, %v8652
        %v8654 = vpop.f32.mrf.mxu0
        %v8655 = vadd.f32 %v7322, %v8654
        %v8656 = vpop.f32.mrf.mxu0
        %v8657 = vadd.f32 %v7324, %v8656
        %8658 = vmatprep.mubr.bf16.mxu0 0
        %8659 = vmatmul.mubr.bf16.gmra.mxu0 %v8318
        %v8660 = vpop.f32.mrf.mxu0
        %v8661 = vadd.f32 %v7328, %v8660
        %v8662 = vpop.f32.mrf.mxu0
        %v8663 = vadd.f32 %v7330, %v8662
        %v8664 = vpop.f32.mrf.mxu0
        %v8665 = vadd.f32 %v7332, %v8664
        %v8666 = vpop.f32.mrf.mxu0
        %v8667 = vadd.f32 %v7334, %v8666
        %8668 = vmatprep.mubr.bf16.mxu0 0
        %8669 = vmatmul.mubr.bf16.gmra.mxu0 %v8321
        %v8670 = vpop.f32.mrf.mxu0
        %v8671 = vadd.f32 %v7338, %v8670
        %v8672 = vpop.f32.mrf.mxu0
        %v8673 = vadd.f32 %v7340, %v8672
        %v8674 = vpop.f32.mrf.mxu0
        %v8675 = vadd.f32 %v7342, %v8674
        %v8676 = vpop.f32.mrf.mxu0
        %v8677 = vadd.f32 %v7344, %v8676
        %8678 = vmatprep.mubr.bf16.mxu0 0
        %8679 = vmatmul.mubr.bf16.gmra.mxu0 %v8324
        %v8680 = vpop.f32.mrf.mxu0
        %v8681 = vadd.f32 %v7348, %v8680
        %v8682 = vpop.f32.mrf.mxu0
        %v8683 = vadd.f32 %v7350, %v8682
        %v8684 = vpop.f32.mrf.mxu0
        %v8685 = vadd.f32 %v7352, %v8684
        %v8686 = vpop.f32.mrf.mxu0
        %v8687 = vadd.f32 %v7354, %v8686
        %8688 = vmatprep.mubr.bf16.mxu0 0
        %8689 = vmatmul.mubr.bf16.gmra.mxu0 %v8327
        %v8690 = vpop.f32.mrf.mxu0
        %v8691 = vadd.f32 %v7358, %v8690
        %v8692 = vpop.f32.mrf.mxu0
        %v8693 = vadd.f32 %v7360, %v8692
        %v8694 = vpop.f32.mrf.mxu0
        %v8695 = vadd.f32 %v7362, %v8694
        %v8696 = vpop.f32.mrf.mxu0
        %v8697 = vadd.f32 %v7364, %v8696
        %8698 = vmatprep.mubr.bf16.mxu0 0
        %8699 = vmatmul.mubr.bf16.gmra.mxu0 %v8330
        %v8700 = vpop.f32.mrf.mxu0
        %v8701 = vadd.f32 %v7368, %v8700
        %v8702 = vpop.f32.mrf.mxu0
        %v8703 = vadd.f32 %v7370, %v8702
        %v8704 = vpop.f32.mrf.mxu0
        %v8705 = vadd.f32 %v7372, %v8704
        %v8706 = vpop.f32.mrf.mxu0
        %v8707 = vadd.f32 %v7374, %v8706
        %8708 = vmatprep.mubr.bf16.mxu0 0
        %8709 = vmatmul.mubr.bf16.gmra.mxu0 %v8333
        %v8710 = vpop.f32.mrf.mxu0
        %v8711 = vadd.f32 %v7378, %v8710
        %v8712 = vpop.f32.mrf.mxu0
        %v8713 = vadd.f32 %v7380, %v8712
        %v8714 = vpop.f32.mrf.mxu0
        %v8715 = vadd.f32 %v7382, %v8714
        %v8716 = vpop.f32.mrf.mxu0
        %v8717 = vadd.f32 %v7384, %v8716
        %8718 = vmatprep.mubr.bf16.mxu0 0
        %8719 = vmatmul.mubr.bf16.gmra.mxu0 %v8336
        %v8720 = vpop.f32.mrf.mxu0
        %v8721 = vadd.f32 %v7388, %v8720
        %v8722 = vpop.f32.mrf.mxu0
        %v8723 = vadd.f32 %v7390, %v8722
        %v8724 = vpop.f32.mrf.mxu0
        %v8725 = vadd.f32 %v7392, %v8724
        %v8726 = vpop.f32.mrf.mxu0
        %v8727 = vadd.f32 %v7394, %v8726
        %8728 = vmatprep.mubr.bf16.mxu0 0
        %8729 = vmatmul.mubr.bf16.gmra.mxu0 %v8339
        %v8730 = vpop.f32.mrf.mxu0
        %v8731 = vadd.f32 %v7398, %v8730
        %v8732 = vpop.f32.mrf.mxu0
        %v8733 = vadd.f32 %v7400, %v8732
        %v8734 = vpop.f32.mrf.mxu0
        %v8735 = vadd.f32 %v7402, %v8734
        %v8736 = vpop.f32.mrf.mxu0
        %v8737 = vadd.f32 %v7404, %v8736
        %8738 = vmatprep.mubr.bf16.mxu0 0
        %8739 = vmatmul.mubr.bf16.gmra.mxu0 %v8342
        %v8740 = vpop.f32.mrf.mxu0
        %v8741 = vadd.f32 %v7408, %v8740
        %v8742 = vpop.f32.mrf.mxu0
        %v8743 = vadd.f32 %v7410, %v8742
        %v8744 = vpop.f32.mrf.mxu0
        %v8745 = vadd.f32 %v7412, %v8744
        %v8746 = vpop.f32.mrf.mxu0
        %v8747 = vadd.f32 %v7414, %v8746
        %8748 = vmatprep.mubr.bf16.mxu0 0
        %8749 = vmatmul.mubr.bf16.gmra.mxu0 %v8345
        %v8750 = vpop.f32.mrf.mxu0
        %v8751 = vadd.f32 %v7418, %v8750
        %v8752 = vpop.f32.mrf.mxu0
        %v8753 = vadd.f32 %v7420, %v8752
        %v8754 = vpop.f32.mrf.mxu0
        %v8755 = vadd.f32 %v7422, %v8754
        %v8756 = vpop.f32.mrf.mxu0
        %v8757 = vadd.f32 %v7424, %v8756
        %8758 = vmatprep.mubr.bf16.mxu0 0
        %8759 = vmatmul.mubr.bf16.gmra.mxu0 %v8348
        %v8760 = vpop.f32.mrf.mxu0
        %v8761 = vadd.f32 %v7428, %v8760
        %v8762 = vpop.f32.mrf.mxu0
        %v8763 = vadd.f32 %v7430, %v8762
        %v8764 = vpop.f32.mrf.mxu0
        %v8765 = vadd.f32 %v7432, %v8764
        %v8766 = vpop.f32.mrf.mxu0
        %v8767 = vadd.f32 %v7434, %v8766
        %8768 = vmatprep.mubr.bf16.mxu0 0
        %8769 = vmatmul.mubr.bf16.gmra.mxu0 %v8351
        %v8770 = vpop.f32.mrf.mxu0
        %v8771 = vadd.f32 %v7438, %v8770
        %v8772 = vpop.f32.mrf.mxu0
        %v8773 = vadd.f32 %v7440, %v8772
        %v8774 = vpop.f32.mrf.mxu0
        %v8775 = vadd.f32 %v7442, %v8774
        %v8776 = vpop.f32.mrf.mxu0
        %v8777 = vadd.f32 %v7444, %v8776
        %8778 = vmatprep.mubr.bf16.mxu0 0
        %8779 = vmatmul.mubr.bf16.gmra.mxu0 %v8354
        %v8780 = vpop.f32.mrf.mxu0
        %v8781 = vadd.f32 %v7448, %v8780
        %v8782 = vpop.f32.mrf.mxu0
        %v8783 = vadd.f32 %v7450, %v8782
        %v8784 = vpop.f32.mrf.mxu0
        %v8785 = vadd.f32 %v7452, %v8784
        %v8786 = vpop.f32.mrf.mxu0
        %v8787 = vadd.f32 %v7454, %v8786
        %8788 = vdwg.mxu0
        %8789 = vmatprep.subr.bf16.mxu0 0
        %8790 = vmatpush1.bf16.xpose.msra.mxu0 %v8426
        %8791 = vmatprep.subr.bf16.mxu0 0
        %8792 = vmatpush1.bf16.xpose.msra.mxu0 %v8423
        %8793 = vmatprep.subr.bf16.mxu0 0
        %8794 = vmatpush1.bf16.xpose.msra.mxu0 %v8420
        %8795 = vmatprep.subr.bf16.mxu0 0
        %8796 = vmatpush1.bf16.xpose.msra.mxu0 %v8417
        %8797 = vmatprep.subr.bf16.mxu0 0
        %8798 = vmatpush1.bf16.xpose.msra.mxu0 %v8414
        %8799 = vmatprep.subr.bf16.mxu0 0
        %8800 = vmatpush1.bf16.xpose.msra.mxu0 %v8411
        %8801 = vmatprep.subr.bf16.mxu0 0
        %8802 = vmatpush1.bf16.xpose.msra.mxu0 %v8408
        %8803 = vmatprep.subr.bf16.mxu0 0
        %8804 = vmatpush1.bf16.xpose.msra.mxu0 %v8405
        %8805 = vmatprep.subr.bf16.mxu0 0
        %8806 = vmatpush2.bf16.xpose.msra.mxu0 %v8450
        %8807 = vmatprep.subr.bf16.mxu0 0
        %8808 = vmatpush2.bf16.xpose.msra.mxu0 %v8447
        %8809 = vmatprep.subr.bf16.mxu0 0
        %8810 = vmatpush2.bf16.xpose.msra.mxu0 %v8444
        %8811 = vmatprep.subr.bf16.mxu0 0
        %8812 = vmatpush2.bf16.xpose.msra.mxu0 %v8441
        %8813 = vmatprep.subr.bf16.mxu0 0
        %8814 = vmatpush2.bf16.xpose.msra.mxu0 %v8438
        %8815 = vmatprep.subr.bf16.mxu0 0
        %8816 = vmatpush2.bf16.xpose.msra.mxu0 %v8435
        %8817 = vmatprep.subr.bf16.mxu0 0
        %8818 = vmatpush2.bf16.xpose.msra.mxu0 %v8432
        %8819 = vmatprep.subr.bf16.mxu0 0
        %8820 = vmatpush2.bf16.xpose.msra.mxu0 %v8429
        %8821 = vmatprep.mubr.bf16.mxu0 0
        %8822 = vmatmul.mubr.bf16.gmra.mxu0 %v8309
        %v8823 = vpop.f32.mrf.mxu0
        %v8824 = vadd.f32 %v7491, %v8823
        %v8825 = vpop.f32.mrf.mxu0
        %v8826 = vadd.f32 %v7493, %v8825
        %v8827 = vpop.f32.mrf.mxu0
        %v8828 = vadd.f32 %v7495, %v8827
        %v8829 = vpop.f32.mrf.mxu0
        %v8830 = vadd.f32 %v7497, %v8829
        %8831 = vmatprep.mubr.bf16.mxu0 0
        %8832 = vmatmul.mubr.bf16.gmra.mxu0 %v8312
        %v8833 = vpop.f32.mrf.mxu0
        %v8834 = vadd.f32 %v7501, %v8833
        %v8835 = vpop.f32.mrf.mxu0
        %v8836 = vadd.f32 %v7503, %v8835
        %v8837 = vpop.f32.mrf.mxu0
        %v8838 = vadd.f32 %v7505, %v8837
        %v8839 = vpop.f32.mrf.mxu0
        %v8840 = vadd.f32 %v7507, %v8839
        %8841 = vmatprep.mubr.bf16.mxu0 0
        %8842 = vmatmul.mubr.bf16.gmra.mxu0 %v8315
        %v8843 = vpop.f32.mrf.mxu0
        %v8844 = vadd.f32 %v7511, %v8843
        %v8845 = vpop.f32.mrf.mxu0
        %v8846 = vadd.f32 %v7513, %v8845
        %v8847 = vpop.f32.mrf.mxu0
        %v8848 = vadd.f32 %v7515, %v8847
        %v8849 = vpop.f32.mrf.mxu0
        %v8850 = vadd.f32 %v7517, %v8849
        %8851 = vmatprep.mubr.bf16.mxu0 0
        %8852 = vmatmul.mubr.bf16.gmra.mxu0 %v8318
        %v8853 = vpop.f32.mrf.mxu0
        %v8854 = vadd.f32 %v7521, %v8853
        %v8855 = vpop.f32.mrf.mxu0
        %v8856 = vadd.f32 %v7523, %v8855
        %v8857 = vpop.f32.mrf.mxu0
        %v8858 = vadd.f32 %v7525, %v8857
        %v8859 = vpop.f32.mrf.mxu0
        %v8860 = vadd.f32 %v7527, %v8859
        %8861 = vmatprep.mubr.bf16.mxu0 0
        %8862 = vmatmul.mubr.bf16.gmra.mxu0 %v8321
        %v8863 = vpop.f32.mrf.mxu0
        %v8864 = vadd.f32 %v7531, %v8863
        %v8865 = vpop.f32.mrf.mxu0
        %v8866 = vadd.f32 %v7533, %v8865
        %v8867 = vpop.f32.mrf.mxu0
        %v8868 = vadd.f32 %v7535, %v8867
        %v8869 = vpop.f32.mrf.mxu0
        %v8870 = vadd.f32 %v7537, %v8869
        %8871 = vmatprep.mubr.bf16.mxu0 0
        %8872 = vmatmul.mubr.bf16.gmra.mxu0 %v8324
        %v8873 = vpop.f32.mrf.mxu0
        %v8874 = vadd.f32 %v7541, %v8873
        %v8875 = vpop.f32.mrf.mxu0
        %v8876 = vadd.f32 %v7543, %v8875
        %v8877 = vpop.f32.mrf.mxu0
        %v8878 = vadd.f32 %v7545, %v8877
        %v8879 = vpop.f32.mrf.mxu0
        %v8880 = vadd.f32 %v7547, %v8879
        %8881 = vmatprep.mubr.bf16.mxu0 0
        %8882 = vmatmul.mubr.bf16.gmra.mxu0 %v8327
        %v8883 = vpop.f32.mrf.mxu0
        %v8884 = vadd.f32 %v7551, %v8883
        %v8885 = vpop.f32.mrf.mxu0
        %v8886 = vadd.f32 %v7553, %v8885
        %v8887 = vpop.f32.mrf.mxu0
        %v8888 = vadd.f32 %v7555, %v8887
        %v8889 = vpop.f32.mrf.mxu0
        %v8890 = vadd.f32 %v7557, %v8889
        %8891 = vmatprep.mubr.bf16.mxu0 0
        %8892 = vmatmul.mubr.bf16.gmra.mxu0 %v8330
        %v8893 = vpop.f32.mrf.mxu0
        %v8894 = vadd.f32 %v7561, %v8893
        %v8895 = vpop.f32.mrf.mxu0
        %v8896 = vadd.f32 %v7563, %v8895
        %v8897 = vpop.f32.mrf.mxu0
        %v8898 = vadd.f32 %v7565, %v8897
        %v8899 = vpop.f32.mrf.mxu0
        %v8900 = vadd.f32 %v7567, %v8899
        %8901 = vmatprep.mubr.bf16.mxu0 0
        %8902 = vmatmul.mubr.bf16.gmra.mxu0 %v8333
        %v8903 = vpop.f32.mrf.mxu0
        %v8904 = vadd.f32 %v7571, %v8903
        %v8905 = vpop.f32.mrf.mxu0
        %v8906 = vadd.f32 %v7573, %v8905
        %v8907 = vpop.f32.mrf.mxu0
        %v8908 = vadd.f32 %v7575, %v8907
        %v8909 = vpop.f32.mrf.mxu0
        %v8910 = vadd.f32 %v7577, %v8909
        %8911 = vmatprep.mubr.bf16.mxu0 0
        %8912 = vmatmul.mubr.bf16.gmra.mxu0 %v8336
        %v8913 = vpop.f32.mrf.mxu0
        %v8914 = vadd.f32 %v7581, %v8913
        %v8915 = vpop.f32.mrf.mxu0
        %v8916 = vadd.f32 %v7583, %v8915
        %v8917 = vpop.f32.mrf.mxu0
        %v8918 = vadd.f32 %v7585, %v8917
        %v8919 = vpop.f32.mrf.mxu0
        %v8920 = vadd.f32 %v7587, %v8919
        %8921 = vmatprep.mubr.bf16.mxu0 0
        %8922 = vmatmul.mubr.bf16.gmra.mxu0 %v8339
        %v8923 = vpop.f32.mrf.mxu0
        %v8924 = vadd.f32 %v7591, %v8923
        %v8925 = vpop.f32.mrf.mxu0
        %v8926 = vadd.f32 %v7593, %v8925
        %v8927 = vpop.f32.mrf.mxu0
        %v8928 = vadd.f32 %v7595, %v8927
        %v8929 = vpop.f32.mrf.mxu0
        %v8930 = vadd.f32 %v7597, %v8929
        %8931 = vmatprep.mubr.bf16.mxu0 0
        %8932 = vmatmul.mubr.bf16.gmra.mxu0 %v8342
        %v8933 = vpop.f32.mrf.mxu0
        %v8934 = vadd.f32 %v7601, %v8933
        %v8935 = vpop.f32.mrf.mxu0
        %v8936 = vadd.f32 %v7603, %v8935
        %v8937 = vpop.f32.mrf.mxu0
        %v8938 = vadd.f32 %v7605, %v8937
        %v8939 = vpop.f32.mrf.mxu0
        %v8940 = vadd.f32 %v7607, %v8939
        %8941 = vmatprep.mubr.bf16.mxu0 0
        %8942 = vmatmul.mubr.bf16.gmra.mxu0 %v8345
        %v8943 = vpop.f32.mrf.mxu0
        %v8944 = vadd.f32 %v7611, %v8943
        %v8945 = vpop.f32.mrf.mxu0
        %v8946 = vadd.f32 %v7613, %v8945
        %v8947 = vpop.f32.mrf.mxu0
        %v8948 = vadd.f32 %v7615, %v8947
        %v8949 = vpop.f32.mrf.mxu0
        %v8950 = vadd.f32 %v7617, %v8949
        %8951 = vmatprep.mubr.bf16.mxu0 0
        %8952 = vmatmul.mubr.bf16.gmra.mxu0 %v8348
        %v8953 = vpop.f32.mrf.mxu0
        %v8954 = vadd.f32 %v7621, %v8953
        %v8955 = vpop.f32.mrf.mxu0
        %v8956 = vadd.f32 %v7623, %v8955
        %v8957 = vpop.f32.mrf.mxu0
        %v8958 = vadd.f32 %v7625, %v8957
        %v8959 = vpop.f32.mrf.mxu0
        %v8960 = vadd.f32 %v7627, %v8959
        %8961 = vmatprep.mubr.bf16.mxu0 0
        %8962 = vmatmul.mubr.bf16.gmra.mxu0 %v8351
        %v8963 = vpop.f32.mrf.mxu0
        %v8964 = vadd.f32 %v7631, %v8963
        %v8965 = vpop.f32.mrf.mxu0
        %v8966 = vadd.f32 %v7633, %v8965
        %v8967 = vpop.f32.mrf.mxu0
        %v8968 = vadd.f32 %v7635, %v8967
        %v8969 = vpop.f32.mrf.mxu0
        %v8970 = vadd.f32 %v7637, %v8969
        %8971 = vmatprep.mubr.bf16.mxu0 0
        %8972 = vmatmul.mubr.bf16.gmra.mxu0 %v8354
        %v8973 = vpop.f32.mrf.mxu0
        %v8974 = vadd.f32 %v7641, %v8973
        %v8975 = vpop.f32.mrf.mxu0
        %v8976 = vadd.f32 %v7643, %v8975
        %v8977 = vpop.f32.mrf.mxu0
        %v8978 = vadd.f32 %v7645, %v8977
        %v8979 = vpop.f32.mrf.mxu0
        %v8980 = vadd.f32 %v7647, %v8979
        %8981 = vdwg.mxu0
        %8982 = vmatprep.subr.bf16.mxu0 0
        %8983 = vmatpush1.bf16.xpose.msra.mxu0 %v8474
        %8984 = vmatprep.subr.bf16.mxu0 0
        %8985 = vmatpush1.bf16.xpose.msra.mxu0 %v8471
        %8986 = vmatprep.subr.bf16.mxu0 0
        %8987 = vmatpush1.bf16.xpose.msra.mxu0 %v8468
        %8988 = vmatprep.subr.bf16.mxu0 0
        %8989 = vmatpush1.bf16.xpose.msra.mxu0 %v8465
        %8990 = vmatprep.subr.bf16.mxu0 0
        %8991 = vmatpush1.bf16.xpose.msra.mxu0 %v8462
        %8992 = vmatprep.subr.bf16.mxu0 0
        %8993 = vmatpush1.bf16.xpose.msra.mxu0 %v8459
        %8994 = vmatprep.subr.bf16.mxu0 0
        %8995 = vmatpush1.bf16.xpose.msra.mxu0 %v8456
        %8996 = vmatprep.subr.bf16.mxu0 0
        %8997 = vmatpush1.bf16.xpose.msra.mxu0 %v8453
        %8998 = vmatprep.subr.bf16.mxu0 0
        %8999 = vmatpush2.bf16.xpose.msra.mxu0 %v8498
        %9000 = vmatprep.subr.bf16.mxu0 0
        %9001 = vmatpush2.bf16.xpose.msra.mxu0 %v8495
        %9002 = vmatprep.subr.bf16.mxu0 0
        %9003 = vmatpush2.bf16.xpose.msra.mxu0 %v8492
        %9004 = vmatprep.subr.bf16.mxu0 0
        %9005 = vmatpush2.bf16.xpose.msra.mxu0 %v8489
        %9006 = vmatprep.subr.bf16.mxu0 0
        %9007 = vmatpush2.bf16.xpose.msra.mxu0 %v8486
        %9008 = vmatprep.subr.bf16.mxu0 0
        %9009 = vmatpush2.bf16.xpose.msra.mxu0 %v8483
        %9010 = vmatprep.subr.bf16.mxu0 0
        %9011 = vmatpush2.bf16.xpose.msra.mxu0 %v8480
        %9012 = vmatprep.subr.bf16.mxu0 0
        %9013 = vmatpush2.bf16.xpose.msra.mxu0 %v8477
        %9014 = vmatprep.mubr.bf16.mxu0 0
        %9015 = vmatmul.mubr.bf16.gmra.mxu0 %v8309
        %v9016 = vpop.f32.mrf.mxu0
        %v9017 = vadd.f32 %v7684, %v9016
        %v9018 = vpop.f32.mrf.mxu0
        %v9019 = vadd.f32 %v7686, %v9018
        %v9020 = vpop.f32.mrf.mxu0
        %v9021 = vadd.f32 %v7688, %v9020
        %v9022 = vpop.f32.mrf.mxu0
        %v9023 = vadd.f32 %v7690, %v9022
        %9024 = vmatprep.mubr.bf16.mxu0 0
        %9025 = vmatmul.mubr.bf16.gmra.mxu0 %v8312
        %v9026 = vpop.f32.mrf.mxu0
        %v9027 = vadd.f32 %v7694, %v9026
        %v9028 = vpop.f32.mrf.mxu0
        %v9029 = vadd.f32 %v7696, %v9028
        %v9030 = vpop.f32.mrf.mxu0
        %v9031 = vadd.f32 %v7698, %v9030
        %v9032 = vpop.f32.mrf.mxu0
        %v9033 = vadd.f32 %v7700, %v9032
        %9034 = vmatprep.mubr.bf16.mxu0 0
        %9035 = vmatmul.mubr.bf16.gmra.mxu0 %v8315
        %v9036 = vpop.f32.mrf.mxu0
        %v9037 = vadd.f32 %v7704, %v9036
        %v9038 = vpop.f32.mrf.mxu0
        %v9039 = vadd.f32 %v7706, %v9038
        %v9040 = vpop.f32.mrf.mxu0
        %v9041 = vadd.f32 %v7708, %v9040
        %v9042 = vpop.f32.mrf.mxu0
        %v9043 = vadd.f32 %v7710, %v9042
        %9044 = vmatprep.mubr.bf16.mxu0 0
        %9045 = vmatmul.mubr.bf16.gmra.mxu0 %v8318
        %v9046 = vpop.f32.mrf.mxu0
        %v9047 = vadd.f32 %v7714, %v9046
        %v9048 = vpop.f32.mrf.mxu0
        %v9049 = vadd.f32 %v7716, %v9048
        %v9050 = vpop.f32.mrf.mxu0
        %v9051 = vadd.f32 %v7718, %v9050
        %v9052 = vpop.f32.mrf.mxu0
        %v9053 = vadd.f32 %v7720, %v9052
        %9054 = vmatprep.mubr.bf16.mxu0 0
        %9055 = vmatmul.mubr.bf16.gmra.mxu0 %v8321
        %v9056 = vpop.f32.mrf.mxu0
        %v9057 = vadd.f32 %v7724, %v9056
        %v9058 = vpop.f32.mrf.mxu0
        %v9059 = vadd.f32 %v7726, %v9058
        %v9060 = vpop.f32.mrf.mxu0
        %v9061 = vadd.f32 %v7728, %v9060
        %v9062 = vpop.f32.mrf.mxu0
        %v9063 = vadd.f32 %v7730, %v9062
        %9064 = vmatprep.mubr.bf16.mxu0 0
        %9065 = vmatmul.mubr.bf16.gmra.mxu0 %v8324
        %v9066 = vpop.f32.mrf.mxu0
        %v9067 = vadd.f32 %v7734, %v9066
        %v9068 = vpop.f32.mrf.mxu0
        %v9069 = vadd.f32 %v7736, %v9068
        %v9070 = vpop.f32.mrf.mxu0
        %v9071 = vadd.f32 %v7738, %v9070
        %v9072 = vpop.f32.mrf.mxu0
        %v9073 = vadd.f32 %v7740, %v9072
        %9074 = vmatprep.mubr.bf16.mxu0 0
        %9075 = vmatmul.mubr.bf16.gmra.mxu0 %v8327
        %v9076 = vpop.f32.mrf.mxu0
        %v9077 = vadd.f32 %v7744, %v9076
        %v9078 = vpop.f32.mrf.mxu0
        %v9079 = vadd.f32 %v7746, %v9078
        %v9080 = vpop.f32.mrf.mxu0
        %v9081 = vadd.f32 %v7748, %v9080
        %v9082 = vpop.f32.mrf.mxu0
        %v9083 = vadd.f32 %v7750, %v9082
        %9084 = vmatprep.mubr.bf16.mxu0 0
        %9085 = vmatmul.mubr.bf16.gmra.mxu0 %v8330
        %v9086 = vpop.f32.mrf.mxu0
        %v9087 = vadd.f32 %v7754, %v9086
        %v9088 = vpop.f32.mrf.mxu0
        %v9089 = vadd.f32 %v7756, %v9088
        %v9090 = vpop.f32.mrf.mxu0
        %v9091 = vadd.f32 %v7758, %v9090
        %v9092 = vpop.f32.mrf.mxu0
        %v9093 = vadd.f32 %v7760, %v9092
        %9094 = vmatprep.mubr.bf16.mxu0 0
        %9095 = vmatmul.mubr.bf16.gmra.mxu0 %v8333
        %v9096 = vpop.f32.mrf.mxu0
        %v9097 = vadd.f32 %v7764, %v9096
        %v9098 = vpop.f32.mrf.mxu0
        %v9099 = vadd.f32 %v7766, %v9098
        %v9100 = vpop.f32.mrf.mxu0
        %v9101 = vadd.f32 %v7768, %v9100
        %v9102 = vpop.f32.mrf.mxu0
        %v9103 = vadd.f32 %v7770, %v9102
        %9104 = vmatprep.mubr.bf16.mxu0 0
        %9105 = vmatmul.mubr.bf16.gmra.mxu0 %v8336
        %v9106 = vpop.f32.mrf.mxu0
        %v9107 = vadd.f32 %v7774, %v9106
        %v9108 = vpop.f32.mrf.mxu0
        %v9109 = vadd.f32 %v7776, %v9108
        %v9110 = vpop.f32.mrf.mxu0
        %v9111 = vadd.f32 %v7778, %v9110
        %v9112 = vpop.f32.mrf.mxu0
        %v9113 = vadd.f32 %v7780, %v9112
        %9114 = vmatprep.mubr.bf16.mxu0 0
        %9115 = vmatmul.mubr.bf16.gmra.mxu0 %v8339
        %v9116 = vpop.f32.mrf.mxu0
        %v9117 = vadd.f32 %v7784, %v9116
        %v9118 = vpop.f32.mrf.mxu0
        %v9119 = vadd.f32 %v7786, %v9118
        %v9120 = vpop.f32.mrf.mxu0
        %v9121 = vadd.f32 %v7788, %v9120
        %v9122 = vpop.f32.mrf.mxu0
        %v9123 = vadd.f32 %v7790, %v9122
        %9124 = vmatprep.mubr.bf16.mxu0 0
        %9125 = vmatmul.mubr.bf16.gmra.mxu0 %v8342
        %v9126 = vpop.f32.mrf.mxu0
        %v9127 = vadd.f32 %v7794, %v9126
        %v9128 = vpop.f32.mrf.mxu0
        %v9129 = vadd.f32 %v7796, %v9128
        %v9130 = vpop.f32.mrf.mxu0
        %v9131 = vadd.f32 %v7798, %v9130
        %v9132 = vpop.f32.mrf.mxu0
        %v9133 = vadd.f32 %v7800, %v9132
        %9134 = vmatprep.mubr.bf16.mxu0 0
        %9135 = vmatmul.mubr.bf16.gmra.mxu0 %v8345
        %v9136 = vpop.f32.mrf.mxu0
        %v9137 = vadd.f32 %v7804, %v9136
        %v9138 = vpop.f32.mrf.mxu0
        %v9139 = vadd.f32 %v7806, %v9138
        %v9140 = vpop.f32.mrf.mxu0
        %v9141 = vadd.f32 %v7808, %v9140
        %v9142 = vpop.f32.mrf.mxu0
        %v9143 = vadd.f32 %v7810, %v9142
        %9144 = vmatprep.mubr.bf16.mxu0 0
        %9145 = vmatmul.mubr.bf16.gmra.mxu0 %v8348
        %v9146 = vpop.f32.mrf.mxu0
        %v9147 = vadd.f32 %v7814, %v9146
        %v9148 = vpop.f32.mrf.mxu0
        %v9149 = vadd.f32 %v7816, %v9148
        %v9150 = vpop.f32.mrf.mxu0
        %v9151 = vadd.f32 %v7818, %v9150
        %v9152 = vpop.f32.mrf.mxu0
        %v9153 = vadd.f32 %v7820, %v9152
        %9154 = vmatprep.mubr.bf16.mxu0 0
        %9155 = vmatmul.mubr.bf16.gmra.mxu0 %v8351
        %v9156 = vpop.f32.mrf.mxu0
        %v9157 = vadd.f32 %v7824, %v9156
        %v9158 = vpop.f32.mrf.mxu0
        %v9159 = vadd.f32 %v7826, %v9158
        %v9160 = vpop.f32.mrf.mxu0
        %v9161 = vadd.f32 %v7828, %v9160
        %v9162 = vpop.f32.mrf.mxu0
        %v9163 = vadd.f32 %v7830, %v9162
        %9164 = vmatprep.mubr.bf16.mxu0 0
        %9165 = vmatmul.mubr.bf16.gmra.mxu0 %v8354
        %v9166 = vpop.f32.mrf.mxu0
        %v9167 = vadd.f32 %v7834, %v9166
        %v9168 = vpop.f32.mrf.mxu0
        %v9169 = vadd.f32 %v7836, %v9168
        %v9170 = vpop.f32.mrf.mxu0
        %v9171 = vadd.f32 %v7838, %v9170
        %v9172 = vpop.f32.mrf.mxu0
        %v9173 = vadd.f32 %v7840, %v9172
        %9174 = vdwg.mxu0
        %9175 = vmatprep.subr.bf16.mxu0 0
        %9176 = vmatpush1.bf16.xpose.msra.mxu0 %v8522
        %9177 = vmatprep.subr.bf16.mxu0 0
        %9178 = vmatpush1.bf16.xpose.msra.mxu0 %v8519
        %9179 = vmatprep.subr.bf16.mxu0 0
        %9180 = vmatpush1.bf16.xpose.msra.mxu0 %v8516
        %9181 = vmatprep.subr.bf16.mxu0 0
        %9182 = vmatpush1.bf16.xpose.msra.mxu0 %v8513
        %9183 = vmatprep.subr.bf16.mxu0 0
        %9184 = vmatpush1.bf16.xpose.msra.mxu0 %v8510
        %9185 = vmatprep.subr.bf16.mxu0 0
        %9186 = vmatpush1.bf16.xpose.msra.mxu0 %v8507
        %9187 = vmatprep.subr.bf16.mxu0 0
        %9188 = vmatpush1.bf16.xpose.msra.mxu0 %v8504
        %9189 = vmatprep.subr.bf16.mxu0 0
        %9190 = vmatpush1.bf16.xpose.msra.mxu0 %v8501
        %9191 = vmatprep.subr.bf16.mxu0 0
        %9192 = vmatpush2.bf16.xpose.msra.mxu0 %v8546
        %9193 = vmatprep.subr.bf16.mxu0 0
        %9194 = vmatpush2.bf16.xpose.msra.mxu0 %v8543
        %9195 = vmatprep.subr.bf16.mxu0 0
        %9196 = vmatpush2.bf16.xpose.msra.mxu0 %v8540
        %9197 = vmatprep.subr.bf16.mxu0 0
        %9198 = vmatpush2.bf16.xpose.msra.mxu0 %v8537
        %9199 = vmatprep.subr.bf16.mxu0 0
        %9200 = vmatpush2.bf16.xpose.msra.mxu0 %v8534
        %9201 = vmatprep.subr.bf16.mxu0 0
        %9202 = vmatpush2.bf16.xpose.msra.mxu0 %v8531
        %9203 = vmatprep.subr.bf16.mxu0 0
        %9204 = vmatpush2.bf16.xpose.msra.mxu0 %v8528
        %9205 = vmatprep.subr.bf16.mxu0 0
        %9206 = vmatpush2.bf16.xpose.msra.mxu0 %v8525
        %9207 = vmatprep.mubr.bf16.mxu0 0
        %9208 = vmatmul.mubr.bf16.gmra.mxu0 %v8309
        %v9209 = vpop.f32.mrf.mxu0
        %v9210 = vadd.f32 %v7877, %v9209
        %v9211 = vpop.f32.mrf.mxu0
        %v9212 = vadd.f32 %v7879, %v9211
        %v9213 = vpop.f32.mrf.mxu0
        %v9214 = vadd.f32 %v7881, %v9213
        %v9215 = vpop.f32.mrf.mxu0
        %v9216 = vadd.f32 %v7883, %v9215
        %9217 = vmatprep.mubr.bf16.mxu0 0
        %9218 = vmatmul.mubr.bf16.gmra.mxu0 %v8312
        %v9219 = vpop.f32.mrf.mxu0
        %v9220 = vadd.f32 %v7887, %v9219
        %v9221 = vpop.f32.mrf.mxu0
        %v9222 = vadd.f32 %v7889, %v9221
        %v9223 = vpop.f32.mrf.mxu0
        %v9224 = vadd.f32 %v7891, %v9223
        %v9225 = vpop.f32.mrf.mxu0
        %v9226 = vadd.f32 %v7893, %v9225
        %9227 = vmatprep.mubr.bf16.mxu0 0
        %9228 = vmatmul.mubr.bf16.gmra.mxu0 %v8315
        %v9229 = vpop.f32.mrf.mxu0
        %v9230 = vadd.f32 %v7897, %v9229
        %v9231 = vpop.f32.mrf.mxu0
        %v9232 = vadd.f32 %v7899, %v9231
        %v9233 = vpop.f32.mrf.mxu0
        %v9234 = vadd.f32 %v7901, %v9233
        %v9235 = vpop.f32.mrf.mxu0
        %v9236 = vadd.f32 %v7903, %v9235
        %9237 = vmatprep.mubr.bf16.mxu0 0
        %9238 = vmatmul.mubr.bf16.gmra.mxu0 %v8318
        %v9239 = vpop.f32.mrf.mxu0
        %v9240 = vadd.f32 %v7907, %v9239
        %v9241 = vpop.f32.mrf.mxu0
        %v9242 = vadd.f32 %v7909, %v9241
        %v9243 = vpop.f32.mrf.mxu0
        %v9244 = vadd.f32 %v7911, %v9243
        %v9245 = vpop.f32.mrf.mxu0
        %v9246 = vadd.f32 %v7913, %v9245
        %9247 = vmatprep.mubr.bf16.mxu0 0
        %9248 = vmatmul.mubr.bf16.gmra.mxu0 %v8321
        %v9249 = vpop.f32.mrf.mxu0
        %v9250 = vadd.f32 %v7917, %v9249
        %v9251 = vpop.f32.mrf.mxu0
        %v9252 = vadd.f32 %v7919, %v9251
        %v9253 = vpop.f32.mrf.mxu0
        %v9254 = vadd.f32 %v7921, %v9253
        %v9255 = vpop.f32.mrf.mxu0
        %v9256 = vadd.f32 %v7923, %v9255
        %9257 = vmatprep.mubr.bf16.mxu0 0
        %9258 = vmatmul.mubr.bf16.gmra.mxu0 %v8324
        %v9259 = vpop.f32.mrf.mxu0
        %v9260 = vadd.f32 %v7927, %v9259
        %v9261 = vpop.f32.mrf.mxu0
        %v9262 = vadd.f32 %v7929, %v9261
        %v9263 = vpop.f32.mrf.mxu0
        %v9264 = vadd.f32 %v7931, %v9263
        %v9265 = vpop.f32.mrf.mxu0
        %v9266 = vadd.f32 %v7933, %v9265
        %9267 = vmatprep.mubr.bf16.mxu0 0
        %9268 = vmatmul.mubr.bf16.gmra.mxu0 %v8327
        %v9269 = vpop.f32.mrf.mxu0
        %v9270 = vadd.f32 %v7937, %v9269
        %v9271 = vpop.f32.mrf.mxu0
        %v9272 = vadd.f32 %v7939, %v9271
        %v9273 = vpop.f32.mrf.mxu0
        %v9274 = vadd.f32 %v7941, %v9273
        %v9275 = vpop.f32.mrf.mxu0
        %v9276 = vadd.f32 %v7943, %v9275
        %9277 = vmatprep.mubr.bf16.mxu0 0
        %9278 = vmatmul.mubr.bf16.gmra.mxu0 %v8330
        %v9279 = vpop.f32.mrf.mxu0
        %v9280 = vadd.f32 %v7947, %v9279
        %v9281 = vpop.f32.mrf.mxu0
        %v9282 = vadd.f32 %v7949, %v9281
        %v9283 = vpop.f32.mrf.mxu0
        %v9284 = vadd.f32 %v7951, %v9283
        %v9285 = vpop.f32.mrf.mxu0
        %v9286 = vadd.f32 %v7953, %v9285
        %9287 = vmatprep.mubr.bf16.mxu0 0
        %9288 = vmatmul.mubr.bf16.gmra.mxu0 %v8333
        %v9289 = vpop.f32.mrf.mxu0
        %v9290 = vadd.f32 %v7957, %v9289
        %v9291 = vpop.f32.mrf.mxu0
        %v9292 = vadd.f32 %v7959, %v9291
        %v9293 = vpop.f32.mrf.mxu0
        %v9294 = vadd.f32 %v7961, %v9293
        %v9295 = vpop.f32.mrf.mxu0
        %v9296 = vadd.f32 %v7963, %v9295
        %9297 = vmatprep.mubr.bf16.mxu0 0
        %9298 = vmatmul.mubr.bf16.gmra.mxu0 %v8336
        %v9299 = vpop.f32.mrf.mxu0
        %v9300 = vadd.f32 %v7967, %v9299
        %v9301 = vpop.f32.mrf.mxu0
        %v9302 = vadd.f32 %v7969, %v9301
        %v9303 = vpop.f32.mrf.mxu0
        %v9304 = vadd.f32 %v7971, %v9303
        %v9305 = vpop.f32.mrf.mxu0
        %v9306 = vadd.f32 %v7973, %v9305
        %9307 = vmatprep.mubr.bf16.mxu0 0
        %9308 = vmatmul.mubr.bf16.gmra.mxu0 %v8339
        %v9309 = vpop.f32.mrf.mxu0
        %v9310 = vadd.f32 %v7977, %v9309
        %v9311 = vpop.f32.mrf.mxu0
        %v9312 = vadd.f32 %v7979, %v9311
        %v9313 = vpop.f32.mrf.mxu0
        %v9314 = vadd.f32 %v7981, %v9313
        %v9315 = vpop.f32.mrf.mxu0
        %v9316 = vadd.f32 %v7983, %v9315
        %9317 = vmatprep.mubr.bf16.mxu0 0
        %9318 = vmatmul.mubr.bf16.gmra.mxu0 %v8342
        %v9319 = vpop.f32.mrf.mxu0
        %v9320 = vadd.f32 %v7987, %v9319
        %v9321 = vpop.f32.mrf.mxu0
        %v9322 = vadd.f32 %v7989, %v9321
        %v9323 = vpop.f32.mrf.mxu0
        %v9324 = vadd.f32 %v7991, %v9323
        %v9325 = vpop.f32.mrf.mxu0
        %v9326 = vadd.f32 %v7993, %v9325
        %9327 = vmatprep.mubr.bf16.mxu0 0
        %9328 = vmatmul.mubr.bf16.gmra.mxu0 %v8345
        %v9329 = vpop.f32.mrf.mxu0
        %v9330 = vadd.f32 %v7997, %v9329
        %v9331 = vpop.f32.mrf.mxu0
        %v9332 = vadd.f32 %v7999, %v9331
        %v9333 = vpop.f32.mrf.mxu0
        %v9334 = vadd.f32 %v8001, %v9333
        %v9335 = vpop.f32.mrf.mxu0
        %v9336 = vadd.f32 %v8003, %v9335
        %9337 = vmatprep.mubr.bf16.mxu0 0
        %9338 = vmatmul.mubr.bf16.gmra.mxu0 %v8348
        %v9339 = vpop.f32.mrf.mxu0
        %v9340 = vadd.f32 %v8007, %v9339
        %v9341 = vpop.f32.mrf.mxu0
        %v9342 = vadd.f32 %v8009, %v9341
        %v9343 = vpop.f32.mrf.mxu0
        %v9344 = vadd.f32 %v8011, %v9343
        %v9345 = vpop.f32.mrf.mxu0
        %v9346 = vadd.f32 %v8013, %v9345
        %9347 = vmatprep.mubr.bf16.mxu0 0
        %9348 = vmatmul.mubr.bf16.gmra.mxu0 %v8351
        %v9349 = vpop.f32.mrf.mxu0
        %v9350 = vadd.f32 %v8017, %v9349
        %v9351 = vpop.f32.mrf.mxu0
        %v9352 = vadd.f32 %v8019, %v9351
        %v9353 = vpop.f32.mrf.mxu0
        %v9354 = vadd.f32 %v8021, %v9353
        %v9355 = vpop.f32.mrf.mxu0
        %v9356 = vadd.f32 %v8023, %v9355
        %9357 = vmatprep.mubr.bf16.mxu0 0
        %9358 = vmatmul.mubr.bf16.gmra.mxu0 %v8354
        %v9359 = vpop.f32.mrf.mxu0
        %v9360 = vadd.f32 %v8027, %v9359
        %v9361 = vpop.f32.mrf.mxu0
        %v9362 = vadd.f32 %v8029, %v9361
        %v9363 = vpop.f32.mrf.mxu0
        %v9364 = vadd.f32 %v8031, %v9363
        %v9365 = vpop.f32.mrf.mxu0
        %v9366 = vadd.f32 %v8033, %v9365
        %9367 = vdwg.mxu0
        %9368 = vmatprep.subr.bf16.mxu0 0
        %9369 = vmatpush1.bf16.xpose.msra.mxu0 %v8570
        %9370 = vmatprep.subr.bf16.mxu0 0
        %9371 = vmatpush1.bf16.xpose.msra.mxu0 %v8567
        %9372 = vmatprep.subr.bf16.mxu0 0
        %9373 = vmatpush1.bf16.xpose.msra.mxu0 %v8564
        %9374 = vmatprep.subr.bf16.mxu0 0
        %9375 = vmatpush1.bf16.xpose.msra.mxu0 %v8561
        %9376 = vmatprep.subr.bf16.mxu0 0
        %9377 = vmatpush1.bf16.xpose.msra.mxu0 %v8558
        %9378 = vmatprep.subr.bf16.mxu0 0
        %9379 = vmatpush1.bf16.xpose.msra.mxu0 %v8555
        %9380 = vmatprep.subr.bf16.mxu0 0
        %9381 = vmatpush1.bf16.xpose.msra.mxu0 %v8552
        %9382 = vmatprep.subr.bf16.mxu0 0
        %9383 = vmatpush1.bf16.xpose.msra.mxu0 %v8549
        %9384 = vmatprep.subr.bf16.mxu0 0
        %9385 = vmatpush2.bf16.xpose.msra.mxu0 %v8594
        %9386 = vmatprep.subr.bf16.mxu0 0
        %9387 = vmatpush2.bf16.xpose.msra.mxu0 %v8591
        %9388 = vmatprep.subr.bf16.mxu0 0
        %9389 = vmatpush2.bf16.xpose.msra.mxu0 %v8588
        %9390 = vmatprep.subr.bf16.mxu0 0
        %9391 = vmatpush2.bf16.xpose.msra.mxu0 %v8585
        %9392 = vmatprep.subr.bf16.mxu0 0
        %9393 = vmatpush2.bf16.xpose.msra.mxu0 %v8582
        %9394 = vmatprep.subr.bf16.mxu0 0
        %9395 = vmatpush2.bf16.xpose.msra.mxu0 %v8579
        %9396 = vmatprep.subr.bf16.mxu0 0
        %9397 = vmatpush2.bf16.xpose.msra.mxu0 %v8576
        %9398 = vmatprep.subr.bf16.mxu0 0
        %9399 = vmatpush2.bf16.xpose.msra.mxu0 %v8573
        %9400 = vmatprep.mubr.bf16.mxu0 0
        %9401 = vmatmul.mubr.bf16.gmra.mxu0 %v8309
        %v9402 = vpop.f32.mrf.mxu0
        %v9403 = vadd.f32 %v8070, %v9402
        %v9404 = vpop.f32.mrf.mxu0
        %v9405 = vadd.f32 %v8072, %v9404
        %v9406 = vpop.f32.mrf.mxu0
        %v9407 = vadd.f32 %v8074, %v9406
        %v9408 = vpop.f32.mrf.mxu0
        %v9409 = vadd.f32 %v8076, %v9408
        %9410 = vmatprep.mubr.bf16.mxu0 0
        %9411 = vmatmul.mubr.bf16.gmra.mxu0 %v8312
        %v9412 = vpop.f32.mrf.mxu0
        %v9413 = vadd.f32 %v8080, %v9412
        %v9414 = vpop.f32.mrf.mxu0
        %v9415 = vadd.f32 %v8082, %v9414
        %v9416 = vpop.f32.mrf.mxu0
        %v9417 = vadd.f32 %v8084, %v9416
        %v9418 = vpop.f32.mrf.mxu0
        %v9419 = vadd.f32 %v8086, %v9418
        %9420 = vmatprep.mubr.bf16.mxu0 0
        %9421 = vmatmul.mubr.bf16.gmra.mxu0 %v8315
        %v9422 = vpop.f32.mrf.mxu0
        %v9423 = vadd.f32 %v8090, %v9422
        %v9424 = vpop.f32.mrf.mxu0
        %v9425 = vadd.f32 %v8092, %v9424
        %v9426 = vpop.f32.mrf.mxu0
        %v9427 = vadd.f32 %v8094, %v9426
        %v9428 = vpop.f32.mrf.mxu0
        %v9429 = vadd.f32 %v8096, %v9428
        %9430 = vmatprep.mubr.bf16.mxu0 0
        %9431 = vmatmul.mubr.bf16.gmra.mxu0 %v8318
        %v9432 = vpop.f32.mrf.mxu0
        %v9433 = vadd.f32 %v8100, %v9432
        %v9434 = vpop.f32.mrf.mxu0
        %v9435 = vadd.f32 %v8102, %v9434
        %v9436 = vpop.f32.mrf.mxu0
        %v9437 = vadd.f32 %v8104, %v9436
        %v9438 = vpop.f32.mrf.mxu0
        %v9439 = vadd.f32 %v8106, %v9438
        %9440 = vmatprep.mubr.bf16.mxu0 0
        %9441 = vmatmul.mubr.bf16.gmra.mxu0 %v8321
        %v9442 = vpop.f32.mrf.mxu0
        %v9443 = vadd.f32 %v8110, %v9442
        %v9444 = vpop.f32.mrf.mxu0
        %v9445 = vadd.f32 %v8112, %v9444
        %v9446 = vpop.f32.mrf.mxu0
        %v9447 = vadd.f32 %v8114, %v9446
        %v9448 = vpop.f32.mrf.mxu0
        %v9449 = vadd.f32 %v8116, %v9448
        %9450 = vmatprep.mubr.bf16.mxu0 0
        %9451 = vmatmul.mubr.bf16.gmra.mxu0 %v8324
        %v9452 = vpop.f32.mrf.mxu0
        %v9453 = vadd.f32 %v8120, %v9452
        %v9454 = vpop.f32.mrf.mxu0
        %v9455 = vadd.f32 %v8122, %v9454
        %v9456 = vpop.f32.mrf.mxu0
        %v9457 = vadd.f32 %v8124, %v9456
        %v9458 = vpop.f32.mrf.mxu0
        %v9459 = vadd.f32 %v8126, %v9458
        %9460 = vmatprep.mubr.bf16.mxu0 0
        %9461 = vmatmul.mubr.bf16.gmra.mxu0 %v8327
        %v9462 = vpop.f32.mrf.mxu0
        %v9463 = vadd.f32 %v8130, %v9462
        %v9464 = vpop.f32.mrf.mxu0
        %v9465 = vadd.f32 %v8132, %v9464
        %v9466 = vpop.f32.mrf.mxu0
        %v9467 = vadd.f32 %v8134, %v9466
        %v9468 = vpop.f32.mrf.mxu0
        %v9469 = vadd.f32 %v8136, %v9468
        %9470 = vmatprep.mubr.bf16.mxu0 0
        %9471 = vmatmul.mubr.bf16.gmra.mxu0 %v8330
        %v9472 = vpop.f32.mrf.mxu0
        %v9473 = vadd.f32 %v8140, %v9472
        %v9474 = vpop.f32.mrf.mxu0
        %v9475 = vadd.f32 %v8142, %v9474
        %v9476 = vpop.f32.mrf.mxu0
        %v9477 = vadd.f32 %v8144, %v9476
        %v9478 = vpop.f32.mrf.mxu0
        %v9479 = vadd.f32 %v8146, %v9478
        %9480 = vmatprep.mubr.bf16.mxu0 0
        %9481 = vmatmul.mubr.bf16.gmra.mxu0 %v8333
        %v9482 = vpop.f32.mrf.mxu0
        %v9483 = vadd.f32 %v8150, %v9482
        %v9484 = vpop.f32.mrf.mxu0
        %v9485 = vadd.f32 %v8152, %v9484
        %v9486 = vpop.f32.mrf.mxu0
        %v9487 = vadd.f32 %v8154, %v9486
        %v9488 = vpop.f32.mrf.mxu0
        %v9489 = vadd.f32 %v8156, %v9488
        %9490 = vmatprep.mubr.bf16.mxu0 0
        %9491 = vmatmul.mubr.bf16.gmra.mxu0 %v8336
        %v9492 = vpop.f32.mrf.mxu0
        %v9493 = vadd.f32 %v8160, %v9492
        %v9494 = vpop.f32.mrf.mxu0
        %v9495 = vadd.f32 %v8162, %v9494
        %v9496 = vpop.f32.mrf.mxu0
        %v9497 = vadd.f32 %v8164, %v9496
        %v9498 = vpop.f32.mrf.mxu0
        %v9499 = vadd.f32 %v8166, %v9498
        %9500 = vmatprep.mubr.bf16.mxu0 0
        %9501 = vmatmul.mubr.bf16.gmra.mxu0 %v8339
        %v9502 = vpop.f32.mrf.mxu0
        %v9503 = vadd.f32 %v8170, %v9502
        %v9504 = vpop.f32.mrf.mxu0
        %v9505 = vadd.f32 %v8172, %v9504
        %v9506 = vpop.f32.mrf.mxu0
        %v9507 = vadd.f32 %v8174, %v9506
        %v9508 = vpop.f32.mrf.mxu0
        %v9509 = vadd.f32 %v8176, %v9508
        %9510 = vmatprep.mubr.bf16.mxu0 0
        %9511 = vmatmul.mubr.bf16.gmra.mxu0 %v8342
        %v9512 = vpop.f32.mrf.mxu0
        %v9513 = vadd.f32 %v8180, %v9512
        %v9514 = vpop.f32.mrf.mxu0
        %v9515 = vadd.f32 %v8182, %v9514
        %v9516 = vpop.f32.mrf.mxu0
        %v9517 = vadd.f32 %v8184, %v9516
        %v9518 = vpop.f32.mrf.mxu0
        %v9519 = vadd.f32 %v8186, %v9518
        %9520 = vmatprep.mubr.bf16.mxu0 0
        %9521 = vmatmul.mubr.bf16.gmra.mxu0 %v8345
        %v9522 = vpop.f32.mrf.mxu0
        %v9523 = vadd.f32 %v8190, %v9522
        %v9524 = vpop.f32.mrf.mxu0
        %v9525 = vadd.f32 %v8192, %v9524
        %v9526 = vpop.f32.mrf.mxu0
        %v9527 = vadd.f32 %v8194, %v9526
        %v9528 = vpop.f32.mrf.mxu0
        %v9529 = vadd.f32 %v8196, %v9528
        %9530 = vmatprep.mubr.bf16.mxu0 0
        %9531 = vmatmul.mubr.bf16.gmra.mxu0 %v8348
        %v9532 = vpop.f32.mrf.mxu0
        %v9533 = vadd.f32 %v8200, %v9532
        %v9534 = vpop.f32.mrf.mxu0
        %v9535 = vadd.f32 %v8202, %v9534
        %v9536 = vpop.f32.mrf.mxu0
        %v9537 = vadd.f32 %v8204, %v9536
        %v9538 = vpop.f32.mrf.mxu0
        %v9539 = vadd.f32 %v8206, %v9538
        %9540 = vmatprep.mubr.bf16.mxu0 0
        %9541 = vmatmul.mubr.bf16.gmra.mxu0 %v8351
        %v9542 = vpop.f32.mrf.mxu0
        %v9543 = vadd.f32 %v8210, %v9542
        %v9544 = vpop.f32.mrf.mxu0
        %v9545 = vadd.f32 %v8212, %v9544
        %v9546 = vpop.f32.mrf.mxu0
        %v9547 = vadd.f32 %v8214, %v9546
        %v9548 = vpop.f32.mrf.mxu0
        %v9549 = vadd.f32 %v8216, %v9548
        %9550 = vmatprep.mubr.bf16.mxu0 0
        %9551 = vmatmul.mubr.bf16.gmra.mxu0 %v8354
        %v9552 = vpop.f32.mrf.mxu0
        %v9553 = vadd.f32 %v8220, %v9552
        %v9554 = vpop.f32.mrf.mxu0
        %v9555 = vadd.f32 %v8222, %v9554
        %v9556 = vpop.f32.mrf.mxu0
        %v9557 = vadd.f32 %v8224, %v9556
        %v9558 = vpop.f32.mrf.mxu0
        %v9559 = vadd.f32 %v8226, %v9558
        %9560 = vdwg.mxu0
        %v9561 = vld [vmem:[%s10] sm:$0xff]
        %v9562 = vld [vmem:[%s10 + $0x8] sm:$0xff]
        %v9563 = vld [vmem:[%s10 + $0x10] sm:$0xff]
        %v9564 = vld [vmem:[%s10 + $0x18] sm:$0xff]
        %v9565 = vld [vmem:[%s10 + $0x20] sm:$0xff]
        %v9566 = vld [vmem:[%s10 + $0x28] sm:$0xff]
        %v9567 = vld [vmem:[%s10 + $0x30] sm:$0xff]
        %v9568 = vld [vmem:[%s10 + $0x38] sm:$0xff]
        %v9569 = vld [vmem:[%s10 + $0x40] sm:$0xff]
        %v9570 = vld [vmem:[%s10 + $0x48] sm:$0xff]
        %v9571 = vld [vmem:[%s10 + $0x50] sm:$0xff]
        %v9572 = vld [vmem:[%s10 + $0x58] sm:$0xff]
        %v9573 = vld [vmem:[%s10 + $0x60] sm:$0xff]
        %v9574 = vld [vmem:[%s10 + $0x68] sm:$0xff]
        %v9575 = vld [vmem:[%s10 + $0x70] sm:$0xff]
        %v9576 = vld [vmem:[%s10 + $0x78] sm:$0xff]
        %v9577 = vld [vmem:[%s10 + $0x80] sm:$0xff]
        %v9578 = vld [vmem:[%s10 + $0x88] sm:$0xff]
        %v9579 = vld [vmem:[%s10 + $0x90] sm:$0xff]
        %v9580 = vld [vmem:[%s10 + $0x98] sm:$0xff]
        %v9581 = vld [vmem:[%s10 + $0xa0] sm:$0xff]
        %v9582 = vld [vmem:[%s10 + $0xa8] sm:$0xff]
        %v9583 = vld [vmem:[%s10 + $0xb0] sm:$0xff]
        %v9584 = vld [vmem:[%s10 + $0xb8] sm:$0xff]
        %v9585 = vld [vmem:[%s10 + $0xc0] sm:$0xff]
        %v9586 = vld [vmem:[%s10 + $0xc8] sm:$0xff]
        %v9587 = vld [vmem:[%s10 + $0xd0] sm:$0xff]
        %v9588 = vld [vmem:[%s10 + $0xd8] sm:$0xff]
        %v9589 = vld [vmem:[%s10 + $0xe0] sm:$0xff]
        %v9590 = vld [vmem:[%s10 + $0xe8] sm:$0xff]
        %v9591 = vld [vmem:[%s10 + $0xf0] sm:$0xff]
        %v9592 = vld [vmem:[%s10 + $0xf8] sm:$0xff]
        %9594 = vset.pattern.permute.xlu0 0
        %9595 = vperm.xlu0 %9594, %v9561
        %v9596 = vpop.permute.xlu0 %9595
        %9599 = vset.pattern.permute.xlu0 0
        %9600 = vperm.xlu0 %9599, %v9562
        %v9601 = vpop.permute.xlu0 %9600
        %9604 = vset.pattern.permute.xlu0 0
        %9605 = vperm.xlu0 %9604, %v9563
        %v9606 = vpop.permute.xlu0 %9605
        %9609 = vset.pattern.permute.xlu0 0
        %9610 = vperm.xlu0 %9609, %v9564
        %v9611 = vpop.permute.xlu0 %9610
        %9614 = vset.pattern.permute.xlu0 0
        %9615 = vperm.xlu0 %9614, %v9565
        %v9616 = vpop.permute.xlu0 %9615
        %9619 = vset.pattern.permute.xlu0 0
        %9620 = vperm.xlu0 %9619, %v9566
        %v9621 = vpop.permute.xlu0 %9620
        %9624 = vset.pattern.permute.xlu0 0
        %9625 = vperm.xlu0 %9624, %v9567
        %v9626 = vpop.permute.xlu0 %9625
        %9629 = vset.pattern.permute.xlu0 0
        %9630 = vperm.xlu0 %9629, %v9568
        %v9631 = vpop.permute.xlu0 %9630
        %9634 = vset.pattern.permute.xlu0 0
        %9635 = vperm.xlu0 %9634, %v9569
        %v9636 = vpop.permute.xlu0 %9635
        %9639 = vset.pattern.permute.xlu0 0
        %9640 = vperm.xlu0 %9639, %v9570
        %v9641 = vpop.permute.xlu0 %9640
        %9644 = vset.pattern.permute.xlu0 0
        %9645 = vperm.xlu0 %9644, %v9571
        %v9646 = vpop.permute.xlu0 %9645
        %9649 = vset.pattern.permute.xlu0 0
        %9650 = vperm.xlu0 %9649, %v9572
        %v9651 = vpop.permute.xlu0 %9650
        %9654 = vset.pattern.permute.xlu0 0
        %9655 = vperm.xlu0 %9654, %v9573
        %v9656 = vpop.permute.xlu0 %9655
        %9659 = vset.pattern.permute.xlu0 0
        %9660 = vperm.xlu0 %9659, %v9574
        %v9661 = vpop.permute.xlu0 %9660
        %9664 = vset.pattern.permute.xlu0 0
        %9665 = vperm.xlu0 %9664, %v9575
        %v9666 = vpop.permute.xlu0 %9665
        %9669 = vset.pattern.permute.xlu0 0
        %9670 = vperm.xlu0 %9669, %v9576
        %v9671 = vpop.permute.xlu0 %9670
        %9674 = vset.pattern.permute.xlu0 0
        %9675 = vperm.xlu0 %9674, %v9577
        %v9676 = vpop.permute.xlu0 %9675
        %9679 = vset.pattern.permute.xlu0 0
        %9680 = vperm.xlu0 %9679, %v9578
        %v9681 = vpop.permute.xlu0 %9680
        %9684 = vset.pattern.permute.xlu0 0
        %9685 = vperm.xlu0 %9684, %v9579
        %v9686 = vpop.permute.xlu0 %9685
        %9689 = vset.pattern.permute.xlu0 0
        %9690 = vperm.xlu0 %9689, %v9580
        %v9691 = vpop.permute.xlu0 %9690
        %9694 = vset.pattern.permute.xlu0 0
        %9695 = vperm.xlu0 %9694, %v9581
        %v9696 = vpop.permute.xlu0 %9695
        %9699 = vset.pattern.permute.xlu0 0
        %9700 = vperm.xlu0 %9699, %v9582
        %v9701 = vpop.permute.xlu0 %9700
        %9704 = vset.pattern.permute.xlu0 0
        %9705 = vperm.xlu0 %9704, %v9583
        %v9706 = vpop.permute.xlu0 %9705
        %9709 = vset.pattern.permute.xlu0 0
        %9710 = vperm.xlu0 %9709, %v9584
        %v9711 = vpop.permute.xlu0 %9710
        %9714 = vset.pattern.permute.xlu0 0
        %9715 = vperm.xlu0 %9714, %v9585
        %v9716 = vpop.permute.xlu0 %9715
        %9719 = vset.pattern.permute.xlu0 0
        %9720 = vperm.xlu0 %9719, %v9586
        %v9721 = vpop.permute.xlu0 %9720
        %9724 = vset.pattern.permute.xlu0 0
        %9725 = vperm.xlu0 %9724, %v9587
        %v9726 = vpop.permute.xlu0 %9725
        %9729 = vset.pattern.permute.xlu0 0
        %9730 = vperm.xlu0 %9729, %v9588
        %v9731 = vpop.permute.xlu0 %9730
        %9734 = vset.pattern.permute.xlu0 0
        %9735 = vperm.xlu0 %9734, %v9589
        %v9736 = vpop.permute.xlu0 %9735
        %9739 = vset.pattern.permute.xlu0 0
        %9740 = vperm.xlu0 %9739, %v9590
        %v9741 = vpop.permute.xlu0 %9740
        %9744 = vset.pattern.permute.xlu0 0
        %9745 = vperm.xlu0 %9744, %v9591
        %v9746 = vpop.permute.xlu0 %9745
        %9749 = vset.pattern.permute.xlu0 0
        %9750 = vperm.xlu0 %9749, %v9592
        %v9751 = vpop.permute.xlu0 %9750
        %v9753 = vadd.f32 %v8631, %v9596
        %v9754 = vadd.f32 %v8633, %v9596
        %v9755 = vadd.f32 %v8824, %v9596
        %v9756 = vadd.f32 %v8826, %v9596
        %v9757 = vadd.f32 %v9017, %v9596
        %v9758 = vadd.f32 %v9019, %v9596
        %v9759 = vadd.f32 %v9210, %v9596
        %v9760 = vadd.f32 %v9212, %v9596
        %v9761 = vadd.f32 %v9403, %v9596
        %v9762 = vadd.f32 %v9405, %v9596
        %v9763 = vadd.f32 %v8635, %v9601
        %v9764 = vadd.f32 %v8637, %v9601
        %v9765 = vadd.f32 %v8828, %v9601
        %v9766 = vadd.f32 %v8830, %v9601
        %v9767 = vadd.f32 %v9021, %v9601
        %v9768 = vadd.f32 %v9023, %v9601
        %v9769 = vadd.f32 %v9214, %v9601
        %v9770 = vadd.f32 %v9216, %v9601
        %v9771 = vadd.f32 %v9407, %v9601
        %v9772 = vadd.f32 %v9409, %v9601
        %v9773 = vadd.f32 %v8641, %v9606
        %v9774 = vadd.f32 %v8643, %v9606
        %v9775 = vadd.f32 %v8834, %v9606
        %v9776 = vadd.f32 %v8836, %v9606
        %v9777 = vadd.f32 %v9027, %v9606
        %v9778 = vadd.f32 %v9029, %v9606
        %v9779 = vadd.f32 %v9220, %v9606
        %v9780 = vadd.f32 %v9222, %v9606
        %v9781 = vadd.f32 %v9413, %v9606
        %v9782 = vadd.f32 %v9415, %v9606
        %v9783 = vadd.f32 %v8645, %v9611
        %v9784 = vadd.f32 %v8647, %v9611
        %v9785 = vadd.f32 %v8838, %v9611
        %v9786 = vadd.f32 %v8840, %v9611
        %v9787 = vadd.f32 %v9031, %v9611
        %v9788 = vadd.f32 %v9033, %v9611
        %v9789 = vadd.f32 %v9224, %v9611
        %v9790 = vadd.f32 %v9226, %v9611
        %v9791 = vadd.f32 %v9417, %v9611
        %v9792 = vadd.f32 %v9419, %v9611
        %v9793 = vadd.f32 %v8651, %v9616
        %v9794 = vadd.f32 %v8653, %v9616
        %v9795 = vadd.f32 %v8844, %v9616
        %v9796 = vadd.f32 %v8846, %v9616
        %v9797 = vadd.f32 %v9037, %v9616
        %v9798 = vadd.f32 %v9039, %v9616
        %v9799 = vadd.f32 %v9230, %v9616
        %v9800 = vadd.f32 %v9232, %v9616
        %v9801 = vadd.f32 %v9423, %v9616
        %v9802 = vadd.f32 %v9425, %v9616
        %v9803 = vadd.f32 %v8655, %v9621
        %v9804 = vadd.f32 %v8657, %v9621
        %v9805 = vadd.f32 %v8848, %v9621
        %v9806 = vadd.f32 %v8850, %v9621
        %v9807 = vadd.f32 %v9041, %v9621
        %v9808 = vadd.f32 %v9043, %v9621
        %v9809 = vadd.f32 %v9234, %v9621
        %v9810 = vadd.f32 %v9236, %v9621
        %v9811 = vadd.f32 %v9427, %v9621
        %v9812 = vadd.f32 %v9429, %v9621
        %v9813 = vadd.f32 %v8661, %v9626
        %v9814 = vadd.f32 %v8663, %v9626
        %v9815 = vadd.f32 %v8854, %v9626
        %v9816 = vadd.f32 %v8856, %v9626
        %v9817 = vadd.f32 %v9047, %v9626
        %v9818 = vadd.f32 %v9049, %v9626
        %v9819 = vadd.f32 %v9240, %v9626
        %v9820 = vadd.f32 %v9242, %v9626
        %v9821 = vadd.f32 %v9433, %v9626
        %v9822 = vadd.f32 %v9435, %v9626
        %v9823 = vadd.f32 %v8665, %v9631
        %v9824 = vadd.f32 %v8667, %v9631
        %v9825 = vadd.f32 %v8858, %v9631
        %v9826 = vadd.f32 %v8860, %v9631
        %v9827 = vadd.f32 %v9051, %v9631
        %v9828 = vadd.f32 %v9053, %v9631
        %v9829 = vadd.f32 %v9244, %v9631
        %v9830 = vadd.f32 %v9246, %v9631
        %v9831 = vadd.f32 %v9437, %v9631
        %v9832 = vadd.f32 %v9439, %v9631
        %v9833 = vadd.f32 %v8671, %v9636
        %v9834 = vadd.f32 %v8673, %v9636
        %v9835 = vadd.f32 %v8864, %v9636
        %v9836 = vadd.f32 %v8866, %v9636
        %v9837 = vadd.f32 %v9057, %v9636
        %v9838 = vadd.f32 %v9059, %v9636
        %v9839 = vadd.f32 %v9250, %v9636
        %v9840 = vadd.f32 %v9252, %v9636
        %v9841 = vadd.f32 %v9443, %v9636
        %v9842 = vadd.f32 %v9445, %v9636
        %v9843 = vadd.f32 %v8675, %v9641
        %v9844 = vadd.f32 %v8677, %v9641
        %v9845 = vadd.f32 %v8868, %v9641
        %v9846 = vadd.f32 %v8870, %v9641
        %v9847 = vadd.f32 %v9061, %v9641
        %v9848 = vadd.f32 %v9063, %v9641
        %v9849 = vadd.f32 %v9254, %v9641
        %v9850 = vadd.f32 %v9256, %v9641
        %v9851 = vadd.f32 %v9447, %v9641
        %v9852 = vadd.f32 %v9449, %v9641
        %v9853 = vadd.f32 %v8681, %v9646
        %v9854 = vadd.f32 %v8683, %v9646
        %v9855 = vadd.f32 %v8874, %v9646
        %v9856 = vadd.f32 %v8876, %v9646
        %v9857 = vadd.f32 %v9067, %v9646
        %v9858 = vadd.f32 %v9069, %v9646
        %v9859 = vadd.f32 %v9260, %v9646
        %v9860 = vadd.f32 %v9262, %v9646
        %v9861 = vadd.f32 %v9453, %v9646
        %v9862 = vadd.f32 %v9455, %v9646
        %v9863 = vadd.f32 %v8685, %v9651
        %v9864 = vadd.f32 %v8687, %v9651
        %v9865 = vadd.f32 %v8878, %v9651
        %v9866 = vadd.f32 %v8880, %v9651
        %v9867 = vadd.f32 %v9071, %v9651
        %v9868 = vadd.f32 %v9073, %v9651
        %v9869 = vadd.f32 %v9264, %v9651
        %v9870 = vadd.f32 %v9266, %v9651
        %v9871 = vadd.f32 %v9457, %v9651
        %v9872 = vadd.f32 %v9459, %v9651
        %v9873 = vadd.f32 %v8691, %v9656
        %v9874 = vadd.f32 %v8693, %v9656
        %v9875 = vadd.f32 %v8884, %v9656
        %v9876 = vadd.f32 %v8886, %v9656
        %v9877 = vadd.f32 %v9077, %v9656
        %v9878 = vadd.f32 %v9079, %v9656
        %v9879 = vadd.f32 %v9270, %v9656
        %v9880 = vadd.f32 %v9272, %v9656
        %v9881 = vadd.f32 %v9463, %v9656
        %v9882 = vadd.f32 %v9465, %v9656
        %v9883 = vadd.f32 %v8695, %v9661
        %v9884 = vadd.f32 %v8697, %v9661
        %v9885 = vadd.f32 %v8888, %v9661
        %v9886 = vadd.f32 %v8890, %v9661
        %v9887 = vadd.f32 %v9081, %v9661
        %v9888 = vadd.f32 %v9083, %v9661
        %v9889 = vadd.f32 %v9274, %v9661
        %v9890 = vadd.f32 %v9276, %v9661
        %v9891 = vadd.f32 %v9467, %v9661
        %v9892 = vadd.f32 %v9469, %v9661
        %v9893 = vadd.f32 %v8701, %v9666
        %v9894 = vadd.f32 %v8703, %v9666
        %v9895 = vadd.f32 %v8894, %v9666
        %v9896 = vadd.f32 %v8896, %v9666
        %v9897 = vadd.f32 %v9087, %v9666
        %v9898 = vadd.f32 %v9089, %v9666
        %v9899 = vadd.f32 %v9280, %v9666
        %v9900 = vadd.f32 %v9282, %v9666
        %v9901 = vadd.f32 %v9473, %v9666
        %v9902 = vadd.f32 %v9475, %v9666
        %v9903 = vadd.f32 %v8705, %v9671
        %v9904 = vadd.f32 %v8707, %v9671
        %v9905 = vadd.f32 %v8898, %v9671
        %v9906 = vadd.f32 %v8900, %v9671
        %v9907 = vadd.f32 %v9091, %v9671
        %v9908 = vadd.f32 %v9093, %v9671
        %v9909 = vadd.f32 %v9284, %v9671
        %v9910 = vadd.f32 %v9286, %v9671
        %v9911 = vadd.f32 %v9477, %v9671
        %v9912 = vadd.f32 %v9479, %v9671
        %v9913 = vadd.f32 %v8711, %v9676
        %v9914 = vadd.f32 %v8713, %v9676
        %v9915 = vadd.f32 %v8904, %v9676
        %v9916 = vadd.f32 %v8906, %v9676
        %v9917 = vadd.f32 %v9097, %v9676
        %v9918 = vadd.f32 %v9099, %v9676
        %v9919 = vadd.f32 %v9290, %v9676
        %v9920 = vadd.f32 %v9292, %v9676
        %v9921 = vadd.f32 %v9483, %v9676
        %v9922 = vadd.f32 %v9485, %v9676
        %v9923 = vadd.f32 %v8715, %v9681
        %v9924 = vadd.f32 %v8717, %v9681
        %v9925 = vadd.f32 %v8908, %v9681
        %v9926 = vadd.f32 %v8910, %v9681
        %v9927 = vadd.f32 %v9101, %v9681
        %v9928 = vadd.f32 %v9103, %v9681
        %v9929 = vadd.f32 %v9294, %v9681
        %v9930 = vadd.f32 %v9296, %v9681
        %v9931 = vadd.f32 %v9487, %v9681
        %v9932 = vadd.f32 %v9489, %v9681
        %v9933 = vadd.f32 %v8721, %v9686
        %v9934 = vadd.f32 %v8723, %v9686
        %v9935 = vadd.f32 %v8914, %v9686
        %v9936 = vadd.f32 %v8916, %v9686
        %v9937 = vadd.f32 %v9107, %v9686
        %v9938 = vadd.f32 %v9109, %v9686
        %v9939 = vadd.f32 %v9300, %v9686
        %v9940 = vadd.f32 %v9302, %v9686
        %v9941 = vadd.f32 %v9493, %v9686
        %v9942 = vadd.f32 %v9495, %v9686
        %v9943 = vadd.f32 %v8725, %v9691
        %v9944 = vadd.f32 %v8727, %v9691
        %v9945 = vadd.f32 %v8918, %v9691
        %v9946 = vadd.f32 %v8920, %v9691
        %v9947 = vadd.f32 %v9111, %v9691
        %v9948 = vadd.f32 %v9113, %v9691
        %v9949 = vadd.f32 %v9304, %v9691
        %v9950 = vadd.f32 %v9306, %v9691
        %v9951 = vadd.f32 %v9497, %v9691
        %v9952 = vadd.f32 %v9499, %v9691
        %v9953 = vadd.f32 %v8731, %v9696
        %v9954 = vadd.f32 %v8733, %v9696
        %v9955 = vadd.f32 %v8924, %v9696
        %v9956 = vadd.f32 %v8926, %v9696
        %v9957 = vadd.f32 %v9117, %v9696
        %v9958 = vadd.f32 %v9119, %v9696
        %v9959 = vadd.f32 %v9310, %v9696
        %v9960 = vadd.f32 %v9312, %v9696
        %v9961 = vadd.f32 %v9503, %v9696
        %v9962 = vadd.f32 %v9505, %v9696
        %v9963 = vadd.f32 %v8735, %v9701
        %v9964 = vadd.f32 %v8737, %v9701
        %v9965 = vadd.f32 %v8928, %v9701
        %v9966 = vadd.f32 %v8930, %v9701
        %v9967 = vadd.f32 %v9121, %v9701
        %v9968 = vadd.f32 %v9123, %v9701
        %v9969 = vadd.f32 %v9314, %v9701
        %v9970 = vadd.f32 %v9316, %v9701
        %v9971 = vadd.f32 %v9507, %v9701
        %v9972 = vadd.f32 %v9509, %v9701
        %v9973 = vadd.f32 %v8741, %v9706
        %v9974 = vadd.f32 %v8743, %v9706
        %v9975 = vadd.f32 %v8934, %v9706
        %v9976 = vadd.f32 %v8936, %v9706
        %v9977 = vadd.f32 %v9127, %v9706
        %v9978 = vadd.f32 %v9129, %v9706
        %v9979 = vadd.f32 %v9320, %v9706
        %v9980 = vadd.f32 %v9322, %v9706
        %v9981 = vadd.f32 %v9513, %v9706
        %v9982 = vadd.f32 %v9515, %v9706
        %v9983 = vadd.f32 %v8745, %v9711
        %v9984 = vadd.f32 %v8747, %v9711
        %v9985 = vadd.f32 %v8938, %v9711
        %v9986 = vadd.f32 %v8940, %v9711
        %v9987 = vadd.f32 %v9131, %v9711
        %v9988 = vadd.f32 %v9133, %v9711
        %v9989 = vadd.f32 %v9324, %v9711
        %v9990 = vadd.f32 %v9326, %v9711
        %v9991 = vadd.f32 %v9517, %v9711
        %v9992 = vadd.f32 %v9519, %v9711
        %v9993 = vadd.f32 %v8751, %v9716
        %v9994 = vadd.f32 %v8753, %v9716
        %v9995 = vadd.f32 %v8944, %v9716
        %v9996 = vadd.f32 %v8946, %v9716
        %v9997 = vadd.f32 %v9137, %v9716
        %v9998 = vadd.f32 %v9139, %v9716
        %v9999 = vadd.f32 %v9330, %v9716
        %v10000 = vadd.f32 %v9332, %v9716
        %v10001 = vadd.f32 %v9523, %v9716
        %v10002 = vadd.f32 %v9525, %v9716
        %v10003 = vadd.f32 %v8755, %v9721
        %v10004 = vadd.f32 %v8757, %v9721
        %v10005 = vadd.f32 %v8948, %v9721
        %v10006 = vadd.f32 %v8950, %v9721
        %v10007 = vadd.f32 %v9141, %v9721
        %v10008 = vadd.f32 %v9143, %v9721
        %v10009 = vadd.f32 %v9334, %v9721
        %v10010 = vadd.f32 %v9336, %v9721
        %v10011 = vadd.f32 %v9527, %v9721
        %v10012 = vadd.f32 %v9529, %v9721
        %v10013 = vadd.f32 %v8761, %v9726
        %v10014 = vadd.f32 %v8763, %v9726
        %v10015 = vadd.f32 %v8954, %v9726
        %v10016 = vadd.f32 %v8956, %v9726
        %v10017 = vadd.f32 %v9147, %v9726
        %v10018 = vadd.f32 %v9149, %v9726
        %v10019 = vadd.f32 %v9340, %v9726
        %v10020 = vadd.f32 %v9342, %v9726
        %v10021 = vadd.f32 %v9533, %v9726
        %v10022 = vadd.f32 %v9535, %v9726
        %v10023 = vadd.f32 %v8765, %v9731
        %v10024 = vadd.f32 %v8767, %v9731
        %v10025 = vadd.f32 %v8958, %v9731
        %v10026 = vadd.f32 %v8960, %v9731
        %v10027 = vadd.f32 %v9151, %v9731
        %v10028 = vadd.f32 %v9153, %v9731
        %v10029 = vadd.f32 %v9344, %v9731
        %v10030 = vadd.f32 %v9346, %v9731
        %v10031 = vadd.f32 %v9537, %v9731
        %v10032 = vadd.f32 %v9539, %v9731
        %v10033 = vadd.f32 %v8771, %v9736
        %v10034 = vadd.f32 %v8773, %v9736
        %v10035 = vadd.f32 %v8964, %v9736
        %v10036 = vadd.f32 %v8966, %v9736
        %v10037 = vadd.f32 %v9157, %v9736
        %v10038 = vadd.f32 %v9159, %v9736
        %v10039 = vadd.f32 %v9350, %v9736
        %v10040 = vadd.f32 %v9352, %v9736
        %v10041 = vadd.f32 %v9543, %v9736
        %v10042 = vadd.f32 %v9545, %v9736
        %v10043 = vadd.f32 %v8775, %v9741
        %v10044 = vadd.f32 %v8777, %v9741
        %v10045 = vadd.f32 %v8968, %v9741
        %v10046 = vadd.f32 %v8970, %v9741
        %v10047 = vadd.f32 %v9161, %v9741
        %v10048 = vadd.f32 %v9163, %v9741
        %v10049 = vadd.f32 %v9354, %v9741
        %v10050 = vadd.f32 %v9356, %v9741
        %v10051 = vadd.f32 %v9547, %v9741
        %v10052 = vadd.f32 %v9549, %v9741
        %v10053 = vadd.f32 %v8781, %v9746
        %v10054 = vadd.f32 %v8783, %v9746
        %v10055 = vadd.f32 %v8974, %v9746
        %v10056 = vadd.f32 %v8976, %v9746
        %v10057 = vadd.f32 %v9167, %v9746
        %v10058 = vadd.f32 %v9169, %v9746
        %v10059 = vadd.f32 %v9360, %v9746
        %v10060 = vadd.f32 %v9362, %v9746
        %v10061 = vadd.f32 %v9553, %v9746
        %v10062 = vadd.f32 %v9555, %v9746
        %v10063 = vadd.f32 %v8785, %v9751
        %v10064 = vadd.f32 %v8787, %v9751
        %v10065 = vadd.f32 %v8978, %v9751
        %v10066 = vadd.f32 %v8980, %v9751
        %v10067 = vadd.f32 %v9171, %v9751
        %v10068 = vadd.f32 %v9173, %v9751
        %v10069 = vadd.f32 %v9364, %v9751
        %v10070 = vadd.f32 %v9366, %v9751
        %v10071 = vadd.f32 %v9557, %v9751
        %v10072 = vadd.f32 %v9559, %v9751
        %v10073 = vmax.f32 %v9753, 0.0
        %v10074 = vmax.f32 %v9754, 0.0
        %v10075 = vmax.f32 %v9755, 0.0
        %v10076 = vmax.f32 %v9756, 0.0
        %v10077 = vmax.f32 %v9757, 0.0
        %v10078 = vmax.f32 %v9758, 0.0
        %v10079 = vmax.f32 %v9759, 0.0
        %v10080 = vmax.f32 %v9760, 0.0
        %v10081 = vmax.f32 %v9761, 0.0
        %v10082 = vmax.f32 %v9762, 0.0
        %v10083 = vmax.f32 %v9763, 0.0
        %v10084 = vmax.f32 %v9764, 0.0
        %v10085 = vmax.f32 %v9765, 0.0
        %v10086 = vmax.f32 %v9766, 0.0
        %v10087 = vmax.f32 %v9767, 0.0
        %v10088 = vmax.f32 %v9768, 0.0
        %v10089 = vmax.f32 %v9769, 0.0
        %v10090 = vmax.f32 %v9770, 0.0
        %v10091 = vmax.f32 %v9771, 0.0
        %v10092 = vmax.f32 %v9772, 0.0
        %v10093 = vmax.f32 %v9773, 0.0
        %v10094 = vmax.f32 %v9774, 0.0
        %v10095 = vmax.f32 %v9775, 0.0
        %v10096 = vmax.f32 %v9776, 0.0
        %v10097 = vmax.f32 %v9777, 0.0
        %v10098 = vmax.f32 %v9778, 0.0
        %v10099 = vmax.f32 %v9779, 0.0
        %v10100 = vmax.f32 %v9780, 0.0
        %v10101 = vmax.f32 %v9781, 0.0
        %v10102 = vmax.f32 %v9782, 0.0
        %v10103 = vmax.f32 %v9783, 0.0
        %v10104 = vmax.f32 %v9784, 0.0
        %v10105 = vmax.f32 %v9785, 0.0
        %v10106 = vmax.f32 %v9786, 0.0
        %v10107 = vmax.f32 %v9787, 0.0
        %v10108 = vmax.f32 %v9788, 0.0
        %v10109 = vmax.f32 %v9789, 0.0
        %v10110 = vmax.f32 %v9790, 0.0
        %v10111 = vmax.f32 %v9791, 0.0
        %v10112 = vmax.f32 %v9792, 0.0
        %v10113 = vmax.f32 %v9793, 0.0
        %v10114 = vmax.f32 %v9794, 0.0
        %v10115 = vmax.f32 %v9795, 0.0
        %v10116 = vmax.f32 %v9796, 0.0
        %v10117 = vmax.f32 %v9797, 0.0
        %v10118 = vmax.f32 %v9798, 0.0
        %v10119 = vmax.f32 %v9799, 0.0
        %v10120 = vmax.f32 %v9800, 0.0
        %v10121 = vmax.f32 %v9801, 0.0
        %v10122 = vmax.f32 %v9802, 0.0
        %v10123 = vmax.f32 %v9803, 0.0
        %v10124 = vmax.f32 %v9804, 0.0
        %v10125 = vmax.f32 %v9805, 0.0
        %v10126 = vmax.f32 %v9806, 0.0
        %v10127 = vmax.f32 %v9807, 0.0
        %v10128 = vmax.f32 %v9808, 0.0
        %v10129 = vmax.f32 %v9809, 0.0
        %v10130 = vmax.f32 %v9810, 0.0
        %v10131 = vmax.f32 %v9811, 0.0
        %v10132 = vmax.f32 %v9812, 0.0
        %v10133 = vmax.f32 %v9813, 0.0
        %v10134 = vmax.f32 %v9814, 0.0
        %v10135 = vmax.f32 %v9815, 0.0
        %v10136 = vmax.f32 %v9816, 0.0
        %v10137 = vmax.f32 %v9817, 0.0
        %v10138 = vmax.f32 %v9818, 0.0
        %v10139 = vmax.f32 %v9819, 0.0
        %v10140 = vmax.f32 %v9820, 0.0
        %v10141 = vmax.f32 %v9821, 0.0
        %v10142 = vmax.f32 %v9822, 0.0
        %v10143 = vmax.f32 %v9823, 0.0
        %v10144 = vmax.f32 %v9824, 0.0
        %v10145 = vmax.f32 %v9825, 0.0
        %v10146 = vmax.f32 %v9826, 0.0
        %v10147 = vmax.f32 %v9827, 0.0
        %v10148 = vmax.f32 %v9828, 0.0
        %v10149 = vmax.f32 %v9829, 0.0
        %v10150 = vmax.f32 %v9830, 0.0
        %v10151 = vmax.f32 %v9831, 0.0
        %v10152 = vmax.f32 %v9832, 0.0
        %v10153 = vmax.f32 %v9833, 0.0
        %v10154 = vmax.f32 %v9834, 0.0
        %v10155 = vmax.f32 %v9835, 0.0
        %v10156 = vmax.f32 %v9836, 0.0
        %v10157 = vmax.f32 %v9837, 0.0
        %v10158 = vmax.f32 %v9838, 0.0
        %v10159 = vmax.f32 %v9839, 0.0
        %v10160 = vmax.f32 %v9840, 0.0
        %v10161 = vmax.f32 %v9841, 0.0
        %v10162 = vmax.f32 %v9842, 0.0
        %v10163 = vmax.f32 %v9843, 0.0
        %v10164 = vmax.f32 %v9844, 0.0
        %v10165 = vmax.f32 %v9845, 0.0
        %v10166 = vmax.f32 %v9846, 0.0
        %v10167 = vmax.f32 %v9847, 0.0
        %v10168 = vmax.f32 %v9848, 0.0
        %v10169 = vmax.f32 %v9849, 0.0
        %v10170 = vmax.f32 %v9850, 0.0
        %v10171 = vmax.f32 %v9851, 0.0
        %v10172 = vmax.f32 %v9852, 0.0
        %v10173 = vmax.f32 %v9853, 0.0
        %v10174 = vmax.f32 %v9854, 0.0
        %v10175 = vmax.f32 %v9855, 0.0
        %v10176 = vmax.f32 %v9856, 0.0
        %v10177 = vmax.f32 %v9857, 0.0
        %v10178 = vmax.f32 %v9858, 0.0
        %v10179 = vmax.f32 %v9859, 0.0
        %v10180 = vmax.f32 %v9860, 0.0
        %v10181 = vmax.f32 %v9861, 0.0
        %v10182 = vmax.f32 %v9862, 0.0
        %v10183 = vmax.f32 %v9863, 0.0
        %v10184 = vmax.f32 %v9864, 0.0
        %v10185 = vmax.f32 %v9865, 0.0
        %v10186 = vmax.f32 %v9866, 0.0
        %v10187 = vmax.f32 %v9867, 0.0
        %v10188 = vmax.f32 %v9868, 0.0
        %v10189 = vmax.f32 %v9869, 0.0
        %v10190 = vmax.f32 %v9870, 0.0
        %v10191 = vmax.f32 %v9871, 0.0
        %v10192 = vmax.f32 %v9872, 0.0
        %v10193 = vmax.f32 %v9873, 0.0
        %v10194 = vmax.f32 %v9874, 0.0
        %v10195 = vmax.f32 %v9875, 0.0
        %v10196 = vmax.f32 %v9876, 0.0
        %v10197 = vmax.f32 %v9877, 0.0
        %v10198 = vmax.f32 %v9878, 0.0
        %v10199 = vmax.f32 %v9879, 0.0
        %v10200 = vmax.f32 %v9880, 0.0
        %v10201 = vmax.f32 %v9881, 0.0
        %v10202 = vmax.f32 %v9882, 0.0
        %v10203 = vmax.f32 %v9883, 0.0
        %v10204 = vmax.f32 %v9884, 0.0
        %v10205 = vmax.f32 %v9885, 0.0
        %v10206 = vmax.f32 %v9886, 0.0
        %v10207 = vmax.f32 %v9887, 0.0
        %v10208 = vmax.f32 %v9888, 0.0
        %v10209 = vmax.f32 %v9889, 0.0
        %v10210 = vmax.f32 %v9890, 0.0
        %v10211 = vmax.f32 %v9891, 0.0
        %v10212 = vmax.f32 %v9892, 0.0
        %v10213 = vmax.f32 %v9893, 0.0
        %v10214 = vmax.f32 %v9894, 0.0
        %v10215 = vmax.f32 %v9895, 0.0
        %v10216 = vmax.f32 %v9896, 0.0
        %v10217 = vmax.f32 %v9897, 0.0
        %v10218 = vmax.f32 %v9898, 0.0
        %v10219 = vmax.f32 %v9899, 0.0
        %v10220 = vmax.f32 %v9900, 0.0
        %v10221 = vmax.f32 %v9901, 0.0
        %v10222 = vmax.f32 %v9902, 0.0
        %v10223 = vmax.f32 %v9903, 0.0
        %v10224 = vmax.f32 %v9904, 0.0
        %v10225 = vmax.f32 %v9905, 0.0
        %v10226 = vmax.f32 %v9906, 0.0
        %v10227 = vmax.f32 %v9907, 0.0
        %v10228 = vmax.f32 %v9908, 0.0
        %v10229 = vmax.f32 %v9909, 0.0
        %v10230 = vmax.f32 %v9910, 0.0
        %v10231 = vmax.f32 %v9911, 0.0
        %v10232 = vmax.f32 %v9912, 0.0
        %v10233 = vmax.f32 %v9913, 0.0
        %v10234 = vmax.f32 %v9914, 0.0
        %v10235 = vmax.f32 %v9915, 0.0
        %v10236 = vmax.f32 %v9916, 0.0
        %v10237 = vmax.f32 %v9917, 0.0
        %v10238 = vmax.f32 %v9918, 0.0
        %v10239 = vmax.f32 %v9919, 0.0
        %v10240 = vmax.f32 %v9920, 0.0
        %v10241 = vmax.f32 %v9921, 0.0
        %v10242 = vmax.f32 %v9922, 0.0
        %v10243 = vmax.f32 %v9923, 0.0
        %v10244 = vmax.f32 %v9924, 0.0
        %v10245 = vmax.f32 %v9925, 0.0
        %v10246 = vmax.f32 %v9926, 0.0
        %v10247 = vmax.f32 %v9927, 0.0
        %v10248 = vmax.f32 %v9928, 0.0
        %v10249 = vmax.f32 %v9929, 0.0
        %v10250 = vmax.f32 %v9930, 0.0
        %v10251 = vmax.f32 %v9931, 0.0
        %v10252 = vmax.f32 %v9932, 0.0
        %v10253 = vmax.f32 %v9933, 0.0
        %v10254 = vmax.f32 %v9934, 0.0
        %v10255 = vmax.f32 %v9935, 0.0
        %v10256 = vmax.f32 %v9936, 0.0
        %v10257 = vmax.f32 %v9937, 0.0
        %v10258 = vmax.f32 %v9938, 0.0
        %v10259 = vmax.f32 %v9939, 0.0
        %v10260 = vmax.f32 %v9940, 0.0
        %v10261 = vmax.f32 %v9941, 0.0
        %v10262 = vmax.f32 %v9942, 0.0
        %v10263 = vmax.f32 %v9943, 0.0
        %v10264 = vmax.f32 %v9944, 0.0
        %v10265 = vmax.f32 %v9945, 0.0
        %v10266 = vmax.f32 %v9946, 0.0
        %v10267 = vmax.f32 %v9947, 0.0
        %v10268 = vmax.f32 %v9948, 0.0
        %v10269 = vmax.f32 %v9949, 0.0
        %v10270 = vmax.f32 %v9950, 0.0
        %v10271 = vmax.f32 %v9951, 0.0
        %v10272 = vmax.f32 %v9952, 0.0
        %v10273 = vmax.f32 %v9953, 0.0
        %v10274 = vmax.f32 %v9954, 0.0
        %v10275 = vmax.f32 %v9955, 0.0
        %v10276 = vmax.f32 %v9956, 0.0
        %v10277 = vmax.f32 %v9957, 0.0
        %v10278 = vmax.f32 %v9958, 0.0
        %v10279 = vmax.f32 %v9959, 0.0
        %v10280 = vmax.f32 %v9960, 0.0
        %v10281 = vmax.f32 %v9961, 0.0
        %v10282 = vmax.f32 %v9962, 0.0
        %v10283 = vmax.f32 %v9963, 0.0
        %v10284 = vmax.f32 %v9964, 0.0
        %v10285 = vmax.f32 %v9965, 0.0
        %v10286 = vmax.f32 %v9966, 0.0
        %v10287 = vmax.f32 %v9967, 0.0
        %v10288 = vmax.f32 %v9968, 0.0
        %v10289 = vmax.f32 %v9969, 0.0
        %v10290 = vmax.f32 %v9970, 0.0
        %v10291 = vmax.f32 %v9971, 0.0
        %v10292 = vmax.f32 %v9972, 0.0
        %v10293 = vmax.f32 %v9973, 0.0
        %v10294 = vmax.f32 %v9974, 0.0
        %v10295 = vmax.f32 %v9975, 0.0
        %v10296 = vmax.f32 %v9976, 0.0
        %v10297 = vmax.f32 %v9977, 0.0
        %v10298 = vmax.f32 %v9978, 0.0
        %v10299 = vmax.f32 %v9979, 0.0
        %v10300 = vmax.f32 %v9980, 0.0
        %v10301 = vmax.f32 %v9981, 0.0
        %v10302 = vmax.f32 %v9982, 0.0
        %v10303 = vmax.f32 %v9983, 0.0
        %v10304 = vmax.f32 %v9984, 0.0
        %v10305 = vmax.f32 %v9985, 0.0
        %v10306 = vmax.f32 %v9986, 0.0
        %v10307 = vmax.f32 %v9987, 0.0
        %v10308 = vmax.f32 %v9988, 0.0
        %v10309 = vmax.f32 %v9989, 0.0
        %v10310 = vmax.f32 %v9990, 0.0
        %v10311 = vmax.f32 %v9991, 0.0
        %v10312 = vmax.f32 %v9992, 0.0
        %v10313 = vmax.f32 %v9993, 0.0
        %v10314 = vmax.f32 %v9994, 0.0
        %v10315 = vmax.f32 %v9995, 0.0
        %v10316 = vmax.f32 %v9996, 0.0
        %v10317 = vmax.f32 %v9997, 0.0
        %v10318 = vmax.f32 %v9998, 0.0
        %v10319 = vmax.f32 %v9999, 0.0
        %v10320 = vmax.f32 %v10000, 0.0
        %v10321 = vmax.f32 %v10001, 0.0
        %v10322 = vmax.f32 %v10002, 0.0
        %v10323 = vmax.f32 %v10003, 0.0
        %v10324 = vmax.f32 %v10004, 0.0
        %v10325 = vmax.f32 %v10005, 0.0
        %v10326 = vmax.f32 %v10006, 0.0
        %v10327 = vmax.f32 %v10007, 0.0
        %v10328 = vmax.f32 %v10008, 0.0
        %v10329 = vmax.f32 %v10009, 0.0
        %v10330 = vmax.f32 %v10010, 0.0
        %v10331 = vmax.f32 %v10011, 0.0
        %v10332 = vmax.f32 %v10012, 0.0
        %v10333 = vmax.f32 %v10013, 0.0
        %v10334 = vmax.f32 %v10014, 0.0
        %v10335 = vmax.f32 %v10015, 0.0
        %v10336 = vmax.f32 %v10016, 0.0
        %v10337 = vmax.f32 %v10017, 0.0
        %v10338 = vmax.f32 %v10018, 0.0
        %v10339 = vmax.f32 %v10019, 0.0
        %v10340 = vmax.f32 %v10020, 0.0
        %v10341 = vmax.f32 %v10021, 0.0
        %v10342 = vmax.f32 %v10022, 0.0
        %v10343 = vmax.f32 %v10023, 0.0
        %v10344 = vmax.f32 %v10024, 0.0
        %v10345 = vmax.f32 %v10025, 0.0
        %v10346 = vmax.f32 %v10026, 0.0
        %v10347 = vmax.f32 %v10027, 0.0
        %v10348 = vmax.f32 %v10028, 0.0
        %v10349 = vmax.f32 %v10029, 0.0
        %v10350 = vmax.f32 %v10030, 0.0
        %v10351 = vmax.f32 %v10031, 0.0
        %v10352 = vmax.f32 %v10032, 0.0
        %v10353 = vmax.f32 %v10033, 0.0
        %v10354 = vmax.f32 %v10034, 0.0
        %v10355 = vmax.f32 %v10035, 0.0
        %v10356 = vmax.f32 %v10036, 0.0
        %v10357 = vmax.f32 %v10037, 0.0
        %v10358 = vmax.f32 %v10038, 0.0
        %v10359 = vmax.f32 %v10039, 0.0
        %v10360 = vmax.f32 %v10040, 0.0
        %v10361 = vmax.f32 %v10041, 0.0
        %v10362 = vmax.f32 %v10042, 0.0
        %v10363 = vmax.f32 %v10043, 0.0
        %v10364 = vmax.f32 %v10044, 0.0
        %v10365 = vmax.f32 %v10045, 0.0
        %v10366 = vmax.f32 %v10046, 0.0
        %v10367 = vmax.f32 %v10047, 0.0
        %v10368 = vmax.f32 %v10048, 0.0
        %v10369 = vmax.f32 %v10049, 0.0
        %v10370 = vmax.f32 %v10050, 0.0
        %v10371 = vmax.f32 %v10051, 0.0
        %v10372 = vmax.f32 %v10052, 0.0
        %v10373 = vmax.f32 %v10053, 0.0
        %v10374 = vmax.f32 %v10054, 0.0
        %v10375 = vmax.f32 %v10055, 0.0
        %v10376 = vmax.f32 %v10056, 0.0
        %v10377 = vmax.f32 %v10057, 0.0
        %v10378 = vmax.f32 %v10058, 0.0
        %v10379 = vmax.f32 %v10059, 0.0
        %v10380 = vmax.f32 %v10060, 0.0
        %v10381 = vmax.f32 %v10061, 0.0
        %v10382 = vmax.f32 %v10062, 0.0
        %v10383 = vmax.f32 %v10063, 0.0
        %v10384 = vmax.f32 %v10064, 0.0
        %v10385 = vmax.f32 %v10065, 0.0
        %v10386 = vmax.f32 %v10066, 0.0
        %v10387 = vmax.f32 %v10067, 0.0
        %v10388 = vmax.f32 %v10068, 0.0
        %v10389 = vmax.f32 %v10069, 0.0
        %v10390 = vmax.f32 %v10070, 0.0
        %v10391 = vmax.f32 %v10071, 0.0
        %v10392 = vmax.f32 %v10072, 0.0
        %v10393 = vld [vmem:[%s11] sm:$0xff]
        %v10394 = vld [vmem:[%s11 + $0x8] sm:$0xff]
        %v10395 = vld [vmem:[%s11 + $0x10] sm:$0xff]
        %v10396 = vld [vmem:[%s11 + $0x18] sm:$0xff]
        %v10397 = vld [vmem:[%s11 + $0x20] sm:$0xff]
        %v10398 = vld [vmem:[%s11 + $0x28] sm:$0xff]
        %v10399 = vld [vmem:[%s11 + $0x30] sm:$0xff]
        %v10400 = vld [vmem:[%s11 + $0x38] sm:$0xff]
        %v10401 = vld [vmem:[%s11 + $0x40] sm:$0xff]
        %v10402 = vld [vmem:[%s11 + $0x48] sm:$0xff]
        %v10403 = vld [vmem:[%s11 + $0x50] sm:$0xff]
        %v10404 = vld [vmem:[%s11 + $0x58] sm:$0xff]
        %v10405 = vld [vmem:[%s11 + $0x60] sm:$0xff]
        %v10406 = vld [vmem:[%s11 + $0x68] sm:$0xff]
        %v10407 = vld [vmem:[%s11 + $0x70] sm:$0xff]
        %v10408 = vld [vmem:[%s11 + $0x78] sm:$0xff]
        %v10409 = vpack.c.bf16 %v10083, %v10073
        %v10410 = vpack.c.bf16 %v10084, %v10074
        %v10411 = vpack.c.bf16 %v10085, %v10075
        %v10412 = vpack.c.bf16 %v10086, %v10076
        %v10413 = vpack.c.bf16 %v10087, %v10077
        %v10414 = vpack.c.bf16 %v10088, %v10078
        %v10415 = vpack.c.bf16 %v10089, %v10079
        %v10416 = vpack.c.bf16 %v10090, %v10080
        %v10417 = vpack.c.bf16 %v10091, %v10081
        %v10418 = vpack.c.bf16 %v10092, %v10082
        %v10419 = vpack.c.bf16 %v10103, %v10093
        %v10420 = vpack.c.bf16 %v10104, %v10094
        %v10421 = vpack.c.bf16 %v10105, %v10095
        %v10422 = vpack.c.bf16 %v10106, %v10096
        %v10423 = vpack.c.bf16 %v10107, %v10097
        %v10424 = vpack.c.bf16 %v10108, %v10098
        %v10425 = vpack.c.bf16 %v10109, %v10099
        %v10426 = vpack.c.bf16 %v10110, %v10100
        %v10427 = vpack.c.bf16 %v10111, %v10101
        %v10428 = vpack.c.bf16 %v10112, %v10102
        %v10429 = vpack.c.bf16 %v10123, %v10113
        %v10430 = vpack.c.bf16 %v10124, %v10114
        %v10431 = vpack.c.bf16 %v10125, %v10115
        %v10432 = vpack.c.bf16 %v10126, %v10116
        %v10433 = vpack.c.bf16 %v10127, %v10117
        %v10434 = vpack.c.bf16 %v10128, %v10118
        %v10435 = vpack.c.bf16 %v10129, %v10119
        %v10436 = vpack.c.bf16 %v10130, %v10120
        %v10437 = vpack.c.bf16 %v10131, %v10121
        %v10438 = vpack.c.bf16 %v10132, %v10122
        %v10439 = vpack.c.bf16 %v10143, %v10133
        %v10440 = vpack.c.bf16 %v10144, %v10134
        %v10441 = vpack.c.bf16 %v10145, %v10135
        %v10442 = vpack.c.bf16 %v10146, %v10136
        %v10443 = vpack.c.bf16 %v10147, %v10137
        %v10444 = vpack.c.bf16 %v10148, %v10138
        %v10445 = vpack.c.bf16 %v10149, %v10139
        %v10446 = vpack.c.bf16 %v10150, %v10140
        %v10447 = vpack.c.bf16 %v10151, %v10141
        %v10448 = vpack.c.bf16 %v10152, %v10142
        %v10449 = vpack.c.bf16 %v10163, %v10153
        %v10450 = vpack.c.bf16 %v10164, %v10154
        %v10451 = vpack.c.bf16 %v10165, %v10155
        %v10452 = vpack.c.bf16 %v10166, %v10156
        %v10453 = vpack.c.bf16 %v10167, %v10157
        %v10454 = vpack.c.bf16 %v10168, %v10158
        %v10455 = vpack.c.bf16 %v10169, %v10159
        %v10456 = vpack.c.bf16 %v10170, %v10160
        %v10457 = vpack.c.bf16 %v10171, %v10161
        %v10458 = vpack.c.bf16 %v10172, %v10162
        %v10459 = vpack.c.bf16 %v10183, %v10173
        %v10460 = vpack.c.bf16 %v10184, %v10174
        %v10461 = vpack.c.bf16 %v10185, %v10175
        %v10462 = vpack.c.bf16 %v10186, %v10176
        %v10463 = vpack.c.bf16 %v10187, %v10177
        %v10464 = vpack.c.bf16 %v10188, %v10178
        %v10465 = vpack.c.bf16 %v10189, %v10179
        %v10466 = vpack.c.bf16 %v10190, %v10180
        %v10467 = vpack.c.bf16 %v10191, %v10181
        %v10468 = vpack.c.bf16 %v10192, %v10182
        %v10469 = vpack.c.bf16 %v10203, %v10193
        %v10470 = vpack.c.bf16 %v10204, %v10194
        %v10471 = vpack.c.bf16 %v10205, %v10195
        %v10472 = vpack.c.bf16 %v10206, %v10196
        %v10473 = vpack.c.bf16 %v10207, %v10197
        %v10474 = vpack.c.bf16 %v10208, %v10198
        %v10475 = vpack.c.bf16 %v10209, %v10199
        %v10476 = vpack.c.bf16 %v10210, %v10200
        %v10477 = vpack.c.bf16 %v10211, %v10201
        %v10478 = vpack.c.bf16 %v10212, %v10202
        %v10479 = vpack.c.bf16 %v10223, %v10213
        %v10480 = vpack.c.bf16 %v10224, %v10214
        %v10481 = vpack.c.bf16 %v10225, %v10215
        %v10482 = vpack.c.bf16 %v10226, %v10216
        %v10483 = vpack.c.bf16 %v10227, %v10217
        %v10484 = vpack.c.bf16 %v10228, %v10218
        %v10485 = vpack.c.bf16 %v10229, %v10219
        %v10486 = vpack.c.bf16 %v10230, %v10220
        %v10487 = vpack.c.bf16 %v10231, %v10221
        %v10488 = vpack.c.bf16 %v10232, %v10222
        %v10489 = vpack.c.bf16 %v10243, %v10233
        %v10490 = vpack.c.bf16 %v10244, %v10234
        %v10491 = vpack.c.bf16 %v10245, %v10235
        %v10492 = vpack.c.bf16 %v10246, %v10236
        %v10493 = vpack.c.bf16 %v10247, %v10237
        %v10494 = vpack.c.bf16 %v10248, %v10238
        %v10495 = vpack.c.bf16 %v10249, %v10239
        %v10496 = vpack.c.bf16 %v10250, %v10240
        %v10497 = vpack.c.bf16 %v10251, %v10241
        %v10498 = vpack.c.bf16 %v10252, %v10242
        %v10499 = vpack.c.bf16 %v10263, %v10253
        %v10500 = vpack.c.bf16 %v10264, %v10254
        %v10501 = vpack.c.bf16 %v10265, %v10255
        %v10502 = vpack.c.bf16 %v10266, %v10256
        %v10503 = vpack.c.bf16 %v10267, %v10257
        %v10504 = vpack.c.bf16 %v10268, %v10258
        %v10505 = vpack.c.bf16 %v10269, %v10259
        %v10506 = vpack.c.bf16 %v10270, %v10260
        %v10507 = vpack.c.bf16 %v10271, %v10261
        %v10508 = vpack.c.bf16 %v10272, %v10262
        %v10509 = vpack.c.bf16 %v10283, %v10273
        %v10510 = vpack.c.bf16 %v10284, %v10274
        %v10511 = vpack.c.bf16 %v10285, %v10275
        %v10512 = vpack.c.bf16 %v10286, %v10276
        %v10513 = vpack.c.bf16 %v10287, %v10277
        %v10514 = vpack.c.bf16 %v10288, %v10278
        %v10515 = vpack.c.bf16 %v10289, %v10279
        %v10516 = vpack.c.bf16 %v10290, %v10280
        %v10517 = vpack.c.bf16 %v10291, %v10281
        %v10518 = vpack.c.bf16 %v10292, %v10282
        %v10519 = vpack.c.bf16 %v10303, %v10293
        %v10520 = vpack.c.bf16 %v10304, %v10294
        %v10521 = vpack.c.bf16 %v10305, %v10295
        %v10522 = vpack.c.bf16 %v10306, %v10296
        %v10523 = vpack.c.bf16 %v10307, %v10297
        %v10524 = vpack.c.bf16 %v10308, %v10298
        %v10525 = vpack.c.bf16 %v10309, %v10299
        %v10526 = vpack.c.bf16 %v10310, %v10300
        %v10527 = vpack.c.bf16 %v10311, %v10301
        %v10528 = vpack.c.bf16 %v10312, %v10302
        %v10529 = vpack.c.bf16 %v10323, %v10313
        %v10530 = vpack.c.bf16 %v10324, %v10314
        %v10531 = vpack.c.bf16 %v10325, %v10315
        %v10532 = vpack.c.bf16 %v10326, %v10316
        %v10533 = vpack.c.bf16 %v10327, %v10317
        %v10534 = vpack.c.bf16 %v10328, %v10318
        %v10535 = vpack.c.bf16 %v10329, %v10319
        %v10536 = vpack.c.bf16 %v10330, %v10320
        %v10537 = vpack.c.bf16 %v10331, %v10321
        %v10538 = vpack.c.bf16 %v10332, %v10322
        %v10539 = vpack.c.bf16 %v10343, %v10333
        %v10540 = vpack.c.bf16 %v10344, %v10334
        %v10541 = vpack.c.bf16 %v10345, %v10335
        %v10542 = vpack.c.bf16 %v10346, %v10336
        %v10543 = vpack.c.bf16 %v10347, %v10337
        %v10544 = vpack.c.bf16 %v10348, %v10338
        %v10545 = vpack.c.bf16 %v10349, %v10339
        %v10546 = vpack.c.bf16 %v10350, %v10340
        %v10547 = vpack.c.bf16 %v10351, %v10341
        %v10548 = vpack.c.bf16 %v10352, %v10342
        %v10549 = vpack.c.bf16 %v10363, %v10353
        %v10550 = vpack.c.bf16 %v10364, %v10354
        %v10551 = vpack.c.bf16 %v10365, %v10355
        %v10552 = vpack.c.bf16 %v10366, %v10356
        %v10553 = vpack.c.bf16 %v10367, %v10357
        %v10554 = vpack.c.bf16 %v10368, %v10358
        %v10555 = vpack.c.bf16 %v10369, %v10359
        %v10556 = vpack.c.bf16 %v10370, %v10360
        %v10557 = vpack.c.bf16 %v10371, %v10361
        %v10558 = vpack.c.bf16 %v10372, %v10362
        %v10559 = vpack.c.bf16 %v10383, %v10373
        %v10560 = vpack.c.bf16 %v10384, %v10374
        %v10561 = vpack.c.bf16 %v10385, %v10375
        %v10562 = vpack.c.bf16 %v10386, %v10376
        %v10563 = vpack.c.bf16 %v10387, %v10377
        %v10564 = vpack.c.bf16 %v10388, %v10378
        %v10565 = vpack.c.bf16 %v10389, %v10379
        %v10566 = vpack.c.bf16 %v10390, %v10380
        %v10567 = vpack.c.bf16 %v10391, %v10381
        %v10568 = vpack.c.bf16 %v10392, %v10382
        %v10569 = vld [vmem:[%s12] sm:$0xff]
        %v10570 = vld [vmem:[%s12 + $0x8] sm:$0xff]
        %v10571 = vld [vmem:[%s12 + $0x10] sm:$0xff]
        %v10572 = vld [vmem:[%s12 + $0x18] sm:$0xff]
        %v10573 = vld [vmem:[%s12 + $0x20] sm:$0xff]
        %v10574 = vld [vmem:[%s12 + $0x28] sm:$0xff]
        %v10575 = vld [vmem:[%s12 + $0x30] sm:$0xff]
        %v10576 = vld [vmem:[%s12 + $0x38] sm:$0xff]
        %v10577 = vld [vmem:[%s12 + $0x40] sm:$0xff]
        %v10578 = vld [vmem:[%s12 + $0x48] sm:$0xff]
        %v10579 = vld [vmem:[%s12 + $0x50] sm:$0xff]
        %v10580 = vld [vmem:[%s12 + $0x58] sm:$0xff]
        %v10581 = vld [vmem:[%s12 + $0x60] sm:$0xff]
        %v10582 = vld [vmem:[%s12 + $0x68] sm:$0xff]
        %v10583 = vld [vmem:[%s12 + $0x70] sm:$0xff]
        %v10584 = vld [vmem:[%s12 + $0x78] sm:$0xff]
        %10586 = vset.pattern.permute.xlu0 0
        %10587 = vperm.xlu0 %10586, %v10569
        %v10588 = vpop.permute.xlu0 %10587
        %10591 = vset.pattern.permute.xlu0 0
        %10592 = vperm.xlu0 %10591, %v10570
        %v10593 = vpop.permute.xlu0 %10592
        %10596 = vset.pattern.permute.xlu0 0
        %10597 = vperm.xlu0 %10596, %v10571
        %v10598 = vpop.permute.xlu0 %10597
        %10601 = vset.pattern.permute.xlu0 0
        %10602 = vperm.xlu0 %10601, %v10572
        %v10603 = vpop.permute.xlu0 %10602
        %10606 = vset.pattern.permute.xlu0 0
        %10607 = vperm.xlu0 %10606, %v10573
        %v10608 = vpop.permute.xlu0 %10607
        %10611 = vset.pattern.permute.xlu0 0
        %10612 = vperm.xlu0 %10611, %v10574
        %v10613 = vpop.permute.xlu0 %10612
        %10616 = vset.pattern.permute.xlu0 0
        %10617 = vperm.xlu0 %10616, %v10575
        %v10618 = vpop.permute.xlu0 %10617
        %10621 = vset.pattern.permute.xlu0 0
        %10622 = vperm.xlu0 %10621, %v10576
        %v10623 = vpop.permute.xlu0 %10622
        %10626 = vset.pattern.permute.xlu0 0
        %10627 = vperm.xlu0 %10626, %v10577
        %v10628 = vpop.permute.xlu0 %10627
        %10631 = vset.pattern.permute.xlu0 0
        %10632 = vperm.xlu0 %10631, %v10578
        %v10633 = vpop.permute.xlu0 %10632
        %10636 = vset.pattern.permute.xlu0 0
        %10637 = vperm.xlu0 %10636, %v10579
        %v10638 = vpop.permute.xlu0 %10637
        %10641 = vset.pattern.permute.xlu0 0
        %10642 = vperm.xlu0 %10641, %v10580
        %v10643 = vpop.permute.xlu0 %10642
        %10646 = vset.pattern.permute.xlu0 0
        %10647 = vperm.xlu0 %10646, %v10581
        %v10648 = vpop.permute.xlu0 %10647
        %10651 = vset.pattern.permute.xlu0 0
        %10652 = vperm.xlu0 %10651, %v10582
        %v10653 = vpop.permute.xlu0 %10652
        %10656 = vset.pattern.permute.xlu0 0
        %10657 = vperm.xlu0 %10656, %v10583
        %v10658 = vpop.permute.xlu0 %10657
        %10661 = vset.pattern.permute.xlu0 0
        %10662 = vperm.xlu0 %10661, %v10584
        %v10663 = vpop.permute.xlu0 %10662
        %v10681 = vunpack.c.l.b16 %v10393
        %v10682 = vunpack.c.h.b16 %v10393
        %v10683 = vunpack.c.l.b16 %v10394
        %v10684 = vunpack.c.h.b16 %v10394
        %v10685 = vunpack.c.l.b16 %v10395
        %v10686 = vunpack.c.h.b16 %v10395
        %v10687 = vunpack.c.l.b16 %v10396
        %v10688 = vunpack.c.h.b16 %v10396
        %v10689 = vunpack.c.l.b16 %v10397
        %v10690 = vunpack.c.h.b16 %v10397
        %v10691 = vunpack.c.l.b16 %v10398
        %v10692 = vunpack.c.h.b16 %v10398
        %v10693 = vunpack.c.l.b16 %v10399
        %v10694 = vunpack.c.h.b16 %v10399
        %v10695 = vunpack.c.l.b16 %v10400
        %v10696 = vunpack.c.h.b16 %v10400
        %v10697 = vunpack.c.l.b16 %v10401
        %v10698 = vunpack.c.h.b16 %v10401
        %v10699 = vunpack.c.l.b16 %v10402
        %v10700 = vunpack.c.h.b16 %v10402
        %v10701 = vunpack.c.l.b16 %v10403
        %v10702 = vunpack.c.h.b16 %v10403
        %v10703 = vunpack.c.l.b16 %v10404
        %v10704 = vunpack.c.h.b16 %v10404
        %v10705 = vunpack.c.l.b16 %v10405
        %v10706 = vunpack.c.h.b16 %v10405
        %v10707 = vunpack.c.l.b16 %v10406
        %v10708 = vunpack.c.h.b16 %v10406
        %v10709 = vunpack.c.l.b16 %v10407
        %v10710 = vunpack.c.h.b16 %v10407
        %v10711 = vunpack.c.l.b16 %v10408
        %v10712 = vunpack.c.h.b16 %v10408
        %v10713 = vpack.c.b16 %v10683, %v10681
        %v10714 = vpack.c.b16 %v10684, %v10682
        %v10715 = vpack.c.b16 %v10687, %v10685
        %v10716 = vpack.c.b16 %v10688, %v10686
        %v10717 = vpack.c.b16 %v10691, %v10689
        %v10718 = vpack.c.b16 %v10692, %v10690
        %v10719 = vpack.c.b16 %v10695, %v10693
        %v10720 = vpack.c.b16 %v10696, %v10694
        %v10721 = vpack.c.b16 %v10699, %v10697
        %v10722 = vpack.c.b16 %v10700, %v10698
        %v10723 = vpack.c.b16 %v10703, %v10701
        %v10724 = vpack.c.b16 %v10704, %v10702
        %v10725 = vpack.c.b16 %v10707, %v10705
        %v10726 = vpack.c.b16 %v10708, %v10706
        %v10727 = vpack.c.b16 %v10711, %v10709
        %v10728 = vpack.c.b16 %v10712, %v10710
        %10745 = vmatprep.subr.bf16.mxu0 %v10480
        %10746 = vmatpush1.bf16.msra.mxu0 %v10479
        %10747 = vmatprep.subr.bf16.mxu0 %v10470
        %10748 = vmatpush1.bf16.msra.mxu0 %v10469
        %10749 = vmatprep.subr.bf16.mxu0 %v10460
        %10750 = vmatpush1.bf16.msra.mxu0 %v10459
        %10751 = vmatprep.subr.bf16.mxu0 %v10450
        %10752 = vmatpush1.bf16.msra.mxu0 %v10449
        %10753 = vmatprep.subr.bf16.mxu0 %v10440
        %10754 = vmatpush1.bf16.msra.mxu0 %v10439
        %10755 = vmatprep.subr.bf16.mxu0 %v10430
        %10756 = vmatpush1.bf16.msra.mxu0 %v10429
        %10757 = vmatprep.subr.bf16.mxu0 %v10420
        %10758 = vmatpush1.bf16.msra.mxu0 %v10419
        %10759 = vmatprep.subr.bf16.mxu0 %v10410
        %10760 = vmatpush1.bf16.msra.mxu0 %v10409
        %10761 = vmatprep.subr.bf16.mxu0 %v10560
        %10762 = vmatpush2.bf16.msra.mxu0 %v10559
        %10763 = vmatprep.subr.bf16.mxu0 %v10550
        %10764 = vmatpush2.bf16.msra.mxu0 %v10549
        %10765 = vmatprep.subr.bf16.mxu0 %v10540
        %10766 = vmatpush2.bf16.msra.mxu0 %v10539
        %10767 = vmatprep.subr.bf16.mxu0 %v10530
        %10768 = vmatpush2.bf16.msra.mxu0 %v10529
        %10769 = vmatprep.subr.bf16.mxu0 %v10520
        %10770 = vmatpush2.bf16.msra.mxu0 %v10519
        %10771 = vmatprep.subr.bf16.mxu0 %v10510
        %10772 = vmatpush2.bf16.msra.mxu0 %v10509
        %10773 = vmatprep.subr.bf16.mxu0 %v10500
        %10774 = vmatpush2.bf16.msra.mxu0 %v10499
        %10775 = vmatprep.subr.bf16.mxu0 %v10490
        %10776 = vmatpush2.bf16.msra.mxu0 %v10489
        %10777 = vmatprep.mubr.bf16.mxu0 %v10714
        %10778 = vmatmul.mubr.bf16.gmra.mxu0 %v10713
        %v10779 = vpop.f32.mrf.mxu0
        %v10780 = vadd.f32 %v10588, %v10779
        %v10781 = vpop.f32.mrf.mxu0
        %v10782 = vadd.f32 %v10588, %v10781
        %v10783 = vpop.f32.mrf.mxu0
        %v10784 = vadd.f32 %v10593, %v10783
        %v10785 = vpop.f32.mrf.mxu0
        %v10786 = vadd.f32 %v10593, %v10785
        %10787 = vmatprep.mubr.bf16.mxu0 %v10716
        %10788 = vmatmul.mubr.bf16.gmra.mxu0 %v10715
        %v10789 = vpop.f32.mrf.mxu0
        %v10790 = vadd.f32 %v10598, %v10789
        %v10791 = vpop.f32.mrf.mxu0
        %v10792 = vadd.f32 %v10598, %v10791
        %v10793 = vpop.f32.mrf.mxu0
        %v10794 = vadd.f32 %v10603, %v10793
        %v10795 = vpop.f32.mrf.mxu0
        %v10796 = vadd.f32 %v10603, %v10795
        %10797 = vmatprep.mubr.bf16.mxu0 %v10718
        %10798 = vmatmul.mubr.bf16.gmra.mxu0 %v10717
        %v10799 = vpop.f32.mrf.mxu0
        %v10800 = vadd.f32 %v10608, %v10799
        %v10801 = vpop.f32.mrf.mxu0
        %v10802 = vadd.f32 %v10608, %v10801
        %v10803 = vpop.f32.mrf.mxu0
        %v10804 = vadd.f32 %v10613, %v10803
        %v10805 = vpop.f32.mrf.mxu0
        %v10806 = vadd.f32 %v10613, %v10805
        %10807 = vmatprep.mubr.bf16.mxu0 %v10720
        %10808 = vmatmul.mubr.bf16.gmra.mxu0 %v10719
        %v10809 = vpop.f32.mrf.mxu0
        %v10810 = vadd.f32 %v10618, %v10809
        %v10811 = vpop.f32.mrf.mxu0
        %v10812 = vadd.f32 %v10618, %v10811
        %v10813 = vpop.f32.mrf.mxu0
        %v10814 = vadd.f32 %v10623, %v10813
        %v10815 = vpop.f32.mrf.mxu0
        %v10816 = vadd.f32 %v10623, %v10815
        %10817 = vmatprep.mubr.bf16.mxu0 %v10722
        %10818 = vmatmul.mubr.bf16.gmra.mxu0 %v10721
        %v10819 = vpop.f32.mrf.mxu0
        %v10820 = vadd.f32 %v10628, %v10819
        %v10821 = vpop.f32.mrf.mxu0
        %v10822 = vadd.f32 %v10628, %v10821
        %v10823 = vpop.f32.mrf.mxu0
        %v10824 = vadd.f32 %v10633, %v10823
        %v10825 = vpop.f32.mrf.mxu0
        %v10826 = vadd.f32 %v10633, %v10825
        %10827 = vmatprep.mubr.bf16.mxu0 %v10724
        %10828 = vmatmul.mubr.bf16.gmra.mxu0 %v10723
        %v10829 = vpop.f32.mrf.mxu0
        %v10830 = vadd.f32 %v10638, %v10829
        %v10831 = vpop.f32.mrf.mxu0
        %v10832 = vadd.f32 %v10638, %v10831
        %v10833 = vpop.f32.mrf.mxu0
        %v10834 = vadd.f32 %v10643, %v10833
        %v10835 = vpop.f32.mrf.mxu0
        %v10836 = vadd.f32 %v10643, %v10835
        %10837 = vmatprep.mubr.bf16.mxu0 %v10726
        %10838 = vmatmul.mubr.bf16.gmra.mxu0 %v10725
        %v10839 = vpop.f32.mrf.mxu0
        %v10840 = vadd.f32 %v10648, %v10839
        %v10841 = vpop.f32.mrf.mxu0
        %v10842 = vadd.f32 %v10648, %v10841
        %v10843 = vpop.f32.mrf.mxu0
        %v10844 = vadd.f32 %v10653, %v10843
        %v10845 = vpop.f32.mrf.mxu0
        %v10846 = vadd.f32 %v10653, %v10845
        %10847 = vmatprep.mubr.bf16.mxu0 %v10728
        %10848 = vmatmul.mubr.bf16.gmra.mxu0 %v10727
        %v10849 = vpop.f32.mrf.mxu0
        %v10850 = vadd.f32 %v10658, %v10849
        %v10851 = vpop.f32.mrf.mxu0
        %v10852 = vadd.f32 %v10658, %v10851
        %v10853 = vpop.f32.mrf.mxu0
        %v10854 = vadd.f32 %v10663, %v10853
        %v10855 = vpop.f32.mrf.mxu0
        %v10856 = vadd.f32 %v10663, %v10855
        %10857 = vdwg.mxu0
        %10858 = vmatprep.subr.bf16.mxu0 %v10482
        %10859 = vmatpush1.bf16.msra.mxu0 %v10481
        %10860 = vmatprep.subr.bf16.mxu0 %v10472
        %10861 = vmatpush1.bf16.msra.mxu0 %v10471
        %10862 = vmatprep.subr.bf16.mxu0 %v10462
        %10863 = vmatpush1.bf16.msra.mxu0 %v10461
        %10864 = vmatprep.subr.bf16.mxu0 %v10452
        %10865 = vmatpush1.bf16.msra.mxu0 %v10451
        %10866 = vmatprep.subr.bf16.mxu0 %v10442
        %10867 = vmatpush1.bf16.msra.mxu0 %v10441
        %10868 = vmatprep.subr.bf16.mxu0 %v10432
        %10869 = vmatpush1.bf16.msra.mxu0 %v10431
        %10870 = vmatprep.subr.bf16.mxu0 %v10422
        %10871 = vmatpush1.bf16.msra.mxu0 %v10421
        %10872 = vmatprep.subr.bf16.mxu0 %v10412
        %10873 = vmatpush1.bf16.msra.mxu0 %v10411
        %10874 = vmatprep.subr.bf16.mxu0 %v10562
        %10875 = vmatpush2.bf16.msra.mxu0 %v10561
        %10876 = vmatprep.subr.bf16.mxu0 %v10552
        %10877 = vmatpush2.bf16.msra.mxu0 %v10551
        %10878 = vmatprep.subr.bf16.mxu0 %v10542
        %10879 = vmatpush2.bf16.msra.mxu0 %v10541
        %10880 = vmatprep.subr.bf16.mxu0 %v10532
        %10881 = vmatpush2.bf16.msra.mxu0 %v10531
        %10882 = vmatprep.subr.bf16.mxu0 %v10522
        %10883 = vmatpush2.bf16.msra.mxu0 %v10521
        %10884 = vmatprep.subr.bf16.mxu0 %v10512
        %10885 = vmatpush2.bf16.msra.mxu0 %v10511
        %10886 = vmatprep.subr.bf16.mxu0 %v10502
        %10887 = vmatpush2.bf16.msra.mxu0 %v10501
        %10888 = vmatprep.subr.bf16.mxu0 %v10492
        %10889 = vmatpush2.bf16.msra.mxu0 %v10491
        %10890 = vmatprep.mubr.bf16.mxu0 %v10714
        %10891 = vmatmul.mubr.bf16.gmra.mxu0 %v10713
        %v10892 = vpop.f32.mrf.mxu0
        %v10893 = vadd.f32 %v10588, %v10892
        %v10894 = vpop.f32.mrf.mxu0
        %v10895 = vadd.f32 %v10588, %v10894
        %v10896 = vpop.f32.mrf.mxu0
        %v10897 = vadd.f32 %v10593, %v10896
        %v10898 = vpop.f32.mrf.mxu0
        %v10899 = vadd.f32 %v10593, %v10898
        %10900 = vmatprep.mubr.bf16.mxu0 %v10716
        %10901 = vmatmul.mubr.bf16.gmra.mxu0 %v10715
        %v10902 = vpop.f32.mrf.mxu0
        %v10903 = vadd.f32 %v10598, %v10902
        %v10904 = vpop.f32.mrf.mxu0
        %v10905 = vadd.f32 %v10598, %v10904
        %v10906 = vpop.f32.mrf.mxu0
        %v10907 = vadd.f32 %v10603, %v10906
        %v10908 = vpop.f32.mrf.mxu0
        %v10909 = vadd.f32 %v10603, %v10908
        %10910 = vmatprep.mubr.bf16.mxu0 %v10718
        %10911 = vmatmul.mubr.bf16.gmra.mxu0 %v10717
        %v10912 = vpop.f32.mrf.mxu0
        %v10913 = vadd.f32 %v10608, %v10912
        %v10914 = vpop.f32.mrf.mxu0
        %v10915 = vadd.f32 %v10608, %v10914
        %v10916 = vpop.f32.mrf.mxu0
        %v10917 = vadd.f32 %v10613, %v10916
        %v10918 = vpop.f32.mrf.mxu0
        %v10919 = vadd.f32 %v10613, %v10918
        %10920 = vmatprep.mubr.bf16.mxu0 %v10720
        %10921 = vmatmul.mubr.bf16.gmra.mxu0 %v10719
        %v10922 = vpop.f32.mrf.mxu0
        %v10923 = vadd.f32 %v10618, %v10922
        %v10924 = vpop.f32.mrf.mxu0
        %v10925 = vadd.f32 %v10618, %v10924
        %v10926 = vpop.f32.mrf.mxu0
        %v10927 = vadd.f32 %v10623, %v10926
        %v10928 = vpop.f32.mrf.mxu0
        %v10929 = vadd.f32 %v10623, %v10928
        %10930 = vmatprep.mubr.bf16.mxu0 %v10722
        %10931 = vmatmul.mubr.bf16.gmra.mxu0 %v10721
        %v10932 = vpop.f32.mrf.mxu0
        %v10933 = vadd.f32 %v10628, %v10932
        %v10934 = vpop.f32.mrf.mxu0
        %v10935 = vadd.f32 %v10628, %v10934
        %v10936 = vpop.f32.mrf.mxu0
        %v10937 = vadd.f32 %v10633, %v10936
        %v10938 = vpop.f32.mrf.mxu0
        %v10939 = vadd.f32 %v10633, %v10938
        %10940 = vmatprep.mubr.bf16.mxu0 %v10724
        %10941 = vmatmul.mubr.bf16.gmra.mxu0 %v10723
        %v10942 = vpop.f32.mrf.mxu0
        %v10943 = vadd.f32 %v10638, %v10942
        %v10944 = vpop.f32.mrf.mxu0
        %v10945 = vadd.f32 %v10638, %v10944
        %v10946 = vpop.f32.mrf.mxu0
        %v10947 = vadd.f32 %v10643, %v10946
        %v10948 = vpop.f32.mrf.mxu0
        %v10949 = vadd.f32 %v10643, %v10948
        %10950 = vmatprep.mubr.bf16.mxu0 %v10726
        %10951 = vmatmul.mubr.bf16.gmra.mxu0 %v10725
        %v10952 = vpop.f32.mrf.mxu0
        %v10953 = vadd.f32 %v10648, %v10952
        %v10954 = vpop.f32.mrf.mxu0
        %v10955 = vadd.f32 %v10648, %v10954
        %v10956 = vpop.f32.mrf.mxu0
        %v10957 = vadd.f32 %v10653, %v10956
        %v10958 = vpop.f32.mrf.mxu0
        %v10959 = vadd.f32 %v10653, %v10958
        %10960 = vmatprep.mubr.bf16.mxu0 %v10728
        %10961 = vmatmul.mubr.bf16.gmra.mxu0 %v10727
        %v10962 = vpop.f32.mrf.mxu0
        %v10963 = vadd.f32 %v10658, %v10962
        %v10964 = vpop.f32.mrf.mxu0
        %v10965 = vadd.f32 %v10658, %v10964
        %v10966 = vpop.f32.mrf.mxu0
        %v10967 = vadd.f32 %v10663, %v10966
        %v10968 = vpop.f32.mrf.mxu0
        %v10969 = vadd.f32 %v10663, %v10968
        %10970 = vdwg.mxu0
        %10971 = vmatprep.subr.bf16.mxu0 %v10484
        %10972 = vmatpush1.bf16.msra.mxu0 %v10483
        %10973 = vmatprep.subr.bf16.mxu0 %v10474
        %10974 = vmatpush1.bf16.msra.mxu0 %v10473
        %10975 = vmatprep.subr.bf16.mxu0 %v10464
        %10976 = vmatpush1.bf16.msra.mxu0 %v10463
        %10977 = vmatprep.subr.bf16.mxu0 %v10454
        %10978 = vmatpush1.bf16.msra.mxu0 %v10453
        %10979 = vmatprep.subr.bf16.mxu0 %v10444
        %10980 = vmatpush1.bf16.msra.mxu0 %v10443
        %10981 = vmatprep.subr.bf16.mxu0 %v10434
        %10982 = vmatpush1.bf16.msra.mxu0 %v10433
        %10983 = vmatprep.subr.bf16.mxu0 %v10424
        %10984 = vmatpush1.bf16.msra.mxu0 %v10423
        %10985 = vmatprep.subr.bf16.mxu0 %v10414
        %10986 = vmatpush1.bf16.msra.mxu0 %v10413
        %10987 = vmatprep.subr.bf16.mxu0 %v10564
        %10988 = vmatpush2.bf16.msra.mxu0 %v10563
        %10989 = vmatprep.subr.bf16.mxu0 %v10554
        %10990 = vmatpush2.bf16.msra.mxu0 %v10553
        %10991 = vmatprep.subr.bf16.mxu0 %v10544
        %10992 = vmatpush2.bf16.msra.mxu0 %v10543
        %10993 = vmatprep.subr.bf16.mxu0 %v10534
        %10994 = vmatpush2.bf16.msra.mxu0 %v10533
        %10995 = vmatprep.subr.bf16.mxu0 %v10524
        %10996 = vmatpush2.bf16.msra.mxu0 %v10523
        %10997 = vmatprep.subr.bf16.mxu0 %v10514
        %10998 = vmatpush2.bf16.msra.mxu0 %v10513
        %10999 = vmatprep.subr.bf16.mxu0 %v10504
        %11000 = vmatpush2.bf16.msra.mxu0 %v10503
        %11001 = vmatprep.subr.bf16.mxu0 %v10494
        %11002 = vmatpush2.bf16.msra.mxu0 %v10493
        %11003 = vmatprep.mubr.bf16.mxu0 %v10714
        %11004 = vmatmul.mubr.bf16.gmra.mxu0 %v10713
        %v11005 = vpop.f32.mrf.mxu0
        %v11006 = vadd.f32 %v10588, %v11005
        %v11007 = vpop.f32.mrf.mxu0
        %v11008 = vadd.f32 %v10588, %v11007
        %v11009 = vpop.f32.mrf.mxu0
        %v11010 = vadd.f32 %v10593, %v11009
        %v11011 = vpop.f32.mrf.mxu0
        %v11012 = vadd.f32 %v10593, %v11011
        %11013 = vmatprep.mubr.bf16.mxu0 %v10716
        %11014 = vmatmul.mubr.bf16.gmra.mxu0 %v10715
        %v11015 = vpop.f32.mrf.mxu0
        %v11016 = vadd.f32 %v10598, %v11015
        %v11017 = vpop.f32.mrf.mxu0
        %v11018 = vadd.f32 %v10598, %v11017
        %v11019 = vpop.f32.mrf.mxu0
        %v11020 = vadd.f32 %v10603, %v11019
        %v11021 = vpop.f32.mrf.mxu0
        %v11022 = vadd.f32 %v10603, %v11021
        %11023 = vmatprep.mubr.bf16.mxu0 %v10718
        %11024 = vmatmul.mubr.bf16.gmra.mxu0 %v10717
        %v11025 = vpop.f32.mrf.mxu0
        %v11026 = vadd.f32 %v10608, %v11025
        %v11027 = vpop.f32.mrf.mxu0
        %v11028 = vadd.f32 %v10608, %v11027
        %v11029 = vpop.f32.mrf.mxu0
        %v11030 = vadd.f32 %v10613, %v11029
        %v11031 = vpop.f32.mrf.mxu0
        %v11032 = vadd.f32 %v10613, %v11031
        %11033 = vmatprep.mubr.bf16.mxu0 %v10720
        %11034 = vmatmul.mubr.bf16.gmra.mxu0 %v10719
        %v11035 = vpop.f32.mrf.mxu0
        %v11036 = vadd.f32 %v10618, %v11035
        %v11037 = vpop.f32.mrf.mxu0
        %v11038 = vadd.f32 %v10618, %v11037
        %v11039 = vpop.f32.mrf.mxu0
        %v11040 = vadd.f32 %v10623, %v11039
        %v11041 = vpop.f32.mrf.mxu0
        %v11042 = vadd.f32 %v10623, %v11041
        %11043 = vmatprep.mubr.bf16.mxu0 %v10722
        %11044 = vmatmul.mubr.bf16.gmra.mxu0 %v10721
        %v11045 = vpop.f32.mrf.mxu0
        %v11046 = vadd.f32 %v10628, %v11045
        %v11047 = vpop.f32.mrf.mxu0
        %v11048 = vadd.f32 %v10628, %v11047
        %v11049 = vpop.f32.mrf.mxu0
        %v11050 = vadd.f32 %v10633, %v11049
        %v11051 = vpop.f32.mrf.mxu0
        %v11052 = vadd.f32 %v10633, %v11051
        %11053 = vmatprep.mubr.bf16.mxu0 %v10724
        %11054 = vmatmul.mubr.bf16.gmra.mxu0 %v10723
        %v11055 = vpop.f32.mrf.mxu0
        %v11056 = vadd.f32 %v10638, %v11055
        %v11057 = vpop.f32.mrf.mxu0
        %v11058 = vadd.f32 %v10638, %v11057
        %v11059 = vpop.f32.mrf.mxu0
        %v11060 = vadd.f32 %v10643, %v11059
        %v11061 = vpop.f32.mrf.mxu0
        %v11062 = vadd.f32 %v10643, %v11061
        %11063 = vmatprep.mubr.bf16.mxu0 %v10726
        %11064 = vmatmul.mubr.bf16.gmra.mxu0 %v10725
        %v11065 = vpop.f32.mrf.mxu0
        %v11066 = vadd.f32 %v10648, %v11065
        %v11067 = vpop.f32.mrf.mxu0
        %v11068 = vadd.f32 %v10648, %v11067
        %v11069 = vpop.f32.mrf.mxu0
        %v11070 = vadd.f32 %v10653, %v11069
        %v11071 = vpop.f32.mrf.mxu0
        %v11072 = vadd.f32 %v10653, %v11071
        %11073 = vmatprep.mubr.bf16.mxu0 %v10728
        %11074 = vmatmul.mubr.bf16.gmra.mxu0 %v10727
        %v11075 = vpop.f32.mrf.mxu0
        %v11076 = vadd.f32 %v10658, %v11075
        %v11077 = vpop.f32.mrf.mxu0
        %v11078 = vadd.f32 %v10658, %v11077
        %v11079 = vpop.f32.mrf.mxu0
        %v11080 = vadd.f32 %v10663, %v11079
        %v11081 = vpop.f32.mrf.mxu0
        %v11082 = vadd.f32 %v10663, %v11081
        %11083 = vdwg.mxu0
        %11084 = vmatprep.subr.bf16.mxu0 %v10486
        %11085 = vmatpush1.bf16.msra.mxu0 %v10485
        %11086 = vmatprep.subr.bf16.mxu0 %v10476
        %11087 = vmatpush1.bf16.msra.mxu0 %v10475
        %11088 = vmatprep.subr.bf16.mxu0 %v10466
        %11089 = vmatpush1.bf16.msra.mxu0 %v10465
        %11090 = vmatprep.subr.bf16.mxu0 %v10456
        %11091 = vmatpush1.bf16.msra.mxu0 %v10455
        %11092 = vmatprep.subr.bf16.mxu0 %v10446
        %11093 = vmatpush1.bf16.msra.mxu0 %v10445
        %11094 = vmatprep.subr.bf16.mxu0 %v10436
        %11095 = vmatpush1.bf16.msra.mxu0 %v10435
        %11096 = vmatprep.subr.bf16.mxu0 %v10426
        %11097 = vmatpush1.bf16.msra.mxu0 %v10425
        %11098 = vmatprep.subr.bf16.mxu0 %v10416
        %11099 = vmatpush1.bf16.msra.mxu0 %v10415
        %11100 = vmatprep.subr.bf16.mxu0 %v10566
        %11101 = vmatpush2.bf16.msra.mxu0 %v10565
        %11102 = vmatprep.subr.bf16.mxu0 %v10556
        %11103 = vmatpush2.bf16.msra.mxu0 %v10555
        %11104 = vmatprep.subr.bf16.mxu0 %v10546
        %11105 = vmatpush2.bf16.msra.mxu0 %v10545
        %11106 = vmatprep.subr.bf16.mxu0 %v10536
        %11107 = vmatpush2.bf16.msra.mxu0 %v10535
        %11108 = vmatprep.subr.bf16.mxu0 %v10526
        %11109 = vmatpush2.bf16.msra.mxu0 %v10525
        %11110 = vmatprep.subr.bf16.mxu0 %v10516
        %11111 = vmatpush2.bf16.msra.mxu0 %v10515
        %11112 = vmatprep.subr.bf16.mxu0 %v10506
        %11113 = vmatpush2.bf16.msra.mxu0 %v10505
        %11114 = vmatprep.subr.bf16.mxu0 %v10496
        %11115 = vmatpush2.bf16.msra.mxu0 %v10495
        %11116 = vmatprep.mubr.bf16.mxu0 %v10714
        %11117 = vmatmul.mubr.bf16.gmra.mxu0 %v10713
        %v11118 = vpop.f32.mrf.mxu0
        %v11119 = vadd.f32 %v10588, %v11118
        %v11120 = vpop.f32.mrf.mxu0
        %v11121 = vadd.f32 %v10588, %v11120
        %v11122 = vpop.f32.mrf.mxu0
        %v11123 = vadd.f32 %v10593, %v11122
        %v11124 = vpop.f32.mrf.mxu0
        %v11125 = vadd.f32 %v10593, %v11124
        %11126 = vmatprep.mubr.bf16.mxu0 %v10716
        %11127 = vmatmul.mubr.bf16.gmra.mxu0 %v10715
        %v11128 = vpop.f32.mrf.mxu0
        %v11129 = vadd.f32 %v10598, %v11128
        %v11130 = vpop.f32.mrf.mxu0
        %v11131 = vadd.f32 %v10598, %v11130
        %v11132 = vpop.f32.mrf.mxu0
        %v11133 = vadd.f32 %v10603, %v11132
        %v11134 = vpop.f32.mrf.mxu0
        %v11135 = vadd.f32 %v10603, %v11134
        %11136 = vmatprep.mubr.bf16.mxu0 %v10718
        %11137 = vmatmul.mubr.bf16.gmra.mxu0 %v10717
        %v11138 = vpop.f32.mrf.mxu0
        %v11139 = vadd.f32 %v10608, %v11138
        %v11140 = vpop.f32.mrf.mxu0
        %v11141 = vadd.f32 %v10608, %v11140
        %v11142 = vpop.f32.mrf.mxu0
        %v11143 = vadd.f32 %v10613, %v11142
        %v11144 = vpop.f32.mrf.mxu0
        %v11145 = vadd.f32 %v10613, %v11144
        %11146 = vmatprep.mubr.bf16.mxu0 %v10720
        %11147 = vmatmul.mubr.bf16.gmra.mxu0 %v10719
        %v11148 = vpop.f32.mrf.mxu0
        %v11149 = vadd.f32 %v10618, %v11148
        %v11150 = vpop.f32.mrf.mxu0
        %v11151 = vadd.f32 %v10618, %v11150
        %v11152 = vpop.f32.mrf.mxu0
        %v11153 = vadd.f32 %v10623, %v11152
        %v11154 = vpop.f32.mrf.mxu0
        %v11155 = vadd.f32 %v10623, %v11154
        %11156 = vmatprep.mubr.bf16.mxu0 %v10722
        %11157 = vmatmul.mubr.bf16.gmra.mxu0 %v10721
        %v11158 = vpop.f32.mrf.mxu0
        %v11159 = vadd.f32 %v10628, %v11158
        %v11160 = vpop.f32.mrf.mxu0
        %v11161 = vadd.f32 %v10628, %v11160
        %v11162 = vpop.f32.mrf.mxu0
        %v11163 = vadd.f32 %v10633, %v11162
        %v11164 = vpop.f32.mrf.mxu0
        %v11165 = vadd.f32 %v10633, %v11164
        %11166 = vmatprep.mubr.bf16.mxu0 %v10724
        %11167 = vmatmul.mubr.bf16.gmra.mxu0 %v10723
        %v11168 = vpop.f32.mrf.mxu0
        %v11169 = vadd.f32 %v10638, %v11168
        %v11170 = vpop.f32.mrf.mxu0
        %v11171 = vadd.f32 %v10638, %v11170
        %v11172 = vpop.f32.mrf.mxu0
        %v11173 = vadd.f32 %v10643, %v11172
        %v11174 = vpop.f32.mrf.mxu0
        %v11175 = vadd.f32 %v10643, %v11174
        %11176 = vmatprep.mubr.bf16.mxu0 %v10726
        %11177 = vmatmul.mubr.bf16.gmra.mxu0 %v10725
        %v11178 = vpop.f32.mrf.mxu0
        %v11179 = vadd.f32 %v10648, %v11178
        %v11180 = vpop.f32.mrf.mxu0
        %v11181 = vadd.f32 %v10648, %v11180
        %v11182 = vpop.f32.mrf.mxu0
        %v11183 = vadd.f32 %v10653, %v11182
        %v11184 = vpop.f32.mrf.mxu0
        %v11185 = vadd.f32 %v10653, %v11184
        %11186 = vmatprep.mubr.bf16.mxu0 %v10728
        %11187 = vmatmul.mubr.bf16.gmra.mxu0 %v10727
        %v11188 = vpop.f32.mrf.mxu0
        %v11189 = vadd.f32 %v10658, %v11188
        %v11190 = vpop.f32.mrf.mxu0
        %v11191 = vadd.f32 %v10658, %v11190
        %v11192 = vpop.f32.mrf.mxu0
        %v11193 = vadd.f32 %v10663, %v11192
        %v11194 = vpop.f32.mrf.mxu0
        %v11195 = vadd.f32 %v10663, %v11194
        %11196 = vdwg.mxu0
        %11197 = vmatprep.subr.bf16.mxu0 %v10488
        %11198 = vmatpush1.bf16.msra.mxu0 %v10487
        %11199 = vmatprep.subr.bf16.mxu0 %v10478
        %11200 = vmatpush1.bf16.msra.mxu0 %v10477
        %11201 = vmatprep.subr.bf16.mxu0 %v10468
        %11202 = vmatpush1.bf16.msra.mxu0 %v10467
        %11203 = vmatprep.subr.bf16.mxu0 %v10458
        %11204 = vmatpush1.bf16.msra.mxu0 %v10457
        %11205 = vmatprep.subr.bf16.mxu0 %v10448
        %11206 = vmatpush1.bf16.msra.mxu0 %v10447
        %11207 = vmatprep.subr.bf16.mxu0 %v10438
        %11208 = vmatpush1.bf16.msra.mxu0 %v10437
        %11209 = vmatprep.subr.bf16.mxu0 %v10428
        %11210 = vmatpush1.bf16.msra.mxu0 %v10427
        %11211 = vmatprep.subr.bf16.mxu0 %v10418
        %11212 = vmatpush1.bf16.msra.mxu0 %v10417
        %11213 = vmatprep.subr.bf16.mxu0 %v10568
        %11214 = vmatpush2.bf16.msra.mxu0 %v10567
        %11215 = vmatprep.subr.bf16.mxu0 %v10558
        %11216 = vmatpush2.bf16.msra.mxu0 %v10557
        %11217 = vmatprep.subr.bf16.mxu0 %v10548
        %11218 = vmatpush2.bf16.msra.mxu0 %v10547
        %11219 = vmatprep.subr.bf16.mxu0 %v10538
        %11220 = vmatpush2.bf16.msra.mxu0 %v10537
        %11221 = vmatprep.subr.bf16.mxu0 %v10528
        %11222 = vmatpush2.bf16.msra.mxu0 %v10527
        %11223 = vmatprep.subr.bf16.mxu0 %v10518
        %11224 = vmatpush2.bf16.msra.mxu0 %v10517
        %11225 = vmatprep.subr.bf16.mxu0 %v10508
        %11226 = vmatpush2.bf16.msra.mxu0 %v10507
        %11227 = vmatprep.subr.bf16.mxu0 %v10498
        %11228 = vmatpush2.bf16.msra.mxu0 %v10497
        %11229 = vmatprep.mubr.bf16.mxu0 %v10714
        %11230 = vmatmul.mubr.bf16.gmra.mxu0 %v10713
        %v11231 = vpop.f32.mrf.mxu0
        %v11232 = vadd.f32 %v10588, %v11231
        %v11233 = vpop.f32.mrf.mxu0
        %v11234 = vadd.f32 %v10588, %v11233
        %v11235 = vpop.f32.mrf.mxu0
        %v11236 = vadd.f32 %v10593, %v11235
        %v11237 = vpop.f32.mrf.mxu0
        %v11238 = vadd.f32 %v10593, %v11237
        %11239 = vmatprep.mubr.bf16.mxu0 %v10716
        %11240 = vmatmul.mubr.bf16.gmra.mxu0 %v10715
        %v11241 = vpop.f32.mrf.mxu0
        %v11242 = vadd.f32 %v10598, %v11241
        %v11243 = vpop.f32.mrf.mxu0
        %v11244 = vadd.f32 %v10598, %v11243
        %v11245 = vpop.f32.mrf.mxu0
        %v11246 = vadd.f32 %v10603, %v11245
        %v11247 = vpop.f32.mrf.mxu0
        %v11248 = vadd.f32 %v10603, %v11247
        %11249 = vmatprep.mubr.bf16.mxu0 %v10718
        %11250 = vmatmul.mubr.bf16.gmra.mxu0 %v10717
        %v11251 = vpop.f32.mrf.mxu0
        %v11252 = vadd.f32 %v10608, %v11251
        %v11253 = vpop.f32.mrf.mxu0
        %v11254 = vadd.f32 %v10608, %v11253
        %v11255 = vpop.f32.mrf.mxu0
        %v11256 = vadd.f32 %v10613, %v11255
        %v11257 = vpop.f32.mrf.mxu0
        %v11258 = vadd.f32 %v10613, %v11257
        %11259 = vmatprep.mubr.bf16.mxu0 %v10720
        %11260 = vmatmul.mubr.bf16.gmra.mxu0 %v10719
        %v11261 = vpop.f32.mrf.mxu0
        %v11262 = vadd.f32 %v10618, %v11261
        %v11263 = vpop.f32.mrf.mxu0
        %v11264 = vadd.f32 %v10618, %v11263
        %v11265 = vpop.f32.mrf.mxu0
        %v11266 = vadd.f32 %v10623, %v11265
        %v11267 = vpop.f32.mrf.mxu0
        %v11268 = vadd.f32 %v10623, %v11267
        %11269 = vmatprep.mubr.bf16.mxu0 %v10722
        %11270 = vmatmul.mubr.bf16.gmra.mxu0 %v10721
        %v11271 = vpop.f32.mrf.mxu0
        %v11272 = vadd.f32 %v10628, %v11271
        %v11273 = vpop.f32.mrf.mxu0
        %v11274 = vadd.f32 %v10628, %v11273
        %v11275 = vpop.f32.mrf.mxu0
        %v11276 = vadd.f32 %v10633, %v11275
        %v11277 = vpop.f32.mrf.mxu0
        %v11278 = vadd.f32 %v10633, %v11277
        %11279 = vmatprep.mubr.bf16.mxu0 %v10724
        %11280 = vmatmul.mubr.bf16.gmra.mxu0 %v10723
        %v11281 = vpop.f32.mrf.mxu0
        %v11282 = vadd.f32 %v10638, %v11281
        %v11283 = vpop.f32.mrf.mxu0
        %v11284 = vadd.f32 %v10638, %v11283
        %v11285 = vpop.f32.mrf.mxu0
        %v11286 = vadd.f32 %v10643, %v11285
        %v11287 = vpop.f32.mrf.mxu0
        %v11288 = vadd.f32 %v10643, %v11287
        %11289 = vmatprep.mubr.bf16.mxu0 %v10726
        %11290 = vmatmul.mubr.bf16.gmra.mxu0 %v10725
        %v11291 = vpop.f32.mrf.mxu0
        %v11292 = vadd.f32 %v10648, %v11291
        %v11293 = vpop.f32.mrf.mxu0
        %v11294 = vadd.f32 %v10648, %v11293
        %v11295 = vpop.f32.mrf.mxu0
        %v11296 = vadd.f32 %v10653, %v11295
        %v11297 = vpop.f32.mrf.mxu0
        %v11298 = vadd.f32 %v10653, %v11297
        %11299 = vmatprep.mubr.bf16.mxu0 %v10728
        %11300 = vmatmul.mubr.bf16.gmra.mxu0 %v10727
        %v11301 = vpop.f32.mrf.mxu0
        %v11302 = vadd.f32 %v10658, %v11301
        %v11303 = vpop.f32.mrf.mxu0
        %v11304 = vadd.f32 %v10658, %v11303
        %v11305 = vpop.f32.mrf.mxu0
        %v11306 = vadd.f32 %v10663, %v11305
        %v11307 = vpop.f32.mrf.mxu0
        %v11308 = vadd.f32 %v10663, %v11307
        %11309 = vdwg.mxu0
        %v11310 = vmax.f32 %v10780, 0.0
        %v11311 = vmax.f32 %v10782, 0.0
        %v11312 = vmax.f32 %v10893, 0.0
        %v11313 = vmax.f32 %v10895, 0.0
        %v11314 = vmax.f32 %v11006, 0.0
        %v11315 = vmax.f32 %v11008, 0.0
        %v11316 = vmax.f32 %v11119, 0.0
        %v11317 = vmax.f32 %v11121, 0.0
        %v11318 = vmax.f32 %v11232, 0.0
        %v11319 = vmax.f32 %v11234, 0.0
        %v11320 = vmax.f32 %v10784, 0.0
        %v11321 = vmax.f32 %v10786, 0.0
        %v11322 = vmax.f32 %v10897, 0.0
        %v11323 = vmax.f32 %v10899, 0.0
        %v11324 = vmax.f32 %v11010, 0.0
        %v11325 = vmax.f32 %v11012, 0.0
        %v11326 = vmax.f32 %v11123, 0.0
        %v11327 = vmax.f32 %v11125, 0.0
        %v11328 = vmax.f32 %v11236, 0.0
        %v11329 = vmax.f32 %v11238, 0.0
        %v11330 = vmax.f32 %v10790, 0.0
        %v11331 = vmax.f32 %v10792, 0.0
        %v11332 = vmax.f32 %v10903, 0.0
        %v11333 = vmax.f32 %v10905, 0.0
        %v11334 = vmax.f32 %v11016, 0.0
        %v11335 = vmax.f32 %v11018, 0.0
        %v11336 = vmax.f32 %v11129, 0.0
        %v11337 = vmax.f32 %v11131, 0.0
        %v11338 = vmax.f32 %v11242, 0.0
        %v11339 = vmax.f32 %v11244, 0.0
        %v11340 = vmax.f32 %v10794, 0.0
        %v11341 = vmax.f32 %v10796, 0.0
        %v11342 = vmax.f32 %v10907, 0.0
        %v11343 = vmax.f32 %v10909, 0.0
        %v11344 = vmax.f32 %v11020, 0.0
        %v11345 = vmax.f32 %v11022, 0.0
        %v11346 = vmax.f32 %v11133, 0.0
        %v11347 = vmax.f32 %v11135, 0.0
        %v11348 = vmax.f32 %v11246, 0.0
        %v11349 = vmax.f32 %v11248, 0.0
        %v11350 = vmax.f32 %v10800, 0.0
        %v11351 = vmax.f32 %v10802, 0.0
        %v11352 = vmax.f32 %v10913, 0.0
        %v11353 = vmax.f32 %v10915, 0.0
        %v11354 = vmax.f32 %v11026, 0.0
        %v11355 = vmax.f32 %v11028, 0.0
        %v11356 = vmax.f32 %v11139, 0.0
        %v11357 = vmax.f32 %v11141, 0.0
        %v11358 = vmax.f32 %v11252, 0.0
        %v11359 = vmax.f32 %v11254, 0.0
        %v11360 = vmax.f32 %v10804, 0.0
        %v11361 = vmax.f32 %v10806, 0.0
        %v11362 = vmax.f32 %v10917, 0.0
        %v11363 = vmax.f32 %v10919, 0.0
        %v11364 = vmax.f32 %v11030, 0.0
        %v11365 = vmax.f32 %v11032, 0.0
        %v11366 = vmax.f32 %v11143, 0.0
        %v11367 = vmax.f32 %v11145, 0.0
        %v11368 = vmax.f32 %v11256, 0.0
        %v11369 = vmax.f32 %v11258, 0.0
        %v11370 = vmax.f32 %v10810, 0.0
        %v11371 = vmax.f32 %v10812, 0.0
        %v11372 = vmax.f32 %v10923, 0.0
        %v11373 = vmax.f32 %v10925, 0.0
        %v11374 = vmax.f32 %v11036, 0.0
        %v11375 = vmax.f32 %v11038, 0.0
        %v11376 = vmax.f32 %v11149, 0.0
        %v11377 = vmax.f32 %v11151, 0.0
        %v11378 = vmax.f32 %v11262, 0.0
        %v11379 = vmax.f32 %v11264, 0.0
        %v11380 = vmax.f32 %v10814, 0.0
        %v11381 = vmax.f32 %v10816, 0.0
        %v11382 = vmax.f32 %v10927, 0.0
        %v11383 = vmax.f32 %v10929, 0.0
        %v11384 = vmax.f32 %v11040, 0.0
        %v11385 = vmax.f32 %v11042, 0.0
        %v11386 = vmax.f32 %v11153, 0.0
        %v11387 = vmax.f32 %v11155, 0.0
        %v11388 = vmax.f32 %v11266, 0.0
        %v11389 = vmax.f32 %v11268, 0.0
        %v11390 = vmax.f32 %v10820, 0.0
        %v11391 = vmax.f32 %v10822, 0.0
        %v11392 = vmax.f32 %v10933, 0.0
        %v11393 = vmax.f32 %v10935, 0.0
        %v11394 = vmax.f32 %v11046, 0.0
        %v11395 = vmax.f32 %v11048, 0.0
        %v11396 = vmax.f32 %v11159, 0.0
        %v11397 = vmax.f32 %v11161, 0.0
        %v11398 = vmax.f32 %v11272, 0.0
        %v11399 = vmax.f32 %v11274, 0.0
        %v11400 = vmax.f32 %v10824, 0.0
        %v11401 = vmax.f32 %v10826, 0.0
        %v11402 = vmax.f32 %v10937, 0.0
        %v11403 = vmax.f32 %v10939, 0.0
        %v11404 = vmax.f32 %v11050, 0.0
        %v11405 = vmax.f32 %v11052, 0.0
        %v11406 = vmax.f32 %v11163, 0.0
        %v11407 = vmax.f32 %v11165, 0.0
        %v11408 = vmax.f32 %v11276, 0.0
        %v11409 = vmax.f32 %v11278, 0.0
        %v11410 = vmax.f32 %v10830, 0.0
        %v11411 = vmax.f32 %v10832, 0.0
        %v11412 = vmax.f32 %v10943, 0.0
        %v11413 = vmax.f32 %v10945, 0.0
        %v11414 = vmax.f32 %v11056, 0.0
        %v11415 = vmax.f32 %v11058, 0.0
        %v11416 = vmax.f32 %v11169, 0.0
        %v11417 = vmax.f32 %v11171, 0.0
        %v11418 = vmax.f32 %v11282, 0.0
        %v11419 = vmax.f32 %v11284, 0.0
        %v11420 = vmax.f32 %v10834, 0.0
        %v11421 = vmax.f32 %v10836, 0.0
        %v11422 = vmax.f32 %v10947, 0.0
        %v11423 = vmax.f32 %v10949, 0.0
        %v11424 = vmax.f32 %v11060, 0.0
        %v11425 = vmax.f32 %v11062, 0.0
        %v11426 = vmax.f32 %v11173, 0.0
        %v11427 = vmax.f32 %v11175, 0.0
        %v11428 = vmax.f32 %v11286, 0.0
        %v11429 = vmax.f32 %v11288, 0.0
        %v11430 = vmax.f32 %v10840, 0.0
        %v11431 = vmax.f32 %v10842, 0.0
        %v11432 = vmax.f32 %v10953, 0.0
        %v11433 = vmax.f32 %v10955, 0.0
        %v11434 = vmax.f32 %v11066, 0.0
        %v11435 = vmax.f32 %v11068, 0.0
        %v11436 = vmax.f32 %v11179, 0.0
        %v11437 = vmax.f32 %v11181, 0.0
        %v11438 = vmax.f32 %v11292, 0.0
        %v11439 = vmax.f32 %v11294, 0.0
        %v11440 = vmax.f32 %v10844, 0.0
        %v11441 = vmax.f32 %v10846, 0.0
        %v11442 = vmax.f32 %v10957, 0.0
        %v11443 = vmax.f32 %v10959, 0.0
        %v11444 = vmax.f32 %v11070, 0.0
        %v11445 = vmax.f32 %v11072, 0.0
        %v11446 = vmax.f32 %v11183, 0.0
        %v11447 = vmax.f32 %v11185, 0.0
        %v11448 = vmax.f32 %v11296, 0.0
        %v11449 = vmax.f32 %v11298, 0.0
        %v11450 = vmax.f32 %v10850, 0.0
        %v11451 = vmax.f32 %v10852, 0.0
        %v11452 = vmax.f32 %v10963, 0.0
        %v11453 = vmax.f32 %v10965, 0.0
        %v11454 = vmax.f32 %v11076, 0.0
        %v11455 = vmax.f32 %v11078, 0.0
        %v11456 = vmax.f32 %v11189, 0.0
        %v11457 = vmax.f32 %v11191, 0.0
        %v11458 = vmax.f32 %v11302, 0.0
        %v11459 = vmax.f32 %v11304, 0.0
        %v11460 = vmax.f32 %v10854, 0.0
        %v11461 = vmax.f32 %v10856, 0.0
        %v11462 = vmax.f32 %v10967, 0.0
        %v11463 = vmax.f32 %v10969, 0.0
        %v11464 = vmax.f32 %v11080, 0.0
        %v11465 = vmax.f32 %v11082, 0.0
        %v11466 = vmax.f32 %v11193, 0.0
        %v11467 = vmax.f32 %v11195, 0.0
        %v11468 = vmax.f32 %v11306, 0.0
        %v11469 = vmax.f32 %v11308, 0.0
        %v11470 = vld [vmem:[%s13] sm:$0xff]
        %v11471 = vld [vmem:[%s13 + $0x8] sm:$0xff]
        %v11472 = vld [vmem:[%s13 + $0x10] sm:$0xff]
        %v11473 = vld [vmem:[%s13 + $0x18] sm:$0xff]
        %v11474 = vld [vmem:[%s13 + $0x20] sm:$0xff]
        %v11475 = vld [vmem:[%s13 + $0x28] sm:$0xff]
        %v11476 = vld [vmem:[%s13 + $0x30] sm:$0xff]
        %v11477 = vld [vmem:[%s13 + $0x38] sm:$0xff]
        %v11478 = vld [vmem:[%s13 + $0x40] sm:$0xff]
        %v11479 = vld [vmem:[%s13 + $0x48] sm:$0xff]
        %v11480 = vld [vmem:[%s13 + $0x50] sm:$0xff]
        %v11481 = vld [vmem:[%s13 + $0x58] sm:$0xff]
        %v11482 = vld [vmem:[%s13 + $0x60] sm:$0xff]
        %v11483 = vld [vmem:[%s13 + $0x68] sm:$0xff]
        %v11484 = vld [vmem:[%s13 + $0x70] sm:$0xff]
        %v11485 = vld [vmem:[%s13 + $0x78] sm:$0xff]
        %11487 = vset.pattern.permute.xlu0 0
        %11488 = vperm.xlu0 %11487, %v11470
        %v11489 = vpop.permute.xlu0 %11488
        %11492 = vset.pattern.permute.xlu0 0
        %11493 = vperm.xlu0 %11492, %v11471
        %v11494 = vpop.permute.xlu0 %11493
        %11497 = vset.pattern.permute.xlu0 0
        %11498 = vperm.xlu0 %11497, %v11472
        %v11499 = vpop.permute.xlu0 %11498
        %11502 = vset.pattern.permute.xlu0 0
        %11503 = vperm.xlu0 %11502, %v11473
        %v11504 = vpop.permute.xlu0 %11503
        %11507 = vset.pattern.permute.xlu0 0
        %11508 = vperm.xlu0 %11507, %v11474
        %v11509 = vpop.permute.xlu0 %11508
        %11512 = vset.pattern.permute.xlu0 0
        %11513 = vperm.xlu0 %11512, %v11475
        %v11514 = vpop.permute.xlu0 %11513
        %11517 = vset.pattern.permute.xlu0 0
        %11518 = vperm.xlu0 %11517, %v11476
        %v11519 = vpop.permute.xlu0 %11518
        %11522 = vset.pattern.permute.xlu0 0
        %11523 = vperm.xlu0 %11522, %v11477
        %v11524 = vpop.permute.xlu0 %11523
        %11527 = vset.pattern.permute.xlu0 0
        %11528 = vperm.xlu0 %11527, %v11478
        %v11529 = vpop.permute.xlu0 %11528
        %11532 = vset.pattern.permute.xlu0 0
        %11533 = vperm.xlu0 %11532, %v11479
        %v11534 = vpop.permute.xlu0 %11533
        %11537 = vset.pattern.permute.xlu0 0
        %11538 = vperm.xlu0 %11537, %v11480
        %v11539 = vpop.permute.xlu0 %11538
        %11542 = vset.pattern.permute.xlu0 0
        %11543 = vperm.xlu0 %11542, %v11481
        %v11544 = vpop.permute.xlu0 %11543
        %11547 = vset.pattern.permute.xlu0 0
        %11548 = vperm.xlu0 %11547, %v11482
        %v11549 = vpop.permute.xlu0 %11548
        %11552 = vset.pattern.permute.xlu0 0
        %11553 = vperm.xlu0 %11552, %v11483
        %v11554 = vpop.permute.xlu0 %11553
        %11557 = vset.pattern.permute.xlu0 0
        %11558 = vperm.xlu0 %11557, %v11484
        %v11559 = vpop.permute.xlu0 %11558
        %11562 = vset.pattern.permute.xlu0 0
        %11563 = vperm.xlu0 %11562, %v11485
        %v11564 = vpop.permute.xlu0 %11563
        %v11566 = vmul.f32 %v11310, %v11489
        %v11567 = vmul.f32 %v11311, %v11489
        %v11568 = vmul.f32 %v11312, %v11489
        %v11569 = vmul.f32 %v11313, %v11489
        %v11570 = vmul.f32 %v11314, %v11489
        %v11571 = vmul.f32 %v11315, %v11489
        %v11572 = vmul.f32 %v11316, %v11489
        %v11573 = vmul.f32 %v11317, %v11489
        %v11574 = vmul.f32 %v11318, %v11489
        %v11575 = vmul.f32 %v11319, %v11489
        %v11576 = vmul.f32 %v11320, %v11494
        %v11577 = vmul.f32 %v11321, %v11494
        %v11578 = vmul.f32 %v11322, %v11494
        %v11579 = vmul.f32 %v11323, %v11494
        %v11580 = vmul.f32 %v11324, %v11494
        %v11581 = vmul.f32 %v11325, %v11494
        %v11582 = vmul.f32 %v11326, %v11494
        %v11583 = vmul.f32 %v11327, %v11494
        %v11584 = vmul.f32 %v11328, %v11494
        %v11585 = vmul.f32 %v11329, %v11494
        %v11586 = vmul.f32 %v11330, %v11499
        %v11587 = vmul.f32 %v11331, %v11499
        %v11588 = vmul.f32 %v11332, %v11499
        %v11589 = vmul.f32 %v11333, %v11499
        %v11590 = vmul.f32 %v11334, %v11499
        %v11591 = vmul.f32 %v11335, %v11499
        %v11592 = vmul.f32 %v11336, %v11499
        %v11593 = vmul.f32 %v11337, %v11499
        %v11594 = vmul.f32 %v11338, %v11499
        %v11595 = vmul.f32 %v11339, %v11499
        %v11596 = vmul.f32 %v11340, %v11504
        %v11597 = vmul.f32 %v11341, %v11504
        %v11598 = vmul.f32 %v11342, %v11504
        %v11599 = vmul.f32 %v11343, %v11504
        %v11600 = vmul.f32 %v11344, %v11504
        %v11601 = vmul.f32 %v11345, %v11504
        %v11602 = vmul.f32 %v11346, %v11504
        %v11603 = vmul.f32 %v11347, %v11504
        %v11604 = vmul.f32 %v11348, %v11504
        %v11605 = vmul.f32 %v11349, %v11504
        %v11606 = vmul.f32 %v11350, %v11509
        %v11607 = vmul.f32 %v11351, %v11509
        %v11608 = vmul.f32 %v11352, %v11509
        %v11609 = vmul.f32 %v11353, %v11509
        %v11610 = vmul.f32 %v11354, %v11509
        %v11611 = vmul.f32 %v11355, %v11509
        %v11612 = vmul.f32 %v11356, %v11509
        %v11613 = vmul.f32 %v11357, %v11509
        %v11614 = vmul.f32 %v11358, %v11509
        %v11615 = vmul.f32 %v11359, %v11509
        %v11616 = vmul.f32 %v11360, %v11514
        %v11617 = vmul.f32 %v11361, %v11514
        %v11618 = vmul.f32 %v11362, %v11514
        %v11619 = vmul.f32 %v11363, %v11514
        %v11620 = vmul.f32 %v11364, %v11514
        %v11621 = vmul.f32 %v11365, %v11514
        %v11622 = vmul.f32 %v11366, %v11514
        %v11623 = vmul.f32 %v11367, %v11514
        %v11624 = vmul.f32 %v11368, %v11514
        %v11625 = vmul.f32 %v11369, %v11514
        %v11626 = vmul.f32 %v11370, %v11519
        %v11627 = vmul.f32 %v11371, %v11519
        %v11628 = vmul.f32 %v11372, %v11519
        %v11629 = vmul.f32 %v11373, %v11519
        %v11630 = vmul.f32 %v11374, %v11519
        %v11631 = vmul.f32 %v11375, %v11519
        %v11632 = vmul.f32 %v11376, %v11519
        %v11633 = vmul.f32 %v11377, %v11519
        %v11634 = vmul.f32 %v11378, %v11519
        %v11635 = vmul.f32 %v11379, %v11519
        %v11636 = vmul.f32 %v11380, %v11524
        %v11637 = vmul.f32 %v11381, %v11524
        %v11638 = vmul.f32 %v11382, %v11524
        %v11639 = vmul.f32 %v11383, %v11524
        %v11640 = vmul.f32 %v11384, %v11524
        %v11641 = vmul.f32 %v11385, %v11524
        %v11642 = vmul.f32 %v11386, %v11524
        %v11643 = vmul.f32 %v11387, %v11524
        %v11644 = vmul.f32 %v11388, %v11524
        %v11645 = vmul.f32 %v11389, %v11524
        %v11646 = vmul.f32 %v11390, %v11529
        %v11647 = vmul.f32 %v11391, %v11529
        %v11648 = vmul.f32 %v11392, %v11529
        %v11649 = vmul.f32 %v11393, %v11529
        %v11650 = vmul.f32 %v11394, %v11529
        %v11651 = vmul.f32 %v11395, %v11529
        %v11652 = vmul.f32 %v11396, %v11529
        %v11653 = vmul.f32 %v11397, %v11529
        %v11654 = vmul.f32 %v11398, %v11529
        %v11655 = vmul.f32 %v11399, %v11529
        %v11656 = vmul.f32 %v11400, %v11534
        %v11657 = vmul.f32 %v11401, %v11534
        %v11658 = vmul.f32 %v11402, %v11534
        %v11659 = vmul.f32 %v11403, %v11534
        %v11660 = vmul.f32 %v11404, %v11534
        %v11661 = vmul.f32 %v11405, %v11534
        %v11662 = vmul.f32 %v11406, %v11534
        %v11663 = vmul.f32 %v11407, %v11534
        %v11664 = vmul.f32 %v11408, %v11534
        %v11665 = vmul.f32 %v11409, %v11534
        %v11666 = vmul.f32 %v11410, %v11539
        %v11667 = vmul.f32 %v11411, %v11539
        %v11668 = vmul.f32 %v11412, %v11539
        %v11669 = vmul.f32 %v11413, %v11539
        %v11670 = vmul.f32 %v11414, %v11539
        %v11671 = vmul.f32 %v11415, %v11539
        %v11672 = vmul.f32 %v11416, %v11539
        %v11673 = vmul.f32 %v11417, %v11539
        %v11674 = vmul.f32 %v11418, %v11539
        %v11675 = vmul.f32 %v11419, %v11539
        %v11676 = vmul.f32 %v11420, %v11544
        %v11677 = vmul.f32 %v11421, %v11544
        %v11678 = vmul.f32 %v11422, %v11544
        %v11679 = vmul.f32 %v11423, %v11544
        %v11680 = vmul.f32 %v11424, %v11544
        %v11681 = vmul.f32 %v11425, %v11544
        %v11682 = vmul.f32 %v11426, %v11544
        %v11683 = vmul.f32 %v11427, %v11544
        %v11684 = vmul.f32 %v11428, %v11544
        %v11685 = vmul.f32 %v11429, %v11544
        %v11686 = vmul.f32 %v11430, %v11549
        %v11687 = vmul.f32 %v11431, %v11549
        %v11688 = vmul.f32 %v11432, %v11549
        %v11689 = vmul.f32 %v11433, %v11549
        %v11690 = vmul.f32 %v11434, %v11549
        %v11691 = vmul.f32 %v11435, %v11549
        %v11692 = vmul.f32 %v11436, %v11549
        %v11693 = vmul.f32 %v11437, %v11549
        %v11694 = vmul.f32 %v11438, %v11549
        %v11695 = vmul.f32 %v11439, %v11549
        %v11696 = vmul.f32 %v11440, %v11554
        %v11697 = vmul.f32 %v11441, %v11554
        %v11698 = vmul.f32 %v11442, %v11554
        %v11699 = vmul.f32 %v11443, %v11554
        %v11700 = vmul.f32 %v11444, %v11554
        %v11701 = vmul.f32 %v11445, %v11554
        %v11702 = vmul.f32 %v11446, %v11554
        %v11703 = vmul.f32 %v11447, %v11554
        %v11704 = vmul.f32 %v11448, %v11554
        %v11705 = vmul.f32 %v11449, %v11554
        %v11706 = vmul.f32 %v11450, %v11559
        %v11707 = vmul.f32 %v11451, %v11559
        %v11708 = vmul.f32 %v11452, %v11559
        %v11709 = vmul.f32 %v11453, %v11559
        %v11710 = vmul.f32 %v11454, %v11559
        %v11711 = vmul.f32 %v11455, %v11559
        %v11712 = vmul.f32 %v11456, %v11559
        %v11713 = vmul.f32 %v11457, %v11559
        %v11714 = vmul.f32 %v11458, %v11559
        %v11715 = vmul.f32 %v11459, %v11559
        %v11716 = vmul.f32 %v11460, %v11564
        %v11717 = vmul.f32 %v11461, %v11564
        %v11718 = vmul.f32 %v11462, %v11564
        %v11719 = vmul.f32 %v11463, %v11564
        %v11720 = vmul.f32 %v11464, %v11564
        %v11721 = vmul.f32 %v11465, %v11564
        %v11722 = vmul.f32 %v11466, %v11564
        %v11723 = vmul.f32 %v11467, %v11564
        %v11724 = vmul.f32 %v11468, %v11564
        %v11725 = vmul.f32 %v11469, %v11564
        %v11726 = vadd.f32 %v11566, %v11576
        %v11727 = vadd.f32 %v11726, %v11586
        %v11728 = vadd.f32 %v11727, %v11596
        %v11729 = vadd.f32 %v11728, %v11606
        %v11730 = vadd.f32 %v11729, %v11616
        %v11731 = vadd.f32 %v11730, %v11626
        %v11732 = vadd.f32 %v11731, %v11636
        %v11733 = vadd.f32 %v11732, %v11646
        %v11734 = vadd.f32 %v11733, %v11656
        %v11735 = vadd.f32 %v11734, %v11666
        %v11736 = vadd.f32 %v11735, %v11676
        %v11737 = vadd.f32 %v11736, %v11686
        %v11738 = vadd.f32 %v11737, %v11696
        %v11739 = vadd.f32 %v11738, %v11706
        %v11740 = vadd.f32 %v11739, %v11716
        %v11741 = vrot.slane %v11740, 4
        %v11742 = vadd.f32 %v11740, %v11741
        %v11743 = vrot.slane %v11742, 2
        %v11744 = vadd.f32 %v11742, %v11743
        %v11745 = vrot.slane %v11744, 1
        %v11746 = vadd.f32 %v11744, %v11745
        %v11747 = vadd.f32 %v11567, %v11577
        %v11748 = vadd.f32 %v11747, %v11587
        %v11749 = vadd.f32 %v11748, %v11597
        %v11750 = vadd.f32 %v11749, %v11607
        %v11751 = vadd.f32 %v11750, %v11617
        %v11752 = vadd.f32 %v11751, %v11627
        %v11753 = vadd.f32 %v11752, %v11637
        %v11754 = vadd.f32 %v11753, %v11647
        %v11755 = vadd.f32 %v11754, %v11657
        %v11756 = vadd.f32 %v11755, %v11667
        %v11757 = vadd.f32 %v11756, %v11677
        %v11758 = vadd.f32 %v11757, %v11687
        %v11759 = vadd.f32 %v11758, %v11697
        %v11760 = vadd.f32 %v11759, %v11707
        %v11761 = vadd.f32 %v11760, %v11717
        %v11762 = vrot.slane %v11761, 4
        %v11763 = vadd.f32 %v11761, %v11762
        %v11764 = vrot.slane %v11763, 2
        %v11765 = vadd.f32 %v11763, %v11764
        %v11766 = vrot.slane %v11765, 1
        %v11767 = vadd.f32 %v11765, %v11766
        %v11768 = vadd.f32 %v11568, %v11578
        %v11769 = vadd.f32 %v11768, %v11588
        %v11770 = vadd.f32 %v11769, %v11598
        %v11771 = vadd.f32 %v11770, %v11608
        %v11772 = vadd.f32 %v11771, %v11618
        %v11773 = vadd.f32 %v11772, %v11628
        %v11774 = vadd.f32 %v11773, %v11638
        %v11775 = vadd.f32 %v11774, %v11648
        %v11776 = vadd.f32 %v11775, %v11658
        %v11777 = vadd.f32 %v11776, %v11668
        %v11778 = vadd.f32 %v11777, %v11678
        %v11779 = vadd.f32 %v11778, %v11688
        %v11780 = vadd.f32 %v11779, %v11698
        %v11781 = vadd.f32 %v11780, %v11708
        %v11782 = vadd.f32 %v11781, %v11718
        %v11783 = vrot.slane %v11782, 4
        %v11784 = vadd.f32 %v11782, %v11783
        %v11785 = vrot.slane %v11784, 2
        %v11786 = vadd.f32 %v11784, %v11785
        %v11787 = vrot.slane %v11786, 1
        %v11788 = vadd.f32 %v11786, %v11787
        %v11789 = vadd.f32 %v11569, %v11579
        %v11790 = vadd.f32 %v11789, %v11589
        %v11791 = vadd.f32 %v11790, %v11599
        %v11792 = vadd.f32 %v11791, %v11609
        %v11793 = vadd.f32 %v11792, %v11619
        %v11794 = vadd.f32 %v11793, %v11629
        %v11795 = vadd.f32 %v11794, %v11639
        %v11796 = vadd.f32 %v11795, %v11649
        %v11797 = vadd.f32 %v11796, %v11659
        %v11798 = vadd.f32 %v11797, %v11669
        %v11799 = vadd.f32 %v11798, %v11679
        %v11800 = vadd.f32 %v11799, %v11689
        %v11801 = vadd.f32 %v11800, %v11699
        %v11802 = vadd.f32 %v11801, %v11709
        %v11803 = vadd.f32 %v11802, %v11719
        %v11804 = vrot.slane %v11803, 4
        %v11805 = vadd.f32 %v11803, %v11804
        %v11806 = vrot.slane %v11805, 2
        %v11807 = vadd.f32 %v11805, %v11806
        %v11808 = vrot.slane %v11807, 1
        %v11809 = vadd.f32 %v11807, %v11808
        %v11810 = vadd.f32 %v11570, %v11580
        %v11811 = vadd.f32 %v11810, %v11590
        %v11812 = vadd.f32 %v11811, %v11600
        %v11813 = vadd.f32 %v11812, %v11610
        %v11814 = vadd.f32 %v11813, %v11620
        %v11815 = vadd.f32 %v11814, %v11630
        %v11816 = vadd.f32 %v11815, %v11640
        %v11817 = vadd.f32 %v11816, %v11650
        %v11818 = vadd.f32 %v11817, %v11660
        %v11819 = vadd.f32 %v11818, %v11670
        %v11820 = vadd.f32 %v11819, %v11680
        %v11821 = vadd.f32 %v11820, %v11690
        %v11822 = vadd.f32 %v11821, %v11700
        %v11823 = vadd.f32 %v11822, %v11710
        %v11824 = vadd.f32 %v11823, %v11720
        %v11825 = vrot.slane %v11824, 4
        %v11826 = vadd.f32 %v11824, %v11825
        %v11827 = vrot.slane %v11826, 2
        %v11828 = vadd.f32 %v11826, %v11827
        %v11829 = vrot.slane %v11828, 1
        %v11830 = vadd.f32 %v11828, %v11829
        %v11831 = vadd.f32 %v11571, %v11581
        %v11832 = vadd.f32 %v11831, %v11591
        %v11833 = vadd.f32 %v11832, %v11601
        %v11834 = vadd.f32 %v11833, %v11611
        %v11835 = vadd.f32 %v11834, %v11621
        %v11836 = vadd.f32 %v11835, %v11631
        %v11837 = vadd.f32 %v11836, %v11641
        %v11838 = vadd.f32 %v11837, %v11651
        %v11839 = vadd.f32 %v11838, %v11661
        %v11840 = vadd.f32 %v11839, %v11671
        %v11841 = vadd.f32 %v11840, %v11681
        %v11842 = vadd.f32 %v11841, %v11691
        %v11843 = vadd.f32 %v11842, %v11701
        %v11844 = vadd.f32 %v11843, %v11711
        %v11845 = vadd.f32 %v11844, %v11721
        %v11846 = vrot.slane %v11845, 4
        %v11847 = vadd.f32 %v11845, %v11846
        %v11848 = vrot.slane %v11847, 2
        %v11849 = vadd.f32 %v11847, %v11848
        %v11850 = vrot.slane %v11849, 1
        %v11851 = vadd.f32 %v11849, %v11850
        %v11852 = vadd.f32 %v11572, %v11582
        %v11853 = vadd.f32 %v11852, %v11592
        %v11854 = vadd.f32 %v11853, %v11602
        %v11855 = vadd.f32 %v11854, %v11612
        %v11856 = vadd.f32 %v11855, %v11622
        %v11857 = vadd.f32 %v11856, %v11632
        %v11858 = vadd.f32 %v11857, %v11642
        %v11859 = vadd.f32 %v11858, %v11652
        %v11860 = vadd.f32 %v11859, %v11662
        %v11861 = vadd.f32 %v11860, %v11672
        %v11862 = vadd.f32 %v11861, %v11682
        %v11863 = vadd.f32 %v11862, %v11692
        %v11864 = vadd.f32 %v11863, %v11702
        %v11865 = vadd.f32 %v11864, %v11712
        %v11866 = vadd.f32 %v11865, %v11722
        %v11867 = vrot.slane %v11866, 4
        %v11868 = vadd.f32 %v11866, %v11867
        %v11869 = vrot.slane %v11868, 2
        %v11870 = vadd.f32 %v11868, %v11869
        %v11871 = vrot.slane %v11870, 1
        %v11872 = vadd.f32 %v11870, %v11871
        %v11873 = vadd.f32 %v11573, %v11583
        %v11874 = vadd.f32 %v11873, %v11593
        %v11875 = vadd.f32 %v11874, %v11603
        %v11876 = vadd.f32 %v11875, %v11613
        %v11877 = vadd.f32 %v11876, %v11623
        %v11878 = vadd.f32 %v11877, %v11633
        %v11879 = vadd.f32 %v11878, %v11643
        %v11880 = vadd.f32 %v11879, %v11653
        %v11881 = vadd.f32 %v11880, %v11663
        %v11882 = vadd.f32 %v11881, %v11673
        %v11883 = vadd.f32 %v11882, %v11683
        %v11884 = vadd.f32 %v11883, %v11693
        %v11885 = vadd.f32 %v11884, %v11703
        %v11886 = vadd.f32 %v11885, %v11713
        %v11887 = vadd.f32 %v11886, %v11723
        %v11888 = vrot.slane %v11887, 4
        %v11889 = vadd.f32 %v11887, %v11888
        %v11890 = vrot.slane %v11889, 2
        %v11891 = vadd.f32 %v11889, %v11890
        %v11892 = vrot.slane %v11891, 1
        %v11893 = vadd.f32 %v11891, %v11892
        %v11894 = vadd.f32 %v11574, %v11584
        %v11895 = vadd.f32 %v11894, %v11594
        %v11896 = vadd.f32 %v11895, %v11604
        %v11897 = vadd.f32 %v11896, %v11614
        %v11898 = vadd.f32 %v11897, %v11624
        %v11899 = vadd.f32 %v11898, %v11634
        %v11900 = vadd.f32 %v11899, %v11644
        %v11901 = vadd.f32 %v11900, %v11654
        %v11902 = vadd.f32 %v11901, %v11664
        %v11903 = vadd.f32 %v11902, %v11674
        %v11904 = vadd.f32 %v11903, %v11684
        %v11905 = vadd.f32 %v11904, %v11694
        %v11906 = vadd.f32 %v11905, %v11704
        %v11907 = vadd.f32 %v11906, %v11714
        %v11908 = vadd.f32 %v11907, %v11724
        %v11909 = vrot.slane %v11908, 4
        %v11910 = vadd.f32 %v11908, %v11909
        %v11911 = vrot.slane %v11910, 2
        %v11912 = vadd.f32 %v11910, %v11911
        %v11913 = vrot.slane %v11912, 1
        %v11914 = vadd.f32 %v11912, %v11913
        %v11915 = vadd.f32 %v11575, %v11585
        %v11916 = vadd.f32 %v11915, %v11595
        %v11917 = vadd.f32 %v11916, %v11605
        %v11918 = vadd.f32 %v11917, %v11615
        %v11919 = vadd.f32 %v11918, %v11625
        %v11920 = vadd.f32 %v11919, %v11635
        %v11921 = vadd.f32 %v11920, %v11645
        %v11922 = vadd.f32 %v11921, %v11655
        %v11923 = vadd.f32 %v11922, %v11665
        %v11924 = vadd.f32 %v11923, %v11675
        %v11925 = vadd.f32 %v11924, %v11685
        %v11926 = vadd.f32 %v11925, %v11695
        %v11927 = vadd.f32 %v11926, %v11705
        %v11928 = vadd.f32 %v11927, %v11715
        %v11929 = vadd.f32 %v11928, %v11725
        %v11930 = vrot.slane %v11929, 4
        %v11931 = vadd.f32 %v11929, %v11930
        %v11932 = vrot.slane %v11931, 2
        %v11933 = vadd.f32 %v11931, %v11932
        %v11934 = vrot.slane %v11933, 1
        %v11935 = vadd.f32 %v11933, %v11934
        %v11936 = vld [vmem:[#allocation2] sm:$0x1]
        %11938 = vset.pattern.permute.xlu0 0
        %11939 = vperm.xlu0 %11938, %v11936
        %v11940 = vpop.permute.xlu0 %11939
        %v11942 = vlaneseq
        %v11943 = vshrl.u32 %v11942, 7
        %v11944 = vsub.s32 0, %v11943
        %v11945 = vrot.slane %v11940, %v11944
        %v11946 = vadd.f32 %v11746, %v11945
        %v11947 = vadd.f32 %v11767, %v11945
        %v11948 = vadd.f32 %v11788, %v11945
        %v11949 = vadd.f32 %v11809, %v11945
        %v11950 = vadd.f32 %v11830, %v11945
        %v11951 = vadd.f32 %v11851, %v11945
        %v11952 = vadd.f32 %v11872, %v11945
        %v11953 = vadd.f32 %v11893, %v11945
        %v11954 = vadd.f32 %v11914, %v11945
        %v11955 = vadd.f32 %v11935, %v11945
        %v11956 = vxor.u32 %v11946, 2147483648
        %v11957 = vxor.u32 %v11947, 2147483648
        %v11958 = vxor.u32 %v11948, 2147483648
        %v11959 = vxor.u32 %v11949, 2147483648
        %v11960 = vxor.u32 %v11950, 2147483648
        %v11961 = vxor.u32 %v11951, 2147483648
        %v11962 = vxor.u32 %v11952, 2147483648
        %v11963 = vxor.u32 %v11953, 2147483648
        %v11964 = vxor.u32 %v11954, 2147483648
        %v11965 = vxor.u32 %v11955, 2147483648
        %v11966 = vmul.f32 %v11956, 1.442695
        %v11967 = vpow.pop %v11966
        %v11968 = vmul.f32 %v11957, 1.442695
        %v11969 = vpow.pop %v11968
        %v11970 = vmul.f32 %v11958, 1.442695
        %v11971 = vpow.pop %v11970
        %v11972 = vmul.f32 %v11959, 1.442695
        %v11973 = vpow.pop %v11972
        %v11974 = vmul.f32 %v11960, 1.442695
        %v11975 = vpow.pop %v11974
        %v11976 = vmul.f32 %v11961, 1.442695
        %v11977 = vpow.pop %v11976
        %v11978 = vmul.f32 %v11962, 1.442695
        %v11979 = vpow.pop %v11978
        %v11980 = vmul.f32 %v11963, 1.442695
        %v11981 = vpow.pop %v11980
        %v11982 = vmul.f32 %v11964, 1.442695
        %v11983 = vpow.pop %v11982
        %v11984 = vmul.f32 %v11965, 1.442695
        %v11985 = vpow.pop %v11984
        %v11986 = vadd.f32 %v11967, 1.0
        %v11987 = vadd.f32 %v11969, 1.0
        %v11988 = vadd.f32 %v11971, 1.0
        %v11989 = vadd.f32 %v11973, 1.0
        %v11990 = vadd.f32 %v11975, 1.0
        %v11991 = vadd.f32 %v11977, 1.0
        %v11992 = vadd.f32 %v11979, 1.0
        %v11993 = vadd.f32 %v11981, 1.0
        %v11994 = vadd.f32 %v11983, 1.0
        %v11995 = vadd.f32 %v11985, 1.0
        %v11996 = vrcp.pop %v11986
        %v11997 = vmul.f32 1.0, %v11996
        %v11998 = vrcp.pop %v11987
        %v11999 = vmul.f32 1.0, %v11998
        %v12000 = vrcp.pop %v11988
        %v12001 = vmul.f32 1.0, %v12000
        %v12002 = vrcp.pop %v11989
        %v12003 = vmul.f32 1.0, %v12002
        %v12004 = vrcp.pop %v11990
        %v12005 = vmul.f32 1.0, %v12004
        %v12006 = vrcp.pop %v11991
        %v12007 = vmul.f32 1.0, %v12006
        %v12008 = vrcp.pop %v11992
        %v12009 = vmul.f32 1.0, %v12008
        %v12010 = vrcp.pop %v11993
        %v12011 = vmul.f32 1.0, %v12010
        %v12012 = vrcp.pop %v11994
        %v12013 = vmul.f32 1.0, %v12012
        %v12014 = vrcp.pop %v11995
        %v12015 = vmul.f32 1.0, %v12014
        %v12026 = vcombine.low %v11997, %v11999
        %v12027 = vcombine.low %v12001, %v12003
        %v12028 = vcombine.low %v12005, %v12007
        %v12029 = vcombine.low %v12009, %v12011
        %v12031 = vunpack.c.l.s4 1966171168
        %v12032 = vunpack.c.0.s8 %v12031
        %v12033 = vlaneseq
        %v12034 = vshrl.u32 %v12033, 7
        %v12035 = vsub.s32 %v12032, %v12034
        %v12036 = vrot.slane %v12026, %v12035
        %v12038 = vunpack.c.l.s4 1966171168
        %v12039 = vunpack.c.0.s8 %v12038
        %v12040 = vlaneseq
        %v12041 = vshrl.u32 %v12040, 7
        %v12042 = vsub.s32 %v12039, %v12041
        %v12043 = vrot.slane %v12027, %v12042
        %v12045 = vunpack.c.l.s4 1966171168
        %v12046 = vunpack.c.0.s8 %v12045
        %v12047 = vlaneseq
        %v12048 = vshrl.u32 %v12047, 7
        %v12049 = vsub.s32 %v12046, %v12048
        %v12050 = vrot.slane %v12028, %v12049
        %v12052 = vunpack.c.l.s4 1966171168
        %v12053 = vunpack.c.0.s8 %v12052
        %v12054 = vlaneseq
        %v12055 = vshrl.u32 %v12054, 7
        %v12056 = vsub.s32 %v12053, %v12055
        %v12057 = vrot.slane %v12029, %v12056
        %v12058 = vcombine.low %v12036, %v12043
        %v12059 = vcombine.low %v12050, %v12057
        %v12061 = vunpack.c.l.s4 1966171168
        %v12062 = vunpack.c.0.s8 %v12061
        %v12063 = vlaneseq
        %v12064 = vshrl.u32 %v12063, 7
        %v12065 = vsub.s32 %v12062, %v12064
        %v12066 = vrot.slane %v12058, %v12065
        %v12068 = vunpack.c.l.s4 1966171168
        %v12069 = vunpack.c.0.s8 %v12068
        %v12070 = vlaneseq
        %v12071 = vshrl.u32 %v12070, 7
        %v12072 = vsub.s32 %v12069, %v12071
        %v12073 = vrot.slane %v12059, %v12072
        %v12074 = vcombine.low %v12066, %v12073
        %v12075 = vcombine.low %v12013, %v12015
        %v12077 = vunpack.c.l.s4 1966171168
        %v12078 = vunpack.c.0.s8 %v12077
        %v12079 = vlaneseq
        %v12080 = vshrl.u32 %v12079, 7
        %v12081 = vsub.s32 %v12078, %v12080
        %v12082 = vrot.slane %v12075, %v12081
        %v12084 = vunpack.c.l.s4 1966171168
        %v12085 = vunpack.c.0.s8 %v12084
        %v12086 = vlaneseq
        %v12087 = vshrl.u32 %v12086, 7
        %v12088 = vsub.s32 %v12085, %v12087
        %v12089 = vrot.slane %v12082, %v12088
        %12092 = vst [vmem:[%s522] sm:$0xff] %v12074
        %v12093 = vlaneseq
        %vm12094 = vcmp.ge.s32.totalorder %v12093, 0
        %vm12095 = vcmp.lt.s32.totalorder %v12093, 256
        %vm12096 = vmand %vm12094, %vm12095
        %12097 = vst.msk [vmem:[%s522 + $0x8] sm:$0x3] %vm12096, %v12089
        %s12098 = sand.u32 %s369, 1
        %s12099 = scalar_lea.sflag [#allocation4], %s12098
        %s12100 = sand.u32 %s369, 1
        %s12101 = smul.addr %s12100, 10
        %s12102 = scalar_lea.vmem [#allocation3], %s12101
        // Predicated region
        $region81: #{tpu_custom_call.1} parent=79 // pred_check
          %p12103 = pneg %p379
        $region82: #{tpu_custom_call.1} parent=79 // pred_check_branch
          %12105 = sbr.rel (%p12103) target = $region84
        $region83: #{tpu_custom_call.1} parent=79 // pred_region
          %s12106 = smul.u32 10, %s31
          %s12108 = ssub.s32 160, 160
          %12109 = vsyncadd %s12099, %s12108
          %s12110 = smul.addr %s12106, 16
          %s12111 = scalar_lea.hbm %s15, %s12110
          %s12113 = sshll.u32 %s12102, 4
          %s12114 = int_to_ptr.vmem [resolvable:$true] %s12113
          %12116 = dma.vmem_to_hbm [thread:$0]  %s12114, 160, %s12111, %s12099
        $region84: #{tpu_custom_call.1} parent=79 // pred_fallthru
          _
      $region80: #{tpu_custom_call.1} parent=5 // pred_fallthru
        _
      %p12117 = scmp.le.s32.totalorder 2, %s26
      // Predicated region
      $region85: #{tpu_custom_call.1} parent=5 // pred_check
        %p12118 = pneg %p12117
      $region86: #{tpu_custom_call.1} parent=5 // pred_check_branch
        %12120 = sbr.rel (%p12118) target = $region88
      $region87: #{tpu_custom_call.1} parent=5 // pred_region
        %s12121 = ssub.s32 %s26, 2
        // Predicated region
        $region89: #{tpu_custom_call.1} parent=87 // pred_check
          %p12122 = pneg %p385
        $region90: #{tpu_custom_call.1} parent=87 // pred_check_branch
          %12124 = sbr.rel (%p12122) target = $region92
        $region91: #{tpu_custom_call.1} parent=87 // pred_region
          %s12125 = sand.u32 %s370, 1
          %s12126 = scalar_lea.sflag [#allocation4], %s12125
          %s12127 = sand.u32 %s370, 1
          %s12128 = smul.addr %s12127, 10
          %s12129 = scalar_lea.vmem [#allocation3], %s12128
          %12130 = dma.done %s12126, 160
        $region92: #{tpu_custom_call.1} parent=87 // pred_fallthru
          _
      $region88: #{tpu_custom_call.1} parent=5 // pred_fallthru
        _
    $region6: #{tpu_custom_call.1} parent=1 // loop_footer
      %s30 = sadd.s32 1, %s26
    $region7: #{tpu_custom_call.1} parent=1 // loop_footer_branch
      %25 = sbr.rel target = $region3
    $region8: #{tpu_custom_call.1} parent=1 // loop_exit
      _
    %12131 = vsyncpa [#allocation4], 1
    %s12132 = scalar_lea.sflag [#allocation4], 1
    %12133 = vsyncpa %s12132, 1

</llo_original>
